<compile_context>
chip_gen: v6e
topology: v6e:2x2x1
jax: 0.10.0
libtpu: 0.0.40
codegen_flags: <defaults>
</compile_context>

<pallas_src>
import jax
import jax.numpy as jnp
from jax.experimental import pallas as pl
from jax.experimental.pallas import tpu as pltpu

EPS = 1e-5                              # BatchNorm1d eps
VMEM_LIMIT_BYTES = 48 * 1024 * 1024     # leaves headroom on v7x's 64 MiB VMEM
CENTER_TILE = 128                       # centers / grid step when tiling (mult. of 128)


def _round_up(x, m):
    return (x + m - 1) // m * m


# ----------------------------------------------------------------------------
# Pallas kernels
# ----------------------------------------------------------------------------
def _edge_mlp_max_kernel(feat_ref, mask_ref, w1, b1, w2, b2, w3, b3, out_ref):
    """One tile of TG centers x K neighbors.

    feat_ref: (K, TG, Cin) bf16 neighbor-major edge features [x_j, pos_j - pos_i]
    mask_ref: (K, TG)      f32 validity {0,1} (lane-dense)
    w*:       bf16 weights with inference BatchNorm folded in
    b*:       f32 (1, C) folded biases
    out_ref:  (TG, C3)     f32 masked max over the K neighbors

    The 3 Linear layers run as one (K*TG, .) matmul chain on the MXU (bf16
    operands, f32 accumulate); bias/ReLU/mask/max stay in f32 on the VPU.  The
    max reduces the leading axis of (K, TG, C3) -> pure VPU elementwise maxes.
    """
    k, tg, cin = feat_ref.shape
    f = feat_ref[...].reshape(k * tg, cin)                    # merge leading dims
    h = jnp.dot(f, w1[...], preferred_element_type=jnp.float32) + b1[...]
    h = jnp.maximum(h, 0.0).astype(jnp.bfloat16)
    h = jnp.dot(h, w2[...], preferred_element_type=jnp.float32) + b2[...]
    h = jnp.maximum(h, 0.0).astype(jnp.bfloat16)
    h = jnp.dot(h, w3[...], preferred_element_type=jnp.float32) + b3[...]   # plain last
    c3 = h.shape[-1]
    h = h.reshape(k, tg, c3)
    valid = mask_ref[...][:, :, None] > 0.0                   # (K, TG, 1)
    out_ref[...] = jnp.max(jnp.where(valid, h, -jnp.inf), axis=0)


def _global_mlp_head_kernel(feat_ref, w1, b1, w2, b2, w3, b3,
                            hw1, hb1, hw2, hb2, out_ref):
    """GlobalSAModule (MLP on cat([x, pos]) + global_max_pool per cloud) fused
    with the final MLP([1024, 512, embed_dim], norm=None) head.  The pooled
    (B, 1024) tensor stays resident in VMEM."""
    m, bsz, cin = feat_ref.shape
    f = feat_ref[...].reshape(m * bsz, cin)
    h = jnp.dot(f, w1[...], preferred_element_type=jnp.float32) + b1[...]
    h = jnp.maximum(h, 0.0).astype(jnp.bfloat16)
    h = jnp.dot(h, w2[...], preferred_element_type=jnp.float32) + b2[...]
    h = jnp.maximum(h, 0.0).astype(jnp.bfloat16)
    h = jnp.dot(h, w3[...], preferred_element_type=jnp.float32) + b3[...]
    pooled = jnp.max(h.reshape(m, bsz, -1), axis=0)           # global_max_pool
    g = jnp.dot(pooled.astype(jnp.bfloat16), hw1[...],
                preferred_element_type=jnp.float32) + hb1[...]
    g = jnp.maximum(g, 0.0).astype(jnp.bfloat16)
    out_ref[...] = jnp.dot(g, hw2[...], preferred_element_type=jnp.float32) + hb2[...]


# ----------------------------------------------------------------------------
# pallas_call wrappers
# ----------------------------------------------------------------------------
def _choose_center_tile(g):
    """Centers per grid step.  When the center axis is split, the tile must be
    a multiple of 128 (lane constraint of the (K, G) mask block); otherwise a
    single full-axis tile rounded up to a sublane multiple of 8."""
    if g <= CENTER_TILE:
        tg = _round_up(g, 8)
        return tg, tg
    return CENTER_TILE, _round_up(g, CENTER_TILE)


def edge_mlp_max(feat, mask, layers):
    """feat (K, G, Cin) bf16, mask (K, G) f32, layers = [(w, b)] * 3 (BN folded).
    Returns (G, C3) f32: masked max over the K axis of MLP(edge features)."""
    (w1, b1), (w2, b2), (w3, b3) = layers
    k, g, cin = feat.shape
    c1, c2, c3 = w1.shape[1], w2.shape[1], w3.shape[1]
    tg, g_pad = _choose_center_tile(g)
    if g_pad != g:
        feat = jnp.pad(feat, ((0, 0), (0, g_pad - g), (0, 0)))
        mask = jnp.pad(mask, ((0, 0), (0, g_pad - g)))

    flops = 2 * k * g_pad * (cin * c1 + c1 * c2 + c2 * c3)
    bytes_accessed = (feat.size * 2 + mask.size * 4 + g_pad * c3 * 4
                      + (w1.size + w2.size + w3.size) * 2
                      + (b1.size + b2.size + b3.size) * 4)

    out = pl.pallas_call(
        _edge_mlp_max_kernel,
        out_shape=jax.ShapeDtypeStruct((g_pad, c3), jnp.float32),
        grid_spec=pltpu.PrefetchScalarGridSpec(
            num_scalar_prefetch=0,
            grid=(g_pad // tg,),
            in_specs=[
                pl.BlockSpec((k, tg, cin), lambda i: (0, i, 0)),   # edge features
                pl.BlockSpec((k, tg), lambda i: (0, i)),           # validity mask
                pl.BlockSpec((cin, c1), lambda i: (0, 0)),         # weights: constant
                pl.BlockSpec((1, c1), lambda i: (0, 0)),           # block -> fetched once
                pl.BlockSpec((c1, c2), lambda i: (0, 0)),
                pl.BlockSpec((1, c2), lambda i: (0, 0)),
                pl.BlockSpec((c2, c3), lambda i: (0, 0)),
                pl.BlockSpec((1, c3), lambda i: (0, 0)),
            ],
            out_specs=pl.BlockSpec((tg, c3), lambda i: (i, 0)),
        ),
        compiler_params=pltpu.CompilerParams(
            dimension_semantics=("parallel",),      # shard center tiles across TCs (v7x)
            vmem_limit_bytes=VMEM_LIMIT_BYTES),
        cost_estimate=pl.CostEstimate(flops=int(flops), transcendentals=0,
                                      bytes_accessed=int(bytes_accessed)),
    )(feat, mask, w1, b1, w2, b2, w3, b3)
    return out[:g]


def global_mlp_head(feat, sa3_layers, head_layers):
    """feat (M, B_pad, Cin) bf16 (B_pad a multiple of 8).  Returns (B_pad, embed)."""
    (w1, b1), (w2, b2), (w3, b3) = sa3_layers
    (hw1, hb1), (hw2, hb2) = head_layers
    _, bsz, _ = feat.shape
    embed = hw2.shape[1]
    vmem = pl.BlockSpec(memory_space=pltpu.MemorySpace.VMEM)
    return pl.pallas_call(
        _global_mlp_head_kernel,
        out_shape=jax.ShapeDtypeStruct((bsz, embed), jnp.float32),
        in_specs=[vmem] * 11,
        out_specs=vmem,
        compiler_params=pltpu.CompilerParams(vmem_limit_bytes=VMEM_LIMIT_BYTES),
    )(feat, w1, b1, w2, b2, w3, b3, hw1, hb1, hw2, hb2)


# ----------------------------------------------------------------------------
# Plain-JAX glue: FPS + radius neighbor search (irregular, data-dependent).
# ----------------------------------------------------------------------------
def fps_indices(pos, m):
    """Farthest point sampling of m points from pos (N, 3).
    # TODO(synk): PyG fps() picks a random start; we start at index 0."""
    idx0 = jnp.zeros((m,), jnp.int32)
    d0 = jnp.sum((pos - pos[0]) ** 2, axis=-1)

    def body(i, state):
        idx, dists = state
        nxt = jnp.argmax(dists).astype(jnp.int32)
        idx = idx.at[i].set(nxt)
        d = jnp.sum((pos - pos[nxt]) ** 2, axis=-1)
        return idx, jnp.minimum(dists, d)

    idx, _ = jax.lax.fori_loop(1, m, body, (idx0, d0))
    return idx


def radius_neighbors(pos, centers, r, k):
    """First k points of pos within distance r of each center.
    Returns (idx (M, k) int32, mask (M, k) float32).  The center itself is
    always included (distance 0), so every row has >= 1 valid neighbor."""
    n = pos.shape[0]
    d2 = jnp.sum((centers[:, None, :] - pos[None, :, :]) ** 2, axis=-1)
    within = d2 <= r * r
    cand = jnp.where(within, jnp.arange(n, dtype=jnp.int32)[None, :], n)
    cand = jnp.sort(cand, axis=1)[:, :k]
    valid = cand < n
    idx = jnp.where(valid, cand, 0).astype(jnp.int32)
    return idx, valid.astype(jnp.float32)


# ----------------------------------------------------------------------------
# PointNet++ modules
# ----------------------------------------------------------------------------
def fold_layer(layer):
    """Fold inference BatchNorm (running stats) into the Linear; cast the MXU
    operand (weight) to bf16; keep the bias in f32 for the VPU add."""
    w, b = layer["w"], layer["b"]
    if "gamma" in layer:
        scale = layer["gamma"] * jax.lax.rsqrt(layer["var"] + EPS)
        w = w * scale
        b = (b - layer["mean"]) * scale + layer["beta"]
    return w.astype(jnp.bfloat16), b.astype(jnp.float32)


def sa_module(x, pos, ratio, r, layers):
    """SAModule: fps -> radius -> PointNetConv(local MLP, max aggregation)."""
    B, N, C = x.shape
    M = max(1, int(N * ratio))
    K = min(64, N)                                          # max_num_neighbors=64
    fps_idx = jax.vmap(lambda p: fps_indices(p, M))(pos)                 # (B, M)
    pos_c = jnp.take_along_axis(pos, fps_idx[..., None], axis=1)         # (B, M, 3)
    nbr_idx, nbr_mask = jax.vmap(
        lambda p, c: radius_neighbors(p, c, r, K))(pos, pos_c)           # (B, M, K)

    # PointNetConv.message: concat([x_j, pos_j - pos_i])
    flat_idx = nbr_idx.reshape(B, M * K, 1)
    x_n = jnp.take_along_axis(x, flat_idx, axis=1).reshape(B, M, K, C)
    p_n = jnp.take_along_axis(pos, flat_idx, axis=1).reshape(B, M, K, 3)
    rel = p_n - pos_c[:, :, None, :]
    edge = jnp.concatenate([x_n, rel], axis=-1)                          # (B, M, K, C+3)

    # Neighbor-major (K, B*M, Cin) bf16 layout + lane-dense (K, B*M) mask.
    # TODO(synk): gather could move inside the kernel (scalar-prefetched
    # nbr_idx + DMA from pl.ANY refs) to avoid materializing edge features.
    feat = jnp.transpose(edge, (2, 0, 1, 3)).reshape(K, B * M, C + 3)
    mask = jnp.transpose(nbr_mask, (2, 0, 1)).reshape(K, B * M)
    out = edge_mlp_max(feat.astype(jnp.bfloat16), mask, layers)          # (B*M, C3)
    return out.reshape(B, M, -1), pos_c


def global_sa_and_head(x, pos, sa3_layers, head_layers):
    """GlobalSAModule (MLP + global_max_pool per cloud) fused with the head MLP.
    (GlobalSAModule's pos=zeros / batch=arange outputs are unused downstream.)"""
    B, M, C = x.shape
    feat = jnp.concatenate([x, pos], axis=-1)               # (B, M, C+3)
    feat = jnp.transpose(feat, (1, 0, 2))                   # (M, B, C+3) point-major
    b_pad = _round_up(B, 8)                                 # sublane-friendly batch
    if b_pad != B:
        feat = jnp.pad(feat, ((0, 0), (0, b_pad - B), (0, 0)))
    out = global_mlp_head(feat.astype(jnp.bfloat16), sa3_layers, head_layers)
    return out[:B]


def pointnetpp_forward(points, params):
    """PointNetPP.forward for the non-dict observation path (state_dim == 0)."""
    pos = points[..., :3]
    color = points[..., 3:]
    sa1 = [fold_layer(l) for l in params["sa1"]]
    sa2 = [fold_layer(l) for l in params["sa2"]]
    sa3 = [fold_layer(l) for l in params["sa3"]]
    head = [fold_layer(l) for l in params["head"]]
    x1, pos1 = sa_module(color, pos, 0.5, 0.2, sa1)
    x2, pos2 = sa_module(x1, pos1, 0.25, 0.4, sa2)
    return global_sa_and_head(x2, pos2, sa3, head)          # (B, embed_dim)


# ----------------------------------------------------------------------------
# Deterministic parameter init (shapes per the module __init__)
# ----------------------------------------------------------------------------
def init_mlp_params(key, dims, norm=True):
    """torch_geometric MLP(dims): Linear layers with BatchNorm1d + ReLU on all
    but the last (plain_last=True).  BatchNorm stored as running stats (eval)."""
    layers = []
    for i in range(len(dims) - 1):
        key, kw, kb = jax.random.split(key, 3)
        w = jax.random.normal(kw, (dims[i], dims[i + 1]), jnp.float32)
        w = w / jnp.sqrt(jnp.float32(dims[i]))
        b = 0.01 * jax.random.normal(kb, (1, dims[i + 1]), jnp.float32)
        layer = {"w": w, "b": b}
        if norm and i < len(dims) - 2:
            key, kg, kbe, km, kv = jax.random.split(key, 5)
            layer["gamma"] = 1.0 + 0.1 * jax.random.normal(kg, (1, dims[i + 1]), jnp.float32)
            layer["beta"] = 0.1 * jax.random.normal(kbe, (1, dims[i + 1]), jnp.float32)
            layer["mean"] = 0.1 * jax.random.normal(km, (1, dims[i + 1]), jnp.float32)
            layer["var"] = 0.5 + jax.random.uniform(kv, (1, dims[i + 1]), jnp.float32)
        layers.append(layer)
    return layers, key


if __name__ == "__main__":
    B, N, POINT_DIM, EMBED_DIM = 2, 32, 6, 64   # point = [xyz(3) | color(3)]

    key = jax.random.PRNGKey(0)
    k_pts, k_par = jax.random.split(key)
    points = jax.random.uniform(k_pts, (B, N, POINT_DIM), jnp.float32)

    pk = k_par
    sa1, pk = init_mlp_params(pk, [POINT_DIM, 64, 64, 128])
    sa2, pk = init_mlp_params(pk, [128 + 3, 128, 128, 256])
    sa3, pk = init_mlp_params(pk, [256 + 3, 256, 512, 1024])
    head, pk = init_mlp_params(pk, [1024, 512, EMBED_DIM], norm=False)
    params = {"sa1": sa1, "sa2": sa2, "sa3": sa3, "head": head}

    out = jax.jit(pointnetpp_forward)(points, params)
    out = jax.block_until_ready(out)
    assert out.shape == (B, EMBED_DIM) and out.dtype == jnp.float32
    print("KERNEL_OK")
</pallas_src>

<mosaic_0001>
module attributes {stable_mosaic.version = 11 : i64} {
  func.func @_edge_mlp_max_kernel(%arg0: i32, %arg1: memref<32x32x6xbf16, #tpu.memory_space<vmem>>, %arg2: memref<32x32xf32, #tpu.memory_space<vmem>>, %arg3: memref<6x64xbf16, #tpu.memory_space<vmem>>, %arg4: memref<1x64xf32, #tpu.memory_space<vmem>>, %arg5: memref<64x64xbf16, #tpu.memory_space<vmem>>, %arg6: memref<1x64xf32, #tpu.memory_space<vmem>>, %arg7: memref<64x128xbf16, #tpu.memory_space<vmem>>, %arg8: memref<1x128xf32, #tpu.memory_space<vmem>>, %arg9: memref<32x128xf32, #tpu.memory_space<vmem>>) attributes {dimension_semantics = [#tpu.dimension_semantics<parallel>], iteration_bounds = array<i64: 1>, scalar_prefetch = 0 : i64, scratch_operands = 0 : i64, tpu.core_type = #tpu.core_type<tc>, window_params = [{transform_indices = @transform_0, window_bounds = array<i64: 32, 32, 6>}, {transform_indices = @transform_1, window_bounds = array<i64: 32, 32>}, {pipeline_mode = #tpu.pipeline_mode<synchronous>, transform_indices = @transform_2, window_bounds = array<i64: 6, 64>}, {pipeline_mode = #tpu.pipeline_mode<synchronous>, transform_indices = @transform_3, window_bounds = array<i64: 1, 64>}, {pipeline_mode = #tpu.pipeline_mode<synchronous>, transform_indices = @transform_4, window_bounds = array<i64: 64, 64>}, {pipeline_mode = #tpu.pipeline_mode<synchronous>, transform_indices = @transform_5, window_bounds = array<i64: 1, 64>}, {pipeline_mode = #tpu.pipeline_mode<synchronous>, transform_indices = @transform_6, window_bounds = array<i64: 64, 128>}, {pipeline_mode = #tpu.pipeline_mode<synchronous>, transform_indices = @transform_7, window_bounds = array<i64: 1, 128>}, {transform_indices = @transform_8, window_bounds = array<i64: 32, 128>}]} {
    %c0 = arith.constant 0 : index
    %c0_0 = arith.constant 0 : index
    %c0_1 = arith.constant 0 : index
    %0 = vector.load %arg1[%c0, %c0_0, %c0_1] : memref<32x32x6xbf16, #tpu.memory_space<vmem>>, vector<32x32x6xbf16>
    %1 = vector.shape_cast %0 : vector<32x32x6xbf16> to vector<1024x6xbf16>
    %c0_2 = arith.constant 0 : index
    %c0_3 = arith.constant 0 : index
    %2 = vector.load %arg3[%c0_2, %c0_3] : memref<6x64xbf16, #tpu.memory_space<vmem>>, vector<6x64xbf16>
    %cst = arith.constant dense<0.000000e+00> : vector<1024x64xf32>
    %3 = tpu.matmul %1, %2, %cst {dimension_numbers = #tpu.dot_dimension_numbers<[1], [0], [0], [1], [0, 0, 1, 1], [], []>} : vector<1024x6xbf16>, vector<6x64xbf16>, vector<1024x64xf32> -> vector<1024x64xf32>
    %c0_4 = arith.constant 0 : index
    %c0_5 = arith.constant 0 : index
    %4 = vector.load %arg4[%c0_4, %c0_5] : memref<1x64xf32, #tpu.memory_space<vmem>>, vector<1x64xf32>
    %5 = vector.broadcast %4 : vector<1x64xf32> to vector<1024x64xf32>
    %6 = arith.addf %3, %5 : vector<1024x64xf32>
    %cst_6 = arith.constant 0.000000e+00 : f32
    %7 = vector.broadcast %cst_6 : f32 to vector<1024x64xf32>
    %8 = arith.maximumf %6, %7 : vector<1024x64xf32>
    %9 = arith.truncf %8 : vector<1024x64xf32> to vector<1024x64xbf16>
    %c0_7 = arith.constant 0 : index
    %c0_8 = arith.constant 0 : index
    %10 = vector.load %arg5[%c0_7, %c0_8] : memref<64x64xbf16, #tpu.memory_space<vmem>>, vector<64x64xbf16>
    %cst_9 = arith.constant dense<0.000000e+00> : vector<1024x64xf32>
    %11 = tpu.matmul %9, %10, %cst_9 {dimension_numbers = #tpu.dot_dimension_numbers<[1], [0], [0], [1], [0, 0, 1, 1], [], []>} : vector<1024x64xbf16>, vector<64x64xbf16>, vector<1024x64xf32> -> vector<1024x64xf32>
    %c0_10 = arith.constant 0 : index
    %c0_11 = arith.constant 0 : index
    %12 = vector.load %arg6[%c0_10, %c0_11] : memref<1x64xf32, #tpu.memory_space<vmem>>, vector<1x64xf32>
    %13 = vector.broadcast %12 : vector<1x64xf32> to vector<1024x64xf32>
    %14 = arith.addf %11, %13 : vector<1024x64xf32>
    %cst_12 = arith.constant 0.000000e+00 : f32
    %15 = vector.broadcast %cst_12 : f32 to vector<1024x64xf32>
    %16 = arith.maximumf %14, %15 : vector<1024x64xf32>
    %17 = arith.truncf %16 : vector<1024x64xf32> to vector<1024x64xbf16>
    %c0_13 = arith.constant 0 : index
    %c0_14 = arith.constant 0 : index
    %18 = vector.load %arg7[%c0_13, %c0_14] : memref<64x128xbf16, #tpu.memory_space<vmem>>, vector<64x128xbf16>
    %cst_15 = arith.constant dense<0.000000e+00> : vector<1024x128xf32>
    %19 = tpu.matmul %17, %18, %cst_15 {dimension_numbers = #tpu.dot_dimension_numbers<[1], [0], [0], [1], [0, 0, 1, 1], [], []>} : vector<1024x64xbf16>, vector<64x128xbf16>, vector<1024x128xf32> -> vector<1024x128xf32>
    %c0_16 = arith.constant 0 : index
    %c0_17 = arith.constant 0 : index
    %20 = vector.load %arg8[%c0_16, %c0_17] : memref<1x128xf32, #tpu.memory_space<vmem>>, vector<1x128xf32>
    %21 = vector.broadcast %20 : vector<1x128xf32> to vector<1024x128xf32>
    %22 = arith.addf %19, %21 : vector<1024x128xf32>
    %23 = vector.shape_cast %22 : vector<1024x128xf32> to vector<32x32x128xf32>
    %c0_18 = arith.constant 0 : index
    %c0_19 = arith.constant 0 : index
    %24 = vector.load %arg2[%c0_18, %c0_19] : memref<32x32xf32, #tpu.memory_space<vmem>>, vector<32x32xf32>
    %25 = vector.shape_cast %24 : vector<32x32xf32> to vector<32x32x1xf32>
    %cst_20 = arith.constant 0.000000e+00 : f32
    %26 = vector.broadcast %cst_20 : f32 to vector<32x32x1xf32>
    %27 = arith.cmpf ogt, %25, %26 : vector<32x32x1xf32>
    %cst_21 = arith.constant 0xFF800000 : f32
    %28 = vector.shape_cast %27 : vector<32x32x1xi1> to vector<32x32x1xi1>
    %29 = vector.broadcast %28 : vector<32x32x1xi1> to vector<32x32x128xi1>
    %30 = vector.broadcast %cst_21 : f32 to vector<32x32x128xf32>
    %31 = arith.select %29, %23, %30 : vector<32x32x128xi1>, vector<32x32x128xf32>
    %cst_22 = arith.constant dense<0xFF800000> : vector<32x128xf32>
    %32 = vector.multi_reduction <maximumf>, %31, %cst_22 [0] : vector<32x32x128xf32> to vector<32x128xf32>
    %c0_23 = arith.constant 0 : index
    %c0_24 = arith.constant 0 : index
    %33 = vector.load %arg9[%c0_23, %c0_24] : memref<32x128xf32, #tpu.memory_space<vmem>>, vector<32x128xf32>
    tpu.vector_store %arg9[%c0_23, %c0_24], %32 {strides = array<i32>} : memref<32x128xf32, #tpu.memory_space<vmem>>, vector<32x128xf32>,
    return
  }
  func.func @transform_0(%arg0: i32) -> (i32, i32, i32) {
    %c0_i32 = arith.constant 0 : i32
    %c0_i32_0 = arith.constant 0 : i32
    %c0_i32_1 = arith.constant 0 : i32
    return %c0_i32, %arg0, %c0_i32_0 : i32, i32, i32
  }
  func.func @transform_1(%arg0: i32) -> (i32, i32) {
    %c0_i32 = arith.constant 0 : i32
    %c0_i32_0 = arith.constant 0 : i32
    return %c0_i32, %arg0 : i32, i32
  }
  func.func @transform_2(%arg0: i32) -> (i32, i32) {
    %c0_i32 = arith.constant 0 : i32
    %c0_i32_0 = arith.constant 0 : i32
    %c0_i32_1 = arith.constant 0 : i32
    return %c0_i32, %c0_i32_0 : i32, i32
  }
  func.func @transform_3(%arg0: i32) -> (i32, i32) {
    %c0_i32 = arith.constant 0 : i32
    %c0_i32_0 = arith.constant 0 : i32
    %c0_i32_1 = arith.constant 0 : i32
    return %c0_i32, %c0_i32_0 : i32, i32
  }
  func.func @transform_4(%arg0: i32) -> (i32, i32) {
    %c0_i32 = arith.constant 0 : i32
    %c0_i32_0 = arith.constant 0 : i32
    %c0_i32_1 = arith.constant 0 : i32
    return %c0_i32, %c0_i32_0 : i32, i32
  }
  func.func @transform_5(%arg0: i32) -> (i32, i32) {
    %c0_i32 = arith.constant 0 : i32
    %c0_i32_0 = arith.constant 0 : i32
    %c0_i32_1 = arith.constant 0 : i32
    return %c0_i32, %c0_i32_0 : i32, i32
  }
  func.func @transform_6(%arg0: i32) -> (i32, i32) {
    %c0_i32 = arith.constant 0 : i32
    %c0_i32_0 = arith.constant 0 : i32
    %c0_i32_1 = arith.constant 0 : i32
    return %c0_i32, %c0_i32_0 : i32, i32
  }
  func.func @transform_7(%arg0: i32) -> (i32, i32) {
    %c0_i32 = arith.constant 0 : i32
    %c0_i32_0 = arith.constant 0 : i32
    %c0_i32_1 = arith.constant 0 : i32
    return %c0_i32, %c0_i32_0 : i32, i32
  }
  func.func @transform_8(%arg0: i32) -> (i32, i32) {
    %c0_i32 = arith.constant 0 : i32
    %c0_i32_0 = arith.constant 0 : i32
    return %arg0, %c0_i32 : i32, i32
  }
}

module attributes {stable_mosaic.version = 11 : i64} {
  func.func @_edge_mlp_max_kernel(%arg0: i32, %arg1: memref<16x8x131xbf16, #tpu.memory_space<vmem>>, %arg2: memref<16x8xf32, #tpu.memory_space<vmem>>, %arg3: memref<131x128xbf16, #tpu.memory_space<vmem>>, %arg4: memref<1x128xf32, #tpu.memory_space<vmem>>, %arg5: memref<128x128xbf16, #tpu.memory_space<vmem>>, %arg6: memref<1x128xf32, #tpu.memory_space<vmem>>, %arg7: memref<128x256xbf16, #tpu.memory_space<vmem>>, %arg8: memref<1x256xf32, #tpu.memory_space<vmem>>, %arg9: memref<8x256xf32, #tpu.memory_space<vmem>>) attributes {dimension_semantics = [#tpu.dimension_semantics<parallel>], iteration_bounds = array<i64: 1>, scalar_prefetch = 0 : i64, scratch_operands = 0 : i64, tpu.core_type = #tpu.core_type<tc>, window_params = [{transform_indices = @transform_0, window_bounds = array<i64: 16, 8, 131>}, {transform_indices = @transform_1, window_bounds = array<i64: 16, 8>}, {pipeline_mode = #tpu.pipeline_mode<synchronous>, transform_indices = @transform_2, window_bounds = array<i64: 131, 128>}, {pipeline_mode = #tpu.pipeline_mode<synchronous>, transform_indices = @transform_3, window_bounds = array<i64: 1, 128>}, {pipeline_mode = #tpu.pipeline_mode<synchronous>, transform_indices = @transform_4, window_bounds = array<i64: 128, 128>}, {pipeline_mode = #tpu.pipeline_mode<synchronous>, transform_indices = @transform_5, window_bounds = array<i64: 1, 128>}, {pipeline_mode = #tpu.pipeline_mode<synchronous>, transform_indices = @transform_6, window_bounds = array<i64: 128, 256>}, {pipeline_mode = #tpu.pipeline_mode<synchronous>, transform_indices = @transform_7, window_bounds = array<i64: 1, 256>}, {transform_indices = @transform_8, window_bounds = array<i64: 8, 256>}]} {
    %c0 = arith.constant 0 : index
    %c0_0 = arith.constant 0 : index
    %c0_1 = arith.constant 0 : index
    %0 = vector.load %arg1[%c0, %c0_0, %c0_1] : memref<16x8x131xbf16, #tpu.memory_space<vmem>>, vector<16x8x131xbf16>
    %1 = vector.shape_cast %0 : vector<16x8x131xbf16> to vector<128x131xbf16>
    %c0_2 = arith.constant 0 : index
    %c0_3 = arith.constant 0 : index
    %2 = vector.load %arg3[%c0_2, %c0_3] : memref<131x128xbf16, #tpu.memory_space<vmem>>, vector<131x128xbf16>
    %cst = arith.constant dense<0.000000e+00> : vector<128x128xf32>
    %3 = tpu.matmul %1, %2, %cst {dimension_numbers = #tpu.dot_dimension_numbers<[1], [0], [0], [1], [0, 0, 1, 1], [], []>} : vector<128x131xbf16>, vector<131x128xbf16>, vector<128x128xf32> -> vector<128x128xf32>
    %c0_4 = arith.constant 0 : index
    %c0_5 = arith.constant 0 : index
    %4 = vector.load %arg4[%c0_4, %c0_5] : memref<1x128xf32, #tpu.memory_space<vmem>>, vector<1x128xf32>
    %5 = vector.broadcast %4 : vector<1x128xf32> to vector<128x128xf32>
    %6 = arith.addf %3, %5 : vector<128x128xf32>
    %cst_6 = arith.constant 0.000000e+00 : f32
    %7 = vector.broadcast %cst_6 : f32 to vector<128x128xf32>
    %8 = arith.maximumf %6, %7 : vector<128x128xf32>
    %9 = arith.truncf %8 : vector<128x128xf32> to vector<128x128xbf16>
    %c0_7 = arith.constant 0 : index
    %c0_8 = arith.constant 0 : index
    %10 = vector.load %arg5[%c0_7, %c0_8] : memref<128x128xbf16, #tpu.memory_space<vmem>>, vector<128x128xbf16>
    %cst_9 = arith.constant dense<0.000000e+00> : vector<128x128xf32>
    %11 = tpu.matmul %9, %10, %cst_9 {dimension_numbers = #tpu.dot_dimension_numbers<[1], [0], [0], [1], [0, 0, 1, 1], [], []>} : vector<128x128xbf16>, vector<128x128xbf16>, vector<128x128xf32> -> vector<128x128xf32>
    %c0_10 = arith.constant 0 : index
    %c0_11 = arith.constant 0 : index
    %12 = vector.load %arg6[%c0_10, %c0_11] : memref<1x128xf32, #tpu.memory_space<vmem>>, vector<1x128xf32>
    %13 = vector.broadcast %12 : vector<1x128xf32> to vector<128x128xf32>
    %14 = arith.addf %11, %13 : vector<128x128xf32>
    %cst_12 = arith.constant 0.000000e+00 : f32
    %15 = vector.broadcast %cst_12 : f32 to vector<128x128xf32>
    %16 = arith.maximumf %14, %15 : vector<128x128xf32>
    %17 = arith.truncf %16 : vector<128x128xf32> to vector<128x128xbf16>
    %c0_13 = arith.constant 0 : index
    %c0_14 = arith.constant 0 : index
    %18 = vector.load %arg7[%c0_13, %c0_14] : memref<128x256xbf16, #tpu.memory_space<vmem>>, vector<128x256xbf16>
    %cst_15 = arith.constant dense<0.000000e+00> : vector<128x256xf32>
    %19 = tpu.matmul %17, %18, %cst_15 {dimension_numbers = #tpu.dot_dimension_numbers<[1], [0], [0], [1], [0, 0, 1, 1], [], []>} : vector<128x128xbf16>, vector<128x256xbf16>, vector<128x256xf32> -> vector<128x256xf32>
    %c0_16 = arith.constant 0 : index
    %c0_17 = arith.constant 0 : index
    %20 = vector.load %arg8[%c0_16, %c0_17] : memref<1x256xf32, #tpu.memory_space<vmem>>, vector<1x256xf32>
    %21 = vector.broadcast %20 : vector<1x256xf32> to vector<128x256xf32>
    %22 = arith.addf %19, %21 : vector<128x256xf32>
    %23 = vector.shape_cast %22 : vector<128x256xf32> to vector<16x8x256xf32>
    %c0_18 = arith.constant 0 : index
    %c0_19 = arith.constant 0 : index
    %24 = vector.load %arg2[%c0_18, %c0_19] : memref<16x8xf32, #tpu.memory_space<vmem>>, vector<16x8xf32>
    %25 = vector.shape_cast %24 : vector<16x8xf32> to vector<16x8x1xf32>
    %cst_20 = arith.constant 0.000000e+00 : f32
    %26 = vector.broadcast %cst_20 : f32 to vector<16x8x1xf32>
    %27 = arith.cmpf ogt, %25, %26 : vector<16x8x1xf32>
    %cst_21 = arith.constant 0xFF800000 : f32
    %28 = vector.shape_cast %27 : vector<16x8x1xi1> to vector<16x8x1xi1>
    %29 = vector.broadcast %28 : vector<16x8x1xi1> to vector<16x8x256xi1>
    %30 = vector.broadcast %cst_21 : f32 to vector<16x8x256xf32>
    %31 = arith.select %29, %23, %30 : vector<16x8x256xi1>, vector<16x8x256xf32>
    %cst_22 = arith.constant dense<0xFF800000> : vector<8x256xf32>
    %32 = vector.multi_reduction <maximumf>, %31, %cst_22 [0] : vector<16x8x256xf32> to vector<8x256xf32>
    %c0_23 = arith.constant 0 : index
    %c0_24 = arith.constant 0 : index
    %33 = vector.load %arg9[%c0_23, %c0_24] : memref<8x256xf32, #tpu.memory_space<vmem>>, vector<8x256xf32>
    tpu.vector_store %arg9[%c0_23, %c0_24], %32 {strides = array<i32>} : memref<8x256xf32, #tpu.memory_space<vmem>>, vector<8x256xf32>,
    return
  }
  func.func @transform_0(%arg0: i32) -> (i32, i32, i32) {
    %c0_i32 = arith.constant 0 : i32
    %c0_i32_0 = arith.constant 0 : i32
    %c0_i32_1 = arith.constant 0 : i32
    return %c0_i32, %arg0, %c0_i32_0 : i32, i32, i32
  }
  func.func @transform_1(%arg0: i32) -> (i32, i32) {
    %c0_i32 = arith.constant 0 : i32
    %c0_i32_0 = arith.constant 0 : i32
    return %c0_i32, %arg0 : i32, i32
  }
  func.func @transform_2(%arg0: i32) -> (i32, i32) {
    %c0_i32 = arith.constant 0 : i32
    %c0_i32_0 = arith.constant 0 : i32
    %c0_i32_1 = arith.constant 0 : i32
    return %c0_i32, %c0_i32_0 : i32, i32
  }
  func.func @transform_3(%arg0: i32) -> (i32, i32) {
    %c0_i32 = arith.constant 0 : i32
    %c0_i32_0 = arith.constant 0 : i32
    %c0_i32_1 = arith.constant 0 : i32
    return %c0_i32, %c0_i32_0 : i32, i32
  }
  func.func @transform_4(%arg0: i32) -> (i32, i32) {
    %c0_i32 = arith.constant 0 : i32
    %c0_i32_0 = arith.constant 0 : i32
    %c0_i32_1 = arith.constant 0 : i32
    return %c0_i32, %c0_i32_0 : i32, i32
  }
  func.func @transform_5(%arg0: i32) -> (i32, i32) {
    %c0_i32 = arith.constant 0 : i32
    %c0_i32_0 = arith.constant 0 : i32
    %c0_i32_1 = arith.constant 0 : i32
    return %c0_i32, %c0_i32_0 : i32, i32
  }
  func.func @transform_6(%arg0: i32) -> (i32, i32) {
    %c0_i32 = arith.constant 0 : i32
    %c0_i32_0 = arith.constant 0 : i32
    %c0_i32_1 = arith.constant 0 : i32
    return %c0_i32, %c0_i32_0 : i32, i32
  }
  func.func @transform_7(%arg0: i32) -> (i32, i32) {
    %c0_i32 = arith.constant 0 : i32
    %c0_i32_0 = arith.constant 0 : i32
    %c0_i32_1 = arith.constant 0 : i32
    return %c0_i32, %c0_i32_0 : i32, i32
  }
  func.func @transform_8(%arg0: i32) -> (i32, i32) {
    %c0_i32 = arith.constant 0 : i32
    %c0_i32_0 = arith.constant 0 : i32
    return %arg0, %c0_i32 : i32, i32
  }
}

module attributes {stable_mosaic.version = 11 : i64} {
  func.func @_global_mlp_head_kernel(%arg0: memref<4x8x259xbf16, #tpu.memory_space<vmem>>, %arg1: memref<259x256xbf16, #tpu.memory_space<vmem>>, %arg2: memref<1x256xf32, #tpu.memory_space<vmem>>, %arg3: memref<256x512xbf16, #tpu.memory_space<vmem>>, %arg4: memref<1x512xf32, #tpu.memory_space<vmem>>, %arg5: memref<512x1024xbf16, #tpu.memory_space<vmem>>, %arg6: memref<1x1024xf32, #tpu.memory_space<vmem>>, %arg7: memref<1024x512xbf16, #tpu.memory_space<vmem>>, %arg8: memref<1x512xf32, #tpu.memory_space<vmem>>, %arg9: memref<512x64xbf16, #tpu.memory_space<vmem>>, %arg10: memref<1x64xf32, #tpu.memory_space<vmem>>, %arg11: memref<8x64xf32, #tpu.memory_space<vmem>>) attributes {dimension_semantics = [], scalar_prefetch = 0 : i64, scratch_operands = 0 : i64, tpu.core_type = #tpu.core_type<tc>} {
    %c0 = arith.constant 0 : index
    %c0_0 = arith.constant 0 : index
    %c0_1 = arith.constant 0 : index
    %0 = vector.load %arg0[%c0, %c0_0, %c0_1] : memref<4x8x259xbf16, #tpu.memory_space<vmem>>, vector<4x8x259xbf16>
    %1 = vector.shape_cast %0 : vector<4x8x259xbf16> to vector<32x259xbf16>
    %c0_2 = arith.constant 0 : index
    %c0_3 = arith.constant 0 : index
    %2 = vector.load %arg1[%c0_2, %c0_3] : memref<259x256xbf16, #tpu.memory_space<vmem>>, vector<259x256xbf16>
    %cst = arith.constant dense<0.000000e+00> : vector<32x256xf32>
    %3 = tpu.matmul %1, %2, %cst {dimension_numbers = #tpu.dot_dimension_numbers<[1], [0], [0], [1], [0, 0, 1, 1], [], []>} : vector<32x259xbf16>, vector<259x256xbf16>, vector<32x256xf32> -> vector<32x256xf32>
    %c0_4 = arith.constant 0 : index
    %c0_5 = arith.constant 0 : index
    %4 = vector.load %arg2[%c0_4, %c0_5] : memref<1x256xf32, #tpu.memory_space<vmem>>, vector<1x256xf32>
    %5 = vector.broadcast %4 : vector<1x256xf32> to vector<32x256xf32>
    %6 = arith.addf %3, %5 : vector<32x256xf32>
    %cst_6 = arith.constant 0.000000e+00 : f32
    %7 = vector.broadcast %cst_6 : f32 to vector<32x256xf32>
    %8 = arith.maximumf %6, %7 : vector<32x256xf32>
    %9 = arith.truncf %8 : vector<32x256xf32> to vector<32x256xbf16>
    %c0_7 = arith.constant 0 : index
    %c0_8 = arith.constant 0 : index
    %10 = vector.load %arg3[%c0_7, %c0_8] : memref<256x512xbf16, #tpu.memory_space<vmem>>, vector<256x512xbf16>
    %cst_9 = arith.constant dense<0.000000e+00> : vector<32x512xf32>
    %11 = tpu.matmul %9, %10, %cst_9 {dimension_numbers = #tpu.dot_dimension_numbers<[1], [0], [0], [1], [0, 0, 1, 1], [], []>} : vector<32x256xbf16>, vector<256x512xbf16>, vector<32x512xf32> -> vector<32x512xf32>
    %c0_10 = arith.constant 0 : index
    %c0_11 = arith.constant 0 : index
    %12 = vector.load %arg4[%c0_10, %c0_11] : memref<1x512xf32, #tpu.memory_space<vmem>>, vector<1x512xf32>
    %13 = vector.broadcast %12 : vector<1x512xf32> to vector<32x512xf32>
    %14 = arith.addf %11, %13 : vector<32x512xf32>
    %cst_12 = arith.constant 0.000000e+00 : f32
    %15 = vector.broadcast %cst_12 : f32 to vector<32x512xf32>
    %16 = arith.maximumf %14, %15 : vector<32x512xf32>
    %17 = arith.truncf %16 : vector<32x512xf32> to vector<32x512xbf16>
    %c0_13 = arith.constant 0 : index
    %c0_14 = arith.constant 0 : index
    %18 = vector.load %arg5[%c0_13, %c0_14] : memref<512x1024xbf16, #tpu.memory_space<vmem>>, vector<512x1024xbf16>
    %cst_15 = arith.constant dense<0.000000e+00> : vector<32x1024xf32>
    %19 = tpu.matmul %17, %18, %cst_15 {dimension_numbers = #tpu.dot_dimension_numbers<[1], [0], [0], [1], [0, 0, 1, 1], [], []>} : vector<32x512xbf16>, vector<512x1024xbf16>, vector<32x1024xf32> -> vector<32x1024xf32>
    %c0_16 = arith.constant 0 : index
    %c0_17 = arith.constant 0 : index
    %20 = vector.load %arg6[%c0_16, %c0_17] : memref<1x1024xf32, #tpu.memory_space<vmem>>, vector<1x1024xf32>
    %21 = vector.broadcast %20 : vector<1x1024xf32> to vector<32x1024xf32>
    %22 = arith.addf %19, %21 : vector<32x1024xf32>
    %23 = vector.shape_cast %22 : vector<32x1024xf32> to vector<4x8x1024xf32>
    %cst_18 = arith.constant dense<0xFF800000> : vector<8x1024xf32>
    %24 = vector.multi_reduction <maximumf>, %23, %cst_18 [0] : vector<4x8x1024xf32> to vector<8x1024xf32>
    %25 = arith.truncf %24 : vector<8x1024xf32> to vector<8x1024xbf16>
    %c0_19 = arith.constant 0 : index
    %c0_20 = arith.constant 0 : index
    %26 = vector.load %arg7[%c0_19, %c0_20] : memref<1024x512xbf16, #tpu.memory_space<vmem>>, vector<1024x512xbf16>
    %cst_21 = arith.constant dense<0.000000e+00> : vector<8x512xf32>
    %27 = tpu.matmul %25, %26, %cst_21 {dimension_numbers = #tpu.dot_dimension_numbers<[1], [0], [0], [1], [0, 0, 1, 1], [], []>} : vector<8x1024xbf16>, vector<1024x512xbf16>, vector<8x512xf32> -> vector<8x512xf32>
    %c0_22 = arith.constant 0 : index
    %c0_23 = arith.constant 0 : index
    %28 = vector.load %arg8[%c0_22, %c0_23] : memref<1x512xf32, #tpu.memory_space<vmem>>, vector<1x512xf32>
    %29 = vector.broadcast %28 : vector<1x512xf32> to vector<8x512xf32>
    %30 = arith.addf %27, %29 : vector<8x512xf32>
    %cst_24 = arith.constant 0.000000e+00 : f32
    %31 = vector.broadcast %cst_24 : f32 to vector<8x512xf32>
    %32 = arith.maximumf %30, %31 : vector<8x512xf32>
    %33 = arith.truncf %32 : vector<8x512xf32> to vector<8x512xbf16>
    %c0_25 = arith.constant 0 : index
    %c0_26 = arith.constant 0 : index
    %34 = vector.load %arg9[%c0_25, %c0_26] : memref<512x64xbf16, #tpu.memory_space<vmem>>, vector<512x64xbf16>
    %cst_27 = arith.constant dense<0.000000e+00> : vector<8x64xf32>
    %35 = tpu.matmul %33, %34, %cst_27 {dimension_numbers = #tpu.dot_dimension_numbers<[1], [0], [0], [1], [0, 0, 1, 1], [], []>} : vector<8x512xbf16>, vector<512x64xbf16>, vector<8x64xf32> -> vector<8x64xf32>
    %c0_28 = arith.constant 0 : index
    %c0_29 = arith.constant 0 : index
    %36 = vector.load %arg10[%c0_28, %c0_29] : memref<1x64xf32, #tpu.memory_space<vmem>>, vector<1x64xf32>
    %37 = vector.broadcast %36 : vector<1x64xf32> to vector<8x64xf32>
    %38 = arith.addf %35, %37 : vector<8x64xf32>
    %c0_30 = arith.constant 0 : index
    %c0_31 = arith.constant 0 : index
    %39 = vector.load %arg11[%c0_30, %c0_31] : memref<8x64xf32, #tpu.memory_space<vmem>>, vector<8x64xf32>
    tpu.vector_store %arg11[%c0_30, %c0_31], %38 {strides = array<i32>} : memref<8x64xf32, #tpu.memory_space<vmem>>, vector<8x64xf32>,
    return
  }
}

</mosaic_0001>

<llo_original>
// kernel: pointnetpp_forward.3
$region0: #{pointnetpp_forward.3}
  #allocation0 [shape = 'u32[]', space=smem, size = 0x4, offset = 0x4, fixed_abs, tag = 'smem constant byte address 0x4 - core index']
  #allocation1 [shape = 'u32[144,128]{1,0:T(1,128)}', space=vmem, size = 0x12000, scoped, tag = 'internal scratch']
  %s0 = inlined_call_operand.vmem [shape: bf16[32,32,6], index: 0, kind: input, shape index: {}]
  %s1 = inlined_call_operand.vmem [shape: f32[32,32], index: 1, kind: input, shape index: {}]
  %s2 = inlined_call_operand.vmem [shape: bf16[6,64], index: 2, kind: input, shape index: {}]
  %s3 = inlined_call_operand.vmem [shape: f32[1,64], index: 3, kind: input, shape index: {}]
  %s4 = inlined_call_operand.vmem [shape: bf16[64,64], index: 4, kind: input, shape index: {}]
  %s5 = inlined_call_operand.vmem [shape: f32[1,64], index: 5, kind: input, shape index: {}]
  %s6 = inlined_call_operand.vmem [shape: bf16[64,128], index: 6, kind: input, shape index: {}]
  %s7 = inlined_call_operand.vmem [shape: f32[1,128], index: 7, kind: input, shape index: {}]
  %s8 = inlined_call_operand.vmem [shape: f32[32,128], index: 8, kind: output, shape index: {}]
  %s9 = sld [smem:[#allocation0]]
  $region42: #{pointnetpp_forward.3} parent=0
    _
  %s11 = ssub.s32 1, %s9
  %s12 = scalar_select 0, %s11, %s9
  // Predicated region
  $region2: #{pointnetpp_forward.3} parent=0 // pred_check
    _
  $region3: #{pointnetpp_forward.3} parent=0 // pred_check_branch
    %14 = sbr.rel (0) target = $region5
  $region4: #{pointnetpp_forward.3} parent=0 // pred_region
    _
  $region5: #{pointnetpp_forward.3} parent=0 // pred_fallthru
    _
  // Predicated region
  $region6: #{pointnetpp_forward.3} parent=0 // pred_check
    _
  $region7: #{pointnetpp_forward.3} parent=0 // pred_check_branch
    %16 = sbr.rel (0) target = $region9
  $region8: #{pointnetpp_forward.3} parent=0 // pred_region
    _
  $region9: #{pointnetpp_forward.3} parent=0 // pred_fallthru
    _
  // Predicated region
  $region10: #{pointnetpp_forward.3} parent=0 // pred_check
    _
  $region11: #{pointnetpp_forward.3} parent=0 // pred_check_branch
    %18 = sbr.rel (0) target = $region13
  $region12: #{pointnetpp_forward.3} parent=0 // pred_region
    _
  $region13: #{pointnetpp_forward.3} parent=0 // pred_fallthru
    _
  // Predicated region
  $region14: #{pointnetpp_forward.3} parent=0 // pred_check
    _
  $region15: #{pointnetpp_forward.3} parent=0 // pred_check_branch
    %20 = sbr.rel (0) target = $region17
  $region16: #{pointnetpp_forward.3} parent=0 // pred_region
    _
  $region17: #{pointnetpp_forward.3} parent=0 // pred_fallthru
    _
  // Predicated region
  $region18: #{pointnetpp_forward.3} parent=0 // pred_check
    _
  $region19: #{pointnetpp_forward.3} parent=0 // pred_check_branch
    %22 = sbr.rel (0) target = $region21
  $region20: #{pointnetpp_forward.3} parent=0 // pred_region
    _
  $region21: #{pointnetpp_forward.3} parent=0 // pred_fallthru
    _
  // Predicated region
  $region22: #{pointnetpp_forward.3} parent=0 // pred_check
    _
  $region23: #{pointnetpp_forward.3} parent=0 // pred_check_branch
    %24 = sbr.rel (0) target = $region25
  $region24: #{pointnetpp_forward.3} parent=0 // pred_region
    _
  $region25: #{pointnetpp_forward.3} parent=0 // pred_fallthru
    _
  // Predicated region
  $region26: #{pointnetpp_forward.3} parent=0 // pred_check
    _
  $region27: #{pointnetpp_forward.3} parent=0 // pred_check_branch
    %26 = sbr.rel (0) target = $region29
  $region28: #{pointnetpp_forward.3} parent=0 // pred_region
    _
  $region29: #{pointnetpp_forward.3} parent=0 // pred_fallthru
    _
  // Predicated region
  $region30: #{pointnetpp_forward.3} parent=0 // pred_check
    _
  $region31: #{pointnetpp_forward.3} parent=0 // pred_check_branch
    %28 = sbr.rel (0) target = $region33
  $region32: #{pointnetpp_forward.3} parent=0 // pred_region
    _
  $region33: #{pointnetpp_forward.3} parent=0 // pred_fallthru
    _
  %v30 = vld [vmem:[%s0] sm:$0xf]
  %v31 = vld [vmem:[%s0 + $0x4] sm:$0xf]
  %v32 = vld [vmem:[%s0 + $0x8] sm:$0xf]
  %v33 = vld [vmem:[%s0 + $0xc] sm:$0xf]
  %v34 = vld [vmem:[%s0 + $0x10] sm:$0xf]
  %v35 = vld [vmem:[%s0 + $0x14] sm:$0xf]
  %v36 = vld [vmem:[%s0 + $0x18] sm:$0xf]
  %v37 = vld [vmem:[%s0 + $0x1c] sm:$0xf]
  %v38 = vld [vmem:[%s0 + $0x20] sm:$0xf]
  %v39 = vld [vmem:[%s0 + $0x24] sm:$0xf]
  %v40 = vld [vmem:[%s0 + $0x28] sm:$0xf]
  %v41 = vld [vmem:[%s0 + $0x2c] sm:$0xf]
  %v42 = vld [vmem:[%s0 + $0x30] sm:$0xf]
  %v43 = vld [vmem:[%s0 + $0x34] sm:$0xf]
  %v44 = vld [vmem:[%s0 + $0x38] sm:$0xf]
  %v45 = vld [vmem:[%s0 + $0x3c] sm:$0xf]
  %v46 = vld [vmem:[%s0 + $0x40] sm:$0xf]
  %v47 = vld [vmem:[%s0 + $0x44] sm:$0xf]
  %v48 = vld [vmem:[%s0 + $0x48] sm:$0xf]
  %v49 = vld [vmem:[%s0 + $0x4c] sm:$0xf]
  %v50 = vld [vmem:[%s0 + $0x50] sm:$0xf]
  %v51 = vld [vmem:[%s0 + $0x54] sm:$0xf]
  %v52 = vld [vmem:[%s0 + $0x58] sm:$0xf]
  %v53 = vld [vmem:[%s0 + $0x5c] sm:$0xf]
  %v54 = vld [vmem:[%s0 + $0x60] sm:$0xf]
  %v55 = vld [vmem:[%s0 + $0x64] sm:$0xf]
  %v56 = vld [vmem:[%s0 + $0x68] sm:$0xf]
  %v57 = vld [vmem:[%s0 + $0x6c] sm:$0xf]
  %v58 = vld [vmem:[%s0 + $0x70] sm:$0xf]
  %v59 = vld [vmem:[%s0 + $0x74] sm:$0xf]
  %v60 = vld [vmem:[%s0 + $0x78] sm:$0xf]
  %v61 = vld [vmem:[%s0 + $0x7c] sm:$0xf]
  %v62 = vld [vmem:[%s0 + $0x80] sm:$0xf]
  %v63 = vld [vmem:[%s0 + $0x84] sm:$0xf]
  %v64 = vld [vmem:[%s0 + $0x88] sm:$0xf]
  %v65 = vld [vmem:[%s0 + $0x8c] sm:$0xf]
  %v66 = vld [vmem:[%s0 + $0x90] sm:$0xf]
  %v67 = vld [vmem:[%s0 + $0x94] sm:$0xf]
  %v68 = vld [vmem:[%s0 + $0x98] sm:$0xf]
  %v69 = vld [vmem:[%s0 + $0x9c] sm:$0xf]
  %v70 = vld [vmem:[%s0 + $0xa0] sm:$0xf]
  %v71 = vld [vmem:[%s0 + $0xa4] sm:$0xf]
  %v72 = vld [vmem:[%s0 + $0xa8] sm:$0xf]
  %v73 = vld [vmem:[%s0 + $0xac] sm:$0xf]
  %v74 = vld [vmem:[%s0 + $0xb0] sm:$0xf]
  %v75 = vld [vmem:[%s0 + $0xb4] sm:$0xf]
  %v76 = vld [vmem:[%s0 + $0xb8] sm:$0xf]
  %v77 = vld [vmem:[%s0 + $0xbc] sm:$0xf]
  %v78 = vld [vmem:[%s0 + $0xc0] sm:$0xf]
  %v79 = vld [vmem:[%s0 + $0xc4] sm:$0xf]
  %v80 = vld [vmem:[%s0 + $0xc8] sm:$0xf]
  %v81 = vld [vmem:[%s0 + $0xcc] sm:$0xf]
  %v82 = vld [vmem:[%s0 + $0xd0] sm:$0xf]
  %v83 = vld [vmem:[%s0 + $0xd4] sm:$0xf]
  %v84 = vld [vmem:[%s0 + $0xd8] sm:$0xf]
  %v85 = vld [vmem:[%s0 + $0xdc] sm:$0xf]
  %v86 = vld [vmem:[%s0 + $0xe0] sm:$0xf]
  %v87 = vld [vmem:[%s0 + $0xe4] sm:$0xf]
  %v88 = vld [vmem:[%s0 + $0xe8] sm:$0xf]
  %v89 = vld [vmem:[%s0 + $0xec] sm:$0xf]
  %v90 = vld [vmem:[%s0 + $0xf0] sm:$0xf]
  %v91 = vld [vmem:[%s0 + $0xf4] sm:$0xf]
  %v92 = vld [vmem:[%s0 + $0xf8] sm:$0xf]
  %v93 = vld [vmem:[%s0 + $0xfc] sm:$0xf]
  %v94 = vld [vmem:[%s0 + $0x100] sm:$0xf]
  %v95 = vld [vmem:[%s0 + $0x104] sm:$0xf]
  %v96 = vld [vmem:[%s0 + $0x108] sm:$0xf]
  %v97 = vld [vmem:[%s0 + $0x10c] sm:$0xf]
  %v98 = vld [vmem:[%s0 + $0x110] sm:$0xf]
  %v99 = vld [vmem:[%s0 + $0x114] sm:$0xf]
  %v100 = vld [vmem:[%s0 + $0x118] sm:$0xf]
  %v101 = vld [vmem:[%s0 + $0x11c] sm:$0xf]
  %v102 = vld [vmem:[%s0 + $0x120] sm:$0xf]
  %v103 = vld [vmem:[%s0 + $0x124] sm:$0xf]
  %v104 = vld [vmem:[%s0 + $0x128] sm:$0xf]
  %v105 = vld [vmem:[%s0 + $0x12c] sm:$0xf]
  %v106 = vld [vmem:[%s0 + $0x130] sm:$0xf]
  %v107 = vld [vmem:[%s0 + $0x134] sm:$0xf]
  %v108 = vld [vmem:[%s0 + $0x138] sm:$0xf]
  %v109 = vld [vmem:[%s0 + $0x13c] sm:$0xf]
  %v110 = vld [vmem:[%s0 + $0x140] sm:$0xf]
  %v111 = vld [vmem:[%s0 + $0x144] sm:$0xf]
  %v112 = vld [vmem:[%s0 + $0x148] sm:$0xf]
  %v113 = vld [vmem:[%s0 + $0x14c] sm:$0xf]
  %v114 = vld [vmem:[%s0 + $0x150] sm:$0xf]
  %v115 = vld [vmem:[%s0 + $0x154] sm:$0xf]
  %v116 = vld [vmem:[%s0 + $0x158] sm:$0xf]
  %v117 = vld [vmem:[%s0 + $0x15c] sm:$0xf]
  %v118 = vld [vmem:[%s0 + $0x160] sm:$0xf]
  %v119 = vld [vmem:[%s0 + $0x164] sm:$0xf]
  %v120 = vld [vmem:[%s0 + $0x168] sm:$0xf]
  %v121 = vld [vmem:[%s0 + $0x16c] sm:$0xf]
  %v122 = vld [vmem:[%s0 + $0x170] sm:$0xf]
  %v123 = vld [vmem:[%s0 + $0x174] sm:$0xf]
  %v124 = vld [vmem:[%s0 + $0x178] sm:$0xf]
  %v125 = vld [vmem:[%s0 + $0x17c] sm:$0xf]
  %v126 = vld [vmem:[%s0 + $0x180] sm:$0xf]
  %v127 = vld [vmem:[%s0 + $0x184] sm:$0xf]
  %v128 = vld [vmem:[%s0 + $0x188] sm:$0xf]
  %v129 = vld [vmem:[%s0 + $0x18c] sm:$0xf]
  %v130 = vld [vmem:[%s0 + $0x190] sm:$0xf]
  %v131 = vld [vmem:[%s0 + $0x194] sm:$0xf]
  %v132 = vld [vmem:[%s0 + $0x198] sm:$0xf]
  %v133 = vld [vmem:[%s0 + $0x19c] sm:$0xf]
  %v134 = vld [vmem:[%s0 + $0x1a0] sm:$0xf]
  %v135 = vld [vmem:[%s0 + $0x1a4] sm:$0xf]
  %v136 = vld [vmem:[%s0 + $0x1a8] sm:$0xf]
  %v137 = vld [vmem:[%s0 + $0x1ac] sm:$0xf]
  %v138 = vld [vmem:[%s0 + $0x1b0] sm:$0xf]
  %v139 = vld [vmem:[%s0 + $0x1b4] sm:$0xf]
  %v140 = vld [vmem:[%s0 + $0x1b8] sm:$0xf]
  %v141 = vld [vmem:[%s0 + $0x1bc] sm:$0xf]
  %v142 = vld [vmem:[%s0 + $0x1c0] sm:$0xf]
  %v143 = vld [vmem:[%s0 + $0x1c4] sm:$0xf]
  %v144 = vld [vmem:[%s0 + $0x1c8] sm:$0xf]
  %v145 = vld [vmem:[%s0 + $0x1cc] sm:$0xf]
  %v146 = vld [vmem:[%s0 + $0x1d0] sm:$0xf]
  %v147 = vld [vmem:[%s0 + $0x1d4] sm:$0xf]
  %v148 = vld [vmem:[%s0 + $0x1d8] sm:$0xf]
  %v149 = vld [vmem:[%s0 + $0x1dc] sm:$0xf]
  %v150 = vld [vmem:[%s0 + $0x1e0] sm:$0xf]
  %v151 = vld [vmem:[%s0 + $0x1e4] sm:$0xf]
  %v152 = vld [vmem:[%s0 + $0x1e8] sm:$0xf]
  %v153 = vld [vmem:[%s0 + $0x1ec] sm:$0xf]
  %v154 = vld [vmem:[%s0 + $0x1f0] sm:$0xf]
  %v155 = vld [vmem:[%s0 + $0x1f4] sm:$0xf]
  %v156 = vld [vmem:[%s0 + $0x1f8] sm:$0xf]
  %v157 = vld [vmem:[%s0 + $0x1fc] sm:$0xf]
  %v158 = vld [vmem:[%s2] sm:$0x7]
  %v159 = vld [vmem:[%s3] sm:$0x1]
  %v161 = vlaneseq
  %v162 = vshrl.u32 %v161, 7
  %v163 = vsub.s32 0, %v162
  %v164 = vrot.slane %v159, %v163
  %v294 = vunpack.c.l.b16 %v30
  %v295 = vunpack.c.l.b16 %v31
  %v296 = vunpack.c.l.b16 %v32
  %v297 = vunpack.c.l.b16 %v33
  %v298 = vunpack.c.l.b16 %v34
  %v299 = vunpack.c.l.b16 %v35
  %v300 = vunpack.c.l.b16 %v36
  %v301 = vunpack.c.l.b16 %v37
  %v302 = vunpack.c.l.b16 %v38
  %v303 = vunpack.c.l.b16 %v39
  %v304 = vunpack.c.l.b16 %v40
  %v305 = vunpack.c.l.b16 %v41
  %v306 = vunpack.c.l.b16 %v42
  %v307 = vunpack.c.l.b16 %v43
  %v308 = vunpack.c.l.b16 %v44
  %v309 = vunpack.c.l.b16 %v45
  %v310 = vunpack.c.l.b16 %v46
  %v311 = vunpack.c.l.b16 %v47
  %v312 = vunpack.c.l.b16 %v48
  %v313 = vunpack.c.l.b16 %v49
  %v314 = vunpack.c.l.b16 %v50
  %v315 = vunpack.c.l.b16 %v51
  %v316 = vunpack.c.l.b16 %v52
  %v317 = vunpack.c.l.b16 %v53
  %v318 = vunpack.c.l.b16 %v54
  %v319 = vunpack.c.l.b16 %v55
  %v320 = vunpack.c.l.b16 %v56
  %v321 = vunpack.c.l.b16 %v57
  %v322 = vunpack.c.l.b16 %v58
  %v323 = vunpack.c.l.b16 %v59
  %v324 = vunpack.c.l.b16 %v60
  %v325 = vunpack.c.l.b16 %v61
  %v326 = vunpack.c.l.b16 %v62
  %v327 = vunpack.c.l.b16 %v63
  %v328 = vunpack.c.l.b16 %v64
  %v329 = vunpack.c.l.b16 %v65
  %v330 = vunpack.c.l.b16 %v66
  %v331 = vunpack.c.l.b16 %v67
  %v332 = vunpack.c.l.b16 %v68
  %v333 = vunpack.c.l.b16 %v69
  %v334 = vunpack.c.l.b16 %v70
  %v335 = vunpack.c.l.b16 %v71
  %v336 = vunpack.c.l.b16 %v72
  %v337 = vunpack.c.l.b16 %v73
  %v338 = vunpack.c.l.b16 %v74
  %v339 = vunpack.c.l.b16 %v75
  %v340 = vunpack.c.l.b16 %v76
  %v341 = vunpack.c.l.b16 %v77
  %v342 = vunpack.c.l.b16 %v78
  %v343 = vunpack.c.l.b16 %v79
  %v344 = vunpack.c.l.b16 %v80
  %v345 = vunpack.c.l.b16 %v81
  %v346 = vunpack.c.l.b16 %v82
  %v347 = vunpack.c.l.b16 %v83
  %v348 = vunpack.c.l.b16 %v84
  %v349 = vunpack.c.l.b16 %v85
  %v350 = vunpack.c.l.b16 %v86
  %v351 = vunpack.c.l.b16 %v87
  %v352 = vunpack.c.l.b16 %v88
  %v353 = vunpack.c.l.b16 %v89
  %v354 = vunpack.c.l.b16 %v90
  %v355 = vunpack.c.l.b16 %v91
  %v356 = vunpack.c.l.b16 %v92
  %v357 = vunpack.c.l.b16 %v93
  %v358 = vunpack.c.l.b16 %v94
  %v359 = vunpack.c.l.b16 %v95
  %v360 = vunpack.c.l.b16 %v96
  %v361 = vunpack.c.l.b16 %v97
  %v362 = vunpack.c.l.b16 %v98
  %v363 = vunpack.c.l.b16 %v99
  %v364 = vunpack.c.l.b16 %v100
  %v365 = vunpack.c.l.b16 %v101
  %v366 = vunpack.c.l.b16 %v102
  %v367 = vunpack.c.l.b16 %v103
  %v368 = vunpack.c.l.b16 %v104
  %v369 = vunpack.c.l.b16 %v105
  %v370 = vunpack.c.l.b16 %v106
  %v371 = vunpack.c.l.b16 %v107
  %v372 = vunpack.c.l.b16 %v108
  %v373 = vunpack.c.l.b16 %v109
  %v374 = vunpack.c.l.b16 %v110
  %v375 = vunpack.c.l.b16 %v111
  %v376 = vunpack.c.l.b16 %v112
  %v377 = vunpack.c.l.b16 %v113
  %v378 = vunpack.c.l.b16 %v114
  %v379 = vunpack.c.l.b16 %v115
  %v380 = vunpack.c.l.b16 %v116
  %v381 = vunpack.c.l.b16 %v117
  %v382 = vunpack.c.l.b16 %v118
  %v383 = vunpack.c.l.b16 %v119
  %v384 = vunpack.c.l.b16 %v120
  %v385 = vunpack.c.l.b16 %v121
  %v386 = vunpack.c.l.b16 %v122
  %v387 = vunpack.c.l.b16 %v123
  %v388 = vunpack.c.l.b16 %v124
  %v389 = vunpack.c.l.b16 %v125
  %v390 = vunpack.c.l.b16 %v126
  %v391 = vunpack.c.l.b16 %v127
  %v392 = vunpack.c.l.b16 %v128
  %v393 = vunpack.c.l.b16 %v129
  %v394 = vunpack.c.l.b16 %v130
  %v395 = vunpack.c.l.b16 %v131
  %v396 = vunpack.c.l.b16 %v132
  %v397 = vunpack.c.l.b16 %v133
  %v398 = vunpack.c.l.b16 %v134
  %v399 = vunpack.c.l.b16 %v135
  %v400 = vunpack.c.l.b16 %v136
  %v401 = vunpack.c.l.b16 %v137
  %v402 = vunpack.c.l.b16 %v138
  %v403 = vunpack.c.l.b16 %v139
  %v404 = vunpack.c.l.b16 %v140
  %v405 = vunpack.c.l.b16 %v141
  %v406 = vunpack.c.l.b16 %v142
  %v407 = vunpack.c.l.b16 %v143
  %v408 = vunpack.c.l.b16 %v144
  %v409 = vunpack.c.l.b16 %v145
  %v410 = vunpack.c.l.b16 %v146
  %v411 = vunpack.c.l.b16 %v147
  %v412 = vunpack.c.l.b16 %v148
  %v413 = vunpack.c.l.b16 %v149
  %v414 = vunpack.c.l.b16 %v150
  %v415 = vunpack.c.l.b16 %v151
  %v416 = vunpack.c.l.b16 %v152
  %v417 = vunpack.c.l.b16 %v153
  %v418 = vunpack.c.l.b16 %v154
  %v419 = vunpack.c.l.b16 %v155
  %v420 = vunpack.c.l.b16 %v156
  %v421 = vunpack.c.l.b16 %v157
  %v422 = vpack.c.b16 %v295, %v294
  %v423 = vpack.c.b16 %v297, %v296
  %v424 = vpack.c.b16 %v299, %v298
  %v425 = vpack.c.b16 %v301, %v300
  %v426 = vpack.c.b16 %v303, %v302
  %v427 = vpack.c.b16 %v305, %v304
  %v428 = vpack.c.b16 %v307, %v306
  %v429 = vpack.c.b16 %v309, %v308
  %v430 = vpack.c.b16 %v311, %v310
  %v431 = vpack.c.b16 %v313, %v312
  %v432 = vpack.c.b16 %v315, %v314
  %v433 = vpack.c.b16 %v317, %v316
  %v434 = vpack.c.b16 %v319, %v318
  %v435 = vpack.c.b16 %v321, %v320
  %v436 = vpack.c.b16 %v323, %v322
  %v437 = vpack.c.b16 %v325, %v324
  %v438 = vpack.c.b16 %v327, %v326
  %v439 = vpack.c.b16 %v329, %v328
  %v440 = vpack.c.b16 %v331, %v330
  %v441 = vpack.c.b16 %v333, %v332
  %v442 = vpack.c.b16 %v335, %v334
  %v443 = vpack.c.b16 %v337, %v336
  %v444 = vpack.c.b16 %v339, %v338
  %v445 = vpack.c.b16 %v341, %v340
  %v446 = vpack.c.b16 %v343, %v342
  %v447 = vpack.c.b16 %v345, %v344
  %v448 = vpack.c.b16 %v347, %v346
  %v449 = vpack.c.b16 %v349, %v348
  %v450 = vpack.c.b16 %v351, %v350
  %v451 = vpack.c.b16 %v353, %v352
  %v452 = vpack.c.b16 %v355, %v354
  %v453 = vpack.c.b16 %v357, %v356
  %v454 = vpack.c.b16 %v359, %v358
  %v455 = vpack.c.b16 %v361, %v360
  %v456 = vpack.c.b16 %v363, %v362
  %v457 = vpack.c.b16 %v365, %v364
  %v458 = vpack.c.b16 %v367, %v366
  %v459 = vpack.c.b16 %v369, %v368
  %v460 = vpack.c.b16 %v371, %v370
  %v461 = vpack.c.b16 %v373, %v372
  %v462 = vpack.c.b16 %v375, %v374
  %v463 = vpack.c.b16 %v377, %v376
  %v464 = vpack.c.b16 %v379, %v378
  %v465 = vpack.c.b16 %v381, %v380
  %v466 = vpack.c.b16 %v383, %v382
  %v467 = vpack.c.b16 %v385, %v384
  %v468 = vpack.c.b16 %v387, %v386
  %v469 = vpack.c.b16 %v389, %v388
  %v470 = vpack.c.b16 %v391, %v390
  %v471 = vpack.c.b16 %v393, %v392
  %v472 = vpack.c.b16 %v395, %v394
  %v473 = vpack.c.b16 %v397, %v396
  %v474 = vpack.c.b16 %v399, %v398
  %v475 = vpack.c.b16 %v401, %v400
  %v476 = vpack.c.b16 %v403, %v402
  %v477 = vpack.c.b16 %v405, %v404
  %v478 = vpack.c.b16 %v407, %v406
  %v479 = vpack.c.b16 %v409, %v408
  %v480 = vpack.c.b16 %v411, %v410
  %v481 = vpack.c.b16 %v413, %v412
  %v482 = vpack.c.b16 %v415, %v414
  %v483 = vpack.c.b16 %v417, %v416
  %v484 = vpack.c.b16 %v419, %v418
  %v485 = vpack.c.b16 %v421, %v420
  %vm486 = vcmask 48128
  %v488 = vsel %vm486, %v422, 0
  %v491 = vsel %vm486, %v423, 0
  %v494 = vsel %vm486, %v424, 0
  %v497 = vsel %vm486, %v425, 0
  %v500 = vsel %vm486, %v426, 0
  %v503 = vsel %vm486, %v427, 0
  %v506 = vsel %vm486, %v428, 0
  %v509 = vsel %vm486, %v429, 0
  %v512 = vsel %vm486, %v430, 0
  %v515 = vsel %vm486, %v431, 0
  %v518 = vsel %vm486, %v432, 0
  %v521 = vsel %vm486, %v433, 0
  %v524 = vsel %vm486, %v434, 0
  %v527 = vsel %vm486, %v435, 0
  %v530 = vsel %vm486, %v436, 0
  %v533 = vsel %vm486, %v437, 0
  %v536 = vsel %vm486, %v438, 0
  %v539 = vsel %vm486, %v439, 0
  %v542 = vsel %vm486, %v440, 0
  %v545 = vsel %vm486, %v441, 0
  %v548 = vsel %vm486, %v442, 0
  %v551 = vsel %vm486, %v443, 0
  %v554 = vsel %vm486, %v444, 0
  %v557 = vsel %vm486, %v445, 0
  %v560 = vsel %vm486, %v446, 0
  %v563 = vsel %vm486, %v447, 0
  %v566 = vsel %vm486, %v448, 0
  %v569 = vsel %vm486, %v449, 0
  %v572 = vsel %vm486, %v450, 0
  %v575 = vsel %vm486, %v451, 0
  %v578 = vsel %vm486, %v452, 0
  %v581 = vsel %vm486, %v453, 0
  %v584 = vsel %vm486, %v454, 0
  %v587 = vsel %vm486, %v455, 0
  %v590 = vsel %vm486, %v456, 0
  %v593 = vsel %vm486, %v457, 0
  %v596 = vsel %vm486, %v458, 0
  %v599 = vsel %vm486, %v459, 0
  %v602 = vsel %vm486, %v460, 0
  %v605 = vsel %vm486, %v461, 0
  %v608 = vsel %vm486, %v462, 0
  %v611 = vsel %vm486, %v463, 0
  %v614 = vsel %vm486, %v464, 0
  %v617 = vsel %vm486, %v465, 0
  %v620 = vsel %vm486, %v466, 0
  %v623 = vsel %vm486, %v467, 0
  %v626 = vsel %vm486, %v468, 0
  %v629 = vsel %vm486, %v469, 0
  %v632 = vsel %vm486, %v470, 0
  %v635 = vsel %vm486, %v471, 0
  %v638 = vsel %vm486, %v472, 0
  %v641 = vsel %vm486, %v473, 0
  %v644 = vsel %vm486, %v474, 0
  %v647 = vsel %vm486, %v475, 0
  %v650 = vsel %vm486, %v476, 0
  %v653 = vsel %vm486, %v477, 0
  %v656 = vsel %vm486, %v478, 0
  %v659 = vsel %vm486, %v479, 0
  %v662 = vsel %vm486, %v480, 0
  %v665 = vsel %vm486, %v481, 0
  %v668 = vsel %vm486, %v482, 0
  %v671 = vsel %vm486, %v483, 0
  %v674 = vsel %vm486, %v484, 0
  %v677 = vsel %vm486, %v485, 0
  %vm679 = vcmask 1042432
  %v681 = vsel %vm679, %v158, 0
  %683 = vmatprep.subr.bf16.mxu0 0
  %684 = vmatpush1.bf16.msra.mxu0 0
  %685 = vmatprep.subr.bf16.mxu0 0
  %686 = vmatpush1.bf16.msra.mxu0 0
  %687 = vmatprep.subr.bf16.mxu0 0
  %688 = vmatpush1.bf16.msra.mxu0 0
  %689 = vmatprep.subr.bf16.mxu0 0
  %690 = vmatpush1.bf16.msra.mxu0 0
  %691 = vmatprep.subr.bf16.mxu0 0
  %692 = vmatpush1.bf16.msra.mxu0 0
  %693 = vmatprep.subr.bf16.mxu0 0
  %694 = vmatpush1.bf16.msra.mxu0 0
  %695 = vmatprep.subr.bf16.mxu0 0
  %696 = vmatpush1.bf16.msra.mxu0 0
  %697 = vmatprep.subr.bf16.mxu0 0
  %698 = vmatpush1.bf16.msra.mxu0 %v681
  %699 = vmatprep.subr.bf16.mxu0 0
  %700 = vmatpush2.bf16.msra.mxu0 0
  %701 = vmatprep.subr.bf16.mxu0 0
  %702 = vmatpush2.bf16.msra.mxu0 0
  %703 = vmatprep.subr.bf16.mxu0 0
  %704 = vmatpush2.bf16.msra.mxu0 0
  %705 = vmatprep.subr.bf16.mxu0 0
  %706 = vmatpush2.bf16.msra.mxu0 0
  %707 = vmatprep.subr.bf16.mxu0 0
  %708 = vmatpush2.bf16.msra.mxu0 0
  %709 = vmatprep.subr.bf16.mxu0 0
  %710 = vmatpush2.bf16.msra.mxu0 0
  %711 = vmatprep.subr.bf16.mxu0 0
  %712 = vmatpush2.bf16.msra.mxu0 0
  %713 = vmatprep.subr.bf16.mxu0 0
  %714 = vmatpush2.bf16.msra.mxu0 0
  %715 = vmatprep.mubr.bf16.mxu0 0
  %716 = vmatmul.mubr.bf16.gmra.mxu0 %v488
  %v717 = vpop.f32.mrf.mxu0
  %v718 = vadd.f32 %v164, %v717
  %v719 = vpop.f32.mrf.mxu0
  %v720 = vpop.f32.mrf.mxu0
  %v721 = vadd.f32 %v164, %v720
  %v722 = vpop.f32.mrf.mxu0
  %723 = vmatprep.mubr.bf16.mxu0 0
  %724 = vmatmul.mubr.bf16.gmra.mxu0 %v491
  %v725 = vpop.f32.mrf.mxu0
  %v726 = vadd.f32 %v164, %v725
  %v727 = vpop.f32.mrf.mxu0
  %v728 = vpop.f32.mrf.mxu0
  %v729 = vadd.f32 %v164, %v728
  %v730 = vpop.f32.mrf.mxu0
  %731 = vmatprep.mubr.bf16.mxu0 0
  %732 = vmatmul.mubr.bf16.gmra.mxu0 %v494
  %v733 = vpop.f32.mrf.mxu0
  %v734 = vadd.f32 %v164, %v733
  %v735 = vpop.f32.mrf.mxu0
  %v736 = vpop.f32.mrf.mxu0
  %v737 = vadd.f32 %v164, %v736
  %v738 = vpop.f32.mrf.mxu0
  %739 = vmatprep.mubr.bf16.mxu0 0
  %740 = vmatmul.mubr.bf16.gmra.mxu0 %v497
  %v741 = vpop.f32.mrf.mxu0
  %v742 = vadd.f32 %v164, %v741
  %v743 = vpop.f32.mrf.mxu0
  %v744 = vpop.f32.mrf.mxu0
  %v745 = vadd.f32 %v164, %v744
  %v746 = vpop.f32.mrf.mxu0
  %747 = vmatprep.mubr.bf16.mxu0 0
  %748 = vmatmul.mubr.bf16.gmra.mxu0 %v500
  %v749 = vpop.f32.mrf.mxu0
  %v750 = vadd.f32 %v164, %v749
  %v751 = vpop.f32.mrf.mxu0
  %v752 = vpop.f32.mrf.mxu0
  %v753 = vadd.f32 %v164, %v752
  %v754 = vpop.f32.mrf.mxu0
  %755 = vmatprep.mubr.bf16.mxu0 0
  %756 = vmatmul.mubr.bf16.gmra.mxu0 %v503
  %v757 = vpop.f32.mrf.mxu0
  %v758 = vadd.f32 %v164, %v757
  %v759 = vpop.f32.mrf.mxu0
  %v760 = vpop.f32.mrf.mxu0
  %v761 = vadd.f32 %v164, %v760
  %v762 = vpop.f32.mrf.mxu0
  %763 = vmatprep.mubr.bf16.mxu0 0
  %764 = vmatmul.mubr.bf16.gmra.mxu0 %v506
  %v765 = vpop.f32.mrf.mxu0
  %v766 = vadd.f32 %v164, %v765
  %v767 = vpop.f32.mrf.mxu0
  %v768 = vpop.f32.mrf.mxu0
  %v769 = vadd.f32 %v164, %v768
  %v770 = vpop.f32.mrf.mxu0
  %771 = vmatprep.mubr.bf16.mxu0 0
  %772 = vmatmul.mubr.bf16.gmra.mxu0 %v509
  %v773 = vpop.f32.mrf.mxu0
  %v774 = vadd.f32 %v164, %v773
  %v775 = vpop.f32.mrf.mxu0
  %v776 = vpop.f32.mrf.mxu0
  %v777 = vadd.f32 %v164, %v776
  %v778 = vpop.f32.mrf.mxu0
  %779 = vmatprep.mubr.bf16.mxu0 0
  %780 = vmatmul.mubr.bf16.gmra.mxu0 %v512
  %v781 = vpop.f32.mrf.mxu0
  %v782 = vadd.f32 %v164, %v781
  %v783 = vpop.f32.mrf.mxu0
  %v784 = vpop.f32.mrf.mxu0
  %v785 = vadd.f32 %v164, %v784
  %v786 = vpop.f32.mrf.mxu0
  %787 = vmatprep.mubr.bf16.mxu0 0
  %788 = vmatmul.mubr.bf16.gmra.mxu0 %v515
  %v789 = vpop.f32.mrf.mxu0
  %v790 = vadd.f32 %v164, %v789
  %v791 = vpop.f32.mrf.mxu0
  %v792 = vpop.f32.mrf.mxu0
  %v793 = vadd.f32 %v164, %v792
  %v794 = vpop.f32.mrf.mxu0
  %795 = vmatprep.mubr.bf16.mxu0 0
  %796 = vmatmul.mubr.bf16.gmra.mxu0 %v518
  %v797 = vpop.f32.mrf.mxu0
  %v798 = vadd.f32 %v164, %v797
  %v799 = vpop.f32.mrf.mxu0
  %v800 = vpop.f32.mrf.mxu0
  %v801 = vadd.f32 %v164, %v800
  %v802 = vpop.f32.mrf.mxu0
  %803 = vmatprep.mubr.bf16.mxu0 0
  %804 = vmatmul.mubr.bf16.gmra.mxu0 %v521
  %v805 = vpop.f32.mrf.mxu0
  %v806 = vadd.f32 %v164, %v805
  %v807 = vpop.f32.mrf.mxu0
  %v808 = vpop.f32.mrf.mxu0
  %v809 = vadd.f32 %v164, %v808
  %v810 = vpop.f32.mrf.mxu0
  %811 = vmatprep.mubr.bf16.mxu0 0
  %812 = vmatmul.mubr.bf16.gmra.mxu0 %v524
  %v813 = vpop.f32.mrf.mxu0
  %v814 = vadd.f32 %v164, %v813
  %v815 = vpop.f32.mrf.mxu0
  %v816 = vpop.f32.mrf.mxu0
  %v817 = vadd.f32 %v164, %v816
  %v818 = vpop.f32.mrf.mxu0
  %819 = vmatprep.mubr.bf16.mxu0 0
  %820 = vmatmul.mubr.bf16.gmra.mxu0 %v527
  %v821 = vpop.f32.mrf.mxu0
  %v822 = vadd.f32 %v164, %v821
  %v823 = vpop.f32.mrf.mxu0
  %v824 = vpop.f32.mrf.mxu0
  %v825 = vadd.f32 %v164, %v824
  %v826 = vpop.f32.mrf.mxu0
  %827 = vmatprep.mubr.bf16.mxu0 0
  %828 = vmatmul.mubr.bf16.gmra.mxu0 %v530
  %v829 = vpop.f32.mrf.mxu0
  %v830 = vadd.f32 %v164, %v829
  %v831 = vpop.f32.mrf.mxu0
  %v832 = vpop.f32.mrf.mxu0
  %v833 = vadd.f32 %v164, %v832
  %v834 = vpop.f32.mrf.mxu0
  %835 = vmatprep.mubr.bf16.mxu0 0
  %836 = vmatmul.mubr.bf16.gmra.mxu0 %v533
  %v837 = vpop.f32.mrf.mxu0
  %v838 = vadd.f32 %v164, %v837
  %v839 = vpop.f32.mrf.mxu0
  %v840 = vpop.f32.mrf.mxu0
  %v841 = vadd.f32 %v164, %v840
  %v842 = vpop.f32.mrf.mxu0
  %843 = vmatprep.mubr.bf16.mxu0 0
  %844 = vmatmul.mubr.bf16.gmra.mxu0 %v536
  %v845 = vpop.f32.mrf.mxu0
  %v846 = vadd.f32 %v164, %v845
  %v847 = vpop.f32.mrf.mxu0
  %v848 = vpop.f32.mrf.mxu0
  %v849 = vadd.f32 %v164, %v848
  %v850 = vpop.f32.mrf.mxu0
  %851 = vmatprep.mubr.bf16.mxu0 0
  %852 = vmatmul.mubr.bf16.gmra.mxu0 %v539
  %v853 = vpop.f32.mrf.mxu0
  %v854 = vadd.f32 %v164, %v853
  %v855 = vpop.f32.mrf.mxu0
  %v856 = vpop.f32.mrf.mxu0
  %v857 = vadd.f32 %v164, %v856
  %v858 = vpop.f32.mrf.mxu0
  %859 = vmatprep.mubr.bf16.mxu0 0
  %860 = vmatmul.mubr.bf16.gmra.mxu0 %v542
  %v861 = vpop.f32.mrf.mxu0
  %v862 = vadd.f32 %v164, %v861
  %v863 = vpop.f32.mrf.mxu0
  %v864 = vpop.f32.mrf.mxu0
  %v865 = vadd.f32 %v164, %v864
  %v866 = vpop.f32.mrf.mxu0
  %867 = vmatprep.mubr.bf16.mxu0 0
  %868 = vmatmul.mubr.bf16.gmra.mxu0 %v545
  %v869 = vpop.f32.mrf.mxu0
  %v870 = vadd.f32 %v164, %v869
  %v871 = vpop.f32.mrf.mxu0
  %v872 = vpop.f32.mrf.mxu0
  %v873 = vadd.f32 %v164, %v872
  %v874 = vpop.f32.mrf.mxu0
  %875 = vmatprep.mubr.bf16.mxu0 0
  %876 = vmatmul.mubr.bf16.gmra.mxu0 %v548
  %v877 = vpop.f32.mrf.mxu0
  %v878 = vadd.f32 %v164, %v877
  %v879 = vpop.f32.mrf.mxu0
  %v880 = vpop.f32.mrf.mxu0
  %v881 = vadd.f32 %v164, %v880
  %v882 = vpop.f32.mrf.mxu0
  %883 = vmatprep.mubr.bf16.mxu0 0
  %884 = vmatmul.mubr.bf16.gmra.mxu0 %v551
  %v885 = vpop.f32.mrf.mxu0
  %v886 = vadd.f32 %v164, %v885
  %v887 = vpop.f32.mrf.mxu0
  %v888 = vpop.f32.mrf.mxu0
  %v889 = vadd.f32 %v164, %v888
  %v890 = vpop.f32.mrf.mxu0
  %891 = vmatprep.mubr.bf16.mxu0 0
  %892 = vmatmul.mubr.bf16.gmra.mxu0 %v554
  %v893 = vpop.f32.mrf.mxu0
  %v894 = vadd.f32 %v164, %v893
  %v895 = vpop.f32.mrf.mxu0
  %v896 = vpop.f32.mrf.mxu0
  %v897 = vadd.f32 %v164, %v896
  %v898 = vpop.f32.mrf.mxu0
  %899 = vmatprep.mubr.bf16.mxu0 0
  %900 = vmatmul.mubr.bf16.gmra.mxu0 %v557
  %v901 = vpop.f32.mrf.mxu0
  %v902 = vadd.f32 %v164, %v901
  %v903 = vpop.f32.mrf.mxu0
  %v904 = vpop.f32.mrf.mxu0
  %v905 = vadd.f32 %v164, %v904
  %v906 = vpop.f32.mrf.mxu0
  %907 = vmatprep.mubr.bf16.mxu0 0
  %908 = vmatmul.mubr.bf16.gmra.mxu0 %v560
  %v909 = vpop.f32.mrf.mxu0
  %v910 = vadd.f32 %v164, %v909
  %v911 = vpop.f32.mrf.mxu0
  %v912 = vpop.f32.mrf.mxu0
  %v913 = vadd.f32 %v164, %v912
  %v914 = vpop.f32.mrf.mxu0
  %915 = vmatprep.mubr.bf16.mxu0 0
  %916 = vmatmul.mubr.bf16.gmra.mxu0 %v563
  %v917 = vpop.f32.mrf.mxu0
  %v918 = vadd.f32 %v164, %v917
  %v919 = vpop.f32.mrf.mxu0
  %v920 = vpop.f32.mrf.mxu0
  %v921 = vadd.f32 %v164, %v920
  %v922 = vpop.f32.mrf.mxu0
  %923 = vmatprep.mubr.bf16.mxu0 0
  %924 = vmatmul.mubr.bf16.gmra.mxu0 %v566
  %v925 = vpop.f32.mrf.mxu0
  %v926 = vadd.f32 %v164, %v925
  %v927 = vpop.f32.mrf.mxu0
  %v928 = vpop.f32.mrf.mxu0
  %v929 = vadd.f32 %v164, %v928
  %v930 = vpop.f32.mrf.mxu0
  %931 = vmatprep.mubr.bf16.mxu0 0
  %932 = vmatmul.mubr.bf16.gmra.mxu0 %v569
  %v933 = vpop.f32.mrf.mxu0
  %v934 = vadd.f32 %v164, %v933
  %v935 = vpop.f32.mrf.mxu0
  %v936 = vpop.f32.mrf.mxu0
  %v937 = vadd.f32 %v164, %v936
  %v938 = vpop.f32.mrf.mxu0
  %939 = vmatprep.mubr.bf16.mxu0 0
  %940 = vmatmul.mubr.bf16.gmra.mxu0 %v572
  %v941 = vpop.f32.mrf.mxu0
  %v942 = vadd.f32 %v164, %v941
  %v943 = vpop.f32.mrf.mxu0
  %v944 = vpop.f32.mrf.mxu0
  %v945 = vadd.f32 %v164, %v944
  %v946 = vpop.f32.mrf.mxu0
  %947 = vmatprep.mubr.bf16.mxu0 0
  %948 = vmatmul.mubr.bf16.gmra.mxu0 %v575
  %v949 = vpop.f32.mrf.mxu0
  %v950 = vadd.f32 %v164, %v949
  %v951 = vpop.f32.mrf.mxu0
  %v952 = vpop.f32.mrf.mxu0
  %v953 = vadd.f32 %v164, %v952
  %v954 = vpop.f32.mrf.mxu0
  %955 = vmatprep.mubr.bf16.mxu0 0
  %956 = vmatmul.mubr.bf16.gmra.mxu0 %v578
  %v957 = vpop.f32.mrf.mxu0
  %v958 = vadd.f32 %v164, %v957
  %v959 = vpop.f32.mrf.mxu0
  %v960 = vpop.f32.mrf.mxu0
  %v961 = vadd.f32 %v164, %v960
  %v962 = vpop.f32.mrf.mxu0
  %963 = vmatprep.mubr.bf16.mxu0 0
  %964 = vmatmul.mubr.bf16.gmra.mxu0 %v581
  %v965 = vpop.f32.mrf.mxu0
  %v966 = vadd.f32 %v164, %v965
  %v967 = vpop.f32.mrf.mxu0
  %v968 = vpop.f32.mrf.mxu0
  %v969 = vadd.f32 %v164, %v968
  %v970 = vpop.f32.mrf.mxu0
  %971 = vmatprep.mubr.bf16.mxu0 0
  %972 = vmatmul.mubr.bf16.gmra.mxu0 %v584
  %v973 = vpop.f32.mrf.mxu0
  %v974 = vadd.f32 %v164, %v973
  %v975 = vpop.f32.mrf.mxu0
  %v976 = vpop.f32.mrf.mxu0
  %v977 = vadd.f32 %v164, %v976
  %v978 = vpop.f32.mrf.mxu0
  %979 = vmatprep.mubr.bf16.mxu0 0
  %980 = vmatmul.mubr.bf16.gmra.mxu0 %v587
  %v981 = vpop.f32.mrf.mxu0
  %v982 = vadd.f32 %v164, %v981
  %v983 = vpop.f32.mrf.mxu0
  %v984 = vpop.f32.mrf.mxu0
  %v985 = vadd.f32 %v164, %v984
  %v986 = vpop.f32.mrf.mxu0
  %987 = vmatprep.mubr.bf16.mxu0 0
  %988 = vmatmul.mubr.bf16.gmra.mxu0 %v590
  %v989 = vpop.f32.mrf.mxu0
  %v990 = vadd.f32 %v164, %v989
  %v991 = vpop.f32.mrf.mxu0
  %v992 = vpop.f32.mrf.mxu0
  %v993 = vadd.f32 %v164, %v992
  %v994 = vpop.f32.mrf.mxu0
  %995 = vmatprep.mubr.bf16.mxu0 0
  %996 = vmatmul.mubr.bf16.gmra.mxu0 %v593
  %v997 = vpop.f32.mrf.mxu0
  %v998 = vadd.f32 %v164, %v997
  %v999 = vpop.f32.mrf.mxu0
  %v1000 = vpop.f32.mrf.mxu0
  %v1001 = vadd.f32 %v164, %v1000
  %v1002 = vpop.f32.mrf.mxu0
  %1003 = vmatprep.mubr.bf16.mxu0 0
  %1004 = vmatmul.mubr.bf16.gmra.mxu0 %v596
  %v1005 = vpop.f32.mrf.mxu0
  %v1006 = vadd.f32 %v164, %v1005
  %v1007 = vpop.f32.mrf.mxu0
  %v1008 = vpop.f32.mrf.mxu0
  %v1009 = vadd.f32 %v164, %v1008
  %v1010 = vpop.f32.mrf.mxu0
  %1011 = vmatprep.mubr.bf16.mxu0 0
  %1012 = vmatmul.mubr.bf16.gmra.mxu0 %v599
  %v1013 = vpop.f32.mrf.mxu0
  %v1014 = vadd.f32 %v164, %v1013
  %v1015 = vpop.f32.mrf.mxu0
  %v1016 = vpop.f32.mrf.mxu0
  %v1017 = vadd.f32 %v164, %v1016
  %v1018 = vpop.f32.mrf.mxu0
  %1019 = vmatprep.mubr.bf16.mxu0 0
  %1020 = vmatmul.mubr.bf16.gmra.mxu0 %v602
  %v1021 = vpop.f32.mrf.mxu0
  %v1022 = vadd.f32 %v164, %v1021
  %v1023 = vpop.f32.mrf.mxu0
  %v1024 = vpop.f32.mrf.mxu0
  %v1025 = vadd.f32 %v164, %v1024
  %v1026 = vpop.f32.mrf.mxu0
  %1027 = vmatprep.mubr.bf16.mxu0 0
  %1028 = vmatmul.mubr.bf16.gmra.mxu0 %v605
  %v1029 = vpop.f32.mrf.mxu0
  %v1030 = vadd.f32 %v164, %v1029
  %v1031 = vpop.f32.mrf.mxu0
  %v1032 = vpop.f32.mrf.mxu0
  %v1033 = vadd.f32 %v164, %v1032
  %v1034 = vpop.f32.mrf.mxu0
  %1035 = vmatprep.mubr.bf16.mxu0 0
  %1036 = vmatmul.mubr.bf16.gmra.mxu0 %v608
  %v1037 = vpop.f32.mrf.mxu0
  %v1038 = vadd.f32 %v164, %v1037
  %v1039 = vpop.f32.mrf.mxu0
  %v1040 = vpop.f32.mrf.mxu0
  %v1041 = vadd.f32 %v164, %v1040
  %v1042 = vpop.f32.mrf.mxu0
  %1043 = vmatprep.mubr.bf16.mxu0 0
  %1044 = vmatmul.mubr.bf16.gmra.mxu0 %v611
  %v1045 = vpop.f32.mrf.mxu0
  %v1046 = vadd.f32 %v164, %v1045
  %v1047 = vpop.f32.mrf.mxu0
  %v1048 = vpop.f32.mrf.mxu0
  %v1049 = vadd.f32 %v164, %v1048
  %v1050 = vpop.f32.mrf.mxu0
  %1051 = vmatprep.mubr.bf16.mxu0 0
  %1052 = vmatmul.mubr.bf16.gmra.mxu0 %v614
  %v1053 = vpop.f32.mrf.mxu0
  %v1054 = vadd.f32 %v164, %v1053
  %v1055 = vpop.f32.mrf.mxu0
  %v1056 = vpop.f32.mrf.mxu0
  %v1057 = vadd.f32 %v164, %v1056
  %v1058 = vpop.f32.mrf.mxu0
  %1059 = vmatprep.mubr.bf16.mxu0 0
  %1060 = vmatmul.mubr.bf16.gmra.mxu0 %v617
  %v1061 = vpop.f32.mrf.mxu0
  %v1062 = vadd.f32 %v164, %v1061
  %v1063 = vpop.f32.mrf.mxu0
  %v1064 = vpop.f32.mrf.mxu0
  %v1065 = vadd.f32 %v164, %v1064
  %v1066 = vpop.f32.mrf.mxu0
  %1067 = vmatprep.mubr.bf16.mxu0 0
  %1068 = vmatmul.mubr.bf16.gmra.mxu0 %v620
  %v1069 = vpop.f32.mrf.mxu0
  %v1070 = vadd.f32 %v164, %v1069
  %v1071 = vpop.f32.mrf.mxu0
  %v1072 = vpop.f32.mrf.mxu0
  %v1073 = vadd.f32 %v164, %v1072
  %v1074 = vpop.f32.mrf.mxu0
  %1075 = vmatprep.mubr.bf16.mxu0 0
  %1076 = vmatmul.mubr.bf16.gmra.mxu0 %v623
  %v1077 = vpop.f32.mrf.mxu0
  %v1078 = vadd.f32 %v164, %v1077
  %v1079 = vpop.f32.mrf.mxu0
  %v1080 = vpop.f32.mrf.mxu0
  %v1081 = vadd.f32 %v164, %v1080
  %v1082 = vpop.f32.mrf.mxu0
  %1083 = vmatprep.mubr.bf16.mxu0 0
  %1084 = vmatmul.mubr.bf16.gmra.mxu0 %v626
  %v1085 = vpop.f32.mrf.mxu0
  %v1086 = vadd.f32 %v164, %v1085
  %v1087 = vpop.f32.mrf.mxu0
  %v1088 = vpop.f32.mrf.mxu0
  %v1089 = vadd.f32 %v164, %v1088
  %v1090 = vpop.f32.mrf.mxu0
  %1091 = vmatprep.mubr.bf16.mxu0 0
  %1092 = vmatmul.mubr.bf16.gmra.mxu0 %v629
  %v1093 = vpop.f32.mrf.mxu0
  %v1094 = vadd.f32 %v164, %v1093
  %v1095 = vpop.f32.mrf.mxu0
  %v1096 = vpop.f32.mrf.mxu0
  %v1097 = vadd.f32 %v164, %v1096
  %v1098 = vpop.f32.mrf.mxu0
  %1099 = vmatprep.mubr.bf16.mxu0 0
  %1100 = vmatmul.mubr.bf16.gmra.mxu0 %v632
  %v1101 = vpop.f32.mrf.mxu0
  %v1102 = vadd.f32 %v164, %v1101
  %v1103 = vpop.f32.mrf.mxu0
  %v1104 = vpop.f32.mrf.mxu0
  %v1105 = vadd.f32 %v164, %v1104
  %v1106 = vpop.f32.mrf.mxu0
  %1107 = vmatprep.mubr.bf16.mxu0 0
  %1108 = vmatmul.mubr.bf16.gmra.mxu0 %v635
  %v1109 = vpop.f32.mrf.mxu0
  %v1110 = vadd.f32 %v164, %v1109
  %v1111 = vpop.f32.mrf.mxu0
  %v1112 = vpop.f32.mrf.mxu0
  %v1113 = vadd.f32 %v164, %v1112
  %v1114 = vpop.f32.mrf.mxu0
  %1115 = vmatprep.mubr.bf16.mxu0 0
  %1116 = vmatmul.mubr.bf16.gmra.mxu0 %v638
  %v1117 = vpop.f32.mrf.mxu0
  %v1118 = vadd.f32 %v164, %v1117
  %v1119 = vpop.f32.mrf.mxu0
  %v1120 = vpop.f32.mrf.mxu0
  %v1121 = vadd.f32 %v164, %v1120
  %v1122 = vpop.f32.mrf.mxu0
  %1123 = vmatprep.mubr.bf16.mxu0 0
  %1124 = vmatmul.mubr.bf16.gmra.mxu0 %v641
  %v1125 = vpop.f32.mrf.mxu0
  %v1126 = vadd.f32 %v164, %v1125
  %v1127 = vpop.f32.mrf.mxu0
  %v1128 = vpop.f32.mrf.mxu0
  %v1129 = vadd.f32 %v164, %v1128
  %v1130 = vpop.f32.mrf.mxu0
  %1131 = vmatprep.mubr.bf16.mxu0 0
  %1132 = vmatmul.mubr.bf16.gmra.mxu0 %v644
  %v1133 = vpop.f32.mrf.mxu0
  %v1134 = vadd.f32 %v164, %v1133
  %v1135 = vpop.f32.mrf.mxu0
  %v1136 = vpop.f32.mrf.mxu0
  %v1137 = vadd.f32 %v164, %v1136
  %v1138 = vpop.f32.mrf.mxu0
  %1139 = vmatprep.mubr.bf16.mxu0 0
  %1140 = vmatmul.mubr.bf16.gmra.mxu0 %v647
  %v1141 = vpop.f32.mrf.mxu0
  %v1142 = vadd.f32 %v164, %v1141
  %v1143 = vpop.f32.mrf.mxu0
  %v1144 = vpop.f32.mrf.mxu0
  %v1145 = vadd.f32 %v164, %v1144
  %v1146 = vpop.f32.mrf.mxu0
  %1147 = vmatprep.mubr.bf16.mxu0 0
  %1148 = vmatmul.mubr.bf16.gmra.mxu0 %v650
  %v1149 = vpop.f32.mrf.mxu0
  %v1150 = vadd.f32 %v164, %v1149
  %v1151 = vpop.f32.mrf.mxu0
  %v1152 = vpop.f32.mrf.mxu0
  %v1153 = vadd.f32 %v164, %v1152
  %v1154 = vpop.f32.mrf.mxu0
  %1155 = vmatprep.mubr.bf16.mxu0 0
  %1156 = vmatmul.mubr.bf16.gmra.mxu0 %v653
  %v1157 = vpop.f32.mrf.mxu0
  %v1158 = vadd.f32 %v164, %v1157
  %v1159 = vpop.f32.mrf.mxu0
  %v1160 = vpop.f32.mrf.mxu0
  %v1161 = vadd.f32 %v164, %v1160
  %v1162 = vpop.f32.mrf.mxu0
  %1163 = vmatprep.mubr.bf16.mxu0 0
  %1164 = vmatmul.mubr.bf16.gmra.mxu0 %v656
  %v1165 = vpop.f32.mrf.mxu0
  %v1166 = vadd.f32 %v164, %v1165
  %v1167 = vpop.f32.mrf.mxu0
  %v1168 = vpop.f32.mrf.mxu0
  %v1169 = vadd.f32 %v164, %v1168
  %v1170 = vpop.f32.mrf.mxu0
  %1171 = vmatprep.mubr.bf16.mxu0 0
  %1172 = vmatmul.mubr.bf16.gmra.mxu0 %v659
  %v1173 = vpop.f32.mrf.mxu0
  %v1174 = vadd.f32 %v164, %v1173
  %v1175 = vpop.f32.mrf.mxu0
  %v1176 = vpop.f32.mrf.mxu0
  %v1177 = vadd.f32 %v164, %v1176
  %v1178 = vpop.f32.mrf.mxu0
  %1179 = vmatprep.mubr.bf16.mxu0 0
  %1180 = vmatmul.mubr.bf16.gmra.mxu0 %v662
  %v1181 = vpop.f32.mrf.mxu0
  %v1182 = vadd.f32 %v164, %v1181
  %v1183 = vpop.f32.mrf.mxu0
  %v1184 = vpop.f32.mrf.mxu0
  %v1185 = vadd.f32 %v164, %v1184
  %v1186 = vpop.f32.mrf.mxu0
  %1187 = vmatprep.mubr.bf16.mxu0 0
  %1188 = vmatmul.mubr.bf16.gmra.mxu0 %v665
  %v1189 = vpop.f32.mrf.mxu0
  %v1190 = vadd.f32 %v164, %v1189
  %v1191 = vpop.f32.mrf.mxu0
  %v1192 = vpop.f32.mrf.mxu0
  %v1193 = vadd.f32 %v164, %v1192
  %v1194 = vpop.f32.mrf.mxu0
  %1195 = vmatprep.mubr.bf16.mxu0 0
  %1196 = vmatmul.mubr.bf16.gmra.mxu0 %v668
  %v1197 = vpop.f32.mrf.mxu0
  %v1198 = vadd.f32 %v164, %v1197
  %v1199 = vpop.f32.mrf.mxu0
  %v1200 = vpop.f32.mrf.mxu0
  %v1201 = vadd.f32 %v164, %v1200
  %v1202 = vpop.f32.mrf.mxu0
  %1203 = vmatprep.mubr.bf16.mxu0 0
  %1204 = vmatmul.mubr.bf16.gmra.mxu0 %v671
  %v1205 = vpop.f32.mrf.mxu0
  %v1206 = vadd.f32 %v164, %v1205
  %v1207 = vpop.f32.mrf.mxu0
  %v1208 = vpop.f32.mrf.mxu0
  %v1209 = vadd.f32 %v164, %v1208
  %v1210 = vpop.f32.mrf.mxu0
  %1211 = vmatprep.mubr.bf16.mxu0 0
  %1212 = vmatmul.mubr.bf16.gmra.mxu0 %v674
  %v1213 = vpop.f32.mrf.mxu0
  %v1214 = vadd.f32 %v164, %v1213
  %v1215 = vpop.f32.mrf.mxu0
  %v1216 = vpop.f32.mrf.mxu0
  %v1217 = vadd.f32 %v164, %v1216
  %v1218 = vpop.f32.mrf.mxu0
  %1219 = vmatprep.mubr.bf16.mxu0 0
  %1220 = vmatmul.mubr.bf16.gmra.mxu0 %v677
  %v1221 = vpop.f32.mrf.mxu0
  %v1222 = vadd.f32 %v164, %v1221
  %v1223 = vpop.f32.mrf.mxu0
  %v1224 = vpop.f32.mrf.mxu0
  %v1225 = vadd.f32 %v164, %v1224
  %v1226 = vpop.f32.mrf.mxu0
  %1227 = vdwg.mxu0
  %v1228 = vmax.f32 %v718, 0.0
  %v1229 = vmax.f32 %v721, 0.0
  %v1230 = vmax.f32 %v726, 0.0
  %v1231 = vmax.f32 %v729, 0.0
  %v1232 = vmax.f32 %v734, 0.0
  %v1233 = vmax.f32 %v737, 0.0
  %v1234 = vmax.f32 %v742, 0.0
  %v1235 = vmax.f32 %v745, 0.0
  %v1236 = vmax.f32 %v750, 0.0
  %v1237 = vmax.f32 %v753, 0.0
  %v1238 = vmax.f32 %v758, 0.0
  %v1239 = vmax.f32 %v761, 0.0
  %v1240 = vmax.f32 %v766, 0.0
  %v1241 = vmax.f32 %v769, 0.0
  %v1242 = vmax.f32 %v774, 0.0
  %v1243 = vmax.f32 %v777, 0.0
  %v1244 = vmax.f32 %v782, 0.0
  %v1245 = vmax.f32 %v785, 0.0
  %v1246 = vmax.f32 %v790, 0.0
  %v1247 = vmax.f32 %v793, 0.0
  %v1248 = vmax.f32 %v798, 0.0
  %v1249 = vmax.f32 %v801, 0.0
  %v1250 = vmax.f32 %v806, 0.0
  %v1251 = vmax.f32 %v809, 0.0
  %v1252 = vmax.f32 %v814, 0.0
  %v1253 = vmax.f32 %v817, 0.0
  %v1254 = vmax.f32 %v822, 0.0
  %v1255 = vmax.f32 %v825, 0.0
  %v1256 = vmax.f32 %v830, 0.0
  %v1257 = vmax.f32 %v833, 0.0
  %v1258 = vmax.f32 %v838, 0.0
  %v1259 = vmax.f32 %v841, 0.0
  %v1260 = vmax.f32 %v846, 0.0
  %v1261 = vmax.f32 %v849, 0.0
  %v1262 = vmax.f32 %v854, 0.0
  %v1263 = vmax.f32 %v857, 0.0
  %v1264 = vmax.f32 %v862, 0.0
  %v1265 = vmax.f32 %v865, 0.0
  %v1266 = vmax.f32 %v870, 0.0
  %v1267 = vmax.f32 %v873, 0.0
  %v1268 = vmax.f32 %v878, 0.0
  %v1269 = vmax.f32 %v881, 0.0
  %v1270 = vmax.f32 %v886, 0.0
  %v1271 = vmax.f32 %v889, 0.0
  %v1272 = vmax.f32 %v894, 0.0
  %v1273 = vmax.f32 %v897, 0.0
  %v1274 = vmax.f32 %v902, 0.0
  %v1275 = vmax.f32 %v905, 0.0
  %v1276 = vmax.f32 %v910, 0.0
  %v1277 = vmax.f32 %v913, 0.0
  %v1278 = vmax.f32 %v918, 0.0
  %v1279 = vmax.f32 %v921, 0.0
  %v1280 = vmax.f32 %v926, 0.0
  %v1281 = vmax.f32 %v929, 0.0
  %v1282 = vmax.f32 %v934, 0.0
  %v1283 = vmax.f32 %v937, 0.0
  %v1284 = vmax.f32 %v942, 0.0
  %v1285 = vmax.f32 %v945, 0.0
  %v1286 = vmax.f32 %v950, 0.0
  %v1287 = vmax.f32 %v953, 0.0
  %v1288 = vmax.f32 %v958, 0.0
  %v1289 = vmax.f32 %v961, 0.0
  %v1290 = vmax.f32 %v966, 0.0
  %v1291 = vmax.f32 %v969, 0.0
  %v1292 = vmax.f32 %v974, 0.0
  %v1293 = vmax.f32 %v977, 0.0
  %v1294 = vmax.f32 %v982, 0.0
  %v1295 = vmax.f32 %v985, 0.0
  %v1296 = vmax.f32 %v990, 0.0
  %v1297 = vmax.f32 %v993, 0.0
  %v1298 = vmax.f32 %v998, 0.0
  %v1299 = vmax.f32 %v1001, 0.0
  %v1300 = vmax.f32 %v1006, 0.0
  %v1301 = vmax.f32 %v1009, 0.0
  %v1302 = vmax.f32 %v1014, 0.0
  %v1303 = vmax.f32 %v1017, 0.0
  %v1304 = vmax.f32 %v1022, 0.0
  %v1305 = vmax.f32 %v1025, 0.0
  %v1306 = vmax.f32 %v1030, 0.0
  %v1307 = vmax.f32 %v1033, 0.0
  %v1308 = vmax.f32 %v1038, 0.0
  %v1309 = vmax.f32 %v1041, 0.0
  %v1310 = vmax.f32 %v1046, 0.0
  %v1311 = vmax.f32 %v1049, 0.0
  %v1312 = vmax.f32 %v1054, 0.0
  %v1313 = vmax.f32 %v1057, 0.0
  %v1314 = vmax.f32 %v1062, 0.0
  %v1315 = vmax.f32 %v1065, 0.0
  %v1316 = vmax.f32 %v1070, 0.0
  %v1317 = vmax.f32 %v1073, 0.0
  %v1318 = vmax.f32 %v1078, 0.0
  %v1319 = vmax.f32 %v1081, 0.0
  %v1320 = vmax.f32 %v1086, 0.0
  %v1321 = vmax.f32 %v1089, 0.0
  %v1322 = vmax.f32 %v1094, 0.0
  %v1323 = vmax.f32 %v1097, 0.0
  %v1324 = vmax.f32 %v1102, 0.0
  %v1325 = vmax.f32 %v1105, 0.0
  %v1326 = vmax.f32 %v1110, 0.0
  %v1327 = vmax.f32 %v1113, 0.0
  %v1328 = vmax.f32 %v1118, 0.0
  %v1329 = vmax.f32 %v1121, 0.0
  %v1330 = vmax.f32 %v1126, 0.0
  %v1331 = vmax.f32 %v1129, 0.0
  %v1332 = vmax.f32 %v1134, 0.0
  %v1333 = vmax.f32 %v1137, 0.0
  %v1334 = vmax.f32 %v1142, 0.0
  %v1335 = vmax.f32 %v1145, 0.0
  %v1336 = vmax.f32 %v1150, 0.0
  %v1337 = vmax.f32 %v1153, 0.0
  %v1338 = vmax.f32 %v1158, 0.0
  %v1339 = vmax.f32 %v1161, 0.0
  %v1340 = vmax.f32 %v1166, 0.0
  %v1341 = vmax.f32 %v1169, 0.0
  %v1342 = vmax.f32 %v1174, 0.0
  %v1343 = vmax.f32 %v1177, 0.0
  %v1344 = vmax.f32 %v1182, 0.0
  %v1345 = vmax.f32 %v1185, 0.0
  %v1346 = vmax.f32 %v1190, 0.0
  %v1347 = vmax.f32 %v1193, 0.0
  %v1348 = vmax.f32 %v1198, 0.0
  %v1349 = vmax.f32 %v1201, 0.0
  %v1350 = vmax.f32 %v1206, 0.0
  %v1351 = vmax.f32 %v1209, 0.0
  %v1352 = vmax.f32 %v1214, 0.0
  %v1353 = vmax.f32 %v1217, 0.0
  %v1354 = vmax.f32 %v1222, 0.0
  %v1355 = vmax.f32 %v1225, 0.0
  %v1356 = vpack.c.bf16 %v1229, %v1228
  %v1357 = vpack.c.bf16 %v1231, %v1230
  %v1358 = vpack.c.bf16 %v1233, %v1232
  %v1359 = vpack.c.bf16 %v1235, %v1234
  %v1360 = vpack.c.bf16 %v1237, %v1236
  %v1361 = vpack.c.bf16 %v1239, %v1238
  %v1362 = vpack.c.bf16 %v1241, %v1240
  %v1363 = vpack.c.bf16 %v1243, %v1242
  %v1364 = vpack.c.bf16 %v1245, %v1244
  %v1365 = vpack.c.bf16 %v1247, %v1246
  %v1366 = vpack.c.bf16 %v1249, %v1248
  %v1367 = vpack.c.bf16 %v1251, %v1250
  %v1368 = vpack.c.bf16 %v1253, %v1252
  %v1369 = vpack.c.bf16 %v1255, %v1254
  %v1370 = vpack.c.bf16 %v1257, %v1256
  %v1371 = vpack.c.bf16 %v1259, %v1258
  %v1372 = vpack.c.bf16 %v1261, %v1260
  %v1373 = vpack.c.bf16 %v1263, %v1262
  %v1374 = vpack.c.bf16 %v1265, %v1264
  %v1375 = vpack.c.bf16 %v1267, %v1266
  %v1376 = vpack.c.bf16 %v1269, %v1268
  %v1377 = vpack.c.bf16 %v1271, %v1270
  %v1378 = vpack.c.bf16 %v1273, %v1272
  %v1379 = vpack.c.bf16 %v1275, %v1274
  %v1380 = vpack.c.bf16 %v1277, %v1276
  %v1381 = vpack.c.bf16 %v1279, %v1278
  %v1382 = vpack.c.bf16 %v1281, %v1280
  %v1383 = vpack.c.bf16 %v1283, %v1282
  %v1384 = vpack.c.bf16 %v1285, %v1284
  %v1385 = vpack.c.bf16 %v1287, %v1286
  %v1386 = vpack.c.bf16 %v1289, %v1288
  %v1387 = vpack.c.bf16 %v1291, %v1290
  %v1388 = vpack.c.bf16 %v1293, %v1292
  %v1389 = vpack.c.bf16 %v1295, %v1294
  %v1390 = vpack.c.bf16 %v1297, %v1296
  %v1391 = vpack.c.bf16 %v1299, %v1298
  %v1392 = vpack.c.bf16 %v1301, %v1300
  %v1393 = vpack.c.bf16 %v1303, %v1302
  %v1394 = vpack.c.bf16 %v1305, %v1304
  %v1395 = vpack.c.bf16 %v1307, %v1306
  %v1396 = vpack.c.bf16 %v1309, %v1308
  %v1397 = vpack.c.bf16 %v1311, %v1310
  %v1398 = vpack.c.bf16 %v1313, %v1312
  %v1399 = vpack.c.bf16 %v1315, %v1314
  %v1400 = vpack.c.bf16 %v1317, %v1316
  %v1401 = vpack.c.bf16 %v1319, %v1318
  %v1402 = vpack.c.bf16 %v1321, %v1320
  %v1403 = vpack.c.bf16 %v1323, %v1322
  %v1404 = vpack.c.bf16 %v1325, %v1324
  %v1405 = vpack.c.bf16 %v1327, %v1326
  %v1406 = vpack.c.bf16 %v1329, %v1328
  %v1407 = vpack.c.bf16 %v1331, %v1330
  %v1408 = vpack.c.bf16 %v1333, %v1332
  %v1409 = vpack.c.bf16 %v1335, %v1334
  %v1410 = vpack.c.bf16 %v1337, %v1336
  %v1411 = vpack.c.bf16 %v1339, %v1338
  %v1412 = vpack.c.bf16 %v1341, %v1340
  %v1413 = vpack.c.bf16 %v1343, %v1342
  %v1414 = vpack.c.bf16 %v1345, %v1344
  %v1415 = vpack.c.bf16 %v1347, %v1346
  %v1416 = vpack.c.bf16 %v1349, %v1348
  %v1417 = vpack.c.bf16 %v1351, %v1350
  %v1418 = vpack.c.bf16 %v1353, %v1352
  %v1419 = vpack.c.bf16 %v1355, %v1354
  %v1420 = vld [vmem:[%s4] sm:$0xf]
  %v1421 = vld [vmem:[%s4 + $0x4] sm:$0xf]
  %v1422 = vld [vmem:[%s4 + $0x8] sm:$0xf]
  %v1423 = vld [vmem:[%s4 + $0xc] sm:$0xf]
  %v1424 = vld [vmem:[%s4 + $0x10] sm:$0xf]
  %v1425 = vld [vmem:[%s4 + $0x14] sm:$0xf]
  %v1426 = vld [vmem:[%s4 + $0x18] sm:$0xf]
  %v1427 = vld [vmem:[%s4 + $0x1c] sm:$0xf]
  %v1428 = vld [vmem:[%s5] sm:$0x1]
  %v1430 = vlaneseq
  %v1431 = vshrl.u32 %v1430, 7
  %v1432 = vsub.s32 0, %v1431
  %v1433 = vrot.slane %v1428, %v1432
  %v1443 = vunpack.c.l.b16 %v1420
  %v1444 = vunpack.c.l.b16 %v1421
  %v1445 = vunpack.c.l.b16 %v1422
  %v1446 = vunpack.c.l.b16 %v1423
  %v1447 = vunpack.c.l.b16 %v1424
  %v1448 = vunpack.c.l.b16 %v1425
  %v1449 = vunpack.c.l.b16 %v1426
  %v1450 = vunpack.c.l.b16 %v1427
  %v1451 = vpack.c.b16 %v1444, %v1443
  %v1452 = vpack.c.b16 %v1446, %v1445
  %v1453 = vpack.c.b16 %v1448, %v1447
  %v1454 = vpack.c.b16 %v1450, %v1449
  %vm1459 = vcmask 523264
  %v1461 = vsel %vm1459, %v1356, 0
  %v1464 = vsel %vm1459, %v1357, 0
  %v1467 = vsel %vm1459, %v1358, 0
  %v1470 = vsel %vm1459, %v1359, 0
  %v1473 = vsel %vm1459, %v1360, 0
  %v1476 = vsel %vm1459, %v1361, 0
  %v1479 = vsel %vm1459, %v1362, 0
  %v1482 = vsel %vm1459, %v1363, 0
  %v1485 = vsel %vm1459, %v1364, 0
  %v1488 = vsel %vm1459, %v1365, 0
  %v1491 = vsel %vm1459, %v1366, 0
  %v1494 = vsel %vm1459, %v1367, 0
  %v1497 = vsel %vm1459, %v1368, 0
  %v1500 = vsel %vm1459, %v1369, 0
  %v1503 = vsel %vm1459, %v1370, 0
  %v1506 = vsel %vm1459, %v1371, 0
  %v1509 = vsel %vm1459, %v1372, 0
  %v1512 = vsel %vm1459, %v1373, 0
  %v1515 = vsel %vm1459, %v1374, 0
  %v1518 = vsel %vm1459, %v1375, 0
  %v1521 = vsel %vm1459, %v1376, 0
  %v1524 = vsel %vm1459, %v1377, 0
  %v1527 = vsel %vm1459, %v1378, 0
  %v1530 = vsel %vm1459, %v1379, 0
  %v1533 = vsel %vm1459, %v1380, 0
  %v1536 = vsel %vm1459, %v1381, 0
  %v1539 = vsel %vm1459, %v1382, 0
  %v1542 = vsel %vm1459, %v1383, 0
  %v1545 = vsel %vm1459, %v1384, 0
  %v1548 = vsel %vm1459, %v1385, 0
  %v1551 = vsel %vm1459, %v1386, 0
  %v1554 = vsel %vm1459, %v1387, 0
  %v1557 = vsel %vm1459, %v1388, 0
  %v1560 = vsel %vm1459, %v1389, 0
  %v1563 = vsel %vm1459, %v1390, 0
  %v1566 = vsel %vm1459, %v1391, 0
  %v1569 = vsel %vm1459, %v1392, 0
  %v1572 = vsel %vm1459, %v1393, 0
  %v1575 = vsel %vm1459, %v1394, 0
  %v1578 = vsel %vm1459, %v1395, 0
  %v1581 = vsel %vm1459, %v1396, 0
  %v1584 = vsel %vm1459, %v1397, 0
  %v1587 = vsel %vm1459, %v1398, 0
  %v1590 = vsel %vm1459, %v1399, 0
  %v1593 = vsel %vm1459, %v1400, 0
  %v1596 = vsel %vm1459, %v1401, 0
  %v1599 = vsel %vm1459, %v1402, 0
  %v1602 = vsel %vm1459, %v1403, 0
  %v1605 = vsel %vm1459, %v1404, 0
  %v1608 = vsel %vm1459, %v1405, 0
  %v1611 = vsel %vm1459, %v1406, 0
  %v1614 = vsel %vm1459, %v1407, 0
  %v1617 = vsel %vm1459, %v1408, 0
  %v1620 = vsel %vm1459, %v1409, 0
  %v1623 = vsel %vm1459, %v1410, 0
  %v1626 = vsel %vm1459, %v1411, 0
  %v1629 = vsel %vm1459, %v1412, 0
  %v1632 = vsel %vm1459, %v1413, 0
  %v1635 = vsel %vm1459, %v1414, 0
  %v1638 = vsel %vm1459, %v1415, 0
  %v1641 = vsel %vm1459, %v1416, 0
  %v1644 = vsel %vm1459, %v1417, 0
  %v1647 = vsel %vm1459, %v1418, 0
  %v1650 = vsel %vm1459, %v1419, 0
  %1652 = vmatprep.subr.bf16.mxu0 0
  %1653 = vmatpush1.bf16.msra.mxu0 0
  %1654 = vmatprep.subr.bf16.mxu0 0
  %1655 = vmatpush1.bf16.msra.mxu0 0
  %1656 = vmatprep.subr.bf16.mxu0 0
  %1657 = vmatpush1.bf16.msra.mxu0 0
  %1658 = vmatprep.subr.bf16.mxu0 0
  %1659 = vmatpush1.bf16.msra.mxu0 0
  %1660 = vmatprep.subr.bf16.mxu0 0
  %1661 = vmatpush1.bf16.msra.mxu0 %v1454
  %1662 = vmatprep.subr.bf16.mxu0 0
  %1663 = vmatpush1.bf16.msra.mxu0 %v1453
  %1664 = vmatprep.subr.bf16.mxu0 0
  %1665 = vmatpush1.bf16.msra.mxu0 %v1452
  %1666 = vmatprep.subr.bf16.mxu0 0
  %1667 = vmatpush1.bf16.msra.mxu0 %v1451
  %1668 = vmatprep.subr.bf16.mxu0 0
  %1669 = vmatpush2.bf16.msra.mxu0 0
  %1670 = vmatprep.subr.bf16.mxu0 0
  %1671 = vmatpush2.bf16.msra.mxu0 0
  %1672 = vmatprep.subr.bf16.mxu0 0
  %1673 = vmatpush2.bf16.msra.mxu0 0
  %1674 = vmatprep.subr.bf16.mxu0 0
  %1675 = vmatpush2.bf16.msra.mxu0 0
  %1676 = vmatprep.subr.bf16.mxu0 0
  %1677 = vmatpush2.bf16.msra.mxu0 0
  %1678 = vmatprep.subr.bf16.mxu0 0
  %1679 = vmatpush2.bf16.msra.mxu0 0
  %1680 = vmatprep.subr.bf16.mxu0 0
  %1681 = vmatpush2.bf16.msra.mxu0 0
  %1682 = vmatprep.subr.bf16.mxu0 0
  %1683 = vmatpush2.bf16.msra.mxu0 0
  %1684 = vmatprep.mubr.bf16.mxu0 0
  %1685 = vmatmul.mubr.bf16.gmra.mxu0 %v1461
  %v1686 = vpop.f32.mrf.mxu0
  %v1687 = vadd.f32 %v1433, %v1686
  %v1688 = vpop.f32.mrf.mxu0
  %v1689 = vpop.f32.mrf.mxu0
  %v1690 = vadd.f32 %v1433, %v1689
  %v1691 = vpop.f32.mrf.mxu0
  %1692 = vmatprep.mubr.bf16.mxu0 0
  %1693 = vmatmul.mubr.bf16.gmra.mxu0 %v1464
  %v1694 = vpop.f32.mrf.mxu0
  %v1695 = vadd.f32 %v1433, %v1694
  %v1696 = vpop.f32.mrf.mxu0
  %v1697 = vpop.f32.mrf.mxu0
  %v1698 = vadd.f32 %v1433, %v1697
  %v1699 = vpop.f32.mrf.mxu0
  %1700 = vmatprep.mubr.bf16.mxu0 0
  %1701 = vmatmul.mubr.bf16.gmra.mxu0 %v1467
  %v1702 = vpop.f32.mrf.mxu0
  %v1703 = vadd.f32 %v1433, %v1702
  %v1704 = vpop.f32.mrf.mxu0
  %v1705 = vpop.f32.mrf.mxu0
  %v1706 = vadd.f32 %v1433, %v1705
  %v1707 = vpop.f32.mrf.mxu0
  %1708 = vmatprep.mubr.bf16.mxu0 0
  %1709 = vmatmul.mubr.bf16.gmra.mxu0 %v1470
  %v1710 = vpop.f32.mrf.mxu0
  %v1711 = vadd.f32 %v1433, %v1710
  %v1712 = vpop.f32.mrf.mxu0
  %v1713 = vpop.f32.mrf.mxu0
  %v1714 = vadd.f32 %v1433, %v1713
  %v1715 = vpop.f32.mrf.mxu0
  %1716 = vmatprep.mubr.bf16.mxu0 0
  %1717 = vmatmul.mubr.bf16.gmra.mxu0 %v1473
  %v1718 = vpop.f32.mrf.mxu0
  %v1719 = vadd.f32 %v1433, %v1718
  %v1720 = vpop.f32.mrf.mxu0
  %v1721 = vpop.f32.mrf.mxu0
  %v1722 = vadd.f32 %v1433, %v1721
  %v1723 = vpop.f32.mrf.mxu0
  %1724 = vmatprep.mubr.bf16.mxu0 0
  %1725 = vmatmul.mubr.bf16.gmra.mxu0 %v1476
  %v1726 = vpop.f32.mrf.mxu0
  %v1727 = vadd.f32 %v1433, %v1726
  %v1728 = vpop.f32.mrf.mxu0
  %v1729 = vpop.f32.mrf.mxu0
  %v1730 = vadd.f32 %v1433, %v1729
  %v1731 = vpop.f32.mrf.mxu0
  %1732 = vmatprep.mubr.bf16.mxu0 0
  %1733 = vmatmul.mubr.bf16.gmra.mxu0 %v1479
  %v1734 = vpop.f32.mrf.mxu0
  %v1735 = vadd.f32 %v1433, %v1734
  %v1736 = vpop.f32.mrf.mxu0
  %v1737 = vpop.f32.mrf.mxu0
  %v1738 = vadd.f32 %v1433, %v1737
  %v1739 = vpop.f32.mrf.mxu0
  %1740 = vmatprep.mubr.bf16.mxu0 0
  %1741 = vmatmul.mubr.bf16.gmra.mxu0 %v1482
  %v1742 = vpop.f32.mrf.mxu0
  %v1743 = vadd.f32 %v1433, %v1742
  %v1744 = vpop.f32.mrf.mxu0
  %v1745 = vpop.f32.mrf.mxu0
  %v1746 = vadd.f32 %v1433, %v1745
  %v1747 = vpop.f32.mrf.mxu0
  %1748 = vmatprep.mubr.bf16.mxu0 0
  %1749 = vmatmul.mubr.bf16.gmra.mxu0 %v1485
  %v1750 = vpop.f32.mrf.mxu0
  %v1751 = vadd.f32 %v1433, %v1750
  %v1752 = vpop.f32.mrf.mxu0
  %v1753 = vpop.f32.mrf.mxu0
  %v1754 = vadd.f32 %v1433, %v1753
  %v1755 = vpop.f32.mrf.mxu0
  %1756 = vmatprep.mubr.bf16.mxu0 0
  %1757 = vmatmul.mubr.bf16.gmra.mxu0 %v1488
  %v1758 = vpop.f32.mrf.mxu0
  %v1759 = vadd.f32 %v1433, %v1758
  %v1760 = vpop.f32.mrf.mxu0
  %v1761 = vpop.f32.mrf.mxu0
  %v1762 = vadd.f32 %v1433, %v1761
  %v1763 = vpop.f32.mrf.mxu0
  %1764 = vmatprep.mubr.bf16.mxu0 0
  %1765 = vmatmul.mubr.bf16.gmra.mxu0 %v1491
  %v1766 = vpop.f32.mrf.mxu0
  %v1767 = vadd.f32 %v1433, %v1766
  %v1768 = vpop.f32.mrf.mxu0
  %v1769 = vpop.f32.mrf.mxu0
  %v1770 = vadd.f32 %v1433, %v1769
  %v1771 = vpop.f32.mrf.mxu0
  %1772 = vmatprep.mubr.bf16.mxu0 0
  %1773 = vmatmul.mubr.bf16.gmra.mxu0 %v1494
  %v1774 = vpop.f32.mrf.mxu0
  %v1775 = vadd.f32 %v1433, %v1774
  %v1776 = vpop.f32.mrf.mxu0
  %v1777 = vpop.f32.mrf.mxu0
  %v1778 = vadd.f32 %v1433, %v1777
  %v1779 = vpop.f32.mrf.mxu0
  %1780 = vmatprep.mubr.bf16.mxu0 0
  %1781 = vmatmul.mubr.bf16.gmra.mxu0 %v1497
  %v1782 = vpop.f32.mrf.mxu0
  %v1783 = vadd.f32 %v1433, %v1782
  %v1784 = vpop.f32.mrf.mxu0
  %v1785 = vpop.f32.mrf.mxu0
  %v1786 = vadd.f32 %v1433, %v1785
  %v1787 = vpop.f32.mrf.mxu0
  %1788 = vmatprep.mubr.bf16.mxu0 0
  %1789 = vmatmul.mubr.bf16.gmra.mxu0 %v1500
  %v1790 = vpop.f32.mrf.mxu0
  %v1791 = vadd.f32 %v1433, %v1790
  %v1792 = vpop.f32.mrf.mxu0
  %v1793 = vpop.f32.mrf.mxu0
  %v1794 = vadd.f32 %v1433, %v1793
  %v1795 = vpop.f32.mrf.mxu0
  %1796 = vmatprep.mubr.bf16.mxu0 0
  %1797 = vmatmul.mubr.bf16.gmra.mxu0 %v1503
  %v1798 = vpop.f32.mrf.mxu0
  %v1799 = vadd.f32 %v1433, %v1798
  %v1800 = vpop.f32.mrf.mxu0
  %v1801 = vpop.f32.mrf.mxu0
  %v1802 = vadd.f32 %v1433, %v1801
  %v1803 = vpop.f32.mrf.mxu0
  %1804 = vmatprep.mubr.bf16.mxu0 0
  %1805 = vmatmul.mubr.bf16.gmra.mxu0 %v1506
  %v1806 = vpop.f32.mrf.mxu0
  %v1807 = vadd.f32 %v1433, %v1806
  %v1808 = vpop.f32.mrf.mxu0
  %v1809 = vpop.f32.mrf.mxu0
  %v1810 = vadd.f32 %v1433, %v1809
  %v1811 = vpop.f32.mrf.mxu0
  %1812 = vmatprep.mubr.bf16.mxu0 0
  %1813 = vmatmul.mubr.bf16.gmra.mxu0 %v1509
  %v1814 = vpop.f32.mrf.mxu0
  %v1815 = vadd.f32 %v1433, %v1814
  %v1816 = vpop.f32.mrf.mxu0
  %v1817 = vpop.f32.mrf.mxu0
  %v1818 = vadd.f32 %v1433, %v1817
  %v1819 = vpop.f32.mrf.mxu0
  %1820 = vmatprep.mubr.bf16.mxu0 0
  %1821 = vmatmul.mubr.bf16.gmra.mxu0 %v1512
  %v1822 = vpop.f32.mrf.mxu0
  %v1823 = vadd.f32 %v1433, %v1822
  %v1824 = vpop.f32.mrf.mxu0
  %v1825 = vpop.f32.mrf.mxu0
  %v1826 = vadd.f32 %v1433, %v1825
  %v1827 = vpop.f32.mrf.mxu0
  %1828 = vmatprep.mubr.bf16.mxu0 0
  %1829 = vmatmul.mubr.bf16.gmra.mxu0 %v1515
  %v1830 = vpop.f32.mrf.mxu0
  %v1831 = vadd.f32 %v1433, %v1830
  %v1832 = vpop.f32.mrf.mxu0
  %v1833 = vpop.f32.mrf.mxu0
  %v1834 = vadd.f32 %v1433, %v1833
  %v1835 = vpop.f32.mrf.mxu0
  %1836 = vmatprep.mubr.bf16.mxu0 0
  %1837 = vmatmul.mubr.bf16.gmra.mxu0 %v1518
  %v1838 = vpop.f32.mrf.mxu0
  %v1839 = vadd.f32 %v1433, %v1838
  %v1840 = vpop.f32.mrf.mxu0
  %v1841 = vpop.f32.mrf.mxu0
  %v1842 = vadd.f32 %v1433, %v1841
  %v1843 = vpop.f32.mrf.mxu0
  %1844 = vmatprep.mubr.bf16.mxu0 0
  %1845 = vmatmul.mubr.bf16.gmra.mxu0 %v1521
  %v1846 = vpop.f32.mrf.mxu0
  %v1847 = vadd.f32 %v1433, %v1846
  %v1848 = vpop.f32.mrf.mxu0
  %v1849 = vpop.f32.mrf.mxu0
  %v1850 = vadd.f32 %v1433, %v1849
  %v1851 = vpop.f32.mrf.mxu0
  %1852 = vmatprep.mubr.bf16.mxu0 0
  %1853 = vmatmul.mubr.bf16.gmra.mxu0 %v1524
  %v1854 = vpop.f32.mrf.mxu0
  %v1855 = vadd.f32 %v1433, %v1854
  %v1856 = vpop.f32.mrf.mxu0
  %v1857 = vpop.f32.mrf.mxu0
  %v1858 = vadd.f32 %v1433, %v1857
  %v1859 = vpop.f32.mrf.mxu0
  %1860 = vmatprep.mubr.bf16.mxu0 0
  %1861 = vmatmul.mubr.bf16.gmra.mxu0 %v1527
  %v1862 = vpop.f32.mrf.mxu0
  %v1863 = vadd.f32 %v1433, %v1862
  %v1864 = vpop.f32.mrf.mxu0
  %v1865 = vpop.f32.mrf.mxu0
  %v1866 = vadd.f32 %v1433, %v1865
  %v1867 = vpop.f32.mrf.mxu0
  %1868 = vmatprep.mubr.bf16.mxu0 0
  %1869 = vmatmul.mubr.bf16.gmra.mxu0 %v1530
  %v1870 = vpop.f32.mrf.mxu0
  %v1871 = vadd.f32 %v1433, %v1870
  %v1872 = vpop.f32.mrf.mxu0
  %v1873 = vpop.f32.mrf.mxu0
  %v1874 = vadd.f32 %v1433, %v1873
  %v1875 = vpop.f32.mrf.mxu0
  %1876 = vmatprep.mubr.bf16.mxu0 0
  %1877 = vmatmul.mubr.bf16.gmra.mxu0 %v1533
  %v1878 = vpop.f32.mrf.mxu0
  %v1879 = vadd.f32 %v1433, %v1878
  %v1880 = vpop.f32.mrf.mxu0
  %v1881 = vpop.f32.mrf.mxu0
  %v1882 = vadd.f32 %v1433, %v1881
  %v1883 = vpop.f32.mrf.mxu0
  %1884 = vmatprep.mubr.bf16.mxu0 0
  %1885 = vmatmul.mubr.bf16.gmra.mxu0 %v1536
  %v1886 = vpop.f32.mrf.mxu0
  %v1887 = vadd.f32 %v1433, %v1886
  %v1888 = vpop.f32.mrf.mxu0
  %v1889 = vpop.f32.mrf.mxu0
  %v1890 = vadd.f32 %v1433, %v1889
  %v1891 = vpop.f32.mrf.mxu0
  %1892 = vmatprep.mubr.bf16.mxu0 0
  %1893 = vmatmul.mubr.bf16.gmra.mxu0 %v1539
  %v1894 = vpop.f32.mrf.mxu0
  %v1895 = vadd.f32 %v1433, %v1894
  %v1896 = vpop.f32.mrf.mxu0
  %v1897 = vpop.f32.mrf.mxu0
  %v1898 = vadd.f32 %v1433, %v1897
  %v1899 = vpop.f32.mrf.mxu0
  %1900 = vmatprep.mubr.bf16.mxu0 0
  %1901 = vmatmul.mubr.bf16.gmra.mxu0 %v1542
  %v1902 = vpop.f32.mrf.mxu0
  %v1903 = vadd.f32 %v1433, %v1902
  %v1904 = vpop.f32.mrf.mxu0
  %v1905 = vpop.f32.mrf.mxu0
  %v1906 = vadd.f32 %v1433, %v1905
  %v1907 = vpop.f32.mrf.mxu0
  %1908 = vmatprep.mubr.bf16.mxu0 0
  %1909 = vmatmul.mubr.bf16.gmra.mxu0 %v1545
  %v1910 = vpop.f32.mrf.mxu0
  %v1911 = vadd.f32 %v1433, %v1910
  %v1912 = vpop.f32.mrf.mxu0
  %v1913 = vpop.f32.mrf.mxu0
  %v1914 = vadd.f32 %v1433, %v1913
  %v1915 = vpop.f32.mrf.mxu0
  %1916 = vmatprep.mubr.bf16.mxu0 0
  %1917 = vmatmul.mubr.bf16.gmra.mxu0 %v1548
  %v1918 = vpop.f32.mrf.mxu0
  %v1919 = vadd.f32 %v1433, %v1918
  %v1920 = vpop.f32.mrf.mxu0
  %v1921 = vpop.f32.mrf.mxu0
  %v1922 = vadd.f32 %v1433, %v1921
  %v1923 = vpop.f32.mrf.mxu0
  %1924 = vmatprep.mubr.bf16.mxu0 0
  %1925 = vmatmul.mubr.bf16.gmra.mxu0 %v1551
  %v1926 = vpop.f32.mrf.mxu0
  %v1927 = vadd.f32 %v1433, %v1926
  %v1928 = vpop.f32.mrf.mxu0
  %v1929 = vpop.f32.mrf.mxu0
  %v1930 = vadd.f32 %v1433, %v1929
  %v1931 = vpop.f32.mrf.mxu0
  %1932 = vmatprep.mubr.bf16.mxu0 0
  %1933 = vmatmul.mubr.bf16.gmra.mxu0 %v1554
  %v1934 = vpop.f32.mrf.mxu0
  %v1935 = vadd.f32 %v1433, %v1934
  %v1936 = vpop.f32.mrf.mxu0
  %v1937 = vpop.f32.mrf.mxu0
  %v1938 = vadd.f32 %v1433, %v1937
  %v1939 = vpop.f32.mrf.mxu0
  %1940 = vmatprep.mubr.bf16.mxu0 0
  %1941 = vmatmul.mubr.bf16.gmra.mxu0 %v1557
  %v1942 = vpop.f32.mrf.mxu0
  %v1943 = vadd.f32 %v1433, %v1942
  %v1944 = vpop.f32.mrf.mxu0
  %v1945 = vpop.f32.mrf.mxu0
  %v1946 = vadd.f32 %v1433, %v1945
  %v1947 = vpop.f32.mrf.mxu0
  %1948 = vmatprep.mubr.bf16.mxu0 0
  %1949 = vmatmul.mubr.bf16.gmra.mxu0 %v1560
  %v1950 = vpop.f32.mrf.mxu0
  %v1951 = vadd.f32 %v1433, %v1950
  %v1952 = vpop.f32.mrf.mxu0
  %v1953 = vpop.f32.mrf.mxu0
  %v1954 = vadd.f32 %v1433, %v1953
  %v1955 = vpop.f32.mrf.mxu0
  %1956 = vmatprep.mubr.bf16.mxu0 0
  %1957 = vmatmul.mubr.bf16.gmra.mxu0 %v1563
  %v1958 = vpop.f32.mrf.mxu0
  %v1959 = vadd.f32 %v1433, %v1958
  %v1960 = vpop.f32.mrf.mxu0
  %v1961 = vpop.f32.mrf.mxu0
  %v1962 = vadd.f32 %v1433, %v1961
  %v1963 = vpop.f32.mrf.mxu0
  %1964 = vmatprep.mubr.bf16.mxu0 0
  %1965 = vmatmul.mubr.bf16.gmra.mxu0 %v1566
  %v1966 = vpop.f32.mrf.mxu0
  %v1967 = vadd.f32 %v1433, %v1966
  %v1968 = vpop.f32.mrf.mxu0
  %v1969 = vpop.f32.mrf.mxu0
  %v1970 = vadd.f32 %v1433, %v1969
  %v1971 = vpop.f32.mrf.mxu0
  %1972 = vmatprep.mubr.bf16.mxu0 0
  %1973 = vmatmul.mubr.bf16.gmra.mxu0 %v1569
  %v1974 = vpop.f32.mrf.mxu0
  %v1975 = vadd.f32 %v1433, %v1974
  %v1976 = vpop.f32.mrf.mxu0
  %v1977 = vpop.f32.mrf.mxu0
  %v1978 = vadd.f32 %v1433, %v1977
  %v1979 = vpop.f32.mrf.mxu0
  %1980 = vmatprep.mubr.bf16.mxu0 0
  %1981 = vmatmul.mubr.bf16.gmra.mxu0 %v1572
  %v1982 = vpop.f32.mrf.mxu0
  %v1983 = vadd.f32 %v1433, %v1982
  %v1984 = vpop.f32.mrf.mxu0
  %v1985 = vpop.f32.mrf.mxu0
  %v1986 = vadd.f32 %v1433, %v1985
  %v1987 = vpop.f32.mrf.mxu0
  %1988 = vmatprep.mubr.bf16.mxu0 0
  %1989 = vmatmul.mubr.bf16.gmra.mxu0 %v1575
  %v1990 = vpop.f32.mrf.mxu0
  %v1991 = vadd.f32 %v1433, %v1990
  %v1992 = vpop.f32.mrf.mxu0
  %v1993 = vpop.f32.mrf.mxu0
  %v1994 = vadd.f32 %v1433, %v1993
  %v1995 = vpop.f32.mrf.mxu0
  %1996 = vmatprep.mubr.bf16.mxu0 0
  %1997 = vmatmul.mubr.bf16.gmra.mxu0 %v1578
  %v1998 = vpop.f32.mrf.mxu0
  %v1999 = vadd.f32 %v1433, %v1998
  %v2000 = vpop.f32.mrf.mxu0
  %v2001 = vpop.f32.mrf.mxu0
  %v2002 = vadd.f32 %v1433, %v2001
  %v2003 = vpop.f32.mrf.mxu0
  %2004 = vmatprep.mubr.bf16.mxu0 0
  %2005 = vmatmul.mubr.bf16.gmra.mxu0 %v1581
  %v2006 = vpop.f32.mrf.mxu0
  %v2007 = vadd.f32 %v1433, %v2006
  %v2008 = vpop.f32.mrf.mxu0
  %v2009 = vpop.f32.mrf.mxu0
  %v2010 = vadd.f32 %v1433, %v2009
  %v2011 = vpop.f32.mrf.mxu0
  %2012 = vmatprep.mubr.bf16.mxu0 0
  %2013 = vmatmul.mubr.bf16.gmra.mxu0 %v1584
  %v2014 = vpop.f32.mrf.mxu0
  %v2015 = vadd.f32 %v1433, %v2014
  %v2016 = vpop.f32.mrf.mxu0
  %v2017 = vpop.f32.mrf.mxu0
  %v2018 = vadd.f32 %v1433, %v2017
  %v2019 = vpop.f32.mrf.mxu0
  %2020 = vmatprep.mubr.bf16.mxu0 0
  %2021 = vmatmul.mubr.bf16.gmra.mxu0 %v1587
  %v2022 = vpop.f32.mrf.mxu0
  %v2023 = vadd.f32 %v1433, %v2022
  %v2024 = vpop.f32.mrf.mxu0
  %v2025 = vpop.f32.mrf.mxu0
  %v2026 = vadd.f32 %v1433, %v2025
  %v2027 = vpop.f32.mrf.mxu0
  %2028 = vmatprep.mubr.bf16.mxu0 0
  %2029 = vmatmul.mubr.bf16.gmra.mxu0 %v1590
  %v2030 = vpop.f32.mrf.mxu0
  %v2031 = vadd.f32 %v1433, %v2030
  %v2032 = vpop.f32.mrf.mxu0
  %v2033 = vpop.f32.mrf.mxu0
  %v2034 = vadd.f32 %v1433, %v2033
  %v2035 = vpop.f32.mrf.mxu0
  %2036 = vmatprep.mubr.bf16.mxu0 0
  %2037 = vmatmul.mubr.bf16.gmra.mxu0 %v1593
  %v2038 = vpop.f32.mrf.mxu0
  %v2039 = vadd.f32 %v1433, %v2038
  %v2040 = vpop.f32.mrf.mxu0
  %v2041 = vpop.f32.mrf.mxu0
  %v2042 = vadd.f32 %v1433, %v2041
  %v2043 = vpop.f32.mrf.mxu0
  %2044 = vmatprep.mubr.bf16.mxu0 0
  %2045 = vmatmul.mubr.bf16.gmra.mxu0 %v1596
  %v2046 = vpop.f32.mrf.mxu0
  %v2047 = vadd.f32 %v1433, %v2046
  %v2048 = vpop.f32.mrf.mxu0
  %v2049 = vpop.f32.mrf.mxu0
  %v2050 = vadd.f32 %v1433, %v2049
  %v2051 = vpop.f32.mrf.mxu0
  %2052 = vmatprep.mubr.bf16.mxu0 0
  %2053 = vmatmul.mubr.bf16.gmra.mxu0 %v1599
  %v2054 = vpop.f32.mrf.mxu0
  %v2055 = vadd.f32 %v1433, %v2054
  %v2056 = vpop.f32.mrf.mxu0
  %v2057 = vpop.f32.mrf.mxu0
  %v2058 = vadd.f32 %v1433, %v2057
  %v2059 = vpop.f32.mrf.mxu0
  %2060 = vmatprep.mubr.bf16.mxu0 0
  %2061 = vmatmul.mubr.bf16.gmra.mxu0 %v1602
  %v2062 = vpop.f32.mrf.mxu0
  %v2063 = vadd.f32 %v1433, %v2062
  %v2064 = vpop.f32.mrf.mxu0
  %v2065 = vpop.f32.mrf.mxu0
  %v2066 = vadd.f32 %v1433, %v2065
  %v2067 = vpop.f32.mrf.mxu0
  %2068 = vmatprep.mubr.bf16.mxu0 0
  %2069 = vmatmul.mubr.bf16.gmra.mxu0 %v1605
  %v2070 = vpop.f32.mrf.mxu0
  %v2071 = vadd.f32 %v1433, %v2070
  %v2072 = vpop.f32.mrf.mxu0
  %v2073 = vpop.f32.mrf.mxu0
  %v2074 = vadd.f32 %v1433, %v2073
  %v2075 = vpop.f32.mrf.mxu0
  %2076 = vmatprep.mubr.bf16.mxu0 0
  %2077 = vmatmul.mubr.bf16.gmra.mxu0 %v1608
  %v2078 = vpop.f32.mrf.mxu0
  %v2079 = vadd.f32 %v1433, %v2078
  %v2080 = vpop.f32.mrf.mxu0
  %v2081 = vpop.f32.mrf.mxu0
  %v2082 = vadd.f32 %v1433, %v2081
  %v2083 = vpop.f32.mrf.mxu0
  %2084 = vmatprep.mubr.bf16.mxu0 0
  %2085 = vmatmul.mubr.bf16.gmra.mxu0 %v1611
  %v2086 = vpop.f32.mrf.mxu0
  %v2087 = vadd.f32 %v1433, %v2086
  %v2088 = vpop.f32.mrf.mxu0
  %v2089 = vpop.f32.mrf.mxu0
  %v2090 = vadd.f32 %v1433, %v2089
  %v2091 = vpop.f32.mrf.mxu0
  %2092 = vmatprep.mubr.bf16.mxu0 0
  %2093 = vmatmul.mubr.bf16.gmra.mxu0 %v1614
  %v2094 = vpop.f32.mrf.mxu0
  %v2095 = vadd.f32 %v1433, %v2094
  %v2096 = vpop.f32.mrf.mxu0
  %v2097 = vpop.f32.mrf.mxu0
  %v2098 = vadd.f32 %v1433, %v2097
  %v2099 = vpop.f32.mrf.mxu0
  %2100 = vmatprep.mubr.bf16.mxu0 0
  %2101 = vmatmul.mubr.bf16.gmra.mxu0 %v1617
  %v2102 = vpop.f32.mrf.mxu0
  %v2103 = vadd.f32 %v1433, %v2102
  %v2104 = vpop.f32.mrf.mxu0
  %v2105 = vpop.f32.mrf.mxu0
  %v2106 = vadd.f32 %v1433, %v2105
  %v2107 = vpop.f32.mrf.mxu0
  %2108 = vmatprep.mubr.bf16.mxu0 0
  %2109 = vmatmul.mubr.bf16.gmra.mxu0 %v1620
  %v2110 = vpop.f32.mrf.mxu0
  %v2111 = vadd.f32 %v1433, %v2110
  %v2112 = vpop.f32.mrf.mxu0
  %v2113 = vpop.f32.mrf.mxu0
  %v2114 = vadd.f32 %v1433, %v2113
  %v2115 = vpop.f32.mrf.mxu0
  %2116 = vmatprep.mubr.bf16.mxu0 0
  %2117 = vmatmul.mubr.bf16.gmra.mxu0 %v1623
  %v2118 = vpop.f32.mrf.mxu0
  %v2119 = vadd.f32 %v1433, %v2118
  %v2120 = vpop.f32.mrf.mxu0
  %v2121 = vpop.f32.mrf.mxu0
  %v2122 = vadd.f32 %v1433, %v2121
  %v2123 = vpop.f32.mrf.mxu0
  %2124 = vmatprep.mubr.bf16.mxu0 0
  %2125 = vmatmul.mubr.bf16.gmra.mxu0 %v1626
  %v2126 = vpop.f32.mrf.mxu0
  %v2127 = vadd.f32 %v1433, %v2126
  %v2128 = vpop.f32.mrf.mxu0
  %v2129 = vpop.f32.mrf.mxu0
  %v2130 = vadd.f32 %v1433, %v2129
  %v2131 = vpop.f32.mrf.mxu0
  %2132 = vmatprep.mubr.bf16.mxu0 0
  %2133 = vmatmul.mubr.bf16.gmra.mxu0 %v1629
  %v2134 = vpop.f32.mrf.mxu0
  %v2135 = vadd.f32 %v1433, %v2134
  %v2136 = vpop.f32.mrf.mxu0
  %v2137 = vpop.f32.mrf.mxu0
  %v2138 = vadd.f32 %v1433, %v2137
  %v2139 = vpop.f32.mrf.mxu0
  %2140 = vmatprep.mubr.bf16.mxu0 0
  %2141 = vmatmul.mubr.bf16.gmra.mxu0 %v1632
  %v2142 = vpop.f32.mrf.mxu0
  %v2143 = vadd.f32 %v1433, %v2142
  %v2144 = vpop.f32.mrf.mxu0
  %v2145 = vpop.f32.mrf.mxu0
  %v2146 = vadd.f32 %v1433, %v2145
  %v2147 = vpop.f32.mrf.mxu0
  %2148 = vmatprep.mubr.bf16.mxu0 0
  %2149 = vmatmul.mubr.bf16.gmra.mxu0 %v1635
  %v2150 = vpop.f32.mrf.mxu0
  %v2151 = vadd.f32 %v1433, %v2150
  %v2152 = vpop.f32.mrf.mxu0
  %v2153 = vpop.f32.mrf.mxu0
  %v2154 = vadd.f32 %v1433, %v2153
  %v2155 = vpop.f32.mrf.mxu0
  %2156 = vmatprep.mubr.bf16.mxu0 0
  %2157 = vmatmul.mubr.bf16.gmra.mxu0 %v1638
  %v2158 = vpop.f32.mrf.mxu0
  %v2159 = vadd.f32 %v1433, %v2158
  %v2160 = vpop.f32.mrf.mxu0
  %v2161 = vpop.f32.mrf.mxu0
  %v2162 = vadd.f32 %v1433, %v2161
  %v2163 = vpop.f32.mrf.mxu0
  %2164 = vmatprep.mubr.bf16.mxu0 0
  %2165 = vmatmul.mubr.bf16.gmra.mxu0 %v1641
  %v2166 = vpop.f32.mrf.mxu0
  %v2167 = vadd.f32 %v1433, %v2166
  %v2168 = vpop.f32.mrf.mxu0
  %v2169 = vpop.f32.mrf.mxu0
  %v2170 = vadd.f32 %v1433, %v2169
  %v2171 = vpop.f32.mrf.mxu0
  %2172 = vmatprep.mubr.bf16.mxu0 0
  %2173 = vmatmul.mubr.bf16.gmra.mxu0 %v1644
  %v2174 = vpop.f32.mrf.mxu0
  %v2175 = vadd.f32 %v1433, %v2174
  %v2176 = vpop.f32.mrf.mxu0
  %v2177 = vpop.f32.mrf.mxu0
  %v2178 = vadd.f32 %v1433, %v2177
  %v2179 = vpop.f32.mrf.mxu0
  %2180 = vmatprep.mubr.bf16.mxu0 0
  %2181 = vmatmul.mubr.bf16.gmra.mxu0 %v1647
  %v2182 = vpop.f32.mrf.mxu0
  %v2183 = vadd.f32 %v1433, %v2182
  %v2184 = vpop.f32.mrf.mxu0
  %v2185 = vpop.f32.mrf.mxu0
  %v2186 = vadd.f32 %v1433, %v2185
  %v2187 = vpop.f32.mrf.mxu0
  %2188 = vmatprep.mubr.bf16.mxu0 0
  %2189 = vmatmul.mubr.bf16.gmra.mxu0 %v1650
  %v2190 = vpop.f32.mrf.mxu0
  %v2191 = vadd.f32 %v1433, %v2190
  %v2192 = vpop.f32.mrf.mxu0
  %v2193 = vpop.f32.mrf.mxu0
  %v2194 = vadd.f32 %v1433, %v2193
  %v2195 = vpop.f32.mrf.mxu0
  %2196 = vdwg.mxu0
  %v2197 = vmax.f32 %v1687, 0.0
  %v2198 = vmax.f32 %v1690, 0.0
  %v2199 = vmax.f32 %v1695, 0.0
  %v2200 = vmax.f32 %v1698, 0.0
  %v2201 = vmax.f32 %v1703, 0.0
  %v2202 = vmax.f32 %v1706, 0.0
  %v2203 = vmax.f32 %v1711, 0.0
  %v2204 = vmax.f32 %v1714, 0.0
  %v2205 = vmax.f32 %v1719, 0.0
  %v2206 = vmax.f32 %v1722, 0.0
  %v2207 = vmax.f32 %v1727, 0.0
  %v2208 = vmax.f32 %v1730, 0.0
  %v2209 = vmax.f32 %v1735, 0.0
  %v2210 = vmax.f32 %v1738, 0.0
  %v2211 = vmax.f32 %v1743, 0.0
  %v2212 = vmax.f32 %v1746, 0.0
  %v2213 = vmax.f32 %v1751, 0.0
  %v2214 = vmax.f32 %v1754, 0.0
  %v2215 = vmax.f32 %v1759, 0.0
  %v2216 = vmax.f32 %v1762, 0.0
  %v2217 = vmax.f32 %v1767, 0.0
  %v2218 = vmax.f32 %v1770, 0.0
  %v2219 = vmax.f32 %v1775, 0.0
  %v2220 = vmax.f32 %v1778, 0.0
  %v2221 = vmax.f32 %v1783, 0.0
  %v2222 = vmax.f32 %v1786, 0.0
  %v2223 = vmax.f32 %v1791, 0.0
  %v2224 = vmax.f32 %v1794, 0.0
  %v2225 = vmax.f32 %v1799, 0.0
  %v2226 = vmax.f32 %v1802, 0.0
  %v2227 = vmax.f32 %v1807, 0.0
  %v2228 = vmax.f32 %v1810, 0.0
  %v2229 = vmax.f32 %v1815, 0.0
  %v2230 = vmax.f32 %v1818, 0.0
  %v2231 = vmax.f32 %v1823, 0.0
  %v2232 = vmax.f32 %v1826, 0.0
  %v2233 = vmax.f32 %v1831, 0.0
  %v2234 = vmax.f32 %v1834, 0.0
  %v2235 = vmax.f32 %v1839, 0.0
  %v2236 = vmax.f32 %v1842, 0.0
  %v2237 = vmax.f32 %v1847, 0.0
  %v2238 = vmax.f32 %v1850, 0.0
  %v2239 = vmax.f32 %v1855, 0.0
  %v2240 = vmax.f32 %v1858, 0.0
  %v2241 = vmax.f32 %v1863, 0.0
  %v2242 = vmax.f32 %v1866, 0.0
  %v2243 = vmax.f32 %v1871, 0.0
  %v2244 = vmax.f32 %v1874, 0.0
  %v2245 = vmax.f32 %v1879, 0.0
  %v2246 = vmax.f32 %v1882, 0.0
  %v2247 = vmax.f32 %v1887, 0.0
  %v2248 = vmax.f32 %v1890, 0.0
  %v2249 = vmax.f32 %v1895, 0.0
  %v2250 = vmax.f32 %v1898, 0.0
  %v2251 = vmax.f32 %v1903, 0.0
  %v2252 = vmax.f32 %v1906, 0.0
  %v2253 = vmax.f32 %v1911, 0.0
  %v2254 = vmax.f32 %v1914, 0.0
  %v2255 = vmax.f32 %v1919, 0.0
  %v2256 = vmax.f32 %v1922, 0.0
  %v2257 = vmax.f32 %v1927, 0.0
  %v2258 = vmax.f32 %v1930, 0.0
  %v2259 = vmax.f32 %v1935, 0.0
  %v2260 = vmax.f32 %v1938, 0.0
  %v2261 = vmax.f32 %v1943, 0.0
  %v2262 = vmax.f32 %v1946, 0.0
  %v2263 = vmax.f32 %v1951, 0.0
  %v2264 = vmax.f32 %v1954, 0.0
  %v2265 = vmax.f32 %v1959, 0.0
  %v2266 = vmax.f32 %v1962, 0.0
  %v2267 = vmax.f32 %v1967, 0.0
  %v2268 = vmax.f32 %v1970, 0.0
  %v2269 = vmax.f32 %v1975, 0.0
  %v2270 = vmax.f32 %v1978, 0.0
  %v2271 = vmax.f32 %v1983, 0.0
  %v2272 = vmax.f32 %v1986, 0.0
  %v2273 = vmax.f32 %v1991, 0.0
  %v2274 = vmax.f32 %v1994, 0.0
  %v2275 = vmax.f32 %v1999, 0.0
  %v2276 = vmax.f32 %v2002, 0.0
  %v2277 = vmax.f32 %v2007, 0.0
  %v2278 = vmax.f32 %v2010, 0.0
  %v2279 = vmax.f32 %v2015, 0.0
  %v2280 = vmax.f32 %v2018, 0.0
  %v2281 = vmax.f32 %v2023, 0.0
  %v2282 = vmax.f32 %v2026, 0.0
  %v2283 = vmax.f32 %v2031, 0.0
  %v2284 = vmax.f32 %v2034, 0.0
  %v2285 = vmax.f32 %v2039, 0.0
  %v2286 = vmax.f32 %v2042, 0.0
  %v2287 = vmax.f32 %v2047, 0.0
  %v2288 = vmax.f32 %v2050, 0.0
  %v2289 = vmax.f32 %v2055, 0.0
  %v2290 = vmax.f32 %v2058, 0.0
  %v2291 = vmax.f32 %v2063, 0.0
  %v2292 = vmax.f32 %v2066, 0.0
  %v2293 = vmax.f32 %v2071, 0.0
  %v2294 = vmax.f32 %v2074, 0.0
  %v2295 = vmax.f32 %v2079, 0.0
  %v2296 = vmax.f32 %v2082, 0.0
  %v2297 = vmax.f32 %v2087, 0.0
  %v2298 = vmax.f32 %v2090, 0.0
  %v2299 = vmax.f32 %v2095, 0.0
  %v2300 = vmax.f32 %v2098, 0.0
  %v2301 = vmax.f32 %v2103, 0.0
  %v2302 = vmax.f32 %v2106, 0.0
  %v2303 = vmax.f32 %v2111, 0.0
  %v2304 = vmax.f32 %v2114, 0.0
  %v2305 = vmax.f32 %v2119, 0.0
  %v2306 = vmax.f32 %v2122, 0.0
  %v2307 = vmax.f32 %v2127, 0.0
  %v2308 = vmax.f32 %v2130, 0.0
  %v2309 = vmax.f32 %v2135, 0.0
  %v2310 = vmax.f32 %v2138, 0.0
  %v2311 = vmax.f32 %v2143, 0.0
  %v2312 = vmax.f32 %v2146, 0.0
  %v2313 = vmax.f32 %v2151, 0.0
  %v2314 = vmax.f32 %v2154, 0.0
  %v2315 = vmax.f32 %v2159, 0.0
  %v2316 = vmax.f32 %v2162, 0.0
  %v2317 = vmax.f32 %v2167, 0.0
  %v2318 = vmax.f32 %v2170, 0.0
  %v2319 = vmax.f32 %v2175, 0.0
  %v2320 = vmax.f32 %v2178, 0.0
  %v2321 = vmax.f32 %v2183, 0.0
  %v2322 = vmax.f32 %v2186, 0.0
  %v2323 = vmax.f32 %v2191, 0.0
  %v2324 = vmax.f32 %v2194, 0.0
  %v2325 = vpack.c.bf16 %v2198, %v2197
  %v2326 = vpack.c.bf16 %v2200, %v2199
  %v2327 = vpack.c.bf16 %v2202, %v2201
  %v2328 = vpack.c.bf16 %v2204, %v2203
  %v2329 = vpack.c.bf16 %v2206, %v2205
  %v2330 = vpack.c.bf16 %v2208, %v2207
  %v2331 = vpack.c.bf16 %v2210, %v2209
  %v2332 = vpack.c.bf16 %v2212, %v2211
  %v2333 = vpack.c.bf16 %v2214, %v2213
  %v2334 = vpack.c.bf16 %v2216, %v2215
  %v2335 = vpack.c.bf16 %v2218, %v2217
  %v2336 = vpack.c.bf16 %v2220, %v2219
  %v2337 = vpack.c.bf16 %v2222, %v2221
  %v2338 = vpack.c.bf16 %v2224, %v2223
  %v2339 = vpack.c.bf16 %v2226, %v2225
  %v2340 = vpack.c.bf16 %v2228, %v2227
  %v2341 = vpack.c.bf16 %v2230, %v2229
  %v2342 = vpack.c.bf16 %v2232, %v2231
  %v2343 = vpack.c.bf16 %v2234, %v2233
  %v2344 = vpack.c.bf16 %v2236, %v2235
  %v2345 = vpack.c.bf16 %v2238, %v2237
  %v2346 = vpack.c.bf16 %v2240, %v2239
  %v2347 = vpack.c.bf16 %v2242, %v2241
  %v2348 = vpack.c.bf16 %v2244, %v2243
  %v2349 = vpack.c.bf16 %v2246, %v2245
  %v2350 = vpack.c.bf16 %v2248, %v2247
  %v2351 = vpack.c.bf16 %v2250, %v2249
  %v2352 = vpack.c.bf16 %v2252, %v2251
  %v2353 = vpack.c.bf16 %v2254, %v2253
  %v2354 = vpack.c.bf16 %v2256, %v2255
  %v2355 = vpack.c.bf16 %v2258, %v2257
  %v2356 = vpack.c.bf16 %v2260, %v2259
  %v2357 = vpack.c.bf16 %v2262, %v2261
  %v2358 = vpack.c.bf16 %v2264, %v2263
  %v2359 = vpack.c.bf16 %v2266, %v2265
  %v2360 = vpack.c.bf16 %v2268, %v2267
  %v2361 = vpack.c.bf16 %v2270, %v2269
  %v2362 = vpack.c.bf16 %v2272, %v2271
  %v2363 = vpack.c.bf16 %v2274, %v2273
  %v2364 = vpack.c.bf16 %v2276, %v2275
  %v2365 = vpack.c.bf16 %v2278, %v2277
  %v2366 = vpack.c.bf16 %v2280, %v2279
  %v2367 = vpack.c.bf16 %v2282, %v2281
  %v2368 = vpack.c.bf16 %v2284, %v2283
  %v2369 = vpack.c.bf16 %v2286, %v2285
  %v2370 = vpack.c.bf16 %v2288, %v2287
  %v2371 = vpack.c.bf16 %v2290, %v2289
  %v2372 = vpack.c.bf16 %v2292, %v2291
  %v2373 = vpack.c.bf16 %v2294, %v2293
  %v2374 = vpack.c.bf16 %v2296, %v2295
  %v2375 = vpack.c.bf16 %v2298, %v2297
  %v2376 = vpack.c.bf16 %v2300, %v2299
  %v2377 = vpack.c.bf16 %v2302, %v2301
  %v2378 = vpack.c.bf16 %v2304, %v2303
  %v2379 = vpack.c.bf16 %v2306, %v2305
  %v2380 = vpack.c.bf16 %v2308, %v2307
  %v2381 = vpack.c.bf16 %v2310, %v2309
  %v2382 = vpack.c.bf16 %v2312, %v2311
  %v2383 = vpack.c.bf16 %v2314, %v2313
  %v2384 = vpack.c.bf16 %v2316, %v2315
  %v2385 = vpack.c.bf16 %v2318, %v2317
  %v2386 = vpack.c.bf16 %v2320, %v2319
  %v2387 = vpack.c.bf16 %v2322, %v2321
  %v2388 = vpack.c.bf16 %v2324, %v2323
  %v2389 = vld [vmem:[%s6] sm:$0xf]
  %v2390 = vld [vmem:[%s6 + $0x4] sm:$0xf]
  %v2391 = vld [vmem:[%s6 + $0x8] sm:$0xf]
  %v2392 = vld [vmem:[%s6 + $0xc] sm:$0xf]
  %v2393 = vld [vmem:[%s6 + $0x10] sm:$0xf]
  %v2394 = vld [vmem:[%s6 + $0x14] sm:$0xf]
  %v2395 = vld [vmem:[%s6 + $0x18] sm:$0xf]
  %v2396 = vld [vmem:[%s6 + $0x1c] sm:$0xf]
  %v2397 = vld [vmem:[%s7] sm:$0x1]
  %v2399 = vlaneseq
  %v2400 = vshrl.u32 %v2399, 7
  %v2401 = vsub.s32 0, %v2400
  %v2402 = vrot.slane %v2397, %v2401
  %v2412 = vunpack.c.l.b16 %v2389
  %v2413 = vunpack.c.l.b16 %v2390
  %v2414 = vunpack.c.l.b16 %v2391
  %v2415 = vunpack.c.l.b16 %v2392
  %v2416 = vunpack.c.l.b16 %v2393
  %v2417 = vunpack.c.l.b16 %v2394
  %v2418 = vunpack.c.l.b16 %v2395
  %v2419 = vunpack.c.l.b16 %v2396
  %v2420 = vpack.c.b16 %v2413, %v2412
  %v2421 = vpack.c.b16 %v2415, %v2414
  %v2422 = vpack.c.b16 %v2417, %v2416
  %v2423 = vpack.c.b16 %v2419, %v2418
  %v2429 = vsel %vm1459, %v2325, 0
  %v2432 = vsel %vm1459, %v2326, 0
  %v2435 = vsel %vm1459, %v2327, 0
  %v2438 = vsel %vm1459, %v2328, 0
  %v2441 = vsel %vm1459, %v2329, 0
  %v2444 = vsel %vm1459, %v2330, 0
  %v2447 = vsel %vm1459, %v2331, 0
  %v2450 = vsel %vm1459, %v2332, 0
  %v2453 = vsel %vm1459, %v2333, 0
  %v2456 = vsel %vm1459, %v2334, 0
  %v2459 = vsel %vm1459, %v2335, 0
  %v2462 = vsel %vm1459, %v2336, 0
  %v2465 = vsel %vm1459, %v2337, 0
  %v2468 = vsel %vm1459, %v2338, 0
  %v2471 = vsel %vm1459, %v2339, 0
  %v2474 = vsel %vm1459, %v2340, 0
  %v2477 = vsel %vm1459, %v2341, 0
  %v2480 = vsel %vm1459, %v2342, 0
  %v2483 = vsel %vm1459, %v2343, 0
  %v2486 = vsel %vm1459, %v2344, 0
  %v2489 = vsel %vm1459, %v2345, 0
  %v2492 = vsel %vm1459, %v2346, 0
  %v2495 = vsel %vm1459, %v2347, 0
  %v2498 = vsel %vm1459, %v2348, 0
  %v2501 = vsel %vm1459, %v2349, 0
  %v2504 = vsel %vm1459, %v2350, 0
  %v2507 = vsel %vm1459, %v2351, 0
  %v2510 = vsel %vm1459, %v2352, 0
  %v2513 = vsel %vm1459, %v2353, 0
  %v2516 = vsel %vm1459, %v2354, 0
  %v2519 = vsel %vm1459, %v2355, 0
  %v2522 = vsel %vm1459, %v2356, 0
  %v2525 = vsel %vm1459, %v2357, 0
  %v2528 = vsel %vm1459, %v2358, 0
  %v2531 = vsel %vm1459, %v2359, 0
  %v2534 = vsel %vm1459, %v2360, 0
  %v2537 = vsel %vm1459, %v2361, 0
  %v2540 = vsel %vm1459, %v2362, 0
  %v2543 = vsel %vm1459, %v2363, 0
  %v2546 = vsel %vm1459, %v2364, 0
  %v2549 = vsel %vm1459, %v2365, 0
  %v2552 = vsel %vm1459, %v2366, 0
  %v2555 = vsel %vm1459, %v2367, 0
  %v2558 = vsel %vm1459, %v2368, 0
  %v2561 = vsel %vm1459, %v2369, 0
  %v2564 = vsel %vm1459, %v2370, 0
  %v2567 = vsel %vm1459, %v2371, 0
  %v2570 = vsel %vm1459, %v2372, 0
  %v2573 = vsel %vm1459, %v2373, 0
  %v2576 = vsel %vm1459, %v2374, 0
  %v2579 = vsel %vm1459, %v2375, 0
  %v2582 = vsel %vm1459, %v2376, 0
  %v2585 = vsel %vm1459, %v2377, 0
  %v2588 = vsel %vm1459, %v2378, 0
  %v2591 = vsel %vm1459, %v2379, 0
  %v2594 = vsel %vm1459, %v2380, 0
  %v2597 = vsel %vm1459, %v2381, 0
  %v2600 = vsel %vm1459, %v2382, 0
  %v2603 = vsel %vm1459, %v2383, 0
  %v2606 = vsel %vm1459, %v2384, 0
  %v2609 = vsel %vm1459, %v2385, 0
  %v2612 = vsel %vm1459, %v2386, 0
  %v2615 = vsel %vm1459, %v2387, 0
  %v2618 = vsel %vm1459, %v2388, 0
  %2620 = vmatprep.subr.bf16.mxu0 0
  %2621 = vmatpush1.bf16.msra.mxu0 0
  %2622 = vmatprep.subr.bf16.mxu0 0
  %2623 = vmatpush1.bf16.msra.mxu0 0
  %2624 = vmatprep.subr.bf16.mxu0 0
  %2625 = vmatpush1.bf16.msra.mxu0 0
  %2626 = vmatprep.subr.bf16.mxu0 0
  %2627 = vmatpush1.bf16.msra.mxu0 0
  %2628 = vmatprep.subr.bf16.mxu0 0
  %2629 = vmatpush1.bf16.msra.mxu0 %v2423
  %2630 = vmatprep.subr.bf16.mxu0 0
  %2631 = vmatpush1.bf16.msra.mxu0 %v2422
  %2632 = vmatprep.subr.bf16.mxu0 0
  %2633 = vmatpush1.bf16.msra.mxu0 %v2421
  %2634 = vmatprep.subr.bf16.mxu0 0
  %2635 = vmatpush1.bf16.msra.mxu0 %v2420
  %2636 = vmatprep.subr.bf16.mxu0 0
  %2637 = vmatpush2.bf16.msra.mxu0 0
  %2638 = vmatprep.subr.bf16.mxu0 0
  %2639 = vmatpush2.bf16.msra.mxu0 0
  %2640 = vmatprep.subr.bf16.mxu0 0
  %2641 = vmatpush2.bf16.msra.mxu0 0
  %2642 = vmatprep.subr.bf16.mxu0 0
  %2643 = vmatpush2.bf16.msra.mxu0 0
  %2644 = vmatprep.subr.bf16.mxu0 0
  %2645 = vmatpush2.bf16.msra.mxu0 0
  %2646 = vmatprep.subr.bf16.mxu0 0
  %2647 = vmatpush2.bf16.msra.mxu0 0
  %2648 = vmatprep.subr.bf16.mxu0 0
  %2649 = vmatpush2.bf16.msra.mxu0 0
  %2650 = vmatprep.subr.bf16.mxu0 0
  %2651 = vmatpush2.bf16.msra.mxu0 0
  %2652 = vmatprep.mubr.bf16.mxu0 0
  %2653 = vmatmul.mubr.bf16.gmra.mxu0 %v2429
  %v2654 = vpop.f32.mrf.mxu0
  %v2655 = vadd.f32 %v2402, %v2654
  %v2656 = vpop.f32.mrf.mxu0
  %v2657 = vpop.f32.mrf.mxu0
  %v2658 = vadd.f32 %v2402, %v2657
  %v2659 = vpop.f32.mrf.mxu0
  %2660 = vmatprep.mubr.bf16.mxu0 0
  %2661 = vmatmul.mubr.bf16.gmra.mxu0 %v2432
  %v2662 = vpop.f32.mrf.mxu0
  %v2663 = vadd.f32 %v2402, %v2662
  %v2664 = vpop.f32.mrf.mxu0
  %v2665 = vpop.f32.mrf.mxu0
  %v2666 = vadd.f32 %v2402, %v2665
  %v2667 = vpop.f32.mrf.mxu0
  %2668 = vmatprep.mubr.bf16.mxu0 0
  %2669 = vmatmul.mubr.bf16.gmra.mxu0 %v2435
  %v2670 = vpop.f32.mrf.mxu0
  %v2671 = vadd.f32 %v2402, %v2670
  %v2672 = vpop.f32.mrf.mxu0
  %v2673 = vpop.f32.mrf.mxu0
  %v2674 = vadd.f32 %v2402, %v2673
  %v2675 = vpop.f32.mrf.mxu0
  %2676 = vmatprep.mubr.bf16.mxu0 0
  %2677 = vmatmul.mubr.bf16.gmra.mxu0 %v2438
  %v2678 = vpop.f32.mrf.mxu0
  %v2679 = vadd.f32 %v2402, %v2678
  %v2680 = vpop.f32.mrf.mxu0
  %v2681 = vpop.f32.mrf.mxu0
  %v2682 = vadd.f32 %v2402, %v2681
  %v2683 = vpop.f32.mrf.mxu0
  %2684 = vmatprep.mubr.bf16.mxu0 0
  %2685 = vmatmul.mubr.bf16.gmra.mxu0 %v2441
  %v2686 = vpop.f32.mrf.mxu0
  %v2687 = vadd.f32 %v2402, %v2686
  %v2688 = vpop.f32.mrf.mxu0
  %v2689 = vpop.f32.mrf.mxu0
  %v2690 = vadd.f32 %v2402, %v2689
  %v2691 = vpop.f32.mrf.mxu0
  %2692 = vmatprep.mubr.bf16.mxu0 0
  %2693 = vmatmul.mubr.bf16.gmra.mxu0 %v2444
  %v2694 = vpop.f32.mrf.mxu0
  %v2695 = vadd.f32 %v2402, %v2694
  %v2696 = vpop.f32.mrf.mxu0
  %v2697 = vpop.f32.mrf.mxu0
  %v2698 = vadd.f32 %v2402, %v2697
  %v2699 = vpop.f32.mrf.mxu0
  %2700 = vmatprep.mubr.bf16.mxu0 0
  %2701 = vmatmul.mubr.bf16.gmra.mxu0 %v2447
  %v2702 = vpop.f32.mrf.mxu0
  %v2703 = vadd.f32 %v2402, %v2702
  %v2704 = vpop.f32.mrf.mxu0
  %v2705 = vpop.f32.mrf.mxu0
  %v2706 = vadd.f32 %v2402, %v2705
  %v2707 = vpop.f32.mrf.mxu0
  %2708 = vmatprep.mubr.bf16.mxu0 0
  %2709 = vmatmul.mubr.bf16.gmra.mxu0 %v2450
  %v2710 = vpop.f32.mrf.mxu0
  %v2711 = vadd.f32 %v2402, %v2710
  %v2712 = vpop.f32.mrf.mxu0
  %v2713 = vpop.f32.mrf.mxu0
  %v2714 = vadd.f32 %v2402, %v2713
  %v2715 = vpop.f32.mrf.mxu0
  %2716 = vmatprep.mubr.bf16.mxu0 0
  %2717 = vmatmul.mubr.bf16.gmra.mxu0 %v2453
  %v2718 = vpop.f32.mrf.mxu0
  %v2719 = vadd.f32 %v2402, %v2718
  %v2720 = vpop.f32.mrf.mxu0
  %v2721 = vpop.f32.mrf.mxu0
  %v2722 = vadd.f32 %v2402, %v2721
  %v2723 = vpop.f32.mrf.mxu0
  %2724 = vmatprep.mubr.bf16.mxu0 0
  %2725 = vmatmul.mubr.bf16.gmra.mxu0 %v2456
  %v2726 = vpop.f32.mrf.mxu0
  %v2727 = vadd.f32 %v2402, %v2726
  %v2728 = vpop.f32.mrf.mxu0
  %v2729 = vpop.f32.mrf.mxu0
  %v2730 = vadd.f32 %v2402, %v2729
  %v2731 = vpop.f32.mrf.mxu0
  %2732 = vmatprep.mubr.bf16.mxu0 0
  %2733 = vmatmul.mubr.bf16.gmra.mxu0 %v2459
  %v2734 = vpop.f32.mrf.mxu0
  %v2735 = vadd.f32 %v2402, %v2734
  %v2736 = vpop.f32.mrf.mxu0
  %v2737 = vpop.f32.mrf.mxu0
  %v2738 = vadd.f32 %v2402, %v2737
  %v2739 = vpop.f32.mrf.mxu0
  %2740 = vmatprep.mubr.bf16.mxu0 0
  %2741 = vmatmul.mubr.bf16.gmra.mxu0 %v2462
  %v2742 = vpop.f32.mrf.mxu0
  %v2743 = vadd.f32 %v2402, %v2742
  %v2744 = vpop.f32.mrf.mxu0
  %v2745 = vpop.f32.mrf.mxu0
  %v2746 = vadd.f32 %v2402, %v2745
  %v2747 = vpop.f32.mrf.mxu0
  %2748 = vmatprep.mubr.bf16.mxu0 0
  %2749 = vmatmul.mubr.bf16.gmra.mxu0 %v2465
  %v2750 = vpop.f32.mrf.mxu0
  %v2751 = vadd.f32 %v2402, %v2750
  %v2752 = vpop.f32.mrf.mxu0
  %v2753 = vpop.f32.mrf.mxu0
  %v2754 = vadd.f32 %v2402, %v2753
  %v2755 = vpop.f32.mrf.mxu0
  %2756 = vmatprep.mubr.bf16.mxu0 0
  %2757 = vmatmul.mubr.bf16.gmra.mxu0 %v2468
  %v2758 = vpop.f32.mrf.mxu0
  %v2759 = vadd.f32 %v2402, %v2758
  %v2760 = vpop.f32.mrf.mxu0
  %v2761 = vpop.f32.mrf.mxu0
  %v2762 = vadd.f32 %v2402, %v2761
  %v2763 = vpop.f32.mrf.mxu0
  %2764 = vmatprep.mubr.bf16.mxu0 0
  %2765 = vmatmul.mubr.bf16.gmra.mxu0 %v2471
  %v2766 = vpop.f32.mrf.mxu0
  %v2767 = vadd.f32 %v2402, %v2766
  %v2768 = vpop.f32.mrf.mxu0
  %v2769 = vpop.f32.mrf.mxu0
  %v2770 = vadd.f32 %v2402, %v2769
  %v2771 = vpop.f32.mrf.mxu0
  %2772 = vmatprep.mubr.bf16.mxu0 0
  %2773 = vmatmul.mubr.bf16.gmra.mxu0 %v2474
  %v2774 = vpop.f32.mrf.mxu0
  %v2775 = vadd.f32 %v2402, %v2774
  %v2776 = vpop.f32.mrf.mxu0
  %v2777 = vpop.f32.mrf.mxu0
  %v2778 = vadd.f32 %v2402, %v2777
  %v2779 = vpop.f32.mrf.mxu0
  %2780 = vmatprep.mubr.bf16.mxu0 0
  %2781 = vmatmul.mubr.bf16.gmra.mxu0 %v2477
  %v2782 = vpop.f32.mrf.mxu0
  %v2783 = vadd.f32 %v2402, %v2782
  %v2784 = vpop.f32.mrf.mxu0
  %v2785 = vpop.f32.mrf.mxu0
  %v2786 = vadd.f32 %v2402, %v2785
  %v2787 = vpop.f32.mrf.mxu0
  %2788 = vmatprep.mubr.bf16.mxu0 0
  %2789 = vmatmul.mubr.bf16.gmra.mxu0 %v2480
  %v2790 = vpop.f32.mrf.mxu0
  %v2791 = vadd.f32 %v2402, %v2790
  %v2792 = vpop.f32.mrf.mxu0
  %v2793 = vpop.f32.mrf.mxu0
  %v2794 = vadd.f32 %v2402, %v2793
  %v2795 = vpop.f32.mrf.mxu0
  %2796 = vmatprep.mubr.bf16.mxu0 0
  %2797 = vmatmul.mubr.bf16.gmra.mxu0 %v2483
  %v2798 = vpop.f32.mrf.mxu0
  %v2799 = vadd.f32 %v2402, %v2798
  %v2800 = vpop.f32.mrf.mxu0
  %v2801 = vpop.f32.mrf.mxu0
  %v2802 = vadd.f32 %v2402, %v2801
  %v2803 = vpop.f32.mrf.mxu0
  %2804 = vmatprep.mubr.bf16.mxu0 0
  %2805 = vmatmul.mubr.bf16.gmra.mxu0 %v2486
  %v2806 = vpop.f32.mrf.mxu0
  %v2807 = vadd.f32 %v2402, %v2806
  %v2808 = vpop.f32.mrf.mxu0
  %v2809 = vpop.f32.mrf.mxu0
  %v2810 = vadd.f32 %v2402, %v2809
  %v2811 = vpop.f32.mrf.mxu0
  %2812 = vmatprep.mubr.bf16.mxu0 0
  %2813 = vmatmul.mubr.bf16.gmra.mxu0 %v2489
  %v2814 = vpop.f32.mrf.mxu0
  %v2815 = vadd.f32 %v2402, %v2814
  %v2816 = vpop.f32.mrf.mxu0
  %v2817 = vpop.f32.mrf.mxu0
  %v2818 = vadd.f32 %v2402, %v2817
  %v2819 = vpop.f32.mrf.mxu0
  %2820 = vmatprep.mubr.bf16.mxu0 0
  %2821 = vmatmul.mubr.bf16.gmra.mxu0 %v2492
  %v2822 = vpop.f32.mrf.mxu0
  %v2823 = vadd.f32 %v2402, %v2822
  %v2824 = vpop.f32.mrf.mxu0
  %v2825 = vpop.f32.mrf.mxu0
  %v2826 = vadd.f32 %v2402, %v2825
  %v2827 = vpop.f32.mrf.mxu0
  %2828 = vmatprep.mubr.bf16.mxu0 0
  %2829 = vmatmul.mubr.bf16.gmra.mxu0 %v2495
  %v2830 = vpop.f32.mrf.mxu0
  %v2831 = vadd.f32 %v2402, %v2830
  %v2832 = vpop.f32.mrf.mxu0
  %v2833 = vpop.f32.mrf.mxu0
  %v2834 = vadd.f32 %v2402, %v2833
  %v2835 = vpop.f32.mrf.mxu0
  %2836 = vmatprep.mubr.bf16.mxu0 0
  %2837 = vmatmul.mubr.bf16.gmra.mxu0 %v2498
  %v2838 = vpop.f32.mrf.mxu0
  %v2839 = vadd.f32 %v2402, %v2838
  %v2840 = vpop.f32.mrf.mxu0
  %v2841 = vpop.f32.mrf.mxu0
  %v2842 = vadd.f32 %v2402, %v2841
  %v2843 = vpop.f32.mrf.mxu0
  %2844 = vmatprep.mubr.bf16.mxu0 0
  %2845 = vmatmul.mubr.bf16.gmra.mxu0 %v2501
  %v2846 = vpop.f32.mrf.mxu0
  %v2847 = vadd.f32 %v2402, %v2846
  %v2848 = vpop.f32.mrf.mxu0
  %v2849 = vpop.f32.mrf.mxu0
  %v2850 = vadd.f32 %v2402, %v2849
  %v2851 = vpop.f32.mrf.mxu0
  %2852 = vmatprep.mubr.bf16.mxu0 0
  %2853 = vmatmul.mubr.bf16.gmra.mxu0 %v2504
  %v2854 = vpop.f32.mrf.mxu0
  %v2855 = vadd.f32 %v2402, %v2854
  %v2856 = vpop.f32.mrf.mxu0
  %v2857 = vpop.f32.mrf.mxu0
  %v2858 = vadd.f32 %v2402, %v2857
  %v2859 = vpop.f32.mrf.mxu0
  %2860 = vmatprep.mubr.bf16.mxu0 0
  %2861 = vmatmul.mubr.bf16.gmra.mxu0 %v2507
  %v2862 = vpop.f32.mrf.mxu0
  %v2863 = vadd.f32 %v2402, %v2862
  %v2864 = vpop.f32.mrf.mxu0
  %v2865 = vpop.f32.mrf.mxu0
  %v2866 = vadd.f32 %v2402, %v2865
  %v2867 = vpop.f32.mrf.mxu0
  %2868 = vmatprep.mubr.bf16.mxu0 0
  %2869 = vmatmul.mubr.bf16.gmra.mxu0 %v2510
  %v2870 = vpop.f32.mrf.mxu0
  %v2871 = vadd.f32 %v2402, %v2870
  %v2872 = vpop.f32.mrf.mxu0
  %v2873 = vpop.f32.mrf.mxu0
  %v2874 = vadd.f32 %v2402, %v2873
  %v2875 = vpop.f32.mrf.mxu0
  %2876 = vmatprep.mubr.bf16.mxu0 0
  %2877 = vmatmul.mubr.bf16.gmra.mxu0 %v2513
  %v2878 = vpop.f32.mrf.mxu0
  %v2879 = vadd.f32 %v2402, %v2878
  %v2880 = vpop.f32.mrf.mxu0
  %v2881 = vpop.f32.mrf.mxu0
  %v2882 = vadd.f32 %v2402, %v2881
  %v2883 = vpop.f32.mrf.mxu0
  %2884 = vmatprep.mubr.bf16.mxu0 0
  %2885 = vmatmul.mubr.bf16.gmra.mxu0 %v2516
  %v2886 = vpop.f32.mrf.mxu0
  %v2887 = vadd.f32 %v2402, %v2886
  %v2888 = vpop.f32.mrf.mxu0
  %v2889 = vpop.f32.mrf.mxu0
  %v2890 = vadd.f32 %v2402, %v2889
  %v2891 = vpop.f32.mrf.mxu0
  %2892 = vmatprep.mubr.bf16.mxu0 0
  %2893 = vmatmul.mubr.bf16.gmra.mxu0 %v2519
  %v2894 = vpop.f32.mrf.mxu0
  %v2895 = vadd.f32 %v2402, %v2894
  %v2896 = vpop.f32.mrf.mxu0
  %v2897 = vpop.f32.mrf.mxu0
  %v2898 = vadd.f32 %v2402, %v2897
  %v2899 = vpop.f32.mrf.mxu0
  %2900 = vmatprep.mubr.bf16.mxu0 0
  %2901 = vmatmul.mubr.bf16.gmra.mxu0 %v2522
  %v2902 = vpop.f32.mrf.mxu0
  %v2903 = vadd.f32 %v2402, %v2902
  %v2904 = vpop.f32.mrf.mxu0
  %v2905 = vpop.f32.mrf.mxu0
  %v2906 = vadd.f32 %v2402, %v2905
  %v2907 = vpop.f32.mrf.mxu0
  %2908 = vmatprep.mubr.bf16.mxu0 0
  %2909 = vmatmul.mubr.bf16.gmra.mxu0 %v2525
  %v2910 = vpop.f32.mrf.mxu0
  %v2911 = vadd.f32 %v2402, %v2910
  %v2912 = vpop.f32.mrf.mxu0
  %v2913 = vpop.f32.mrf.mxu0
  %v2914 = vadd.f32 %v2402, %v2913
  %v2915 = vpop.f32.mrf.mxu0
  %2916 = vmatprep.mubr.bf16.mxu0 0
  %2917 = vmatmul.mubr.bf16.gmra.mxu0 %v2528
  %v2918 = vpop.f32.mrf.mxu0
  %v2919 = vadd.f32 %v2402, %v2918
  %v2920 = vpop.f32.mrf.mxu0
  %v2921 = vpop.f32.mrf.mxu0
  %v2922 = vadd.f32 %v2402, %v2921
  %v2923 = vpop.f32.mrf.mxu0
  %2924 = vmatprep.mubr.bf16.mxu0 0
  %2925 = vmatmul.mubr.bf16.gmra.mxu0 %v2531
  %v2926 = vpop.f32.mrf.mxu0
  %v2927 = vadd.f32 %v2402, %v2926
  %v2928 = vpop.f32.mrf.mxu0
  %v2929 = vpop.f32.mrf.mxu0
  %v2930 = vadd.f32 %v2402, %v2929
  %v2931 = vpop.f32.mrf.mxu0
  %2932 = vmatprep.mubr.bf16.mxu0 0
  %2933 = vmatmul.mubr.bf16.gmra.mxu0 %v2534
  %v2934 = vpop.f32.mrf.mxu0
  %v2935 = vadd.f32 %v2402, %v2934
  %v2936 = vpop.f32.mrf.mxu0
  %v2937 = vpop.f32.mrf.mxu0
  %v2938 = vadd.f32 %v2402, %v2937
  %v2939 = vpop.f32.mrf.mxu0
  %2940 = vmatprep.mubr.bf16.mxu0 0
  %2941 = vmatmul.mubr.bf16.gmra.mxu0 %v2537
  %v2942 = vpop.f32.mrf.mxu0
  %v2943 = vadd.f32 %v2402, %v2942
  %v2944 = vpop.f32.mrf.mxu0
  %v2945 = vpop.f32.mrf.mxu0
  %v2946 = vadd.f32 %v2402, %v2945
  %v2947 = vpop.f32.mrf.mxu0
  %2948 = vmatprep.mubr.bf16.mxu0 0
  %2949 = vmatmul.mubr.bf16.gmra.mxu0 %v2540
  %v2950 = vpop.f32.mrf.mxu0
  %v2951 = vadd.f32 %v2402, %v2950
  %v2952 = vpop.f32.mrf.mxu0
  %v2953 = vpop.f32.mrf.mxu0
  %v2954 = vadd.f32 %v2402, %v2953
  %v2955 = vpop.f32.mrf.mxu0
  %2956 = vmatprep.mubr.bf16.mxu0 0
  %2957 = vmatmul.mubr.bf16.gmra.mxu0 %v2543
  %v2958 = vpop.f32.mrf.mxu0
  %v2959 = vadd.f32 %v2402, %v2958
  %v2960 = vpop.f32.mrf.mxu0
  %v2961 = vpop.f32.mrf.mxu0
  %v2962 = vadd.f32 %v2402, %v2961
  %v2963 = vpop.f32.mrf.mxu0
  %2964 = vmatprep.mubr.bf16.mxu0 0
  %2965 = vmatmul.mubr.bf16.gmra.mxu0 %v2546
  %v2966 = vpop.f32.mrf.mxu0
  %v2967 = vadd.f32 %v2402, %v2966
  %v2968 = vpop.f32.mrf.mxu0
  %v2969 = vpop.f32.mrf.mxu0
  %v2970 = vadd.f32 %v2402, %v2969
  %v2971 = vpop.f32.mrf.mxu0
  %2972 = vmatprep.mubr.bf16.mxu0 0
  %2973 = vmatmul.mubr.bf16.gmra.mxu0 %v2549
  %v2974 = vpop.f32.mrf.mxu0
  %v2975 = vadd.f32 %v2402, %v2974
  %v2976 = vpop.f32.mrf.mxu0
  %v2977 = vpop.f32.mrf.mxu0
  %v2978 = vadd.f32 %v2402, %v2977
  %v2979 = vpop.f32.mrf.mxu0
  %2980 = vmatprep.mubr.bf16.mxu0 0
  %2981 = vmatmul.mubr.bf16.gmra.mxu0 %v2552
  %v2982 = vpop.f32.mrf.mxu0
  %v2983 = vadd.f32 %v2402, %v2982
  %v2984 = vpop.f32.mrf.mxu0
  %v2985 = vpop.f32.mrf.mxu0
  %v2986 = vadd.f32 %v2402, %v2985
  %v2987 = vpop.f32.mrf.mxu0
  %2988 = vmatprep.mubr.bf16.mxu0 0
  %2989 = vmatmul.mubr.bf16.gmra.mxu0 %v2555
  %v2990 = vpop.f32.mrf.mxu0
  %v2991 = vadd.f32 %v2402, %v2990
  %v2992 = vpop.f32.mrf.mxu0
  %v2993 = vpop.f32.mrf.mxu0
  %v2994 = vadd.f32 %v2402, %v2993
  %v2995 = vpop.f32.mrf.mxu0
  %2996 = vmatprep.mubr.bf16.mxu0 0
  %2997 = vmatmul.mubr.bf16.gmra.mxu0 %v2558
  %v2998 = vpop.f32.mrf.mxu0
  %v2999 = vadd.f32 %v2402, %v2998
  %v3000 = vpop.f32.mrf.mxu0
  %v3001 = vpop.f32.mrf.mxu0
  %v3002 = vadd.f32 %v2402, %v3001
  %v3003 = vpop.f32.mrf.mxu0
  %3004 = vmatprep.mubr.bf16.mxu0 0
  %3005 = vmatmul.mubr.bf16.gmra.mxu0 %v2561
  %v3006 = vpop.f32.mrf.mxu0
  %v3007 = vadd.f32 %v2402, %v3006
  %v3008 = vpop.f32.mrf.mxu0
  %v3009 = vpop.f32.mrf.mxu0
  %v3010 = vadd.f32 %v2402, %v3009
  %v3011 = vpop.f32.mrf.mxu0
  %3012 = vmatprep.mubr.bf16.mxu0 0
  %3013 = vmatmul.mubr.bf16.gmra.mxu0 %v2564
  %v3014 = vpop.f32.mrf.mxu0
  %v3015 = vadd.f32 %v2402, %v3014
  %v3016 = vpop.f32.mrf.mxu0
  %v3017 = vpop.f32.mrf.mxu0
  %v3018 = vadd.f32 %v2402, %v3017
  %v3019 = vpop.f32.mrf.mxu0
  %3020 = vmatprep.mubr.bf16.mxu0 0
  %3021 = vmatmul.mubr.bf16.gmra.mxu0 %v2567
  %v3022 = vpop.f32.mrf.mxu0
  %v3023 = vadd.f32 %v2402, %v3022
  %v3024 = vpop.f32.mrf.mxu0
  %v3025 = vpop.f32.mrf.mxu0
  %v3026 = vadd.f32 %v2402, %v3025
  %v3027 = vpop.f32.mrf.mxu0
  %3028 = vmatprep.mubr.bf16.mxu0 0
  %3029 = vmatmul.mubr.bf16.gmra.mxu0 %v2570
  %v3030 = vpop.f32.mrf.mxu0
  %v3031 = vadd.f32 %v2402, %v3030
  %v3032 = vpop.f32.mrf.mxu0
  %v3033 = vpop.f32.mrf.mxu0
  %v3034 = vadd.f32 %v2402, %v3033
  %v3035 = vpop.f32.mrf.mxu0
  %3036 = vmatprep.mubr.bf16.mxu0 0
  %3037 = vmatmul.mubr.bf16.gmra.mxu0 %v2573
  %v3038 = vpop.f32.mrf.mxu0
  %v3039 = vadd.f32 %v2402, %v3038
  %v3040 = vpop.f32.mrf.mxu0
  %v3041 = vpop.f32.mrf.mxu0
  %v3042 = vadd.f32 %v2402, %v3041
  %v3043 = vpop.f32.mrf.mxu0
  %3044 = vmatprep.mubr.bf16.mxu0 0
  %3045 = vmatmul.mubr.bf16.gmra.mxu0 %v2576
  %v3046 = vpop.f32.mrf.mxu0
  %v3047 = vadd.f32 %v2402, %v3046
  %v3048 = vpop.f32.mrf.mxu0
  %v3049 = vpop.f32.mrf.mxu0
  %v3050 = vadd.f32 %v2402, %v3049
  %v3051 = vpop.f32.mrf.mxu0
  %3052 = vmatprep.mubr.bf16.mxu0 0
  %3053 = vmatmul.mubr.bf16.gmra.mxu0 %v2579
  %v3054 = vpop.f32.mrf.mxu0
  %v3055 = vadd.f32 %v2402, %v3054
  %v3056 = vpop.f32.mrf.mxu0
  %v3057 = vpop.f32.mrf.mxu0
  %v3058 = vadd.f32 %v2402, %v3057
  %v3059 = vpop.f32.mrf.mxu0
  %3060 = vmatprep.mubr.bf16.mxu0 0
  %3061 = vmatmul.mubr.bf16.gmra.mxu0 %v2582
  %v3062 = vpop.f32.mrf.mxu0
  %v3063 = vadd.f32 %v2402, %v3062
  %v3064 = vpop.f32.mrf.mxu0
  %v3065 = vpop.f32.mrf.mxu0
  %v3066 = vadd.f32 %v2402, %v3065
  %v3067 = vpop.f32.mrf.mxu0
  %3068 = vmatprep.mubr.bf16.mxu0 0
  %3069 = vmatmul.mubr.bf16.gmra.mxu0 %v2585
  %v3070 = vpop.f32.mrf.mxu0
  %v3071 = vadd.f32 %v2402, %v3070
  %v3072 = vpop.f32.mrf.mxu0
  %v3073 = vpop.f32.mrf.mxu0
  %v3074 = vadd.f32 %v2402, %v3073
  %v3075 = vpop.f32.mrf.mxu0
  %3076 = vmatprep.mubr.bf16.mxu0 0
  %3077 = vmatmul.mubr.bf16.gmra.mxu0 %v2588
  %v3078 = vpop.f32.mrf.mxu0
  %v3079 = vadd.f32 %v2402, %v3078
  %v3080 = vpop.f32.mrf.mxu0
  %v3081 = vpop.f32.mrf.mxu0
  %v3082 = vadd.f32 %v2402, %v3081
  %v3083 = vpop.f32.mrf.mxu0
  %3084 = vmatprep.mubr.bf16.mxu0 0
  %3085 = vmatmul.mubr.bf16.gmra.mxu0 %v2591
  %v3086 = vpop.f32.mrf.mxu0
  %v3087 = vadd.f32 %v2402, %v3086
  %v3088 = vpop.f32.mrf.mxu0
  %v3089 = vpop.f32.mrf.mxu0
  %v3090 = vadd.f32 %v2402, %v3089
  %v3091 = vpop.f32.mrf.mxu0
  %3092 = vmatprep.mubr.bf16.mxu0 0
  %3093 = vmatmul.mubr.bf16.gmra.mxu0 %v2594
  %v3094 = vpop.f32.mrf.mxu0
  %v3095 = vadd.f32 %v2402, %v3094
  %v3096 = vpop.f32.mrf.mxu0
  %v3097 = vpop.f32.mrf.mxu0
  %v3098 = vadd.f32 %v2402, %v3097
  %v3099 = vpop.f32.mrf.mxu0
  %3100 = vmatprep.mubr.bf16.mxu0 0
  %3101 = vmatmul.mubr.bf16.gmra.mxu0 %v2597
  %v3102 = vpop.f32.mrf.mxu0
  %v3103 = vadd.f32 %v2402, %v3102
  %v3104 = vpop.f32.mrf.mxu0
  %v3105 = vpop.f32.mrf.mxu0
  %v3106 = vadd.f32 %v2402, %v3105
  %v3107 = vpop.f32.mrf.mxu0
  %3108 = vmatprep.mubr.bf16.mxu0 0
  %3109 = vmatmul.mubr.bf16.gmra.mxu0 %v2600
  %v3110 = vpop.f32.mrf.mxu0
  %v3111 = vadd.f32 %v2402, %v3110
  %v3112 = vpop.f32.mrf.mxu0
  %v3113 = vpop.f32.mrf.mxu0
  %v3114 = vadd.f32 %v2402, %v3113
  %v3115 = vpop.f32.mrf.mxu0
  %3116 = vmatprep.mubr.bf16.mxu0 0
  %3117 = vmatmul.mubr.bf16.gmra.mxu0 %v2603
  %v3118 = vpop.f32.mrf.mxu0
  %v3119 = vadd.f32 %v2402, %v3118
  %v3120 = vpop.f32.mrf.mxu0
  %v3121 = vpop.f32.mrf.mxu0
  %v3122 = vadd.f32 %v2402, %v3121
  %v3123 = vpop.f32.mrf.mxu0
  %3124 = vmatprep.mubr.bf16.mxu0 0
  %3125 = vmatmul.mubr.bf16.gmra.mxu0 %v2606
  %v3126 = vpop.f32.mrf.mxu0
  %v3127 = vadd.f32 %v2402, %v3126
  %v3128 = vpop.f32.mrf.mxu0
  %v3129 = vpop.f32.mrf.mxu0
  %v3130 = vadd.f32 %v2402, %v3129
  %v3131 = vpop.f32.mrf.mxu0
  %3132 = vmatprep.mubr.bf16.mxu0 0
  %3133 = vmatmul.mubr.bf16.gmra.mxu0 %v2609
  %v3134 = vpop.f32.mrf.mxu0
  %v3135 = vadd.f32 %v2402, %v3134
  %v3136 = vpop.f32.mrf.mxu0
  %v3137 = vpop.f32.mrf.mxu0
  %v3138 = vadd.f32 %v2402, %v3137
  %v3139 = vpop.f32.mrf.mxu0
  %3140 = vmatprep.mubr.bf16.mxu0 0
  %3141 = vmatmul.mubr.bf16.gmra.mxu0 %v2612
  %v3142 = vpop.f32.mrf.mxu0
  %v3143 = vadd.f32 %v2402, %v3142
  %v3144 = vpop.f32.mrf.mxu0
  %v3145 = vpop.f32.mrf.mxu0
  %v3146 = vadd.f32 %v2402, %v3145
  %v3147 = vpop.f32.mrf.mxu0
  %3148 = vmatprep.mubr.bf16.mxu0 0
  %3149 = vmatmul.mubr.bf16.gmra.mxu0 %v2615
  %v3150 = vpop.f32.mrf.mxu0
  %v3151 = vadd.f32 %v2402, %v3150
  %v3152 = vpop.f32.mrf.mxu0
  %v3153 = vpop.f32.mrf.mxu0
  %v3154 = vadd.f32 %v2402, %v3153
  %v3155 = vpop.f32.mrf.mxu0
  %3156 = vmatprep.mubr.bf16.mxu0 0
  %3157 = vmatmul.mubr.bf16.gmra.mxu0 %v2618
  %v3158 = vpop.f32.mrf.mxu0
  %v3159 = vadd.f32 %v2402, %v3158
  %v3160 = vpop.f32.mrf.mxu0
  %v3161 = vpop.f32.mrf.mxu0
  %v3162 = vadd.f32 %v2402, %v3161
  %v3163 = vpop.f32.mrf.mxu0
  %3164 = vdwg.mxu0
  %v3165 = vld [vmem:[%s1] sm:$0xff]
  %v3166 = vld [vmem:[%s1 + $0x8] sm:$0xff]
  %v3167 = vld [vmem:[%s1 + $0x10] sm:$0xff]
  %v3168 = vld [vmem:[%s1 + $0x18] sm:$0xff]
  %v3169 = vlaneseq
  %v3170 = vshrl.u32 %v3169, 7
  %v3171 = vsub.s32 0, %v3170
  %v3172 = vrot.slane %v3165, %v3171
  %3174 = vbcast.lane.b32.xlu0 %v3172, 256
  %v3175 = vpop.permute.xlu0 %3174
  %s3177 = sor.u32 256, 8
  %3178 = vbcast.lane.b32.xlu0 %v3172, %s3177
  %v3179 = vpop.permute.xlu0 %3178
  %s3181 = sor.u32 256, 16
  %3182 = vbcast.lane.b32.xlu0 %v3172, %s3181
  %v3183 = vpop.permute.xlu0 %3182
  %s3185 = sor.u32 256, 24
  %3186 = vbcast.lane.b32.xlu0 %v3172, %s3185
  %v3187 = vpop.permute.xlu0 %3186
  %v3188 = vlaneseq
  %v3189 = vshrl.u32 %v3188, 7
  %v3190 = vsub.s32 1, %v3189
  %v3191 = vrot.slane %v3165, %v3190
  %3193 = vbcast.lane.b32.xlu0 %v3191, 256
  %v3194 = vpop.permute.xlu0 %3193
  %s3196 = sor.u32 256, 8
  %3197 = vbcast.lane.b32.xlu0 %v3191, %s3196
  %v3198 = vpop.permute.xlu0 %3197
  %s3200 = sor.u32 256, 16
  %3201 = vbcast.lane.b32.xlu0 %v3191, %s3200
  %v3202 = vpop.permute.xlu0 %3201
  %s3204 = sor.u32 256, 24
  %3205 = vbcast.lane.b32.xlu0 %v3191, %s3204
  %v3206 = vpop.permute.xlu0 %3205
  %v3207 = vlaneseq
  %v3208 = vshrl.u32 %v3207, 7
  %v3209 = vsub.s32 2, %v3208
  %v3210 = vrot.slane %v3165, %v3209
  %3212 = vbcast.lane.b32.xlu0 %v3210, 256
  %v3213 = vpop.permute.xlu0 %3212
  %s3215 = sor.u32 256, 8
  %3216 = vbcast.lane.b32.xlu0 %v3210, %s3215
  %v3217 = vpop.permute.xlu0 %3216
  %s3219 = sor.u32 256, 16
  %3220 = vbcast.lane.b32.xlu0 %v3210, %s3219
  %v3221 = vpop.permute.xlu0 %3220
  %s3223 = sor.u32 256, 24
  %3224 = vbcast.lane.b32.xlu0 %v3210, %s3223
  %v3225 = vpop.permute.xlu0 %3224
  %v3226 = vlaneseq
  %v3227 = vshrl.u32 %v3226, 7
  %v3228 = vsub.s32 3, %v3227
  %v3229 = vrot.slane %v3165, %v3228
  %3231 = vbcast.lane.b32.xlu0 %v3229, 256
  %v3232 = vpop.permute.xlu0 %3231
  %s3234 = sor.u32 256, 8
  %3235 = vbcast.lane.b32.xlu0 %v3229, %s3234
  %v3236 = vpop.permute.xlu0 %3235
  %s3238 = sor.u32 256, 16
  %3239 = vbcast.lane.b32.xlu0 %v3229, %s3238
  %v3240 = vpop.permute.xlu0 %3239
  %s3242 = sor.u32 256, 24
  %3243 = vbcast.lane.b32.xlu0 %v3229, %s3242
  %v3244 = vpop.permute.xlu0 %3243
  %v3245 = vlaneseq
  %v3246 = vshrl.u32 %v3245, 7
  %v3247 = vsub.s32 4, %v3246
  %v3248 = vrot.slane %v3165, %v3247
  %3250 = vbcast.lane.b32.xlu0 %v3248, 256
  %v3251 = vpop.permute.xlu0 %3250
  %s3253 = sor.u32 256, 8
  %3254 = vbcast.lane.b32.xlu0 %v3248, %s3253
  %v3255 = vpop.permute.xlu0 %3254
  %s3257 = sor.u32 256, 16
  %3258 = vbcast.lane.b32.xlu0 %v3248, %s3257
  %v3259 = vpop.permute.xlu0 %3258
  %s3261 = sor.u32 256, 24
  %3262 = vbcast.lane.b32.xlu0 %v3248, %s3261
  %v3263 = vpop.permute.xlu0 %3262
  %v3264 = vlaneseq
  %v3265 = vshrl.u32 %v3264, 7
  %v3266 = vsub.s32 5, %v3265
  %v3267 = vrot.slane %v3165, %v3266
  %3269 = vbcast.lane.b32.xlu0 %v3267, 256
  %v3270 = vpop.permute.xlu0 %3269
  %s3272 = sor.u32 256, 8
  %3273 = vbcast.lane.b32.xlu0 %v3267, %s3272
  %v3274 = vpop.permute.xlu0 %3273
  %s3276 = sor.u32 256, 16
  %3277 = vbcast.lane.b32.xlu0 %v3267, %s3276
  %v3278 = vpop.permute.xlu0 %3277
  %s3280 = sor.u32 256, 24
  %3281 = vbcast.lane.b32.xlu0 %v3267, %s3280
  %v3282 = vpop.permute.xlu0 %3281
  %v3283 = vlaneseq
  %v3284 = vshrl.u32 %v3283, 7
  %v3285 = vsub.s32 6, %v3284
  %v3286 = vrot.slane %v3165, %v3285
  %3288 = vbcast.lane.b32.xlu0 %v3286, 256
  %v3289 = vpop.permute.xlu0 %3288
  %s3291 = sor.u32 256, 8
  %3292 = vbcast.lane.b32.xlu0 %v3286, %s3291
  %v3293 = vpop.permute.xlu0 %3292
  %s3295 = sor.u32 256, 16
  %3296 = vbcast.lane.b32.xlu0 %v3286, %s3295
  %v3297 = vpop.permute.xlu0 %3296
  %s3299 = sor.u32 256, 24
  %3300 = vbcast.lane.b32.xlu0 %v3286, %s3299
  %v3301 = vpop.permute.xlu0 %3300
  %v3302 = vlaneseq
  %v3303 = vshrl.u32 %v3302, 7
  %v3304 = vsub.s32 7, %v3303
  %v3305 = vrot.slane %v3165, %v3304
  %3307 = vbcast.lane.b32.xlu0 %v3305, 256
  %v3308 = vpop.permute.xlu0 %3307
  %s3310 = sor.u32 256, 8
  %3311 = vbcast.lane.b32.xlu0 %v3305, %s3310
  %v3312 = vpop.permute.xlu0 %3311
  %s3314 = sor.u32 256, 16
  %3315 = vbcast.lane.b32.xlu0 %v3305, %s3314
  %v3316 = vpop.permute.xlu0 %3315
  %s3318 = sor.u32 256, 24
  %3319 = vbcast.lane.b32.xlu0 %v3305, %s3318
  %v3320 = vpop.permute.xlu0 %3319
  %v3321 = vlaneseq
  %v3322 = vshrl.u32 %v3321, 7
  %v3323 = vsub.s32 0, %v3322
  %v3324 = vrot.slane %v3166, %v3323
  %3326 = vbcast.lane.b32.xlu0 %v3324, 256
  %v3327 = vpop.permute.xlu0 %3326
  %s3329 = sor.u32 256, 8
  %3330 = vbcast.lane.b32.xlu0 %v3324, %s3329
  %v3331 = vpop.permute.xlu0 %3330
  %s3333 = sor.u32 256, 16
  %3334 = vbcast.lane.b32.xlu0 %v3324, %s3333
  %v3335 = vpop.permute.xlu0 %3334
  %s3337 = sor.u32 256, 24
  %3338 = vbcast.lane.b32.xlu0 %v3324, %s3337
  %v3339 = vpop.permute.xlu0 %3338
  %v3340 = vlaneseq
  %v3341 = vshrl.u32 %v3340, 7
  %v3342 = vsub.s32 1, %v3341
  %v3343 = vrot.slane %v3166, %v3342
  %3345 = vbcast.lane.b32.xlu0 %v3343, 256
  %v3346 = vpop.permute.xlu0 %3345
  %s3348 = sor.u32 256, 8
  %3349 = vbcast.lane.b32.xlu0 %v3343, %s3348
  %v3350 = vpop.permute.xlu0 %3349
  %s3352 = sor.u32 256, 16
  %3353 = vbcast.lane.b32.xlu0 %v3343, %s3352
  %v3354 = vpop.permute.xlu0 %3353
  %s3356 = sor.u32 256, 24
  %3357 = vbcast.lane.b32.xlu0 %v3343, %s3356
  %v3358 = vpop.permute.xlu0 %3357
  %v3359 = vlaneseq
  %v3360 = vshrl.u32 %v3359, 7
  %v3361 = vsub.s32 2, %v3360
  %v3362 = vrot.slane %v3166, %v3361
  %3364 = vbcast.lane.b32.xlu0 %v3362, 256
  %v3365 = vpop.permute.xlu0 %3364
  %s3367 = sor.u32 256, 8
  %3368 = vbcast.lane.b32.xlu0 %v3362, %s3367
  %v3369 = vpop.permute.xlu0 %3368
  %s3371 = sor.u32 256, 16
  %3372 = vbcast.lane.b32.xlu0 %v3362, %s3371
  %v3373 = vpop.permute.xlu0 %3372
  %s3375 = sor.u32 256, 24
  %3376 = vbcast.lane.b32.xlu0 %v3362, %s3375
  %v3377 = vpop.permute.xlu0 %3376
  %v3378 = vlaneseq
  %v3379 = vshrl.u32 %v3378, 7
  %v3380 = vsub.s32 3, %v3379
  %v3381 = vrot.slane %v3166, %v3380
  %3383 = vbcast.lane.b32.xlu0 %v3381, 256
  %v3384 = vpop.permute.xlu0 %3383
  %s3386 = sor.u32 256, 8
  %3387 = vbcast.lane.b32.xlu0 %v3381, %s3386
  %v3388 = vpop.permute.xlu0 %3387
  %s3390 = sor.u32 256, 16
  %3391 = vbcast.lane.b32.xlu0 %v3381, %s3390
  %v3392 = vpop.permute.xlu0 %3391
  %s3394 = sor.u32 256, 24
  %3395 = vbcast.lane.b32.xlu0 %v3381, %s3394
  %v3396 = vpop.permute.xlu0 %3395
  %v3397 = vlaneseq
  %v3398 = vshrl.u32 %v3397, 7
  %v3399 = vsub.s32 4, %v3398
  %v3400 = vrot.slane %v3166, %v3399
  %3402 = vbcast.lane.b32.xlu0 %v3400, 256
  %v3403 = vpop.permute.xlu0 %3402
  %s3405 = sor.u32 256, 8
  %3406 = vbcast.lane.b32.xlu0 %v3400, %s3405
  %v3407 = vpop.permute.xlu0 %3406
  %s3409 = sor.u32 256, 16
  %3410 = vbcast.lane.b32.xlu0 %v3400, %s3409
  %v3411 = vpop.permute.xlu0 %3410
  %s3413 = sor.u32 256, 24
  %3414 = vbcast.lane.b32.xlu0 %v3400, %s3413
  %v3415 = vpop.permute.xlu0 %3414
  %v3416 = vlaneseq
  %v3417 = vshrl.u32 %v3416, 7
  %v3418 = vsub.s32 5, %v3417
  %v3419 = vrot.slane %v3166, %v3418
  %3421 = vbcast.lane.b32.xlu0 %v3419, 256
  %v3422 = vpop.permute.xlu0 %3421
  %s3424 = sor.u32 256, 8
  %3425 = vbcast.lane.b32.xlu0 %v3419, %s3424
  %v3426 = vpop.permute.xlu0 %3425
  %s3428 = sor.u32 256, 16
  %3429 = vbcast.lane.b32.xlu0 %v3419, %s3428
  %v3430 = vpop.permute.xlu0 %3429
  %s3432 = sor.u32 256, 24
  %3433 = vbcast.lane.b32.xlu0 %v3419, %s3432
  %v3434 = vpop.permute.xlu0 %3433
  %v3435 = vlaneseq
  %v3436 = vshrl.u32 %v3435, 7
  %v3437 = vsub.s32 6, %v3436
  %v3438 = vrot.slane %v3166, %v3437
  %3440 = vbcast.lane.b32.xlu0 %v3438, 256
  %v3441 = vpop.permute.xlu0 %3440
  %s3443 = sor.u32 256, 8
  %3444 = vbcast.lane.b32.xlu0 %v3438, %s3443
  %v3445 = vpop.permute.xlu0 %3444
  %s3447 = sor.u32 256, 16
  %3448 = vbcast.lane.b32.xlu0 %v3438, %s3447
  %v3449 = vpop.permute.xlu0 %3448
  %s3451 = sor.u32 256, 24
  %3452 = vbcast.lane.b32.xlu0 %v3438, %s3451
  %v3453 = vpop.permute.xlu0 %3452
  %v3454 = vlaneseq
  %v3455 = vshrl.u32 %v3454, 7
  %v3456 = vsub.s32 7, %v3455
  %v3457 = vrot.slane %v3166, %v3456
  %3459 = vbcast.lane.b32.xlu0 %v3457, 256
  %v3460 = vpop.permute.xlu0 %3459
  %s3462 = sor.u32 256, 8
  %3463 = vbcast.lane.b32.xlu0 %v3457, %s3462
  %v3464 = vpop.permute.xlu0 %3463
  %s3466 = sor.u32 256, 16
  %3467 = vbcast.lane.b32.xlu0 %v3457, %s3466
  %v3468 = vpop.permute.xlu0 %3467
  %s3470 = sor.u32 256, 24
  %3471 = vbcast.lane.b32.xlu0 %v3457, %s3470
  %v3472 = vpop.permute.xlu0 %3471
  %v3473 = vlaneseq
  %v3474 = vshrl.u32 %v3473, 7
  %v3475 = vsub.s32 0, %v3474
  %v3476 = vrot.slane %v3167, %v3475
  %3478 = vbcast.lane.b32.xlu0 %v3476, 256
  %v3479 = vpop.permute.xlu0 %3478
  %s3481 = sor.u32 256, 8
  %3482 = vbcast.lane.b32.xlu0 %v3476, %s3481
  %v3483 = vpop.permute.xlu0 %3482
  %s3485 = sor.u32 256, 16
  %3486 = vbcast.lane.b32.xlu0 %v3476, %s3485
  %v3487 = vpop.permute.xlu0 %3486
  %s3489 = sor.u32 256, 24
  %3490 = vbcast.lane.b32.xlu0 %v3476, %s3489
  %v3491 = vpop.permute.xlu0 %3490
  %v3492 = vlaneseq
  %v3493 = vshrl.u32 %v3492, 7
  %v3494 = vsub.s32 1, %v3493
  %v3495 = vrot.slane %v3167, %v3494
  %3497 = vbcast.lane.b32.xlu0 %v3495, 256
  %v3498 = vpop.permute.xlu0 %3497
  %s3500 = sor.u32 256, 8
  %3501 = vbcast.lane.b32.xlu0 %v3495, %s3500
  %v3502 = vpop.permute.xlu0 %3501
  %s3504 = sor.u32 256, 16
  %3505 = vbcast.lane.b32.xlu0 %v3495, %s3504
  %v3506 = vpop.permute.xlu0 %3505
  %s3508 = sor.u32 256, 24
  %3509 = vbcast.lane.b32.xlu0 %v3495, %s3508
  %v3510 = vpop.permute.xlu0 %3509
  %v3511 = vlaneseq
  %v3512 = vshrl.u32 %v3511, 7
  %v3513 = vsub.s32 2, %v3512
  %v3514 = vrot.slane %v3167, %v3513
  %3516 = vbcast.lane.b32.xlu0 %v3514, 256
  %v3517 = vpop.permute.xlu0 %3516
  %s3519 = sor.u32 256, 8
  %3520 = vbcast.lane.b32.xlu0 %v3514, %s3519
  %v3521 = vpop.permute.xlu0 %3520
  %s3523 = sor.u32 256, 16
  %3524 = vbcast.lane.b32.xlu0 %v3514, %s3523
  %v3525 = vpop.permute.xlu0 %3524
  %s3527 = sor.u32 256, 24
  %3528 = vbcast.lane.b32.xlu0 %v3514, %s3527
  %v3529 = vpop.permute.xlu0 %3528
  %v3530 = vlaneseq
  %v3531 = vshrl.u32 %v3530, 7
  %v3532 = vsub.s32 3, %v3531
  %v3533 = vrot.slane %v3167, %v3532
  %3535 = vbcast.lane.b32.xlu0 %v3533, 256
  %v3536 = vpop.permute.xlu0 %3535
  %s3538 = sor.u32 256, 8
  %3539 = vbcast.lane.b32.xlu0 %v3533, %s3538
  %v3540 = vpop.permute.xlu0 %3539
  %s3542 = sor.u32 256, 16
  %3543 = vbcast.lane.b32.xlu0 %v3533, %s3542
  %v3544 = vpop.permute.xlu0 %3543
  %s3546 = sor.u32 256, 24
  %3547 = vbcast.lane.b32.xlu0 %v3533, %s3546
  %v3548 = vpop.permute.xlu0 %3547
  %v3549 = vlaneseq
  %v3550 = vshrl.u32 %v3549, 7
  %v3551 = vsub.s32 4, %v3550
  %v3552 = vrot.slane %v3167, %v3551
  %3554 = vbcast.lane.b32.xlu0 %v3552, 256
  %v3555 = vpop.permute.xlu0 %3554
  %s3557 = sor.u32 256, 8
  %3558 = vbcast.lane.b32.xlu0 %v3552, %s3557
  %v3559 = vpop.permute.xlu0 %3558
  %s3561 = sor.u32 256, 16
  %3562 = vbcast.lane.b32.xlu0 %v3552, %s3561
  %v3563 = vpop.permute.xlu0 %3562
  %s3565 = sor.u32 256, 24
  %3566 = vbcast.lane.b32.xlu0 %v3552, %s3565
  %v3567 = vpop.permute.xlu0 %3566
  %v3568 = vlaneseq
  %v3569 = vshrl.u32 %v3568, 7
  %v3570 = vsub.s32 5, %v3569
  %v3571 = vrot.slane %v3167, %v3570
  %3573 = vbcast.lane.b32.xlu0 %v3571, 256
  %v3574 = vpop.permute.xlu0 %3573
  %s3576 = sor.u32 256, 8
  %3577 = vbcast.lane.b32.xlu0 %v3571, %s3576
  %v3578 = vpop.permute.xlu0 %3577
  %s3580 = sor.u32 256, 16
  %3581 = vbcast.lane.b32.xlu0 %v3571, %s3580
  %v3582 = vpop.permute.xlu0 %3581
  %s3584 = sor.u32 256, 24
  %3585 = vbcast.lane.b32.xlu0 %v3571, %s3584
  %v3586 = vpop.permute.xlu0 %3585
  %v3587 = vlaneseq
  %v3588 = vshrl.u32 %v3587, 7
  %v3589 = vsub.s32 6, %v3588
  %v3590 = vrot.slane %v3167, %v3589
  %3592 = vbcast.lane.b32.xlu0 %v3590, 256
  %v3593 = vpop.permute.xlu0 %3592
  %s3595 = sor.u32 256, 8
  %3596 = vbcast.lane.b32.xlu0 %v3590, %s3595
  %v3597 = vpop.permute.xlu0 %3596
  %s3599 = sor.u32 256, 16
  %3600 = vbcast.lane.b32.xlu0 %v3590, %s3599
  %v3601 = vpop.permute.xlu0 %3600
  %s3603 = sor.u32 256, 24
  %3604 = vbcast.lane.b32.xlu0 %v3590, %s3603
  %v3605 = vpop.permute.xlu0 %3604
  %v3606 = vlaneseq
  %v3607 = vshrl.u32 %v3606, 7
  %v3608 = vsub.s32 7, %v3607
  %v3609 = vrot.slane %v3167, %v3608
  %3611 = vbcast.lane.b32.xlu0 %v3609, 256
  %v3612 = vpop.permute.xlu0 %3611
  %s3614 = sor.u32 256, 8
  %3615 = vbcast.lane.b32.xlu0 %v3609, %s3614
  %v3616 = vpop.permute.xlu0 %3615
  %s3618 = sor.u32 256, 16
  %3619 = vbcast.lane.b32.xlu0 %v3609, %s3618
  %v3620 = vpop.permute.xlu0 %3619
  %s3622 = sor.u32 256, 24
  %3623 = vbcast.lane.b32.xlu0 %v3609, %s3622
  %v3624 = vpop.permute.xlu0 %3623
  %v3625 = vlaneseq
  %v3626 = vshrl.u32 %v3625, 7
  %v3627 = vsub.s32 0, %v3626
  %v3628 = vrot.slane %v3168, %v3627
  %3630 = vbcast.lane.b32.xlu0 %v3628, 256
  %v3631 = vpop.permute.xlu0 %3630
  %s3633 = sor.u32 256, 8
  %3634 = vbcast.lane.b32.xlu0 %v3628, %s3633
  %v3635 = vpop.permute.xlu0 %3634
  %s3637 = sor.u32 256, 16
  %3638 = vbcast.lane.b32.xlu0 %v3628, %s3637
  %v3639 = vpop.permute.xlu0 %3638
  %s3641 = sor.u32 256, 24
  %3642 = vbcast.lane.b32.xlu0 %v3628, %s3641
  %v3643 = vpop.permute.xlu0 %3642
  %v3644 = vlaneseq
  %v3645 = vshrl.u32 %v3644, 7
  %v3646 = vsub.s32 1, %v3645
  %v3647 = vrot.slane %v3168, %v3646
  %3649 = vbcast.lane.b32.xlu0 %v3647, 256
  %v3650 = vpop.permute.xlu0 %3649
  %s3652 = sor.u32 256, 8
  %3653 = vbcast.lane.b32.xlu0 %v3647, %s3652
  %v3654 = vpop.permute.xlu0 %3653
  %s3656 = sor.u32 256, 16
  %3657 = vbcast.lane.b32.xlu0 %v3647, %s3656
  %v3658 = vpop.permute.xlu0 %3657
  %s3660 = sor.u32 256, 24
  %3661 = vbcast.lane.b32.xlu0 %v3647, %s3660
  %v3662 = vpop.permute.xlu0 %3661
  %v3663 = vlaneseq
  %v3664 = vshrl.u32 %v3663, 7
  %v3665 = vsub.s32 2, %v3664
  %v3666 = vrot.slane %v3168, %v3665
  %3668 = vbcast.lane.b32.xlu0 %v3666, 256
  %v3669 = vpop.permute.xlu0 %3668
  %s3671 = sor.u32 256, 8
  %3672 = vbcast.lane.b32.xlu0 %v3666, %s3671
  %v3673 = vpop.permute.xlu0 %3672
  %s3675 = sor.u32 256, 16
  %3676 = vbcast.lane.b32.xlu0 %v3666, %s3675
  %v3677 = vpop.permute.xlu0 %3676
  %s3679 = sor.u32 256, 24
  %3680 = vbcast.lane.b32.xlu0 %v3666, %s3679
  %v3681 = vpop.permute.xlu0 %3680
  %v3682 = vlaneseq
  %v3683 = vshrl.u32 %v3682, 7
  %v3684 = vsub.s32 3, %v3683
  %v3685 = vrot.slane %v3168, %v3684
  %3687 = vbcast.lane.b32.xlu0 %v3685, 256
  %v3688 = vpop.permute.xlu0 %3687
  %s3690 = sor.u32 256, 8
  %3691 = vbcast.lane.b32.xlu0 %v3685, %s3690
  %v3692 = vpop.permute.xlu0 %3691
  %s3694 = sor.u32 256, 16
  %3695 = vbcast.lane.b32.xlu0 %v3685, %s3694
  %v3696 = vpop.permute.xlu0 %3695
  %s3698 = sor.u32 256, 24
  %3699 = vbcast.lane.b32.xlu0 %v3685, %s3698
  %v3700 = vpop.permute.xlu0 %3699
  %v3701 = vlaneseq
  %v3702 = vshrl.u32 %v3701, 7
  %v3703 = vsub.s32 4, %v3702
  %v3704 = vrot.slane %v3168, %v3703
  %3706 = vbcast.lane.b32.xlu0 %v3704, 256
  %v3707 = vpop.permute.xlu0 %3706
  %s3709 = sor.u32 256, 8
  %3710 = vbcast.lane.b32.xlu0 %v3704, %s3709
  %v3711 = vpop.permute.xlu0 %3710
  %s3713 = sor.u32 256, 16
  %3714 = vbcast.lane.b32.xlu0 %v3704, %s3713
  %v3715 = vpop.permute.xlu0 %3714
  %s3717 = sor.u32 256, 24
  %3718 = vbcast.lane.b32.xlu0 %v3704, %s3717
  %v3719 = vpop.permute.xlu0 %3718
  %v3720 = vlaneseq
  %v3721 = vshrl.u32 %v3720, 7
  %v3722 = vsub.s32 5, %v3721
  %v3723 = vrot.slane %v3168, %v3722
  %3725 = vbcast.lane.b32.xlu0 %v3723, 256
  %v3726 = vpop.permute.xlu0 %3725
  %s3728 = sor.u32 256, 8
  %3729 = vbcast.lane.b32.xlu0 %v3723, %s3728
  %v3730 = vpop.permute.xlu0 %3729
  %s3732 = sor.u32 256, 16
  %3733 = vbcast.lane.b32.xlu0 %v3723, %s3732
  %v3734 = vpop.permute.xlu0 %3733
  %s3736 = sor.u32 256, 24
  %3737 = vbcast.lane.b32.xlu0 %v3723, %s3736
  %v3738 = vpop.permute.xlu0 %3737
  %v3739 = vlaneseq
  %v3740 = vshrl.u32 %v3739, 7
  %v3741 = vsub.s32 6, %v3740
  %v3742 = vrot.slane %v3168, %v3741
  %3744 = vbcast.lane.b32.xlu0 %v3742, 256
  %v3745 = vpop.permute.xlu0 %3744
  %s3747 = sor.u32 256, 8
  %3748 = vbcast.lane.b32.xlu0 %v3742, %s3747
  %v3749 = vpop.permute.xlu0 %3748
  %s3751 = sor.u32 256, 16
  %3752 = vbcast.lane.b32.xlu0 %v3742, %s3751
  %v3753 = vpop.permute.xlu0 %3752
  %s3755 = sor.u32 256, 24
  %3756 = vbcast.lane.b32.xlu0 %v3742, %s3755
  %v3757 = vpop.permute.xlu0 %3756
  %v3758 = vlaneseq
  %v3759 = vshrl.u32 %v3758, 7
  %v3760 = vsub.s32 7, %v3759
  %v3761 = vrot.slane %v3168, %v3760
  %3763 = vbcast.lane.b32.xlu0 %v3761, 256
  %v3764 = vpop.permute.xlu0 %3763
  %s3766 = sor.u32 256, 8
  %3767 = vbcast.lane.b32.xlu0 %v3761, %s3766
  %v3768 = vpop.permute.xlu0 %3767
  %s3770 = sor.u32 256, 16
  %3771 = vbcast.lane.b32.xlu0 %v3761, %s3770
  %v3772 = vpop.permute.xlu0 %3771
  %s3774 = sor.u32 256, 24
  %3775 = vbcast.lane.b32.xlu0 %v3761, %s3774
  %v3776 = vpop.permute.xlu0 %3775
  %vm3777 = vcmp.gt.f32.partialorder %v3175, 0.0
  %vm3778 = vcmp.gt.f32.partialorder %v3179, 0.0
  %vm3779 = vcmp.gt.f32.partialorder %v3183, 0.0
  %vm3780 = vcmp.gt.f32.partialorder %v3187, 0.0
  %vm3781 = vcmp.gt.f32.partialorder %v3194, 0.0
  %vm3782 = vcmp.gt.f32.partialorder %v3198, 0.0
  %vm3783 = vcmp.gt.f32.partialorder %v3202, 0.0
  %vm3784 = vcmp.gt.f32.partialorder %v3206, 0.0
  %vm3785 = vcmp.gt.f32.partialorder %v3213, 0.0
  %vm3786 = vcmp.gt.f32.partialorder %v3217, 0.0
  %vm3787 = vcmp.gt.f32.partialorder %v3221, 0.0
  %vm3788 = vcmp.gt.f32.partialorder %v3225, 0.0
  %vm3789 = vcmp.gt.f32.partialorder %v3232, 0.0
  %vm3790 = vcmp.gt.f32.partialorder %v3236, 0.0
  %vm3791 = vcmp.gt.f32.partialorder %v3240, 0.0
  %vm3792 = vcmp.gt.f32.partialorder %v3244, 0.0
  %vm3793 = vcmp.gt.f32.partialorder %v3251, 0.0
  %vm3794 = vcmp.gt.f32.partialorder %v3255, 0.0
  %vm3795 = vcmp.gt.f32.partialorder %v3259, 0.0
  %vm3796 = vcmp.gt.f32.partialorder %v3263, 0.0
  %vm3797 = vcmp.gt.f32.partialorder %v3270, 0.0
  %vm3798 = vcmp.gt.f32.partialorder %v3274, 0.0
  %vm3799 = vcmp.gt.f32.partialorder %v3278, 0.0
  %vm3800 = vcmp.gt.f32.partialorder %v3282, 0.0
  %vm3801 = vcmp.gt.f32.partialorder %v3289, 0.0
  %vm3802 = vcmp.gt.f32.partialorder %v3293, 0.0
  %vm3803 = vcmp.gt.f32.partialorder %v3297, 0.0
  %vm3804 = vcmp.gt.f32.partialorder %v3301, 0.0
  %vm3805 = vcmp.gt.f32.partialorder %v3308, 0.0
  %vm3806 = vcmp.gt.f32.partialorder %v3312, 0.0
  %vm3807 = vcmp.gt.f32.partialorder %v3316, 0.0
  %vm3808 = vcmp.gt.f32.partialorder %v3320, 0.0
  %vm3809 = vcmp.gt.f32.partialorder %v3327, 0.0
  %vm3810 = vcmp.gt.f32.partialorder %v3331, 0.0
  %vm3811 = vcmp.gt.f32.partialorder %v3335, 0.0
  %vm3812 = vcmp.gt.f32.partialorder %v3339, 0.0
  %vm3813 = vcmp.gt.f32.partialorder %v3346, 0.0
  %vm3814 = vcmp.gt.f32.partialorder %v3350, 0.0
  %vm3815 = vcmp.gt.f32.partialorder %v3354, 0.0
  %vm3816 = vcmp.gt.f32.partialorder %v3358, 0.0
  %vm3817 = vcmp.gt.f32.partialorder %v3365, 0.0
  %vm3818 = vcmp.gt.f32.partialorder %v3369, 0.0
  %vm3819 = vcmp.gt.f32.partialorder %v3373, 0.0
  %vm3820 = vcmp.gt.f32.partialorder %v3377, 0.0
  %vm3821 = vcmp.gt.f32.partialorder %v3384, 0.0
  %vm3822 = vcmp.gt.f32.partialorder %v3388, 0.0
  %vm3823 = vcmp.gt.f32.partialorder %v3392, 0.0
  %vm3824 = vcmp.gt.f32.partialorder %v3396, 0.0
  %vm3825 = vcmp.gt.f32.partialorder %v3403, 0.0
  %vm3826 = vcmp.gt.f32.partialorder %v3407, 0.0
  %vm3827 = vcmp.gt.f32.partialorder %v3411, 0.0
  %vm3828 = vcmp.gt.f32.partialorder %v3415, 0.0
  %vm3829 = vcmp.gt.f32.partialorder %v3422, 0.0
  %vm3830 = vcmp.gt.f32.partialorder %v3426, 0.0
  %vm3831 = vcmp.gt.f32.partialorder %v3430, 0.0
  %vm3832 = vcmp.gt.f32.partialorder %v3434, 0.0
  %vm3833 = vcmp.gt.f32.partialorder %v3441, 0.0
  %vm3834 = vcmp.gt.f32.partialorder %v3445, 0.0
  %vm3835 = vcmp.gt.f32.partialorder %v3449, 0.0
  %vm3836 = vcmp.gt.f32.partialorder %v3453, 0.0
  %vm3837 = vcmp.gt.f32.partialorder %v3460, 0.0
  %vm3838 = vcmp.gt.f32.partialorder %v3464, 0.0
  %vm3839 = vcmp.gt.f32.partialorder %v3468, 0.0
  %vm3840 = vcmp.gt.f32.partialorder %v3472, 0.0
  %vm3841 = vcmp.gt.f32.partialorder %v3479, 0.0
  %vm3842 = vcmp.gt.f32.partialorder %v3483, 0.0
  %vm3843 = vcmp.gt.f32.partialorder %v3487, 0.0
  %vm3844 = vcmp.gt.f32.partialorder %v3491, 0.0
  %vm3845 = vcmp.gt.f32.partialorder %v3498, 0.0
  %vm3846 = vcmp.gt.f32.partialorder %v3502, 0.0
  %vm3847 = vcmp.gt.f32.partialorder %v3506, 0.0
  %vm3848 = vcmp.gt.f32.partialorder %v3510, 0.0
  %vm3849 = vcmp.gt.f32.partialorder %v3517, 0.0
  %vm3850 = vcmp.gt.f32.partialorder %v3521, 0.0
  %vm3851 = vcmp.gt.f32.partialorder %v3525, 0.0
  %vm3852 = vcmp.gt.f32.partialorder %v3529, 0.0
  %vm3853 = vcmp.gt.f32.partialorder %v3536, 0.0
  %vm3854 = vcmp.gt.f32.partialorder %v3540, 0.0
  %vm3855 = vcmp.gt.f32.partialorder %v3544, 0.0
  %vm3856 = vcmp.gt.f32.partialorder %v3548, 0.0
  %vm3857 = vcmp.gt.f32.partialorder %v3555, 0.0
  %vm3858 = vcmp.gt.f32.partialorder %v3559, 0.0
  %vm3859 = vcmp.gt.f32.partialorder %v3563, 0.0
  %vm3860 = vcmp.gt.f32.partialorder %v3567, 0.0
  %vm3861 = vcmp.gt.f32.partialorder %v3574, 0.0
  %vm3862 = vcmp.gt.f32.partialorder %v3578, 0.0
  %vm3863 = vcmp.gt.f32.partialorder %v3582, 0.0
  %vm3864 = vcmp.gt.f32.partialorder %v3586, 0.0
  %vm3865 = vcmp.gt.f32.partialorder %v3593, 0.0
  %vm3866 = vcmp.gt.f32.partialorder %v3597, 0.0
  %vm3867 = vcmp.gt.f32.partialorder %v3601, 0.0
  %vm3868 = vcmp.gt.f32.partialorder %v3605, 0.0
  %vm3869 = vcmp.gt.f32.partialorder %v3612, 0.0
  %vm3870 = vcmp.gt.f32.partialorder %v3616, 0.0
  %vm3871 = vcmp.gt.f32.partialorder %v3620, 0.0
  %vm3872 = vcmp.gt.f32.partialorder %v3624, 0.0
  %vm3873 = vcmp.gt.f32.partialorder %v3631, 0.0
  %vm3874 = vcmp.gt.f32.partialorder %v3635, 0.0
  %vm3875 = vcmp.gt.f32.partialorder %v3639, 0.0
  %vm3876 = vcmp.gt.f32.partialorder %v3643, 0.0
  %vm3877 = vcmp.gt.f32.partialorder %v3650, 0.0
  %vm3878 = vcmp.gt.f32.partialorder %v3654, 0.0
  %vm3879 = vcmp.gt.f32.partialorder %v3658, 0.0
  %vm3880 = vcmp.gt.f32.partialorder %v3662, 0.0
  %vm3881 = vcmp.gt.f32.partialorder %v3669, 0.0
  %vm3882 = vcmp.gt.f32.partialorder %v3673, 0.0
  %vm3883 = vcmp.gt.f32.partialorder %v3677, 0.0
  %vm3884 = vcmp.gt.f32.partialorder %v3681, 0.0
  %vm3885 = vcmp.gt.f32.partialorder %v3688, 0.0
  %vm3886 = vcmp.gt.f32.partialorder %v3692, 0.0
  %vm3887 = vcmp.gt.f32.partialorder %v3696, 0.0
  %vm3888 = vcmp.gt.f32.partialorder %v3700, 0.0
  %vm3889 = vcmp.gt.f32.partialorder %v3707, 0.0
  %vm3890 = vcmp.gt.f32.partialorder %v3711, 0.0
  %vm3891 = vcmp.gt.f32.partialorder %v3715, 0.0
  %vm3892 = vcmp.gt.f32.partialorder %v3719, 0.0
  %vm3893 = vcmp.gt.f32.partialorder %v3726, 0.0
  %vm3894 = vcmp.gt.f32.partialorder %v3730, 0.0
  %vm3895 = vcmp.gt.f32.partialorder %v3734, 0.0
  %vm3896 = vcmp.gt.f32.partialorder %v3738, 0.0
  %vm3897 = vcmp.gt.f32.partialorder %v3745, 0.0
  %vm3898 = vcmp.gt.f32.partialorder %v3749, 0.0
  %vm3899 = vcmp.gt.f32.partialorder %v3753, 0.0
  %vm3900 = vcmp.gt.f32.partialorder %v3757, 0.0
  %vm3901 = vcmp.gt.f32.partialorder %v3764, 0.0
  %vm3902 = vcmp.gt.f32.partialorder %v3768, 0.0
  %vm3903 = vcmp.gt.f32.partialorder %v3772, 0.0
  %vm3904 = vcmp.gt.f32.partialorder %v3776, 0.0
  %v3905 = vsel %vm3777, 1, 0
  %v3906 = vsel %vm3778, 1, 0
  %v3907 = vsel %vm3779, 1, 0
  %v3908 = vsel %vm3780, 1, 0
  %v3909 = vsel %vm3781, 1, 0
  %v3910 = vsel %vm3782, 1, 0
  %v3911 = vsel %vm3783, 1, 0
  %v3912 = vsel %vm3784, 1, 0
  %v3913 = vsel %vm3785, 1, 0
  %v3914 = vsel %vm3786, 1, 0
  %v3915 = vsel %vm3787, 1, 0
  %v3916 = vsel %vm3788, 1, 0
  %v3917 = vsel %vm3789, 1, 0
  %v3918 = vsel %vm3790, 1, 0
  %v3919 = vsel %vm3791, 1, 0
  %v3920 = vsel %vm3792, 1, 0
  %v3921 = vsel %vm3793, 1, 0
  %v3922 = vsel %vm3794, 1, 0
  %v3923 = vsel %vm3795, 1, 0
  %v3924 = vsel %vm3796, 1, 0
  %v3925 = vsel %vm3797, 1, 0
  %v3926 = vsel %vm3798, 1, 0
  %v3927 = vsel %vm3799, 1, 0
  %v3928 = vsel %vm3800, 1, 0
  %v3929 = vsel %vm3801, 1, 0
  %v3930 = vsel %vm3802, 1, 0
  %v3931 = vsel %vm3803, 1, 0
  %v3932 = vsel %vm3804, 1, 0
  %v3933 = vsel %vm3805, 1, 0
  %v3934 = vsel %vm3806, 1, 0
  %v3935 = vsel %vm3807, 1, 0
  %v3936 = vsel %vm3808, 1, 0
  %v3937 = vsel %vm3809, 1, 0
  %v3938 = vsel %vm3810, 1, 0
  %v3939 = vsel %vm3811, 1, 0
  %v3940 = vsel %vm3812, 1, 0
  %v3941 = vsel %vm3813, 1, 0
  %v3942 = vsel %vm3814, 1, 0
  %v3943 = vsel %vm3815, 1, 0
  %v3944 = vsel %vm3816, 1, 0
  %v3945 = vsel %vm3817, 1, 0
  %v3946 = vsel %vm3818, 1, 0
  %v3947 = vsel %vm3819, 1, 0
  %v3948 = vsel %vm3820, 1, 0
  %v3949 = vsel %vm3821, 1, 0
  %v3950 = vsel %vm3822, 1, 0
  %v3951 = vsel %vm3823, 1, 0
  %v3952 = vsel %vm3824, 1, 0
  %v3953 = vsel %vm3825, 1, 0
  %v3954 = vsel %vm3826, 1, 0
  %v3955 = vsel %vm3827, 1, 0
  %v3956 = vsel %vm3828, 1, 0
  %v3957 = vsel %vm3829, 1, 0
  %v3958 = vsel %vm3830, 1, 0
  %v3959 = vsel %vm3831, 1, 0
  %v3960 = vsel %vm3832, 1, 0
  %v3961 = vsel %vm3833, 1, 0
  %v3962 = vsel %vm3834, 1, 0
  %v3963 = vsel %vm3835, 1, 0
  %v3964 = vsel %vm3836, 1, 0
  %v3965 = vsel %vm3837, 1, 0
  %v3966 = vsel %vm3838, 1, 0
  %v3967 = vsel %vm3839, 1, 0
  %v3968 = vsel %vm3840, 1, 0
  %v3969 = vsel %vm3841, 1, 0
  %v3970 = vsel %vm3842, 1, 0
  %v3971 = vsel %vm3843, 1, 0
  %v3972 = vsel %vm3844, 1, 0
  %v3973 = vsel %vm3845, 1, 0
  %v3974 = vsel %vm3846, 1, 0
  %v3975 = vsel %vm3847, 1, 0
  %v3976 = vsel %vm3848, 1, 0
  %v3977 = vsel %vm3849, 1, 0
  %v3978 = vsel %vm3850, 1, 0
  %v3979 = vsel %vm3851, 1, 0
  %v3980 = vsel %vm3852, 1, 0
  %v3981 = vsel %vm3853, 1, 0
  %v3982 = vsel %vm3854, 1, 0
  %v3983 = vsel %vm3855, 1, 0
  %v3984 = vsel %vm3856, 1, 0
  %v3985 = vsel %vm3857, 1, 0
  %v3986 = vsel %vm3858, 1, 0
  %v3987 = vsel %vm3859, 1, 0
  %v3988 = vsel %vm3860, 1, 0
  %v3989 = vsel %vm3861, 1, 0
  %v3990 = vsel %vm3862, 1, 0
  %v3991 = vsel %vm3863, 1, 0
  %v3992 = vsel %vm3864, 1, 0
  %v3993 = vsel %vm3865, 1, 0
  %v3994 = vsel %vm3866, 1, 0
  %v3995 = vsel %vm3867, 1, 0
  %v3996 = vsel %vm3868, 1, 0
  %v3997 = vsel %vm3869, 1, 0
  %v3998 = vsel %vm3870, 1, 0
  %v3999 = vsel %vm3871, 1, 0
  %v4000 = vsel %vm3872, 1, 0
  %v4001 = vsel %vm3873, 1, 0
  %v4002 = vsel %vm3874, 1, 0
  %v4003 = vsel %vm3875, 1, 0
  %v4004 = vsel %vm3876, 1, 0
  %v4005 = vsel %vm3877, 1, 0
  %v4006 = vsel %vm3878, 1, 0
  %v4007 = vsel %vm3879, 1, 0
  %v4008 = vsel %vm3880, 1, 0
  %v4009 = vsel %vm3881, 1, 0
  %v4010 = vsel %vm3882, 1, 0
  %v4011 = vsel %vm3883, 1, 0
  %v4012 = vsel %vm3884, 1, 0
  %v4013 = vsel %vm3885, 1, 0
  %v4014 = vsel %vm3886, 1, 0
  %v4015 = vsel %vm3887, 1, 0
  %v4016 = vsel %vm3888, 1, 0
  %v4017 = vsel %vm3889, 1, 0
  %v4018 = vsel %vm3890, 1, 0
  %v4019 = vsel %vm3891, 1, 0
  %v4020 = vsel %vm3892, 1, 0
  %v4021 = vsel %vm3893, 1, 0
  %v4022 = vsel %vm3894, 1, 0
  %v4023 = vsel %vm3895, 1, 0
  %v4024 = vsel %vm3896, 1, 0
  %v4025 = vsel %vm3897, 1, 0
  %v4026 = vsel %vm3898, 1, 0
  %v4027 = vsel %vm3899, 1, 0
  %v4028 = vsel %vm3900, 1, 0
  %v4029 = vsel %vm3901, 1, 0
  %v4030 = vsel %vm3902, 1, 0
  %v4031 = vsel %vm3903, 1, 0
  %v4032 = vsel %vm3904, 1, 0
  %vm4033 = vcmp.eq.s32.totalorder %v3905, 1
  %vm4034 = vcmp.eq.s32.totalorder %v3906, 1
  %vm4035 = vcmp.eq.s32.totalorder %v3907, 1
  %vm4036 = vcmp.eq.s32.totalorder %v3908, 1
  %vm4037 = vcmp.eq.s32.totalorder %v3909, 1
  %vm4038 = vcmp.eq.s32.totalorder %v3910, 1
  %vm4039 = vcmp.eq.s32.totalorder %v3911, 1
  %vm4040 = vcmp.eq.s32.totalorder %v3912, 1
  %vm4041 = vcmp.eq.s32.totalorder %v3913, 1
  %vm4042 = vcmp.eq.s32.totalorder %v3914, 1
  %vm4043 = vcmp.eq.s32.totalorder %v3915, 1
  %vm4044 = vcmp.eq.s32.totalorder %v3916, 1
  %vm4045 = vcmp.eq.s32.totalorder %v3917, 1
  %vm4046 = vcmp.eq.s32.totalorder %v3918, 1
  %vm4047 = vcmp.eq.s32.totalorder %v3919, 1
  %vm4048 = vcmp.eq.s32.totalorder %v3920, 1
  %vm4049 = vcmp.eq.s32.totalorder %v3921, 1
  %vm4050 = vcmp.eq.s32.totalorder %v3922, 1
  %vm4051 = vcmp.eq.s32.totalorder %v3923, 1
  %vm4052 = vcmp.eq.s32.totalorder %v3924, 1
  %vm4053 = vcmp.eq.s32.totalorder %v3925, 1
  %vm4054 = vcmp.eq.s32.totalorder %v3926, 1
  %vm4055 = vcmp.eq.s32.totalorder %v3927, 1
  %vm4056 = vcmp.eq.s32.totalorder %v3928, 1
  %vm4057 = vcmp.eq.s32.totalorder %v3929, 1
  %vm4058 = vcmp.eq.s32.totalorder %v3930, 1
  %vm4059 = vcmp.eq.s32.totalorder %v3931, 1
  %vm4060 = vcmp.eq.s32.totalorder %v3932, 1
  %vm4061 = vcmp.eq.s32.totalorder %v3933, 1
  %vm4062 = vcmp.eq.s32.totalorder %v3934, 1
  %vm4063 = vcmp.eq.s32.totalorder %v3935, 1
  %vm4064 = vcmp.eq.s32.totalorder %v3936, 1
  %vm4065 = vcmp.eq.s32.totalorder %v3937, 1
  %vm4066 = vcmp.eq.s32.totalorder %v3938, 1
  %vm4067 = vcmp.eq.s32.totalorder %v3939, 1
  %vm4068 = vcmp.eq.s32.totalorder %v3940, 1
  %vm4069 = vcmp.eq.s32.totalorder %v3941, 1
  %vm4070 = vcmp.eq.s32.totalorder %v3942, 1
  %vm4071 = vcmp.eq.s32.totalorder %v3943, 1
  %vm4072 = vcmp.eq.s32.totalorder %v3944, 1
  %vm4073 = vcmp.eq.s32.totalorder %v3945, 1
  %vm4074 = vcmp.eq.s32.totalorder %v3946, 1
  %vm4075 = vcmp.eq.s32.totalorder %v3947, 1
  %vm4076 = vcmp.eq.s32.totalorder %v3948, 1
  %vm4077 = vcmp.eq.s32.totalorder %v3949, 1
  %vm4078 = vcmp.eq.s32.totalorder %v3950, 1
  %vm4079 = vcmp.eq.s32.totalorder %v3951, 1
  %vm4080 = vcmp.eq.s32.totalorder %v3952, 1
  %vm4081 = vcmp.eq.s32.totalorder %v3953, 1
  %vm4082 = vcmp.eq.s32.totalorder %v3954, 1
  %vm4083 = vcmp.eq.s32.totalorder %v3955, 1
  %vm4084 = vcmp.eq.s32.totalorder %v3956, 1
  %vm4085 = vcmp.eq.s32.totalorder %v3957, 1
  %vm4086 = vcmp.eq.s32.totalorder %v3958, 1
  %vm4087 = vcmp.eq.s32.totalorder %v3959, 1
  %vm4088 = vcmp.eq.s32.totalorder %v3960, 1
  %vm4089 = vcmp.eq.s32.totalorder %v3961, 1
  %vm4090 = vcmp.eq.s32.totalorder %v3962, 1
  %vm4091 = vcmp.eq.s32.totalorder %v3963, 1
  %vm4092 = vcmp.eq.s32.totalorder %v3964, 1
  %vm4093 = vcmp.eq.s32.totalorder %v3965, 1
  %vm4094 = vcmp.eq.s32.totalorder %v3966, 1
  %vm4095 = vcmp.eq.s32.totalorder %v3967, 1
  %vm4096 = vcmp.eq.s32.totalorder %v3968, 1
  %vm4097 = vcmp.eq.s32.totalorder %v3969, 1
  %vm4098 = vcmp.eq.s32.totalorder %v3970, 1
  %vm4099 = vcmp.eq.s32.totalorder %v3971, 1
  %vm4100 = vcmp.eq.s32.totalorder %v3972, 1
  %vm4101 = vcmp.eq.s32.totalorder %v3973, 1
  %vm4102 = vcmp.eq.s32.totalorder %v3974, 1
  %vm4103 = vcmp.eq.s32.totalorder %v3975, 1
  %vm4104 = vcmp.eq.s32.totalorder %v3976, 1
  %vm4105 = vcmp.eq.s32.totalorder %v3977, 1
  %vm4106 = vcmp.eq.s32.totalorder %v3978, 1
  %vm4107 = vcmp.eq.s32.totalorder %v3979, 1
  %vm4108 = vcmp.eq.s32.totalorder %v3980, 1
  %vm4109 = vcmp.eq.s32.totalorder %v3981, 1
  %vm4110 = vcmp.eq.s32.totalorder %v3982, 1
  %vm4111 = vcmp.eq.s32.totalorder %v3983, 1
  %vm4112 = vcmp.eq.s32.totalorder %v3984, 1
  %vm4113 = vcmp.eq.s32.totalorder %v3985, 1
  %vm4114 = vcmp.eq.s32.totalorder %v3986, 1
  %vm4115 = vcmp.eq.s32.totalorder %v3987, 1
  %vm4116 = vcmp.eq.s32.totalorder %v3988, 1
  %vm4117 = vcmp.eq.s32.totalorder %v3989, 1
  %vm4118 = vcmp.eq.s32.totalorder %v3990, 1
  %vm4119 = vcmp.eq.s32.totalorder %v3991, 1
  %vm4120 = vcmp.eq.s32.totalorder %v3992, 1
  %vm4121 = vcmp.eq.s32.totalorder %v3993, 1
  %vm4122 = vcmp.eq.s32.totalorder %v3994, 1
  %vm4123 = vcmp.eq.s32.totalorder %v3995, 1
  %vm4124 = vcmp.eq.s32.totalorder %v3996, 1
  %vm4125 = vcmp.eq.s32.totalorder %v3997, 1
  %vm4126 = vcmp.eq.s32.totalorder %v3998, 1
  %vm4127 = vcmp.eq.s32.totalorder %v3999, 1
  %vm4128 = vcmp.eq.s32.totalorder %v4000, 1
  %vm4129 = vcmp.eq.s32.totalorder %v4001, 1
  %vm4130 = vcmp.eq.s32.totalorder %v4002, 1
  %vm4131 = vcmp.eq.s32.totalorder %v4003, 1
  %vm4132 = vcmp.eq.s32.totalorder %v4004, 1
  %vm4133 = vcmp.eq.s32.totalorder %v4005, 1
  %vm4134 = vcmp.eq.s32.totalorder %v4006, 1
  %vm4135 = vcmp.eq.s32.totalorder %v4007, 1
  %vm4136 = vcmp.eq.s32.totalorder %v4008, 1
  %vm4137 = vcmp.eq.s32.totalorder %v4009, 1
  %vm4138 = vcmp.eq.s32.totalorder %v4010, 1
  %vm4139 = vcmp.eq.s32.totalorder %v4011, 1
  %vm4140 = vcmp.eq.s32.totalorder %v4012, 1
  %vm4141 = vcmp.eq.s32.totalorder %v4013, 1
  %vm4142 = vcmp.eq.s32.totalorder %v4014, 1
  %vm4143 = vcmp.eq.s32.totalorder %v4015, 1
  %vm4144 = vcmp.eq.s32.totalorder %v4016, 1
  %vm4145 = vcmp.eq.s32.totalorder %v4017, 1
  %vm4146 = vcmp.eq.s32.totalorder %v4018, 1
  %vm4147 = vcmp.eq.s32.totalorder %v4019, 1
  %vm4148 = vcmp.eq.s32.totalorder %v4020, 1
  %vm4149 = vcmp.eq.s32.totalorder %v4021, 1
  %vm4150 = vcmp.eq.s32.totalorder %v4022, 1
  %vm4151 = vcmp.eq.s32.totalorder %v4023, 1
  %vm4152 = vcmp.eq.s32.totalorder %v4024, 1
  %vm4153 = vcmp.eq.s32.totalorder %v4025, 1
  %vm4154 = vcmp.eq.s32.totalorder %v4026, 1
  %vm4155 = vcmp.eq.s32.totalorder %v4027, 1
  %vm4156 = vcmp.eq.s32.totalorder %v4028, 1
  %vm4157 = vcmp.eq.s32.totalorder %v4029, 1
  %vm4158 = vcmp.eq.s32.totalorder %v4030, 1
  %vm4159 = vcmp.eq.s32.totalorder %v4031, 1
  %vm4160 = vcmp.eq.s32.totalorder %v4032, 1
  %v4161 = vsel %vm4033, %v2655, -inf
  %v4162 = vsel %vm4034, %v2658, -inf
  %v4163 = vsel %vm4035, %v2663, -inf
  %v4164 = vsel %vm4036, %v2666, -inf
  %v4165 = vsel %vm4037, %v2671, -inf
  %v4166 = vsel %vm4038, %v2674, -inf
  %v4167 = vsel %vm4039, %v2679, -inf
  %v4168 = vsel %vm4040, %v2682, -inf
  %v4169 = vsel %vm4041, %v2687, -inf
  %v4170 = vsel %vm4042, %v2690, -inf
  %v4171 = vsel %vm4043, %v2695, -inf
  %v4172 = vsel %vm4044, %v2698, -inf
  %v4173 = vsel %vm4045, %v2703, -inf
  %v4174 = vsel %vm4046, %v2706, -inf
  %v4175 = vsel %vm4047, %v2711, -inf
  %v4176 = vsel %vm4048, %v2714, -inf
  %v4177 = vsel %vm4049, %v2719, -inf
  %v4178 = vsel %vm4050, %v2722, -inf
  %v4179 = vsel %vm4051, %v2727, -inf
  %v4180 = vsel %vm4052, %v2730, -inf
  %v4181 = vsel %vm4053, %v2735, -inf
  %v4182 = vsel %vm4054, %v2738, -inf
  %v4183 = vsel %vm4055, %v2743, -inf
  %v4184 = vsel %vm4056, %v2746, -inf
  %v4185 = vsel %vm4057, %v2751, -inf
  %v4186 = vsel %vm4058, %v2754, -inf
  %v4187 = vsel %vm4059, %v2759, -inf
  %v4188 = vsel %vm4060, %v2762, -inf
  %v4189 = vsel %vm4061, %v2767, -inf
  %v4190 = vsel %vm4062, %v2770, -inf
  %v4191 = vsel %vm4063, %v2775, -inf
  %v4192 = vsel %vm4064, %v2778, -inf
  %v4193 = vsel %vm4065, %v2783, -inf
  %v4194 = vsel %vm4066, %v2786, -inf
  %v4195 = vsel %vm4067, %v2791, -inf
  %v4196 = vsel %vm4068, %v2794, -inf
  %v4197 = vsel %vm4069, %v2799, -inf
  %v4198 = vsel %vm4070, %v2802, -inf
  %v4199 = vsel %vm4071, %v2807, -inf
  %v4200 = vsel %vm4072, %v2810, -inf
  %v4201 = vsel %vm4073, %v2815, -inf
  %v4202 = vsel %vm4074, %v2818, -inf
  %v4203 = vsel %vm4075, %v2823, -inf
  %v4204 = vsel %vm4076, %v2826, -inf
  %v4205 = vsel %vm4077, %v2831, -inf
  %v4206 = vsel %vm4078, %v2834, -inf
  %v4207 = vsel %vm4079, %v2839, -inf
  %v4208 = vsel %vm4080, %v2842, -inf
  %v4209 = vsel %vm4081, %v2847, -inf
  %v4210 = vsel %vm4082, %v2850, -inf
  %v4211 = vsel %vm4083, %v2855, -inf
  %v4212 = vsel %vm4084, %v2858, -inf
  %v4213 = vsel %vm4085, %v2863, -inf
  %v4214 = vsel %vm4086, %v2866, -inf
  %v4215 = vsel %vm4087, %v2871, -inf
  %v4216 = vsel %vm4088, %v2874, -inf
  %v4217 = vsel %vm4089, %v2879, -inf
  %v4218 = vsel %vm4090, %v2882, -inf
  %v4219 = vsel %vm4091, %v2887, -inf
  %v4220 = vsel %vm4092, %v2890, -inf
  %v4221 = vsel %vm4093, %v2895, -inf
  %v4222 = vsel %vm4094, %v2898, -inf
  %v4223 = vsel %vm4095, %v2903, -inf
  %v4224 = vsel %vm4096, %v2906, -inf
  %v4225 = vsel %vm4097, %v2911, -inf
  %v4226 = vsel %vm4098, %v2914, -inf
  %v4227 = vsel %vm4099, %v2919, -inf
  %v4228 = vsel %vm4100, %v2922, -inf
  %v4229 = vsel %vm4101, %v2927, -inf
  %v4230 = vsel %vm4102, %v2930, -inf
  %v4231 = vsel %vm4103, %v2935, -inf
  %v4232 = vsel %vm4104, %v2938, -inf
  %v4233 = vsel %vm4105, %v2943, -inf
  %v4234 = vsel %vm4106, %v2946, -inf
  %v4235 = vsel %vm4107, %v2951, -inf
  %v4236 = vsel %vm4108, %v2954, -inf
  %v4237 = vsel %vm4109, %v2959, -inf
  %v4238 = vsel %vm4110, %v2962, -inf
  %v4239 = vsel %vm4111, %v2967, -inf
  %v4240 = vsel %vm4112, %v2970, -inf
  %v4241 = vsel %vm4113, %v2975, -inf
  %v4242 = vsel %vm4114, %v2978, -inf
  %v4243 = vsel %vm4115, %v2983, -inf
  %v4244 = vsel %vm4116, %v2986, -inf
  %v4245 = vsel %vm4117, %v2991, -inf
  %v4246 = vsel %vm4118, %v2994, -inf
  %v4247 = vsel %vm4119, %v2999, -inf
  %v4248 = vsel %vm4120, %v3002, -inf
  %v4249 = vsel %vm4121, %v3007, -inf
  %v4250 = vsel %vm4122, %v3010, -inf
  %v4251 = vsel %vm4123, %v3015, -inf
  %v4252 = vsel %vm4124, %v3018, -inf
  %v4253 = vsel %vm4125, %v3023, -inf
  %v4254 = vsel %vm4126, %v3026, -inf
  %v4255 = vsel %vm4127, %v3031, -inf
  %v4256 = vsel %vm4128, %v3034, -inf
  %v4257 = vsel %vm4129, %v3039, -inf
  %v4258 = vsel %vm4130, %v3042, -inf
  %v4259 = vsel %vm4131, %v3047, -inf
  %v4260 = vsel %vm4132, %v3050, -inf
  %v4261 = vsel %vm4133, %v3055, -inf
  %v4262 = vsel %vm4134, %v3058, -inf
  %v4263 = vsel %vm4135, %v3063, -inf
  %v4264 = vsel %vm4136, %v3066, -inf
  %v4265 = vsel %vm4137, %v3071, -inf
  %v4266 = vsel %vm4138, %v3074, -inf
  %v4267 = vsel %vm4139, %v3079, -inf
  %v4268 = vsel %vm4140, %v3082, -inf
  %v4269 = vsel %vm4141, %v3087, -inf
  %v4270 = vsel %vm4142, %v3090, -inf
  %v4271 = vsel %vm4143, %v3095, -inf
  %v4272 = vsel %vm4144, %v3098, -inf
  %v4273 = vsel %vm4145, %v3103, -inf
  %v4274 = vsel %vm4146, %v3106, -inf
  %v4275 = vsel %vm4147, %v3111, -inf
  %v4276 = vsel %vm4148, %v3114, -inf
  %v4277 = vsel %vm4149, %v3119, -inf
  %v4278 = vsel %vm4150, %v3122, -inf
  %v4279 = vsel %vm4151, %v3127, -inf
  %v4280 = vsel %vm4152, %v3130, -inf
  %v4281 = vsel %vm4153, %v3135, -inf
  %v4282 = vsel %vm4154, %v3138, -inf
  %v4283 = vsel %vm4155, %v3143, -inf
  %v4284 = vsel %vm4156, %v3146, -inf
  %v4285 = vsel %vm4157, %v3151, -inf
  %v4286 = vsel %vm4158, %v3154, -inf
  %v4287 = vsel %vm4159, %v3159, -inf
  %v4288 = vsel %vm4160, %v3162, -inf
  %v4289 = vmax.f32 %v4161, %v4165
  %v4290 = vmax.f32 %v4289, %v4169
  %v4291 = vmax.f32 %v4290, %v4173
  %v4292 = vmax.f32 %v4291, %v4177
  %v4293 = vmax.f32 %v4292, %v4181
  %v4294 = vmax.f32 %v4293, %v4185
  %v4295 = vmax.f32 %v4294, %v4189
  %v4296 = vmax.f32 %v4295, %v4193
  %v4297 = vmax.f32 %v4296, %v4197
  %v4298 = vmax.f32 %v4297, %v4201
  %v4299 = vmax.f32 %v4298, %v4205
  %v4300 = vmax.f32 %v4299, %v4209
  %v4301 = vmax.f32 %v4300, %v4213
  %v4302 = vmax.f32 %v4301, %v4217
  %v4303 = vmax.f32 %v4302, %v4221
  %v4304 = vmax.f32 %v4303, %v4225
  %v4305 = vmax.f32 %v4304, %v4229
  %v4306 = vmax.f32 %v4305, %v4233
  %v4307 = vmax.f32 %v4306, %v4237
  %v4308 = vmax.f32 %v4307, %v4241
  %v4309 = vmax.f32 %v4308, %v4245
  %v4310 = vmax.f32 %v4309, %v4249
  %v4311 = vmax.f32 %v4310, %v4253
  %v4312 = vmax.f32 %v4311, %v4257
  %v4313 = vmax.f32 %v4312, %v4261
  %v4314 = vmax.f32 %v4313, %v4265
  %v4315 = vmax.f32 %v4314, %v4269
  %v4316 = vmax.f32 %v4315, %v4273
  %v4317 = vmax.f32 %v4316, %v4277
  %v4318 = vmax.f32 %v4317, %v4281
  %v4319 = vmax.f32 %v4318, %v4285
  %v4320 = vmax.f32 %v4162, %v4166
  %v4321 = vmax.f32 %v4320, %v4170
  %v4322 = vmax.f32 %v4321, %v4174
  %v4323 = vmax.f32 %v4322, %v4178
  %v4324 = vmax.f32 %v4323, %v4182
  %v4325 = vmax.f32 %v4324, %v4186
  %v4326 = vmax.f32 %v4325, %v4190
  %v4327 = vmax.f32 %v4326, %v4194
  %v4328 = vmax.f32 %v4327, %v4198
  %v4329 = vmax.f32 %v4328, %v4202
  %v4330 = vmax.f32 %v4329, %v4206
  %v4331 = vmax.f32 %v4330, %v4210
  %v4332 = vmax.f32 %v4331, %v4214
  %v4333 = vmax.f32 %v4332, %v4218
  %v4334 = vmax.f32 %v4333, %v4222
  %v4335 = vmax.f32 %v4334, %v4226
  %v4336 = vmax.f32 %v4335, %v4230
  %v4337 = vmax.f32 %v4336, %v4234
  %v4338 = vmax.f32 %v4337, %v4238
  %v4339 = vmax.f32 %v4338, %v4242
  %v4340 = vmax.f32 %v4339, %v4246
  %v4341 = vmax.f32 %v4340, %v4250
  %v4342 = vmax.f32 %v4341, %v4254
  %v4343 = vmax.f32 %v4342, %v4258
  %v4344 = vmax.f32 %v4343, %v4262
  %v4345 = vmax.f32 %v4344, %v4266
  %v4346 = vmax.f32 %v4345, %v4270
  %v4347 = vmax.f32 %v4346, %v4274
  %v4348 = vmax.f32 %v4347, %v4278
  %v4349 = vmax.f32 %v4348, %v4282
  %v4350 = vmax.f32 %v4349, %v4286
  %v4351 = vmax.f32 %v4163, %v4167
  %v4352 = vmax.f32 %v4351, %v4171
  %v4353 = vmax.f32 %v4352, %v4175
  %v4354 = vmax.f32 %v4353, %v4179
  %v4355 = vmax.f32 %v4354, %v4183
  %v4356 = vmax.f32 %v4355, %v4187
  %v4357 = vmax.f32 %v4356, %v4191
  %v4358 = vmax.f32 %v4357, %v4195
  %v4359 = vmax.f32 %v4358, %v4199
  %v4360 = vmax.f32 %v4359, %v4203
  %v4361 = vmax.f32 %v4360, %v4207
  %v4362 = vmax.f32 %v4361, %v4211
  %v4363 = vmax.f32 %v4362, %v4215
  %v4364 = vmax.f32 %v4363, %v4219
  %v4365 = vmax.f32 %v4364, %v4223
  %v4366 = vmax.f32 %v4365, %v4227
  %v4367 = vmax.f32 %v4366, %v4231
  %v4368 = vmax.f32 %v4367, %v4235
  %v4369 = vmax.f32 %v4368, %v4239
  %v4370 = vmax.f32 %v4369, %v4243
  %v4371 = vmax.f32 %v4370, %v4247
  %v4372 = vmax.f32 %v4371, %v4251
  %v4373 = vmax.f32 %v4372, %v4255
  %v4374 = vmax.f32 %v4373, %v4259
  %v4375 = vmax.f32 %v4374, %v4263
  %v4376 = vmax.f32 %v4375, %v4267
  %v4377 = vmax.f32 %v4376, %v4271
  %v4378 = vmax.f32 %v4377, %v4275
  %v4379 = vmax.f32 %v4378, %v4279
  %v4380 = vmax.f32 %v4379, %v4283
  %v4381 = vmax.f32 %v4380, %v4287
  %v4382 = vmax.f32 %v4164, %v4168
  %v4383 = vmax.f32 %v4382, %v4172
  %v4384 = vmax.f32 %v4383, %v4176
  %v4385 = vmax.f32 %v4384, %v4180
  %v4386 = vmax.f32 %v4385, %v4184
  %v4387 = vmax.f32 %v4386, %v4188
  %v4388 = vmax.f32 %v4387, %v4192
  %v4389 = vmax.f32 %v4388, %v4196
  %v4390 = vmax.f32 %v4389, %v4200
  %v4391 = vmax.f32 %v4390, %v4204
  %v4392 = vmax.f32 %v4391, %v4208
  %v4393 = vmax.f32 %v4392, %v4212
  %v4394 = vmax.f32 %v4393, %v4216
  %v4395 = vmax.f32 %v4394, %v4220
  %v4396 = vmax.f32 %v4395, %v4224
  %v4397 = vmax.f32 %v4396, %v4228
  %v4398 = vmax.f32 %v4397, %v4232
  %v4399 = vmax.f32 %v4398, %v4236
  %v4400 = vmax.f32 %v4399, %v4240
  %v4401 = vmax.f32 %v4400, %v4244
  %v4402 = vmax.f32 %v4401, %v4248
  %v4403 = vmax.f32 %v4402, %v4252
  %v4404 = vmax.f32 %v4403, %v4256
  %v4405 = vmax.f32 %v4404, %v4260
  %v4406 = vmax.f32 %v4405, %v4264
  %v4407 = vmax.f32 %v4406, %v4268
  %v4408 = vmax.f32 %v4407, %v4272
  %v4409 = vmax.f32 %v4408, %v4276
  %v4410 = vmax.f32 %v4409, %v4280
  %v4411 = vmax.f32 %v4410, %v4284
  %v4412 = vmax.f32 %v4411, %v4288
  %4413 = vst [vmem:[%s8] sm:$0xff] %v4319
  %4414 = vst [vmem:[%s8 + $0x8] sm:$0xff] %v4350
  %4415 = vst [vmem:[%s8 + $0x10] sm:$0xff] %v4381
  %4416 = vst [vmem:[%s8 + $0x18] sm:$0xff] %v4412
  // Predicated region
  $region34: #{pointnetpp_forward.3} parent=0 // pred_check
    _
  $region35: #{pointnetpp_forward.3} parent=0 // pred_check_branch
    %4418 = sbr.rel (0) target = $region37
  $region36: #{pointnetpp_forward.3} parent=0 // pred_region
    _
  $region37: #{pointnetpp_forward.3} parent=0 // pred_fallthru
    _
  // Predicated region
  $region38: #{pointnetpp_forward.3} parent=0 // pred_check
    _
  $region39: #{pointnetpp_forward.3} parent=0 // pred_check_branch
    %4420 = sbr.rel (0) target = $region41
  $region40: #{pointnetpp_forward.3} parent=0 // pred_region
    _
  $region41: #{pointnetpp_forward.3} parent=0 // pred_fallthru
    _

// kernel: pointnetpp_forward.4
$region0: #{pointnetpp_forward.4}
  #allocation0 [shape = 'u32[]', space=smem, size = 0x4, offset = 0x4, fixed_abs, tag = 'smem constant byte address 0x4 - core index']
  #allocation1 [shape = 'u32[144,128]{1,0:T(1,128)}', space=vmem, size = 0x12000, scoped, tag = 'internal scratch']
  %s0 = inlined_call_operand.vmem [shape: bf16[16,8,131], index: 0, kind: input, shape index: {}]
  %s1 = inlined_call_operand.vmem [shape: f32[16,8], index: 1, kind: input, shape index: {}]
  %s2 = inlined_call_operand.vmem [shape: bf16[131,128], index: 2, kind: input, shape index: {}]
  %s3 = inlined_call_operand.vmem [shape: f32[1,128], index: 3, kind: input, shape index: {}]
  %s4 = inlined_call_operand.vmem [shape: bf16[128,128], index: 4, kind: input, shape index: {}]
  %s5 = inlined_call_operand.vmem [shape: f32[1,128], index: 5, kind: input, shape index: {}]
  %s6 = inlined_call_operand.vmem [shape: bf16[128,256], index: 6, kind: input, shape index: {}]
  %s7 = inlined_call_operand.vmem [shape: f32[1,256], index: 7, kind: input, shape index: {}]
  %s8 = inlined_call_operand.vmem [shape: f32[8,256], index: 8, kind: output, shape index: {}]
  %s9 = sld [smem:[#allocation0]]
  $region42: #{pointnetpp_forward.4} parent=0
    _
  %s11 = ssub.s32 1, %s9
  %s12 = scalar_select 0, %s11, %s9
  // Predicated region
  $region2: #{pointnetpp_forward.4} parent=0 // pred_check
    _
  $region3: #{pointnetpp_forward.4} parent=0 // pred_check_branch
    %14 = sbr.rel (0) target = $region5
  $region4: #{pointnetpp_forward.4} parent=0 // pred_region
    _
  $region5: #{pointnetpp_forward.4} parent=0 // pred_fallthru
    _
  // Predicated region
  $region6: #{pointnetpp_forward.4} parent=0 // pred_check
    _
  $region7: #{pointnetpp_forward.4} parent=0 // pred_check_branch
    %16 = sbr.rel (0) target = $region9
  $region8: #{pointnetpp_forward.4} parent=0 // pred_region
    _
  $region9: #{pointnetpp_forward.4} parent=0 // pred_fallthru
    _
  // Predicated region
  $region10: #{pointnetpp_forward.4} parent=0 // pred_check
    _
  $region11: #{pointnetpp_forward.4} parent=0 // pred_check_branch
    %18 = sbr.rel (0) target = $region13
  $region12: #{pointnetpp_forward.4} parent=0 // pred_region
    _
  $region13: #{pointnetpp_forward.4} parent=0 // pred_fallthru
    _
  // Predicated region
  $region14: #{pointnetpp_forward.4} parent=0 // pred_check
    _
  $region15: #{pointnetpp_forward.4} parent=0 // pred_check_branch
    %20 = sbr.rel (0) target = $region17
  $region16: #{pointnetpp_forward.4} parent=0 // pred_region
    _
  $region17: #{pointnetpp_forward.4} parent=0 // pred_fallthru
    _
  // Predicated region
  $region18: #{pointnetpp_forward.4} parent=0 // pred_check
    _
  $region19: #{pointnetpp_forward.4} parent=0 // pred_check_branch
    %22 = sbr.rel (0) target = $region21
  $region20: #{pointnetpp_forward.4} parent=0 // pred_region
    _
  $region21: #{pointnetpp_forward.4} parent=0 // pred_fallthru
    _
  // Predicated region
  $region22: #{pointnetpp_forward.4} parent=0 // pred_check
    _
  $region23: #{pointnetpp_forward.4} parent=0 // pred_check_branch
    %24 = sbr.rel (0) target = $region25
  $region24: #{pointnetpp_forward.4} parent=0 // pred_region
    _
  $region25: #{pointnetpp_forward.4} parent=0 // pred_fallthru
    _
  // Predicated region
  $region26: #{pointnetpp_forward.4} parent=0 // pred_check
    _
  $region27: #{pointnetpp_forward.4} parent=0 // pred_check_branch
    %26 = sbr.rel (0) target = $region29
  $region28: #{pointnetpp_forward.4} parent=0 // pred_region
    _
  $region29: #{pointnetpp_forward.4} parent=0 // pred_fallthru
    _
  // Predicated region
  $region30: #{pointnetpp_forward.4} parent=0 // pred_check
    _
  $region31: #{pointnetpp_forward.4} parent=0 // pred_check_branch
    %28 = sbr.rel (0) target = $region33
  $region32: #{pointnetpp_forward.4} parent=0 // pred_region
    _
  $region33: #{pointnetpp_forward.4} parent=0 // pred_fallthru
    _
  %v30 = vld [vmem:[%s0] sm:$0xff]
  %v31 = vld [vmem:[%s0 + $0x8] sm:$0xff]
  %v32 = vld [vmem:[%s0 + $0x10] sm:$0xff]
  %v33 = vld [vmem:[%s0 + $0x18] sm:$0xff]
  %v34 = vld [vmem:[%s0 + $0x20] sm:$0xff]
  %v35 = vld [vmem:[%s0 + $0x28] sm:$0xff]
  %v36 = vld [vmem:[%s0 + $0x30] sm:$0xff]
  %v37 = vld [vmem:[%s0 + $0x38] sm:$0xff]
  %v38 = vld [vmem:[%s0 + $0x40] sm:$0xff]
  %v39 = vld [vmem:[%s0 + $0x48] sm:$0xff]
  %v40 = vld [vmem:[%s0 + $0x50] sm:$0xff]
  %v41 = vld [vmem:[%s0 + $0x58] sm:$0xff]
  %v42 = vld [vmem:[%s0 + $0x60] sm:$0xff]
  %v43 = vld [vmem:[%s0 + $0x68] sm:$0xff]
  %v44 = vld [vmem:[%s0 + $0x70] sm:$0xff]
  %v45 = vld [vmem:[%s0 + $0x78] sm:$0xff]
  %v46 = vld [vmem:[%s2] sm:$0xf]
  %v47 = vld [vmem:[%s2 + $0x4] sm:$0xf]
  %v48 = vld [vmem:[%s2 + $0x8] sm:$0xf]
  %v49 = vld [vmem:[%s2 + $0xc] sm:$0xf]
  %v50 = vld [vmem:[%s2 + $0x10] sm:$0xf]
  %v51 = vld [vmem:[%s2 + $0x14] sm:$0xf]
  %v52 = vld [vmem:[%s2 + $0x18] sm:$0xf]
  %v53 = vld [vmem:[%s2 + $0x1c] sm:$0xf]
  %v54 = vld [vmem:[%s2 + $0x20] sm:$0xf]
  %v55 = vld [vmem:[%s2 + $0x24] sm:$0xf]
  %v56 = vld [vmem:[%s2 + $0x28] sm:$0xf]
  %v57 = vld [vmem:[%s2 + $0x2c] sm:$0xf]
  %v58 = vld [vmem:[%s2 + $0x30] sm:$0xf]
  %v59 = vld [vmem:[%s2 + $0x34] sm:$0xf]
  %v60 = vld [vmem:[%s2 + $0x38] sm:$0xf]
  %v61 = vld [vmem:[%s2 + $0x3c] sm:$0xf]
  %v62 = vld [vmem:[%s2 + $0x40] sm:$0x3]
  %v63 = vld [vmem:[%s3] sm:$0x1]
  %v65 = vlaneseq
  %v66 = vshrl.u32 %v65, 7
  %v67 = vsub.s32 0, %v66
  %v68 = vrot.slane %v63, %v67
  %v86 = vunpack.c.l.b16 %v30
  %v87 = vunpack.c.h.b16 %v30
  %v88 = vunpack.c.l.b16 %v31
  %v89 = vunpack.c.h.b16 %v31
  %v90 = vunpack.c.l.b16 %v32
  %v91 = vunpack.c.h.b16 %v32
  %v92 = vunpack.c.l.b16 %v33
  %v93 = vunpack.c.h.b16 %v33
  %v94 = vunpack.c.l.b16 %v34
  %v95 = vunpack.c.h.b16 %v34
  %v96 = vunpack.c.l.b16 %v35
  %v97 = vunpack.c.h.b16 %v35
  %v98 = vunpack.c.l.b16 %v36
  %v99 = vunpack.c.h.b16 %v36
  %v100 = vunpack.c.l.b16 %v37
  %v101 = vunpack.c.h.b16 %v37
  %v102 = vunpack.c.l.b16 %v38
  %v103 = vunpack.c.h.b16 %v38
  %v104 = vunpack.c.l.b16 %v39
  %v105 = vunpack.c.h.b16 %v39
  %v106 = vunpack.c.l.b16 %v40
  %v107 = vunpack.c.h.b16 %v40
  %v108 = vunpack.c.l.b16 %v41
  %v109 = vunpack.c.h.b16 %v41
  %v110 = vunpack.c.l.b16 %v42
  %v111 = vunpack.c.h.b16 %v42
  %v112 = vunpack.c.l.b16 %v43
  %v113 = vunpack.c.h.b16 %v43
  %v114 = vunpack.c.l.b16 %v44
  %v115 = vunpack.c.h.b16 %v44
  %v116 = vunpack.c.l.b16 %v45
  %v117 = vunpack.c.h.b16 %v45
  %v118 = vpack.c.b16 %v88, %v86
  %v119 = vpack.c.b16 %v89, %v87
  %v120 = vpack.c.b16 %v92, %v90
  %v121 = vpack.c.b16 %v93, %v91
  %v122 = vpack.c.b16 %v96, %v94
  %v123 = vpack.c.b16 %v97, %v95
  %v124 = vpack.c.b16 %v100, %v98
  %v125 = vpack.c.b16 %v101, %v99
  %v126 = vpack.c.b16 %v104, %v102
  %v127 = vpack.c.b16 %v105, %v103
  %v128 = vpack.c.b16 %v108, %v106
  %v129 = vpack.c.b16 %v109, %v107
  %v130 = vpack.c.b16 %v112, %v110
  %v131 = vpack.c.b16 %v113, %v111
  %v132 = vpack.c.b16 %v116, %v114
  %v133 = vpack.c.b16 %v117, %v115
  %v159 = vunpack.c.l.b16 %v46
  %v160 = vunpack.c.l.b16 %v47
  %v161 = vunpack.c.l.b16 %v48
  %v162 = vunpack.c.l.b16 %v49
  %v163 = vunpack.c.l.b16 %v50
  %v164 = vunpack.c.l.b16 %v51
  %v165 = vunpack.c.l.b16 %v52
  %v166 = vunpack.c.l.b16 %v53
  %v167 = vunpack.c.l.b16 %v54
  %v168 = vunpack.c.l.b16 %v55
  %v169 = vunpack.c.l.b16 %v56
  %v170 = vunpack.c.l.b16 %v57
  %v171 = vunpack.c.l.b16 %v58
  %v172 = vunpack.c.l.b16 %v59
  %v173 = vunpack.c.l.b16 %v60
  %v174 = vunpack.c.l.b16 %v61
  %v175 = vunpack.c.l.b16 %v62
  %v176 = vpack.c.b16 %v160, %v159
  %v177 = vpack.c.b16 %v162, %v161
  %v178 = vpack.c.b16 %v164, %v163
  %v179 = vpack.c.b16 %v166, %v165
  %v180 = vpack.c.b16 %v168, %v167
  %v181 = vpack.c.b16 %v170, %v169
  %v182 = vpack.c.b16 %v172, %v171
  %v183 = vpack.c.b16 %v174, %v173
  %v184 = vpack.c.b16 %v175, %v175
  %vm193 = vcmask 23552
  %v195 = vsel %vm193, %v119, 0
  %v198 = vsel %vm193, %v121, 0
  %v201 = vsel %vm193, %v123, 0
  %v204 = vsel %vm193, %v125, 0
  %v207 = vsel %vm193, %v127, 0
  %v210 = vsel %vm193, %v129, 0
  %v213 = vsel %vm193, %v131, 0
  %v216 = vsel %vm193, %v133, 0
  %vm218 = vcmask 1040384
  %vm219 = vcmask 1041408
  %v220 = vsel %vm218, 4294967295, 65535
  %v221 = vsel %vm219, %v220, 0
  %v223 = vand.u32 %v184, %v221
  %225 = vmatprep.subr.bf16.mxu0 0
  %226 = vmatpush1.bf16.msra.mxu0 %v183
  %227 = vmatprep.subr.bf16.mxu0 0
  %228 = vmatpush1.bf16.msra.mxu0 %v182
  %229 = vmatprep.subr.bf16.mxu0 0
  %230 = vmatpush1.bf16.msra.mxu0 %v181
  %231 = vmatprep.subr.bf16.mxu0 0
  %232 = vmatpush1.bf16.msra.mxu0 %v180
  %233 = vmatprep.subr.bf16.mxu0 0
  %234 = vmatpush1.bf16.msra.mxu0 %v179
  %235 = vmatprep.subr.bf16.mxu0 0
  %236 = vmatpush1.bf16.msra.mxu0 %v178
  %237 = vmatprep.subr.bf16.mxu0 0
  %238 = vmatpush1.bf16.msra.mxu0 %v177
  %239 = vmatprep.subr.bf16.mxu0 0
  %240 = vmatpush1.bf16.msra.mxu0 %v176
  %241 = vmatprep.subr.bf16.mxu0 0
  %242 = vmatpush2.bf16.msra.mxu0 0
  %243 = vmatprep.subr.bf16.mxu0 0
  %244 = vmatpush2.bf16.msra.mxu0 0
  %245 = vmatprep.subr.bf16.mxu0 0
  %246 = vmatpush2.bf16.msra.mxu0 0
  %247 = vmatprep.subr.bf16.mxu0 0
  %248 = vmatpush2.bf16.msra.mxu0 0
  %249 = vmatprep.subr.bf16.mxu0 0
  %250 = vmatpush2.bf16.msra.mxu0 0
  %251 = vmatprep.subr.bf16.mxu0 0
  %252 = vmatpush2.bf16.msra.mxu0 0
  %253 = vmatprep.subr.bf16.mxu0 0
  %254 = vmatpush2.bf16.msra.mxu0 0
  %255 = vmatprep.subr.bf16.mxu0 0
  %256 = vmatpush2.bf16.msra.mxu0 %v223
  %257 = vmatprep.mubr.bf16.mxu0 %v195
  %258 = vmatmul.mubr.bf16.gmra.mxu0 %v118
  %v259 = vpop.f32.mrf.mxu0
  %v260 = vadd.f32 %v68, %v259
  %v261 = vpop.f32.mrf.mxu0
  %v262 = vpop.f32.mrf.mxu0
  %v263 = vadd.f32 %v68, %v262
  %v264 = vpop.f32.mrf.mxu0
  %265 = vmatprep.mubr.bf16.mxu0 %v198
  %266 = vmatmul.mubr.bf16.gmra.mxu0 %v120
  %v267 = vpop.f32.mrf.mxu0
  %v268 = vadd.f32 %v68, %v267
  %v269 = vpop.f32.mrf.mxu0
  %v270 = vpop.f32.mrf.mxu0
  %v271 = vadd.f32 %v68, %v270
  %v272 = vpop.f32.mrf.mxu0
  %273 = vmatprep.mubr.bf16.mxu0 %v201
  %274 = vmatmul.mubr.bf16.gmra.mxu0 %v122
  %v275 = vpop.f32.mrf.mxu0
  %v276 = vadd.f32 %v68, %v275
  %v277 = vpop.f32.mrf.mxu0
  %v278 = vpop.f32.mrf.mxu0
  %v279 = vadd.f32 %v68, %v278
  %v280 = vpop.f32.mrf.mxu0
  %281 = vmatprep.mubr.bf16.mxu0 %v204
  %282 = vmatmul.mubr.bf16.gmra.mxu0 %v124
  %v283 = vpop.f32.mrf.mxu0
  %v284 = vadd.f32 %v68, %v283
  %v285 = vpop.f32.mrf.mxu0
  %v286 = vpop.f32.mrf.mxu0
  %v287 = vadd.f32 %v68, %v286
  %v288 = vpop.f32.mrf.mxu0
  %289 = vmatprep.mubr.bf16.mxu0 %v207
  %290 = vmatmul.mubr.bf16.gmra.mxu0 %v126
  %v291 = vpop.f32.mrf.mxu0
  %v292 = vadd.f32 %v68, %v291
  %v293 = vpop.f32.mrf.mxu0
  %v294 = vpop.f32.mrf.mxu0
  %v295 = vadd.f32 %v68, %v294
  %v296 = vpop.f32.mrf.mxu0
  %297 = vmatprep.mubr.bf16.mxu0 %v210
  %298 = vmatmul.mubr.bf16.gmra.mxu0 %v128
  %v299 = vpop.f32.mrf.mxu0
  %v300 = vadd.f32 %v68, %v299
  %v301 = vpop.f32.mrf.mxu0
  %v302 = vpop.f32.mrf.mxu0
  %v303 = vadd.f32 %v68, %v302
  %v304 = vpop.f32.mrf.mxu0
  %305 = vmatprep.mubr.bf16.mxu0 %v213
  %306 = vmatmul.mubr.bf16.gmra.mxu0 %v130
  %v307 = vpop.f32.mrf.mxu0
  %v308 = vadd.f32 %v68, %v307
  %v309 = vpop.f32.mrf.mxu0
  %v310 = vpop.f32.mrf.mxu0
  %v311 = vadd.f32 %v68, %v310
  %v312 = vpop.f32.mrf.mxu0
  %313 = vmatprep.mubr.bf16.mxu0 %v216
  %314 = vmatmul.mubr.bf16.gmra.mxu0 %v132
  %v315 = vpop.f32.mrf.mxu0
  %v316 = vadd.f32 %v68, %v315
  %v317 = vpop.f32.mrf.mxu0
  %v318 = vpop.f32.mrf.mxu0
  %v319 = vadd.f32 %v68, %v318
  %v320 = vpop.f32.mrf.mxu0
  %321 = vdwg.mxu0
  %v322 = vmax.f32 %v260, 0.0
  %v323 = vmax.f32 %v263, 0.0
  %v324 = vmax.f32 %v268, 0.0
  %v325 = vmax.f32 %v271, 0.0
  %v326 = vmax.f32 %v276, 0.0
  %v327 = vmax.f32 %v279, 0.0
  %v328 = vmax.f32 %v284, 0.0
  %v329 = vmax.f32 %v287, 0.0
  %v330 = vmax.f32 %v292, 0.0
  %v331 = vmax.f32 %v295, 0.0
  %v332 = vmax.f32 %v300, 0.0
  %v333 = vmax.f32 %v303, 0.0
  %v334 = vmax.f32 %v308, 0.0
  %v335 = vmax.f32 %v311, 0.0
  %v336 = vmax.f32 %v316, 0.0
  %v337 = vmax.f32 %v319, 0.0
  %v338 = vpack.c.bf16 %v323, %v322
  %v339 = vpack.c.bf16 %v325, %v324
  %v340 = vpack.c.bf16 %v327, %v326
  %v341 = vpack.c.bf16 %v329, %v328
  %v342 = vpack.c.bf16 %v331, %v330
  %v343 = vpack.c.bf16 %v333, %v332
  %v344 = vpack.c.bf16 %v335, %v334
  %v345 = vpack.c.bf16 %v337, %v336
  %v346 = vld [vmem:[%s4] sm:$0xf]
  %v347 = vld [vmem:[%s4 + $0x4] sm:$0xf]
  %v348 = vld [vmem:[%s4 + $0x8] sm:$0xf]
  %v349 = vld [vmem:[%s4 + $0xc] sm:$0xf]
  %v350 = vld [vmem:[%s4 + $0x10] sm:$0xf]
  %v351 = vld [vmem:[%s4 + $0x14] sm:$0xf]
  %v352 = vld [vmem:[%s4 + $0x18] sm:$0xf]
  %v353 = vld [vmem:[%s4 + $0x1c] sm:$0xf]
  %v354 = vld [vmem:[%s4 + $0x20] sm:$0xf]
  %v355 = vld [vmem:[%s4 + $0x24] sm:$0xf]
  %v356 = vld [vmem:[%s4 + $0x28] sm:$0xf]
  %v357 = vld [vmem:[%s4 + $0x2c] sm:$0xf]
  %v358 = vld [vmem:[%s4 + $0x30] sm:$0xf]
  %v359 = vld [vmem:[%s4 + $0x34] sm:$0xf]
  %v360 = vld [vmem:[%s4 + $0x38] sm:$0xf]
  %v361 = vld [vmem:[%s4 + $0x3c] sm:$0xf]
  %v362 = vld [vmem:[%s5] sm:$0x1]
  %v364 = vlaneseq
  %v365 = vshrl.u32 %v364, 7
  %v366 = vsub.s32 0, %v365
  %v367 = vrot.slane %v362, %v366
  %v385 = vunpack.c.l.b16 %v346
  %v386 = vunpack.c.l.b16 %v347
  %v387 = vunpack.c.l.b16 %v348
  %v388 = vunpack.c.l.b16 %v349
  %v389 = vunpack.c.l.b16 %v350
  %v390 = vunpack.c.l.b16 %v351
  %v391 = vunpack.c.l.b16 %v352
  %v392 = vunpack.c.l.b16 %v353
  %v393 = vunpack.c.l.b16 %v354
  %v394 = vunpack.c.l.b16 %v355
  %v395 = vunpack.c.l.b16 %v356
  %v396 = vunpack.c.l.b16 %v357
  %v397 = vunpack.c.l.b16 %v358
  %v398 = vunpack.c.l.b16 %v359
  %v399 = vunpack.c.l.b16 %v360
  %v400 = vunpack.c.l.b16 %v361
  %v401 = vpack.c.b16 %v386, %v385
  %v402 = vpack.c.b16 %v388, %v387
  %v403 = vpack.c.b16 %v390, %v389
  %v404 = vpack.c.b16 %v392, %v391
  %v405 = vpack.c.b16 %v394, %v393
  %v406 = vpack.c.b16 %v396, %v395
  %v407 = vpack.c.b16 %v398, %v397
  %v408 = vpack.c.b16 %v400, %v399
  %417 = vmatprep.subr.bf16.mxu0 0
  %418 = vmatpush1.bf16.msra.mxu0 %v408
  %419 = vmatprep.subr.bf16.mxu0 0
  %420 = vmatpush1.bf16.msra.mxu0 %v407
  %421 = vmatprep.subr.bf16.mxu0 0
  %422 = vmatpush1.bf16.msra.mxu0 %v406
  %423 = vmatprep.subr.bf16.mxu0 0
  %424 = vmatpush1.bf16.msra.mxu0 %v405
  %425 = vmatprep.subr.bf16.mxu0 0
  %426 = vmatpush1.bf16.msra.mxu0 %v404
  %427 = vmatprep.subr.bf16.mxu0 0
  %428 = vmatpush1.bf16.msra.mxu0 %v403
  %429 = vmatprep.subr.bf16.mxu0 0
  %430 = vmatpush1.bf16.msra.mxu0 %v402
  %431 = vmatprep.subr.bf16.mxu0 0
  %432 = vmatpush1.bf16.msra.mxu0 %v401
  %433 = vmatprep.subr.bf16.mxu0 0
  %434 = vmatpush2.bf16.msra.mxu0 0
  %435 = vmatprep.subr.bf16.mxu0 0
  %436 = vmatpush2.bf16.msra.mxu0 0
  %437 = vmatprep.subr.bf16.mxu0 0
  %438 = vmatpush2.bf16.msra.mxu0 0
  %439 = vmatprep.subr.bf16.mxu0 0
  %440 = vmatpush2.bf16.msra.mxu0 0
  %441 = vmatprep.subr.bf16.mxu0 0
  %442 = vmatpush2.bf16.msra.mxu0 0
  %443 = vmatprep.subr.bf16.mxu0 0
  %444 = vmatpush2.bf16.msra.mxu0 0
  %445 = vmatprep.subr.bf16.mxu0 0
  %446 = vmatpush2.bf16.msra.mxu0 0
  %447 = vmatprep.subr.bf16.mxu0 0
  %448 = vmatpush2.bf16.msra.mxu0 0
  %449 = vmatprep.mubr.bf16.mxu0 0
  %450 = vmatmul.mubr.bf16.gmra.mxu0 %v338
  %v451 = vpop.f32.mrf.mxu0
  %v452 = vadd.f32 %v367, %v451
  %v453 = vpop.f32.mrf.mxu0
  %v454 = vpop.f32.mrf.mxu0
  %v455 = vadd.f32 %v367, %v454
  %v456 = vpop.f32.mrf.mxu0
  %457 = vmatprep.mubr.bf16.mxu0 0
  %458 = vmatmul.mubr.bf16.gmra.mxu0 %v339
  %v459 = vpop.f32.mrf.mxu0
  %v460 = vadd.f32 %v367, %v459
  %v461 = vpop.f32.mrf.mxu0
  %v462 = vpop.f32.mrf.mxu0
  %v463 = vadd.f32 %v367, %v462
  %v464 = vpop.f32.mrf.mxu0
  %465 = vmatprep.mubr.bf16.mxu0 0
  %466 = vmatmul.mubr.bf16.gmra.mxu0 %v340
  %v467 = vpop.f32.mrf.mxu0
  %v468 = vadd.f32 %v367, %v467
  %v469 = vpop.f32.mrf.mxu0
  %v470 = vpop.f32.mrf.mxu0
  %v471 = vadd.f32 %v367, %v470
  %v472 = vpop.f32.mrf.mxu0
  %473 = vmatprep.mubr.bf16.mxu0 0
  %474 = vmatmul.mubr.bf16.gmra.mxu0 %v341
  %v475 = vpop.f32.mrf.mxu0
  %v476 = vadd.f32 %v367, %v475
  %v477 = vpop.f32.mrf.mxu0
  %v478 = vpop.f32.mrf.mxu0
  %v479 = vadd.f32 %v367, %v478
  %v480 = vpop.f32.mrf.mxu0
  %481 = vmatprep.mubr.bf16.mxu0 0
  %482 = vmatmul.mubr.bf16.gmra.mxu0 %v342
  %v483 = vpop.f32.mrf.mxu0
  %v484 = vadd.f32 %v367, %v483
  %v485 = vpop.f32.mrf.mxu0
  %v486 = vpop.f32.mrf.mxu0
  %v487 = vadd.f32 %v367, %v486
  %v488 = vpop.f32.mrf.mxu0
  %489 = vmatprep.mubr.bf16.mxu0 0
  %490 = vmatmul.mubr.bf16.gmra.mxu0 %v343
  %v491 = vpop.f32.mrf.mxu0
  %v492 = vadd.f32 %v367, %v491
  %v493 = vpop.f32.mrf.mxu0
  %v494 = vpop.f32.mrf.mxu0
  %v495 = vadd.f32 %v367, %v494
  %v496 = vpop.f32.mrf.mxu0
  %497 = vmatprep.mubr.bf16.mxu0 0
  %498 = vmatmul.mubr.bf16.gmra.mxu0 %v344
  %v499 = vpop.f32.mrf.mxu0
  %v500 = vadd.f32 %v367, %v499
  %v501 = vpop.f32.mrf.mxu0
  %v502 = vpop.f32.mrf.mxu0
  %v503 = vadd.f32 %v367, %v502
  %v504 = vpop.f32.mrf.mxu0
  %505 = vmatprep.mubr.bf16.mxu0 0
  %506 = vmatmul.mubr.bf16.gmra.mxu0 %v345
  %v507 = vpop.f32.mrf.mxu0
  %v508 = vadd.f32 %v367, %v507
  %v509 = vpop.f32.mrf.mxu0
  %v510 = vpop.f32.mrf.mxu0
  %v511 = vadd.f32 %v367, %v510
  %v512 = vpop.f32.mrf.mxu0
  %513 = vdwg.mxu0
  %v514 = vmax.f32 %v452, 0.0
  %v515 = vmax.f32 %v455, 0.0
  %v516 = vmax.f32 %v460, 0.0
  %v517 = vmax.f32 %v463, 0.0
  %v518 = vmax.f32 %v468, 0.0
  %v519 = vmax.f32 %v471, 0.0
  %v520 = vmax.f32 %v476, 0.0
  %v521 = vmax.f32 %v479, 0.0
  %v522 = vmax.f32 %v484, 0.0
  %v523 = vmax.f32 %v487, 0.0
  %v524 = vmax.f32 %v492, 0.0
  %v525 = vmax.f32 %v495, 0.0
  %v526 = vmax.f32 %v500, 0.0
  %v527 = vmax.f32 %v503, 0.0
  %v528 = vmax.f32 %v508, 0.0
  %v529 = vmax.f32 %v511, 0.0
  %v530 = vpack.c.bf16 %v515, %v514
  %v531 = vpack.c.bf16 %v517, %v516
  %v532 = vpack.c.bf16 %v519, %v518
  %v533 = vpack.c.bf16 %v521, %v520
  %v534 = vpack.c.bf16 %v523, %v522
  %v535 = vpack.c.bf16 %v525, %v524
  %v536 = vpack.c.bf16 %v527, %v526
  %v537 = vpack.c.bf16 %v529, %v528
  %v538 = vld [vmem:[%s6] sm:$0xff]
  %v539 = vld [vmem:[%s6 + $0x8] sm:$0xff]
  %v540 = vld [vmem:[%s6 + $0x10] sm:$0xff]
  %v541 = vld [vmem:[%s6 + $0x18] sm:$0xff]
  %v542 = vld [vmem:[%s6 + $0x20] sm:$0xff]
  %v543 = vld [vmem:[%s6 + $0x28] sm:$0xff]
  %v544 = vld [vmem:[%s6 + $0x30] sm:$0xff]
  %v545 = vld [vmem:[%s6 + $0x38] sm:$0xff]
  %v546 = vld [vmem:[%s6 + $0x40] sm:$0xff]
  %v547 = vld [vmem:[%s6 + $0x48] sm:$0xff]
  %v548 = vld [vmem:[%s6 + $0x50] sm:$0xff]
  %v549 = vld [vmem:[%s6 + $0x58] sm:$0xff]
  %v550 = vld [vmem:[%s6 + $0x60] sm:$0xff]
  %v551 = vld [vmem:[%s6 + $0x68] sm:$0xff]
  %v552 = vld [vmem:[%s6 + $0x70] sm:$0xff]
  %v553 = vld [vmem:[%s6 + $0x78] sm:$0xff]
  %v554 = vld [vmem:[%s7] sm:$0x3]
  %v556 = vlaneseq
  %v557 = vshrl.u32 %v556, 7
  %v558 = vsub.s32 0, %v557
  %v559 = vrot.slane %v554, %v558
  %v560 = vlaneseq
  %v561 = vshrl.u32 %v560, 7
  %v562 = vsub.s32 1, %v561
  %v563 = vrot.slane %v554, %v562
  %v582 = vunpack.c.l.b16 %v538
  %v583 = vunpack.c.h.b16 %v538
  %v584 = vunpack.c.l.b16 %v539
  %v585 = vunpack.c.h.b16 %v539
  %v586 = vunpack.c.l.b16 %v540
  %v587 = vunpack.c.h.b16 %v540
  %v588 = vunpack.c.l.b16 %v541
  %v589 = vunpack.c.h.b16 %v541
  %v590 = vunpack.c.l.b16 %v542
  %v591 = vunpack.c.h.b16 %v542
  %v592 = vunpack.c.l.b16 %v543
  %v593 = vunpack.c.h.b16 %v543
  %v594 = vunpack.c.l.b16 %v544
  %v595 = vunpack.c.h.b16 %v544
  %v596 = vunpack.c.l.b16 %v545
  %v597 = vunpack.c.h.b16 %v545
  %v598 = vunpack.c.l.b16 %v546
  %v599 = vunpack.c.h.b16 %v546
  %v600 = vunpack.c.l.b16 %v547
  %v601 = vunpack.c.h.b16 %v547
  %v602 = vunpack.c.l.b16 %v548
  %v603 = vunpack.c.h.b16 %v548
  %v604 = vunpack.c.l.b16 %v549
  %v605 = vunpack.c.h.b16 %v549
  %v606 = vunpack.c.l.b16 %v550
  %v607 = vunpack.c.h.b16 %v550
  %v608 = vunpack.c.l.b16 %v551
  %v609 = vunpack.c.h.b16 %v551
  %v610 = vunpack.c.l.b16 %v552
  %v611 = vunpack.c.h.b16 %v552
  %v612 = vunpack.c.l.b16 %v553
  %v613 = vunpack.c.h.b16 %v553
  %v614 = vpack.c.b16 %v584, %v582
  %v615 = vpack.c.b16 %v585, %v583
  %v616 = vpack.c.b16 %v588, %v586
  %v617 = vpack.c.b16 %v589, %v587
  %v618 = vpack.c.b16 %v592, %v590
  %v619 = vpack.c.b16 %v593, %v591
  %v620 = vpack.c.b16 %v596, %v594
  %v621 = vpack.c.b16 %v597, %v595
  %v622 = vpack.c.b16 %v600, %v598
  %v623 = vpack.c.b16 %v601, %v599
  %v624 = vpack.c.b16 %v604, %v602
  %v625 = vpack.c.b16 %v605, %v603
  %v626 = vpack.c.b16 %v608, %v606
  %v627 = vpack.c.b16 %v609, %v607
  %v628 = vpack.c.b16 %v612, %v610
  %v629 = vpack.c.b16 %v613, %v611
  %646 = vmatprep.subr.bf16.mxu0 %v629
  %647 = vmatpush1.bf16.msra.mxu0 %v628
  %648 = vmatprep.subr.bf16.mxu0 %v627
  %649 = vmatpush1.bf16.msra.mxu0 %v626
  %650 = vmatprep.subr.bf16.mxu0 %v625
  %651 = vmatpush1.bf16.msra.mxu0 %v624
  %652 = vmatprep.subr.bf16.mxu0 %v623
  %653 = vmatpush1.bf16.msra.mxu0 %v622
  %654 = vmatprep.subr.bf16.mxu0 %v621
  %655 = vmatpush1.bf16.msra.mxu0 %v620
  %656 = vmatprep.subr.bf16.mxu0 %v619
  %657 = vmatpush1.bf16.msra.mxu0 %v618
  %658 = vmatprep.subr.bf16.mxu0 %v617
  %659 = vmatpush1.bf16.msra.mxu0 %v616
  %660 = vmatprep.subr.bf16.mxu0 %v615
  %661 = vmatpush1.bf16.msra.mxu0 %v614
  %662 = vmatprep.subr.bf16.mxu0 0
  %663 = vmatpush2.bf16.msra.mxu0 0
  %664 = vmatprep.subr.bf16.mxu0 0
  %665 = vmatpush2.bf16.msra.mxu0 0
  %666 = vmatprep.subr.bf16.mxu0 0
  %667 = vmatpush2.bf16.msra.mxu0 0
  %668 = vmatprep.subr.bf16.mxu0 0
  %669 = vmatpush2.bf16.msra.mxu0 0
  %670 = vmatprep.subr.bf16.mxu0 0
  %671 = vmatpush2.bf16.msra.mxu0 0
  %672 = vmatprep.subr.bf16.mxu0 0
  %673 = vmatpush2.bf16.msra.mxu0 0
  %674 = vmatprep.subr.bf16.mxu0 0
  %675 = vmatpush2.bf16.msra.mxu0 0
  %676 = vmatprep.subr.bf16.mxu0 0
  %677 = vmatpush2.bf16.msra.mxu0 0
  %678 = vmatprep.mubr.bf16.mxu0 0
  %679 = vmatmul.mubr.bf16.gmra.mxu0 %v530
  %v680 = vpop.f32.mrf.mxu0
  %v681 = vadd.f32 %v559, %v680
  %v682 = vpop.f32.mrf.mxu0
  %v683 = vadd.f32 %v563, %v682
  %v684 = vpop.f32.mrf.mxu0
  %v685 = vadd.f32 %v559, %v684
  %v686 = vpop.f32.mrf.mxu0
  %v687 = vadd.f32 %v563, %v686
  %688 = vmatprep.mubr.bf16.mxu0 0
  %689 = vmatmul.mubr.bf16.gmra.mxu0 %v531
  %v690 = vpop.f32.mrf.mxu0
  %v691 = vadd.f32 %v559, %v690
  %v692 = vpop.f32.mrf.mxu0
  %v693 = vadd.f32 %v563, %v692
  %v694 = vpop.f32.mrf.mxu0
  %v695 = vadd.f32 %v559, %v694
  %v696 = vpop.f32.mrf.mxu0
  %v697 = vadd.f32 %v563, %v696
  %698 = vmatprep.mubr.bf16.mxu0 0
  %699 = vmatmul.mubr.bf16.gmra.mxu0 %v532
  %v700 = vpop.f32.mrf.mxu0
  %v701 = vadd.f32 %v559, %v700
  %v702 = vpop.f32.mrf.mxu0
  %v703 = vadd.f32 %v563, %v702
  %v704 = vpop.f32.mrf.mxu0
  %v705 = vadd.f32 %v559, %v704
  %v706 = vpop.f32.mrf.mxu0
  %v707 = vadd.f32 %v563, %v706
  %708 = vmatprep.mubr.bf16.mxu0 0
  %709 = vmatmul.mubr.bf16.gmra.mxu0 %v533
  %v710 = vpop.f32.mrf.mxu0
  %v711 = vadd.f32 %v559, %v710
  %v712 = vpop.f32.mrf.mxu0
  %v713 = vadd.f32 %v563, %v712
  %v714 = vpop.f32.mrf.mxu0
  %v715 = vadd.f32 %v559, %v714
  %v716 = vpop.f32.mrf.mxu0
  %v717 = vadd.f32 %v563, %v716
  %718 = vmatprep.mubr.bf16.mxu0 0
  %719 = vmatmul.mubr.bf16.gmra.mxu0 %v534
  %v720 = vpop.f32.mrf.mxu0
  %v721 = vadd.f32 %v559, %v720
  %v722 = vpop.f32.mrf.mxu0
  %v723 = vadd.f32 %v563, %v722
  %v724 = vpop.f32.mrf.mxu0
  %v725 = vadd.f32 %v559, %v724
  %v726 = vpop.f32.mrf.mxu0
  %v727 = vadd.f32 %v563, %v726
  %728 = vmatprep.mubr.bf16.mxu0 0
  %729 = vmatmul.mubr.bf16.gmra.mxu0 %v535
  %v730 = vpop.f32.mrf.mxu0
  %v731 = vadd.f32 %v559, %v730
  %v732 = vpop.f32.mrf.mxu0
  %v733 = vadd.f32 %v563, %v732
  %v734 = vpop.f32.mrf.mxu0
  %v735 = vadd.f32 %v559, %v734
  %v736 = vpop.f32.mrf.mxu0
  %v737 = vadd.f32 %v563, %v736
  %738 = vmatprep.mubr.bf16.mxu0 0
  %739 = vmatmul.mubr.bf16.gmra.mxu0 %v536
  %v740 = vpop.f32.mrf.mxu0
  %v741 = vadd.f32 %v559, %v740
  %v742 = vpop.f32.mrf.mxu0
  %v743 = vadd.f32 %v563, %v742
  %v744 = vpop.f32.mrf.mxu0
  %v745 = vadd.f32 %v559, %v744
  %v746 = vpop.f32.mrf.mxu0
  %v747 = vadd.f32 %v563, %v746
  %748 = vmatprep.mubr.bf16.mxu0 0
  %749 = vmatmul.mubr.bf16.gmra.mxu0 %v537
  %v750 = vpop.f32.mrf.mxu0
  %v751 = vadd.f32 %v559, %v750
  %v752 = vpop.f32.mrf.mxu0
  %v753 = vadd.f32 %v563, %v752
  %v754 = vpop.f32.mrf.mxu0
  %v755 = vadd.f32 %v559, %v754
  %v756 = vpop.f32.mrf.mxu0
  %v757 = vadd.f32 %v563, %v756
  %758 = vdwg.mxu0
  %v759 = vld [vmem:[%s1] sm:$0xff]
  %v760 = vld [vmem:[%s1 + $0x8] sm:$0xff]
  %v761 = vlaneseq
  %v762 = vshrl.u32 %v761, 7
  %v763 = vsub.s32 0, %v762
  %v764 = vrot.slane %v759, %v763
  %766 = vbcast.lane.b32.xlu0 %v764, 256
  %v767 = vpop.permute.xlu0 %766
  %v768 = vlaneseq
  %v769 = vshrl.u32 %v768, 7
  %v770 = vsub.s32 1, %v769
  %v771 = vrot.slane %v759, %v770
  %773 = vbcast.lane.b32.xlu0 %v771, 256
  %v774 = vpop.permute.xlu0 %773
  %v775 = vlaneseq
  %v776 = vshrl.u32 %v775, 7
  %v777 = vsub.s32 2, %v776
  %v778 = vrot.slane %v759, %v777
  %780 = vbcast.lane.b32.xlu0 %v778, 256
  %v781 = vpop.permute.xlu0 %780
  %v782 = vlaneseq
  %v783 = vshrl.u32 %v782, 7
  %v784 = vsub.s32 3, %v783
  %v785 = vrot.slane %v759, %v784
  %787 = vbcast.lane.b32.xlu0 %v785, 256
  %v788 = vpop.permute.xlu0 %787
  %v789 = vlaneseq
  %v790 = vshrl.u32 %v789, 7
  %v791 = vsub.s32 4, %v790
  %v792 = vrot.slane %v759, %v791
  %794 = vbcast.lane.b32.xlu0 %v792, 256
  %v795 = vpop.permute.xlu0 %794
  %v796 = vlaneseq
  %v797 = vshrl.u32 %v796, 7
  %v798 = vsub.s32 5, %v797
  %v799 = vrot.slane %v759, %v798
  %801 = vbcast.lane.b32.xlu0 %v799, 256
  %v802 = vpop.permute.xlu0 %801
  %v803 = vlaneseq
  %v804 = vshrl.u32 %v803, 7
  %v805 = vsub.s32 6, %v804
  %v806 = vrot.slane %v759, %v805
  %808 = vbcast.lane.b32.xlu0 %v806, 256
  %v809 = vpop.permute.xlu0 %808
  %v810 = vlaneseq
  %v811 = vshrl.u32 %v810, 7
  %v812 = vsub.s32 7, %v811
  %v813 = vrot.slane %v759, %v812
  %815 = vbcast.lane.b32.xlu0 %v813, 256
  %v816 = vpop.permute.xlu0 %815
  %v817 = vlaneseq
  %v818 = vshrl.u32 %v817, 7
  %v819 = vsub.s32 0, %v818
  %v820 = vrot.slane %v760, %v819
  %822 = vbcast.lane.b32.xlu0 %v820, 256
  %v823 = vpop.permute.xlu0 %822
  %v824 = vlaneseq
  %v825 = vshrl.u32 %v824, 7
  %v826 = vsub.s32 1, %v825
  %v827 = vrot.slane %v760, %v826
  %829 = vbcast.lane.b32.xlu0 %v827, 256
  %v830 = vpop.permute.xlu0 %829
  %v831 = vlaneseq
  %v832 = vshrl.u32 %v831, 7
  %v833 = vsub.s32 2, %v832
  %v834 = vrot.slane %v760, %v833
  %836 = vbcast.lane.b32.xlu0 %v834, 256
  %v837 = vpop.permute.xlu0 %836
  %v838 = vlaneseq
  %v839 = vshrl.u32 %v838, 7
  %v840 = vsub.s32 3, %v839
  %v841 = vrot.slane %v760, %v840
  %843 = vbcast.lane.b32.xlu0 %v841, 256
  %v844 = vpop.permute.xlu0 %843
  %v845 = vlaneseq
  %v846 = vshrl.u32 %v845, 7
  %v847 = vsub.s32 4, %v846
  %v848 = vrot.slane %v760, %v847
  %850 = vbcast.lane.b32.xlu0 %v848, 256
  %v851 = vpop.permute.xlu0 %850
  %v852 = vlaneseq
  %v853 = vshrl.u32 %v852, 7
  %v854 = vsub.s32 5, %v853
  %v855 = vrot.slane %v760, %v854
  %857 = vbcast.lane.b32.xlu0 %v855, 256
  %v858 = vpop.permute.xlu0 %857
  %v859 = vlaneseq
  %v860 = vshrl.u32 %v859, 7
  %v861 = vsub.s32 6, %v860
  %v862 = vrot.slane %v760, %v861
  %864 = vbcast.lane.b32.xlu0 %v862, 256
  %v865 = vpop.permute.xlu0 %864
  %v866 = vlaneseq
  %v867 = vshrl.u32 %v866, 7
  %v868 = vsub.s32 7, %v867
  %v869 = vrot.slane %v760, %v868
  %871 = vbcast.lane.b32.xlu0 %v869, 256
  %v872 = vpop.permute.xlu0 %871
  %vm873 = vcmp.gt.f32.partialorder %v767, 0.0
  %vm874 = vcmp.gt.f32.partialorder %v774, 0.0
  %vm875 = vcmp.gt.f32.partialorder %v781, 0.0
  %vm876 = vcmp.gt.f32.partialorder %v788, 0.0
  %vm877 = vcmp.gt.f32.partialorder %v795, 0.0
  %vm878 = vcmp.gt.f32.partialorder %v802, 0.0
  %vm879 = vcmp.gt.f32.partialorder %v809, 0.0
  %vm880 = vcmp.gt.f32.partialorder %v816, 0.0
  %vm881 = vcmp.gt.f32.partialorder %v823, 0.0
  %vm882 = vcmp.gt.f32.partialorder %v830, 0.0
  %vm883 = vcmp.gt.f32.partialorder %v837, 0.0
  %vm884 = vcmp.gt.f32.partialorder %v844, 0.0
  %vm885 = vcmp.gt.f32.partialorder %v851, 0.0
  %vm886 = vcmp.gt.f32.partialorder %v858, 0.0
  %vm887 = vcmp.gt.f32.partialorder %v865, 0.0
  %vm888 = vcmp.gt.f32.partialorder %v872, 0.0
  %v889 = vsel %vm873, 1, 0
  %v890 = vsel %vm874, 1, 0
  %v891 = vsel %vm875, 1, 0
  %v892 = vsel %vm876, 1, 0
  %v893 = vsel %vm877, 1, 0
  %v894 = vsel %vm878, 1, 0
  %v895 = vsel %vm879, 1, 0
  %v896 = vsel %vm880, 1, 0
  %v897 = vsel %vm881, 1, 0
  %v898 = vsel %vm882, 1, 0
  %v899 = vsel %vm883, 1, 0
  %v900 = vsel %vm884, 1, 0
  %v901 = vsel %vm885, 1, 0
  %v902 = vsel %vm886, 1, 0
  %v903 = vsel %vm887, 1, 0
  %v904 = vsel %vm888, 1, 0
  %vm905 = vcmp.eq.s32.totalorder %v889, 1
  %vm906 = vcmp.eq.s32.totalorder %v890, 1
  %vm907 = vcmp.eq.s32.totalorder %v891, 1
  %vm908 = vcmp.eq.s32.totalorder %v892, 1
  %vm909 = vcmp.eq.s32.totalorder %v893, 1
  %vm910 = vcmp.eq.s32.totalorder %v894, 1
  %vm911 = vcmp.eq.s32.totalorder %v895, 1
  %vm912 = vcmp.eq.s32.totalorder %v896, 1
  %vm913 = vcmp.eq.s32.totalorder %v897, 1
  %vm914 = vcmp.eq.s32.totalorder %v898, 1
  %vm915 = vcmp.eq.s32.totalorder %v899, 1
  %vm916 = vcmp.eq.s32.totalorder %v900, 1
  %vm917 = vcmp.eq.s32.totalorder %v901, 1
  %vm918 = vcmp.eq.s32.totalorder %v902, 1
  %vm919 = vcmp.eq.s32.totalorder %v903, 1
  %vm920 = vcmp.eq.s32.totalorder %v904, 1
  %v921 = vsel %vm905, %v681, -inf
  %v922 = vsel %vm905, %v683, -inf
  %v923 = vsel %vm906, %v685, -inf
  %v924 = vsel %vm906, %v687, -inf
  %v925 = vsel %vm907, %v691, -inf
  %v926 = vsel %vm907, %v693, -inf
  %v927 = vsel %vm908, %v695, -inf
  %v928 = vsel %vm908, %v697, -inf
  %v929 = vsel %vm909, %v701, -inf
  %v930 = vsel %vm909, %v703, -inf
  %v931 = vsel %vm910, %v705, -inf
  %v932 = vsel %vm910, %v707, -inf
  %v933 = vsel %vm911, %v711, -inf
  %v934 = vsel %vm911, %v713, -inf
  %v935 = vsel %vm912, %v715, -inf
  %v936 = vsel %vm912, %v717, -inf
  %v937 = vsel %vm913, %v721, -inf
  %v938 = vsel %vm913, %v723, -inf
  %v939 = vsel %vm914, %v725, -inf
  %v940 = vsel %vm914, %v727, -inf
  %v941 = vsel %vm915, %v731, -inf
  %v942 = vsel %vm915, %v733, -inf
  %v943 = vsel %vm916, %v735, -inf
  %v944 = vsel %vm916, %v737, -inf
  %v945 = vsel %vm917, %v741, -inf
  %v946 = vsel %vm917, %v743, -inf
  %v947 = vsel %vm918, %v745, -inf
  %v948 = vsel %vm918, %v747, -inf
  %v949 = vsel %vm919, %v751, -inf
  %v950 = vsel %vm919, %v753, -inf
  %v951 = vsel %vm920, %v755, -inf
  %v952 = vsel %vm920, %v757, -inf
  %v953 = vmax.f32 %v921, %v925
  %v954 = vmax.f32 %v923, %v927
  %v955 = vmax.f32 %v953, %v929
  %v956 = vmax.f32 %v954, %v931
  %v957 = vmax.f32 %v955, %v933
  %v958 = vmax.f32 %v956, %v935
  %v959 = vmax.f32 %v957, %v937
  %v960 = vmax.f32 %v958, %v939
  %v961 = vmax.f32 %v959, %v941
  %v962 = vmax.f32 %v960, %v943
  %v963 = vmax.f32 %v961, %v945
  %v964 = vmax.f32 %v962, %v947
  %v965 = vmax.f32 %v963, %v949
  %v966 = vmax.f32 %v964, %v951
  %v967 = vmax.f32 %v965, %v966
  %v968 = vmax.f32 %v922, %v926
  %v969 = vmax.f32 %v924, %v928
  %v970 = vmax.f32 %v968, %v930
  %v971 = vmax.f32 %v969, %v932
  %v972 = vmax.f32 %v970, %v934
  %v973 = vmax.f32 %v971, %v936
  %v974 = vmax.f32 %v972, %v938
  %v975 = vmax.f32 %v973, %v940
  %v976 = vmax.f32 %v974, %v942
  %v977 = vmax.f32 %v975, %v944
  %v978 = vmax.f32 %v976, %v946
  %v979 = vmax.f32 %v977, %v948
  %v980 = vmax.f32 %v978, %v950
  %v981 = vmax.f32 %v979, %v952
  %v982 = vmax.f32 %v980, %v981
  %983 = vst [vmem:[%s8] sm:$0xff] %v967
  %984 = vst [vmem:[%s8 + $0x8] sm:$0xff] %v982
  // Predicated region
  $region34: #{pointnetpp_forward.4} parent=0 // pred_check
    _
  $region35: #{pointnetpp_forward.4} parent=0 // pred_check_branch
    %986 = sbr.rel (0) target = $region37
  $region36: #{pointnetpp_forward.4} parent=0 // pred_region
    _
  $region37: #{pointnetpp_forward.4} parent=0 // pred_fallthru
    _
  // Predicated region
  $region38: #{pointnetpp_forward.4} parent=0 // pred_check
    _
  $region39: #{pointnetpp_forward.4} parent=0 // pred_check_branch
    %988 = sbr.rel (0) target = $region41
  $region40: #{pointnetpp_forward.4} parent=0 // pred_region
    _
  $region41: #{pointnetpp_forward.4} parent=0 // pred_fallthru
    _

// kernel: pointnetpp_forward.5
$region0: #{pointnetpp_forward.5}
  #allocation0 [shape = 'u32[]', space=smem, size = 0x4, offset = 0x4, fixed_abs, tag = 'smem constant byte address 0x4 - core index']
  #allocation1 [shape = 'u32[144,128]{1,0:T(1,128)}', space=vmem, size = 0x12000, scoped, tag = 'internal scratch']
  %s0 = inlined_call_operand.vmem [shape: bf16[4,8,259], index: 0, kind: input, shape index: {}]
  %s1 = inlined_call_operand.vmem [shape: bf16[259,256], index: 1, kind: input, shape index: {}]
  %s2 = inlined_call_operand.vmem [shape: f32[1,256], index: 2, kind: input, shape index: {}]
  %s3 = inlined_call_operand.vmem [shape: bf16[256,512], index: 3, kind: input, shape index: {}]
  %s4 = inlined_call_operand.vmem [shape: f32[1,512], index: 4, kind: input, shape index: {}]
  %s5 = inlined_call_operand.vmem [shape: bf16[512,1024], index: 5, kind: input, shape index: {}]
  %s6 = inlined_call_operand.vmem [shape: f32[1,1024], index: 6, kind: input, shape index: {}]
  %s7 = inlined_call_operand.vmem [shape: bf16[1024,512], index: 7, kind: input, shape index: {}]
  %s8 = inlined_call_operand.vmem [shape: f32[1,512], index: 8, kind: input, shape index: {}]
  %s9 = inlined_call_operand.vmem [shape: bf16[512,64], index: 9, kind: input, shape index: {}]
  %s10 = inlined_call_operand.vmem [shape: f32[1,64], index: 10, kind: input, shape index: {}]
  %s11 = inlined_call_operand.vmem [shape: f32[8,64], index: 11, kind: output, shape index: {}]
  %s12 = sld [smem:[#allocation0]]
  $region54: #{pointnetpp_forward.5} parent=0
    _
  %s14 = ssub.s32 1, %s12
  %s15 = scalar_select 0, %s14, %s12
  // Predicated region
  $region2: #{pointnetpp_forward.5} parent=0 // pred_check
    _
  $region3: #{pointnetpp_forward.5} parent=0 // pred_check_branch
    %17 = sbr.rel (0) target = $region5
  $region4: #{pointnetpp_forward.5} parent=0 // pred_region
    _
  $region5: #{pointnetpp_forward.5} parent=0 // pred_fallthru
    _
  // Predicated region
  $region6: #{pointnetpp_forward.5} parent=0 // pred_check
    _
  $region7: #{pointnetpp_forward.5} parent=0 // pred_check_branch
    %19 = sbr.rel (0) target = $region9
  $region8: #{pointnetpp_forward.5} parent=0 // pred_region
    _
  $region9: #{pointnetpp_forward.5} parent=0 // pred_fallthru
    _
  // Predicated region
  $region10: #{pointnetpp_forward.5} parent=0 // pred_check
    _
  $region11: #{pointnetpp_forward.5} parent=0 // pred_check_branch
    %21 = sbr.rel (0) target = $region13
  $region12: #{pointnetpp_forward.5} parent=0 // pred_region
    _
  $region13: #{pointnetpp_forward.5} parent=0 // pred_fallthru
    _
  // Predicated region
  $region14: #{pointnetpp_forward.5} parent=0 // pred_check
    _
  $region15: #{pointnetpp_forward.5} parent=0 // pred_check_branch
    %23 = sbr.rel (0) target = $region17
  $region16: #{pointnetpp_forward.5} parent=0 // pred_region
    _
  $region17: #{pointnetpp_forward.5} parent=0 // pred_fallthru
    _
  // Predicated region
  $region18: #{pointnetpp_forward.5} parent=0 // pred_check
    _
  $region19: #{pointnetpp_forward.5} parent=0 // pred_check_branch
    %25 = sbr.rel (0) target = $region21
  $region20: #{pointnetpp_forward.5} parent=0 // pred_region
    _
  $region21: #{pointnetpp_forward.5} parent=0 // pred_fallthru
    _
  // Predicated region
  $region22: #{pointnetpp_forward.5} parent=0 // pred_check
    _
  $region23: #{pointnetpp_forward.5} parent=0 // pred_check_branch
    %27 = sbr.rel (0) target = $region25
  $region24: #{pointnetpp_forward.5} parent=0 // pred_region
    _
  $region25: #{pointnetpp_forward.5} parent=0 // pred_fallthru
    _
  // Predicated region
  $region26: #{pointnetpp_forward.5} parent=0 // pred_check
    _
  $region27: #{pointnetpp_forward.5} parent=0 // pred_check_branch
    %29 = sbr.rel (0) target = $region29
  $region28: #{pointnetpp_forward.5} parent=0 // pred_region
    _
  $region29: #{pointnetpp_forward.5} parent=0 // pred_fallthru
    _
  // Predicated region
  $region30: #{pointnetpp_forward.5} parent=0 // pred_check
    _
  $region31: #{pointnetpp_forward.5} parent=0 // pred_check_branch
    %31 = sbr.rel (0) target = $region33
  $region32: #{pointnetpp_forward.5} parent=0 // pred_region
    _
  $region33: #{pointnetpp_forward.5} parent=0 // pred_fallthru
    _
  // Predicated region
  $region34: #{pointnetpp_forward.5} parent=0 // pred_check
    _
  $region35: #{pointnetpp_forward.5} parent=0 // pred_check_branch
    %33 = sbr.rel (0) target = $region37
  $region36: #{pointnetpp_forward.5} parent=0 // pred_region
    _
  $region37: #{pointnetpp_forward.5} parent=0 // pred_fallthru
    _
  // Predicated region
  $region38: #{pointnetpp_forward.5} parent=0 // pred_check
    _
  $region39: #{pointnetpp_forward.5} parent=0 // pred_check_branch
    %35 = sbr.rel (0) target = $region41
  $region40: #{pointnetpp_forward.5} parent=0 // pred_region
    _
  $region41: #{pointnetpp_forward.5} parent=0 // pred_fallthru
    _
  // Predicated region
  $region42: #{pointnetpp_forward.5} parent=0 // pred_check
    _
  $region43: #{pointnetpp_forward.5} parent=0 // pred_check_branch
    %37 = sbr.rel (0) target = $region45
  $region44: #{pointnetpp_forward.5} parent=0 // pred_region
    _
  $region45: #{pointnetpp_forward.5} parent=0 // pred_fallthru
    _
  %v39 = vld [vmem:[%s0] sm:$0xff]
  %v40 = vld [vmem:[%s0 + $0x8] sm:$0xf]
  %v41 = vld [vmem:[%s0 + $0xc] sm:$0xff]
  %v42 = vld [vmem:[%s0 + $0x14] sm:$0xf]
  %v43 = vld [vmem:[%s0 + $0x18] sm:$0xff]
  %v44 = vld [vmem:[%s0 + $0x20] sm:$0xf]
  %v45 = vld [vmem:[%s0 + $0x24] sm:$0xff]
  %v46 = vld [vmem:[%s0 + $0x2c] sm:$0xf]
  %v47 = vld [vmem:[%s1] sm:$0xff]
  %v48 = vld [vmem:[%s1 + $0x8] sm:$0xff]
  %v49 = vld [vmem:[%s1 + $0x10] sm:$0xff]
  %v50 = vld [vmem:[%s1 + $0x18] sm:$0xff]
  %v51 = vld [vmem:[%s1 + $0x20] sm:$0xff]
  %v52 = vld [vmem:[%s1 + $0x28] sm:$0xff]
  %v53 = vld [vmem:[%s1 + $0x30] sm:$0xff]
  %v54 = vld [vmem:[%s1 + $0x38] sm:$0xff]
  %v55 = vld [vmem:[%s1 + $0x40] sm:$0xff]
  %v56 = vld [vmem:[%s1 + $0x48] sm:$0xff]
  %v57 = vld [vmem:[%s1 + $0x50] sm:$0xff]
  %v58 = vld [vmem:[%s1 + $0x58] sm:$0xff]
  %v59 = vld [vmem:[%s1 + $0x60] sm:$0xff]
  %v60 = vld [vmem:[%s1 + $0x68] sm:$0xff]
  %v61 = vld [vmem:[%s1 + $0x70] sm:$0xff]
  %v62 = vld [vmem:[%s1 + $0x78] sm:$0xff]
  %v63 = vld [vmem:[%s1 + $0x80] sm:$0xff]
  %v64 = vld [vmem:[%s1 + $0x88] sm:$0xff]
  %v65 = vld [vmem:[%s1 + $0x90] sm:$0xff]
  %v66 = vld [vmem:[%s1 + $0x98] sm:$0xff]
  %v67 = vld [vmem:[%s1 + $0xa0] sm:$0xff]
  %v68 = vld [vmem:[%s1 + $0xa8] sm:$0xff]
  %v69 = vld [vmem:[%s1 + $0xb0] sm:$0xff]
  %v70 = vld [vmem:[%s1 + $0xb8] sm:$0xff]
  %v71 = vld [vmem:[%s1 + $0xc0] sm:$0xff]
  %v72 = vld [vmem:[%s1 + $0xc8] sm:$0xff]
  %v73 = vld [vmem:[%s1 + $0xd0] sm:$0xff]
  %v74 = vld [vmem:[%s1 + $0xd8] sm:$0xff]
  %v75 = vld [vmem:[%s1 + $0xe0] sm:$0xff]
  %v76 = vld [vmem:[%s1 + $0xe8] sm:$0xff]
  %v77 = vld [vmem:[%s1 + $0xf0] sm:$0xff]
  %v78 = vld [vmem:[%s1 + $0xf8] sm:$0xff]
  %v79 = vld [vmem:[%s1 + $0x100] sm:$0x33]
  %v80 = vld [vmem:[%s2] sm:$0x3]
  %v82 = vlaneseq
  %v83 = vshrl.u32 %v82, 7
  %v84 = vsub.s32 0, %v83
  %v85 = vrot.slane %v80, %v84
  %v86 = vlaneseq
  %v87 = vshrl.u32 %v86, 7
  %v88 = vsub.s32 1, %v87
  %v89 = vrot.slane %v80, %v88
  %v100 = vunpack.c.l.b16 %v39
  %v101 = vunpack.c.h.b16 %v39
  %v102 = vunpack.c.l.b16 %v40
  %v103 = vunpack.c.l.b16 %v41
  %v104 = vunpack.c.h.b16 %v41
  %v105 = vunpack.c.l.b16 %v42
  %v106 = vunpack.c.l.b16 %v43
  %v107 = vunpack.c.h.b16 %v43
  %v108 = vunpack.c.l.b16 %v44
  %v109 = vunpack.c.l.b16 %v45
  %v110 = vunpack.c.h.b16 %v45
  %v111 = vunpack.c.l.b16 %v46
  %v112 = vpack.c.b16 %v103, %v100
  %v113 = vpack.c.b16 %v104, %v101
  %v114 = vpack.c.b16 %v105, %v102
  %v115 = vpack.c.b16 %v109, %v106
  %v116 = vpack.c.b16 %v110, %v107
  %v117 = vpack.c.b16 %v111, %v108
  %v155 = vunpack.c.l.b16 %v47
  %v156 = vunpack.c.h.b16 %v47
  %v157 = vunpack.c.l.b16 %v48
  %v158 = vunpack.c.h.b16 %v48
  %v159 = vunpack.c.l.b16 %v49
  %v160 = vunpack.c.h.b16 %v49
  %v161 = vunpack.c.l.b16 %v50
  %v162 = vunpack.c.h.b16 %v50
  %v163 = vunpack.c.l.b16 %v51
  %v164 = vunpack.c.h.b16 %v51
  %v165 = vunpack.c.l.b16 %v52
  %v166 = vunpack.c.h.b16 %v52
  %v167 = vunpack.c.l.b16 %v53
  %v168 = vunpack.c.h.b16 %v53
  %v169 = vunpack.c.l.b16 %v54
  %v170 = vunpack.c.h.b16 %v54
  %v171 = vunpack.c.l.b16 %v55
  %v172 = vunpack.c.h.b16 %v55
  %v173 = vunpack.c.l.b16 %v56
  %v174 = vunpack.c.h.b16 %v56
  %v175 = vunpack.c.l.b16 %v57
  %v176 = vunpack.c.h.b16 %v57
  %v177 = vunpack.c.l.b16 %v58
  %v178 = vunpack.c.h.b16 %v58
  %v179 = vunpack.c.l.b16 %v59
  %v180 = vunpack.c.h.b16 %v59
  %v181 = vunpack.c.l.b16 %v60
  %v182 = vunpack.c.h.b16 %v60
  %v183 = vunpack.c.l.b16 %v61
  %v184 = vunpack.c.h.b16 %v61
  %v185 = vunpack.c.l.b16 %v62
  %v186 = vunpack.c.h.b16 %v62
  %v187 = vunpack.c.l.b16 %v63
  %v188 = vunpack.c.h.b16 %v63
  %v189 = vunpack.c.l.b16 %v64
  %v190 = vunpack.c.h.b16 %v64
  %v191 = vunpack.c.l.b16 %v65
  %v192 = vunpack.c.h.b16 %v65
  %v193 = vunpack.c.l.b16 %v66
  %v194 = vunpack.c.h.b16 %v66
  %v195 = vunpack.c.l.b16 %v67
  %v196 = vunpack.c.h.b16 %v67
  %v197 = vunpack.c.l.b16 %v68
  %v198 = vunpack.c.h.b16 %v68
  %v199 = vunpack.c.l.b16 %v69
  %v200 = vunpack.c.h.b16 %v69
  %v201 = vunpack.c.l.b16 %v70
  %v202 = vunpack.c.h.b16 %v70
  %v203 = vunpack.c.l.b16 %v71
  %v204 = vunpack.c.h.b16 %v71
  %v205 = vunpack.c.l.b16 %v72
  %v206 = vunpack.c.h.b16 %v72
  %v207 = vunpack.c.l.b16 %v73
  %v208 = vunpack.c.h.b16 %v73
  %v209 = vunpack.c.l.b16 %v74
  %v210 = vunpack.c.h.b16 %v74
  %v211 = vunpack.c.l.b16 %v75
  %v212 = vunpack.c.h.b16 %v75
  %v213 = vunpack.c.l.b16 %v76
  %v214 = vunpack.c.h.b16 %v76
  %v215 = vunpack.c.l.b16 %v77
  %v216 = vunpack.c.h.b16 %v77
  %v217 = vunpack.c.l.b16 %v78
  %v218 = vunpack.c.h.b16 %v78
  %v219 = vunpack.c.l.b16 %v79
  %v220 = vunpack.c.h.b16 %v79
  %v221 = vpack.c.b16 %v157, %v155
  %v222 = vpack.c.b16 %v158, %v156
  %v223 = vpack.c.b16 %v161, %v159
  %v224 = vpack.c.b16 %v162, %v160
  %v225 = vpack.c.b16 %v165, %v163
  %v226 = vpack.c.b16 %v166, %v164
  %v227 = vpack.c.b16 %v169, %v167
  %v228 = vpack.c.b16 %v170, %v168
  %v229 = vpack.c.b16 %v173, %v171
  %v230 = vpack.c.b16 %v174, %v172
  %v231 = vpack.c.b16 %v177, %v175
  %v232 = vpack.c.b16 %v178, %v176
  %v233 = vpack.c.b16 %v181, %v179
  %v234 = vpack.c.b16 %v182, %v180
  %v235 = vpack.c.b16 %v185, %v183
  %v236 = vpack.c.b16 %v186, %v184
  %v237 = vpack.c.b16 %v189, %v187
  %v238 = vpack.c.b16 %v190, %v188
  %v239 = vpack.c.b16 %v193, %v191
  %v240 = vpack.c.b16 %v194, %v192
  %v241 = vpack.c.b16 %v197, %v195
  %v242 = vpack.c.b16 %v198, %v196
  %v243 = vpack.c.b16 %v201, %v199
  %v244 = vpack.c.b16 %v202, %v200
  %v245 = vpack.c.b16 %v205, %v203
  %v246 = vpack.c.b16 %v206, %v204
  %v247 = vpack.c.b16 %v209, %v207
  %v248 = vpack.c.b16 %v210, %v208
  %v249 = vpack.c.b16 %v213, %v211
  %v250 = vpack.c.b16 %v214, %v212
  %v251 = vpack.c.b16 %v217, %v215
  %v252 = vpack.c.b16 %v218, %v216
  %v253 = vpack.c.b16 %v219, %v219
  %v254 = vpack.c.b16 %v220, %v220
  %vm287 = vcmask 23552
  %v289 = vsel %vm287, %v114, 0
  %v292 = vsel %vm287, %v117, 0
  %vm294 = vcmask 1040384
  %vm295 = vcmask 1041408
  %v296 = vsel %vm294, 4294967295, 65535
  %v297 = vsel %vm295, %v296, 0
  %v299 = vand.u32 %v253, %v297
  %v302 = vand.u32 %v254, %v297
  %304 = vmatprep.subr.bf16.mxu0 %v236
  %305 = vmatpush1.bf16.msra.mxu0 %v235
  %306 = vmatprep.subr.bf16.mxu0 %v234
  %307 = vmatpush1.bf16.msra.mxu0 %v233
  %308 = vmatprep.subr.bf16.mxu0 %v232
  %309 = vmatpush1.bf16.msra.mxu0 %v231
  %310 = vmatprep.subr.bf16.mxu0 %v230
  %311 = vmatpush1.bf16.msra.mxu0 %v229
  %312 = vmatprep.subr.bf16.mxu0 %v228
  %313 = vmatpush1.bf16.msra.mxu0 %v227
  %314 = vmatprep.subr.bf16.mxu0 %v226
  %315 = vmatpush1.bf16.msra.mxu0 %v225
  %316 = vmatprep.subr.bf16.mxu0 %v224
  %317 = vmatpush1.bf16.msra.mxu0 %v223
  %318 = vmatprep.subr.bf16.mxu0 %v222
  %319 = vmatpush1.bf16.msra.mxu0 %v221
  %320 = vmatprep.subr.bf16.mxu0 %v252
  %321 = vmatpush2.bf16.msra.mxu0 %v251
  %322 = vmatprep.subr.bf16.mxu0 %v250
  %323 = vmatpush2.bf16.msra.mxu0 %v249
  %324 = vmatprep.subr.bf16.mxu0 %v248
  %325 = vmatpush2.bf16.msra.mxu0 %v247
  %326 = vmatprep.subr.bf16.mxu0 %v246
  %327 = vmatpush2.bf16.msra.mxu0 %v245
  %328 = vmatprep.subr.bf16.mxu0 %v244
  %329 = vmatpush2.bf16.msra.mxu0 %v243
  %330 = vmatprep.subr.bf16.mxu0 %v242
  %331 = vmatpush2.bf16.msra.mxu0 %v241
  %332 = vmatprep.subr.bf16.mxu0 %v240
  %333 = vmatpush2.bf16.msra.mxu0 %v239
  %334 = vmatprep.subr.bf16.mxu0 %v238
  %335 = vmatpush2.bf16.msra.mxu0 %v237
  %336 = vmatprep.mubr.bf16.mxu0 %v113
  %337 = vmatmul.mubr.bf16.gmra.mxu0 %v112
  %v338 = vpop.f32.mrf.mxu0
  %v339 = vadd.f32 %v85, %v338
  %v340 = vpop.f32.mrf.mxu0
  %v341 = vadd.f32 %v89, %v340
  %v342 = vpop.f32.mrf.mxu0
  %v343 = vadd.f32 %v85, %v342
  %v344 = vpop.f32.mrf.mxu0
  %v345 = vadd.f32 %v89, %v344
  %346 = vmatprep.mubr.bf16.mxu0 %v116
  %347 = vmatmul.mubr.bf16.gmra.mxu0 %v115
  %v348 = vpop.f32.mrf.mxu0
  %v349 = vadd.f32 %v85, %v348
  %v350 = vpop.f32.mrf.mxu0
  %v351 = vadd.f32 %v89, %v350
  %v352 = vpop.f32.mrf.mxu0
  %v353 = vadd.f32 %v85, %v352
  %v354 = vpop.f32.mrf.mxu0
  %v355 = vadd.f32 %v89, %v354
  %356 = vdwg.mxu0
  %357 = vmatprep.subr.bf16.mxu0 0
  %358 = vmatpush1.bf16.msra.mxu0 0
  %359 = vmatprep.subr.bf16.mxu0 0
  %360 = vmatpush1.bf16.msra.mxu0 0
  %361 = vmatprep.subr.bf16.mxu0 0
  %362 = vmatpush1.bf16.msra.mxu0 0
  %363 = vmatprep.subr.bf16.mxu0 0
  %364 = vmatpush1.bf16.msra.mxu0 0
  %365 = vmatprep.subr.bf16.mxu0 0
  %366 = vmatpush1.bf16.msra.mxu0 0
  %367 = vmatprep.subr.bf16.mxu0 0
  %368 = vmatpush1.bf16.msra.mxu0 0
  %369 = vmatprep.subr.bf16.mxu0 0
  %370 = vmatpush1.bf16.msra.mxu0 0
  %371 = vmatprep.subr.bf16.mxu0 %v302
  %372 = vmatpush1.bf16.msra.mxu0 %v299
  %373 = vmatprep.subr.bf16.mxu0 0
  %374 = vmatpush2.bf16.msra.mxu0 0
  %375 = vmatprep.subr.bf16.mxu0 0
  %376 = vmatpush2.bf16.msra.mxu0 0
  %377 = vmatprep.subr.bf16.mxu0 0
  %378 = vmatpush2.bf16.msra.mxu0 0
  %379 = vmatprep.subr.bf16.mxu0 0
  %380 = vmatpush2.bf16.msra.mxu0 0
  %381 = vmatprep.subr.bf16.mxu0 0
  %382 = vmatpush2.bf16.msra.mxu0 0
  %383 = vmatprep.subr.bf16.mxu0 0
  %384 = vmatpush2.bf16.msra.mxu0 0
  %385 = vmatprep.subr.bf16.mxu0 0
  %386 = vmatpush2.bf16.msra.mxu0 0
  %387 = vmatprep.subr.bf16.mxu0 0
  %388 = vmatpush2.bf16.msra.mxu0 0
  %389 = vmatprep.mubr.bf16.mxu0 0
  %390 = vmatmul.mubr.bf16.gmra.mxu0 %v289
  %v391 = vpop.f32.mrf.mxu0
  %v392 = vadd.f32 %v339, %v391
  %v393 = vpop.f32.mrf.mxu0
  %v394 = vadd.f32 %v341, %v393
  %v395 = vpop.f32.mrf.mxu0
  %v396 = vadd.f32 %v343, %v395
  %v397 = vpop.f32.mrf.mxu0
  %v398 = vadd.f32 %v345, %v397
  %399 = vmatprep.mubr.bf16.mxu0 0
  %400 = vmatmul.mubr.bf16.gmra.mxu0 %v292
  %v401 = vpop.f32.mrf.mxu0
  %v402 = vadd.f32 %v349, %v401
  %v403 = vpop.f32.mrf.mxu0
  %v404 = vadd.f32 %v351, %v403
  %v405 = vpop.f32.mrf.mxu0
  %v406 = vadd.f32 %v353, %v405
  %v407 = vpop.f32.mrf.mxu0
  %v408 = vadd.f32 %v355, %v407
  %409 = vdwg.mxu0
  %v410 = vmax.f32 %v392, 0.0
  %v411 = vmax.f32 %v394, 0.0
  %v412 = vmax.f32 %v396, 0.0
  %v413 = vmax.f32 %v398, 0.0
  %v414 = vmax.f32 %v402, 0.0
  %v415 = vmax.f32 %v404, 0.0
  %v416 = vmax.f32 %v406, 0.0
  %v417 = vmax.f32 %v408, 0.0
  %v418 = vpack.c.bf16 %v412, %v410
  %v419 = vpack.c.bf16 %v413, %v411
  %v420 = vpack.c.bf16 %v416, %v414
  %v421 = vpack.c.bf16 %v417, %v415
  %v422 = vld [vmem:[%s3] sm:$0xff]
  %v423 = vld [vmem:[%s3 + $0x8] sm:$0xff]
  %v424 = vld [vmem:[%s3 + $0x10] sm:$0xff]
  %v425 = vld [vmem:[%s3 + $0x18] sm:$0xff]
  %v426 = vld [vmem:[%s3 + $0x20] sm:$0xff]
  %v427 = vld [vmem:[%s3 + $0x28] sm:$0xff]
  %v428 = vld [vmem:[%s3 + $0x30] sm:$0xff]
  %v429 = vld [vmem:[%s3 + $0x38] sm:$0xff]
  %v430 = vld [vmem:[%s3 + $0x40] sm:$0xff]
  %v431 = vld [vmem:[%s3 + $0x48] sm:$0xff]
  %v432 = vld [vmem:[%s3 + $0x50] sm:$0xff]
  %v433 = vld [vmem:[%s3 + $0x58] sm:$0xff]
  %v434 = vld [vmem:[%s3 + $0x60] sm:$0xff]
  %v435 = vld [vmem:[%s3 + $0x68] sm:$0xff]
  %v436 = vld [vmem:[%s3 + $0x70] sm:$0xff]
  %v437 = vld [vmem:[%s3 + $0x78] sm:$0xff]
  %v438 = vld [vmem:[%s3 + $0x80] sm:$0xff]
  %v439 = vld [vmem:[%s3 + $0x88] sm:$0xff]
  %v440 = vld [vmem:[%s3 + $0x90] sm:$0xff]
  %v441 = vld [vmem:[%s3 + $0x98] sm:$0xff]
  %v442 = vld [vmem:[%s3 + $0xa0] sm:$0xff]
  %v443 = vld [vmem:[%s3 + $0xa8] sm:$0xff]
  %v444 = vld [vmem:[%s3 + $0xb0] sm:$0xff]
  %v445 = vld [vmem:[%s3 + $0xb8] sm:$0xff]
  %v446 = vld [vmem:[%s3 + $0xc0] sm:$0xff]
  %v447 = vld [vmem:[%s3 + $0xc8] sm:$0xff]
  %v448 = vld [vmem:[%s3 + $0xd0] sm:$0xff]
  %v449 = vld [vmem:[%s3 + $0xd8] sm:$0xff]
  %v450 = vld [vmem:[%s3 + $0xe0] sm:$0xff]
  %v451 = vld [vmem:[%s3 + $0xe8] sm:$0xff]
  %v452 = vld [vmem:[%s3 + $0xf0] sm:$0xff]
  %v453 = vld [vmem:[%s3 + $0xf8] sm:$0xff]
  %v454 = vld [vmem:[%s3 + $0x100] sm:$0xff]
  %v455 = vld [vmem:[%s3 + $0x108] sm:$0xff]
  %v456 = vld [vmem:[%s3 + $0x110] sm:$0xff]
  %v457 = vld [vmem:[%s3 + $0x118] sm:$0xff]
  %v458 = vld [vmem:[%s3 + $0x120] sm:$0xff]
  %v459 = vld [vmem:[%s3 + $0x128] sm:$0xff]
  %v460 = vld [vmem:[%s3 + $0x130] sm:$0xff]
  %v461 = vld [vmem:[%s3 + $0x138] sm:$0xff]
  %v462 = vld [vmem:[%s3 + $0x140] sm:$0xff]
  %v463 = vld [vmem:[%s3 + $0x148] sm:$0xff]
  %v464 = vld [vmem:[%s3 + $0x150] sm:$0xff]
  %v465 = vld [vmem:[%s3 + $0x158] sm:$0xff]
  %v466 = vld [vmem:[%s3 + $0x160] sm:$0xff]
  %v467 = vld [vmem:[%s3 + $0x168] sm:$0xff]
  %v468 = vld [vmem:[%s3 + $0x170] sm:$0xff]
  %v469 = vld [vmem:[%s3 + $0x178] sm:$0xff]
  %v470 = vld [vmem:[%s3 + $0x180] sm:$0xff]
  %v471 = vld [vmem:[%s3 + $0x188] sm:$0xff]
  %v472 = vld [vmem:[%s3 + $0x190] sm:$0xff]
  %v473 = vld [vmem:[%s3 + $0x198] sm:$0xff]
  %v474 = vld [vmem:[%s3 + $0x1a0] sm:$0xff]
  %v475 = vld [vmem:[%s3 + $0x1a8] sm:$0xff]
  %v476 = vld [vmem:[%s3 + $0x1b0] sm:$0xff]
  %v477 = vld [vmem:[%s3 + $0x1b8] sm:$0xff]
  %v478 = vld [vmem:[%s3 + $0x1c0] sm:$0xff]
  %v479 = vld [vmem:[%s3 + $0x1c8] sm:$0xff]
  %v480 = vld [vmem:[%s3 + $0x1d0] sm:$0xff]
  %v481 = vld [vmem:[%s3 + $0x1d8] sm:$0xff]
  %v482 = vld [vmem:[%s3 + $0x1e0] sm:$0xff]
  %v483 = vld [vmem:[%s3 + $0x1e8] sm:$0xff]
  %v484 = vld [vmem:[%s3 + $0x1f0] sm:$0xff]
  %v485 = vld [vmem:[%s3 + $0x1f8] sm:$0xff]
  %v486 = vld [vmem:[%s4] sm:$0xf]
  %v488 = vlaneseq
  %v489 = vshrl.u32 %v488, 7
  %v490 = vsub.s32 0, %v489
  %v491 = vrot.slane %v486, %v490
  %v492 = vlaneseq
  %v493 = vshrl.u32 %v492, 7
  %v494 = vsub.s32 1, %v493
  %v495 = vrot.slane %v486, %v494
  %v496 = vlaneseq
  %v497 = vshrl.u32 %v496, 7
  %v498 = vsub.s32 2, %v497
  %v499 = vrot.slane %v486, %v498
  %v500 = vlaneseq
  %v501 = vshrl.u32 %v500, 7
  %v502 = vsub.s32 3, %v501
  %v503 = vrot.slane %v486, %v502
  %v572 = vunpack.c.l.b16 %v422
  %v573 = vunpack.c.h.b16 %v422
  %v574 = vunpack.c.l.b16 %v423
  %v575 = vunpack.c.h.b16 %v423
  %v576 = vunpack.c.l.b16 %v424
  %v577 = vunpack.c.h.b16 %v424
  %v578 = vunpack.c.l.b16 %v425
  %v579 = vunpack.c.h.b16 %v425
  %v580 = vunpack.c.l.b16 %v426
  %v581 = vunpack.c.h.b16 %v426
  %v582 = vunpack.c.l.b16 %v427
  %v583 = vunpack.c.h.b16 %v427
  %v584 = vunpack.c.l.b16 %v428
  %v585 = vunpack.c.h.b16 %v428
  %v586 = vunpack.c.l.b16 %v429
  %v587 = vunpack.c.h.b16 %v429
  %v588 = vunpack.c.l.b16 %v430
  %v589 = vunpack.c.h.b16 %v430
  %v590 = vunpack.c.l.b16 %v431
  %v591 = vunpack.c.h.b16 %v431
  %v592 = vunpack.c.l.b16 %v432
  %v593 = vunpack.c.h.b16 %v432
  %v594 = vunpack.c.l.b16 %v433
  %v595 = vunpack.c.h.b16 %v433
  %v596 = vunpack.c.l.b16 %v434
  %v597 = vunpack.c.h.b16 %v434
  %v598 = vunpack.c.l.b16 %v435
  %v599 = vunpack.c.h.b16 %v435
  %v600 = vunpack.c.l.b16 %v436
  %v601 = vunpack.c.h.b16 %v436
  %v602 = vunpack.c.l.b16 %v437
  %v603 = vunpack.c.h.b16 %v437
  %v604 = vunpack.c.l.b16 %v438
  %v605 = vunpack.c.h.b16 %v438
  %v606 = vunpack.c.l.b16 %v439
  %v607 = vunpack.c.h.b16 %v439
  %v608 = vunpack.c.l.b16 %v440
  %v609 = vunpack.c.h.b16 %v440
  %v610 = vunpack.c.l.b16 %v441
  %v611 = vunpack.c.h.b16 %v441
  %v612 = vunpack.c.l.b16 %v442
  %v613 = vunpack.c.h.b16 %v442
  %v614 = vunpack.c.l.b16 %v443
  %v615 = vunpack.c.h.b16 %v443
  %v616 = vunpack.c.l.b16 %v444
  %v617 = vunpack.c.h.b16 %v444
  %v618 = vunpack.c.l.b16 %v445
  %v619 = vunpack.c.h.b16 %v445
  %v620 = vunpack.c.l.b16 %v446
  %v621 = vunpack.c.h.b16 %v446
  %v622 = vunpack.c.l.b16 %v447
  %v623 = vunpack.c.h.b16 %v447
  %v624 = vunpack.c.l.b16 %v448
  %v625 = vunpack.c.h.b16 %v448
  %v626 = vunpack.c.l.b16 %v449
  %v627 = vunpack.c.h.b16 %v449
  %v628 = vunpack.c.l.b16 %v450
  %v629 = vunpack.c.h.b16 %v450
  %v630 = vunpack.c.l.b16 %v451
  %v631 = vunpack.c.h.b16 %v451
  %v632 = vunpack.c.l.b16 %v452
  %v633 = vunpack.c.h.b16 %v452
  %v634 = vunpack.c.l.b16 %v453
  %v635 = vunpack.c.h.b16 %v453
  %v636 = vunpack.c.l.b16 %v454
  %v637 = vunpack.c.h.b16 %v454
  %v638 = vunpack.c.l.b16 %v455
  %v639 = vunpack.c.h.b16 %v455
  %v640 = vunpack.c.l.b16 %v456
  %v641 = vunpack.c.h.b16 %v456
  %v642 = vunpack.c.l.b16 %v457
  %v643 = vunpack.c.h.b16 %v457
  %v644 = vunpack.c.l.b16 %v458
  %v645 = vunpack.c.h.b16 %v458
  %v646 = vunpack.c.l.b16 %v459
  %v647 = vunpack.c.h.b16 %v459
  %v648 = vunpack.c.l.b16 %v460
  %v649 = vunpack.c.h.b16 %v460
  %v650 = vunpack.c.l.b16 %v461
  %v651 = vunpack.c.h.b16 %v461
  %v652 = vunpack.c.l.b16 %v462
  %v653 = vunpack.c.h.b16 %v462
  %v654 = vunpack.c.l.b16 %v463
  %v655 = vunpack.c.h.b16 %v463
  %v656 = vunpack.c.l.b16 %v464
  %v657 = vunpack.c.h.b16 %v464
  %v658 = vunpack.c.l.b16 %v465
  %v659 = vunpack.c.h.b16 %v465
  %v660 = vunpack.c.l.b16 %v466
  %v661 = vunpack.c.h.b16 %v466
  %v662 = vunpack.c.l.b16 %v467
  %v663 = vunpack.c.h.b16 %v467
  %v664 = vunpack.c.l.b16 %v468
  %v665 = vunpack.c.h.b16 %v468
  %v666 = vunpack.c.l.b16 %v469
  %v667 = vunpack.c.h.b16 %v469
  %v668 = vunpack.c.l.b16 %v470
  %v669 = vunpack.c.h.b16 %v470
  %v670 = vunpack.c.l.b16 %v471
  %v671 = vunpack.c.h.b16 %v471
  %v672 = vunpack.c.l.b16 %v472
  %v673 = vunpack.c.h.b16 %v472
  %v674 = vunpack.c.l.b16 %v473
  %v675 = vunpack.c.h.b16 %v473
  %v676 = vunpack.c.l.b16 %v474
  %v677 = vunpack.c.h.b16 %v474
  %v678 = vunpack.c.l.b16 %v475
  %v679 = vunpack.c.h.b16 %v475
  %v680 = vunpack.c.l.b16 %v476
  %v681 = vunpack.c.h.b16 %v476
  %v682 = vunpack.c.l.b16 %v477
  %v683 = vunpack.c.h.b16 %v477
  %v684 = vunpack.c.l.b16 %v478
  %v685 = vunpack.c.h.b16 %v478
  %v686 = vunpack.c.l.b16 %v479
  %v687 = vunpack.c.h.b16 %v479
  %v688 = vunpack.c.l.b16 %v480
  %v689 = vunpack.c.h.b16 %v480
  %v690 = vunpack.c.l.b16 %v481
  %v691 = vunpack.c.h.b16 %v481
  %v692 = vunpack.c.l.b16 %v482
  %v693 = vunpack.c.h.b16 %v482
  %v694 = vunpack.c.l.b16 %v483
  %v695 = vunpack.c.h.b16 %v483
  %v696 = vunpack.c.l.b16 %v484
  %v697 = vunpack.c.h.b16 %v484
  %v698 = vunpack.c.l.b16 %v485
  %v699 = vunpack.c.h.b16 %v485
  %v700 = vpack.c.b16 %v576, %v572
  %v701 = vpack.c.b16 %v577, %v573
  %v702 = vpack.c.b16 %v578, %v574
  %v703 = vpack.c.b16 %v579, %v575
  %v704 = vpack.c.b16 %v584, %v580
  %v705 = vpack.c.b16 %v585, %v581
  %v706 = vpack.c.b16 %v586, %v582
  %v707 = vpack.c.b16 %v587, %v583
  %v708 = vpack.c.b16 %v592, %v588
  %v709 = vpack.c.b16 %v593, %v589
  %v710 = vpack.c.b16 %v594, %v590
  %v711 = vpack.c.b16 %v595, %v591
  %v712 = vpack.c.b16 %v600, %v596
  %v713 = vpack.c.b16 %v601, %v597
  %v714 = vpack.c.b16 %v602, %v598
  %v715 = vpack.c.b16 %v603, %v599
  %v716 = vpack.c.b16 %v608, %v604
  %v717 = vpack.c.b16 %v609, %v605
  %v718 = vpack.c.b16 %v610, %v606
  %v719 = vpack.c.b16 %v611, %v607
  %v720 = vpack.c.b16 %v616, %v612
  %v721 = vpack.c.b16 %v617, %v613
  %v722 = vpack.c.b16 %v618, %v614
  %v723 = vpack.c.b16 %v619, %v615
  %v724 = vpack.c.b16 %v624, %v620
  %v725 = vpack.c.b16 %v625, %v621
  %v726 = vpack.c.b16 %v626, %v622
  %v727 = vpack.c.b16 %v627, %v623
  %v728 = vpack.c.b16 %v632, %v628
  %v729 = vpack.c.b16 %v633, %v629
  %v730 = vpack.c.b16 %v634, %v630
  %v731 = vpack.c.b16 %v635, %v631
  %v732 = vpack.c.b16 %v640, %v636
  %v733 = vpack.c.b16 %v641, %v637
  %v734 = vpack.c.b16 %v642, %v638
  %v735 = vpack.c.b16 %v643, %v639
  %v736 = vpack.c.b16 %v648, %v644
  %v737 = vpack.c.b16 %v649, %v645
  %v738 = vpack.c.b16 %v650, %v646
  %v739 = vpack.c.b16 %v651, %v647
  %v740 = vpack.c.b16 %v656, %v652
  %v741 = vpack.c.b16 %v657, %v653
  %v742 = vpack.c.b16 %v658, %v654
  %v743 = vpack.c.b16 %v659, %v655
  %v744 = vpack.c.b16 %v664, %v660
  %v745 = vpack.c.b16 %v665, %v661
  %v746 = vpack.c.b16 %v666, %v662
  %v747 = vpack.c.b16 %v667, %v663
  %v748 = vpack.c.b16 %v672, %v668
  %v749 = vpack.c.b16 %v673, %v669
  %v750 = vpack.c.b16 %v674, %v670
  %v751 = vpack.c.b16 %v675, %v671
  %v752 = vpack.c.b16 %v680, %v676
  %v753 = vpack.c.b16 %v681, %v677
  %v754 = vpack.c.b16 %v682, %v678
  %v755 = vpack.c.b16 %v683, %v679
  %v756 = vpack.c.b16 %v688, %v684
  %v757 = vpack.c.b16 %v689, %v685
  %v758 = vpack.c.b16 %v690, %v686
  %v759 = vpack.c.b16 %v691, %v687
  %v760 = vpack.c.b16 %v696, %v692
  %v761 = vpack.c.b16 %v697, %v693
  %v762 = vpack.c.b16 %v698, %v694
  %v763 = vpack.c.b16 %v699, %v695
  %828 = vmatprep.subr.bf16.mxu0 %v729
  %829 = vmatpush1.bf16.msra.mxu0 %v728
  %830 = vmatprep.subr.bf16.mxu0 %v725
  %831 = vmatpush1.bf16.msra.mxu0 %v724
  %832 = vmatprep.subr.bf16.mxu0 %v721
  %833 = vmatpush1.bf16.msra.mxu0 %v720
  %834 = vmatprep.subr.bf16.mxu0 %v717
  %835 = vmatpush1.bf16.msra.mxu0 %v716
  %836 = vmatprep.subr.bf16.mxu0 %v713
  %837 = vmatpush1.bf16.msra.mxu0 %v712
  %838 = vmatprep.subr.bf16.mxu0 %v709
  %839 = vmatpush1.bf16.msra.mxu0 %v708
  %840 = vmatprep.subr.bf16.mxu0 %v705
  %841 = vmatpush1.bf16.msra.mxu0 %v704
  %842 = vmatprep.subr.bf16.mxu0 %v701
  %843 = vmatpush1.bf16.msra.mxu0 %v700
  %844 = vmatprep.subr.bf16.mxu0 %v761
  %845 = vmatpush2.bf16.msra.mxu0 %v760
  %846 = vmatprep.subr.bf16.mxu0 %v757
  %847 = vmatpush2.bf16.msra.mxu0 %v756
  %848 = vmatprep.subr.bf16.mxu0 %v753
  %849 = vmatpush2.bf16.msra.mxu0 %v752
  %850 = vmatprep.subr.bf16.mxu0 %v749
  %851 = vmatpush2.bf16.msra.mxu0 %v748
  %852 = vmatprep.subr.bf16.mxu0 %v745
  %853 = vmatpush2.bf16.msra.mxu0 %v744
  %854 = vmatprep.subr.bf16.mxu0 %v741
  %855 = vmatpush2.bf16.msra.mxu0 %v740
  %856 = vmatprep.subr.bf16.mxu0 %v737
  %857 = vmatpush2.bf16.msra.mxu0 %v736
  %858 = vmatprep.subr.bf16.mxu0 %v733
  %859 = vmatpush2.bf16.msra.mxu0 %v732
  %860 = vmatprep.mubr.bf16.mxu0 %v419
  %861 = vmatmul.mubr.bf16.gmra.mxu0 %v418
  %v862 = vpop.f32.mrf.mxu0
  %v863 = vadd.f32 %v491, %v862
  %v864 = vpop.f32.mrf.mxu0
  %v865 = vadd.f32 %v495, %v864
  %v866 = vpop.f32.mrf.mxu0
  %v867 = vadd.f32 %v491, %v866
  %v868 = vpop.f32.mrf.mxu0
  %v869 = vadd.f32 %v495, %v868
  %870 = vmatprep.mubr.bf16.mxu0 %v421
  %871 = vmatmul.mubr.bf16.gmra.mxu0 %v420
  %v872 = vpop.f32.mrf.mxu0
  %v873 = vadd.f32 %v491, %v872
  %v874 = vpop.f32.mrf.mxu0
  %v875 = vadd.f32 %v495, %v874
  %v876 = vpop.f32.mrf.mxu0
  %v877 = vadd.f32 %v491, %v876
  %v878 = vpop.f32.mrf.mxu0
  %v879 = vadd.f32 %v495, %v878
  %880 = vdwg.mxu0
  %881 = vmatprep.subr.bf16.mxu0 %v731
  %882 = vmatpush1.bf16.msra.mxu0 %v730
  %883 = vmatprep.subr.bf16.mxu0 %v727
  %884 = vmatpush1.bf16.msra.mxu0 %v726
  %885 = vmatprep.subr.bf16.mxu0 %v723
  %886 = vmatpush1.bf16.msra.mxu0 %v722
  %887 = vmatprep.subr.bf16.mxu0 %v719
  %888 = vmatpush1.bf16.msra.mxu0 %v718
  %889 = vmatprep.subr.bf16.mxu0 %v715
  %890 = vmatpush1.bf16.msra.mxu0 %v714
  %891 = vmatprep.subr.bf16.mxu0 %v711
  %892 = vmatpush1.bf16.msra.mxu0 %v710
  %893 = vmatprep.subr.bf16.mxu0 %v707
  %894 = vmatpush1.bf16.msra.mxu0 %v706
  %895 = vmatprep.subr.bf16.mxu0 %v703
  %896 = vmatpush1.bf16.msra.mxu0 %v702
  %897 = vmatprep.subr.bf16.mxu0 %v763
  %898 = vmatpush2.bf16.msra.mxu0 %v762
  %899 = vmatprep.subr.bf16.mxu0 %v759
  %900 = vmatpush2.bf16.msra.mxu0 %v758
  %901 = vmatprep.subr.bf16.mxu0 %v755
  %902 = vmatpush2.bf16.msra.mxu0 %v754
  %903 = vmatprep.subr.bf16.mxu0 %v751
  %904 = vmatpush2.bf16.msra.mxu0 %v750
  %905 = vmatprep.subr.bf16.mxu0 %v747
  %906 = vmatpush2.bf16.msra.mxu0 %v746
  %907 = vmatprep.subr.bf16.mxu0 %v743
  %908 = vmatpush2.bf16.msra.mxu0 %v742
  %909 = vmatprep.subr.bf16.mxu0 %v739
  %910 = vmatpush2.bf16.msra.mxu0 %v738
  %911 = vmatprep.subr.bf16.mxu0 %v735
  %912 = vmatpush2.bf16.msra.mxu0 %v734
  %913 = vmatprep.mubr.bf16.mxu0 %v419
  %914 = vmatmul.mubr.bf16.gmra.mxu0 %v418
  %v915 = vpop.f32.mrf.mxu0
  %v916 = vadd.f32 %v499, %v915
  %v917 = vpop.f32.mrf.mxu0
  %v918 = vadd.f32 %v503, %v917
  %v919 = vpop.f32.mrf.mxu0
  %v920 = vadd.f32 %v499, %v919
  %v921 = vpop.f32.mrf.mxu0
  %v922 = vadd.f32 %v503, %v921
  %923 = vmatprep.mubr.bf16.mxu0 %v421
  %924 = vmatmul.mubr.bf16.gmra.mxu0 %v420
  %v925 = vpop.f32.mrf.mxu0
  %v926 = vadd.f32 %v499, %v925
  %v927 = vpop.f32.mrf.mxu0
  %v928 = vadd.f32 %v503, %v927
  %v929 = vpop.f32.mrf.mxu0
  %v930 = vadd.f32 %v499, %v929
  %v931 = vpop.f32.mrf.mxu0
  %v932 = vadd.f32 %v503, %v931
  %933 = vdwg.mxu0
  %v934 = vmax.f32 %v863, 0.0
  %v935 = vmax.f32 %v865, 0.0
  %v936 = vmax.f32 %v916, 0.0
  %v937 = vmax.f32 %v918, 0.0
  %v938 = vmax.f32 %v867, 0.0
  %v939 = vmax.f32 %v869, 0.0
  %v940 = vmax.f32 %v920, 0.0
  %v941 = vmax.f32 %v922, 0.0
  %v942 = vmax.f32 %v873, 0.0
  %v943 = vmax.f32 %v875, 0.0
  %v944 = vmax.f32 %v926, 0.0
  %v945 = vmax.f32 %v928, 0.0
  %v946 = vmax.f32 %v877, 0.0
  %v947 = vmax.f32 %v879, 0.0
  %v948 = vmax.f32 %v930, 0.0
  %v949 = vmax.f32 %v932, 0.0
  %v950 = vpack.c.bf16 %v938, %v934
  %v951 = vpack.c.bf16 %v939, %v935
  %v952 = vpack.c.bf16 %v940, %v936
  %v953 = vpack.c.bf16 %v941, %v937
  %v954 = vpack.c.bf16 %v946, %v942
  %v955 = vpack.c.bf16 %v947, %v943
  %v956 = vpack.c.bf16 %v948, %v944
  %v957 = vpack.c.bf16 %v949, %v945
  %v958 = vld [vmem:[%s5] sm:$0xff]
  %v959 = vld [vmem:[%s5 + $0x8] sm:$0xff]
  %v960 = vld [vmem:[%s5 + $0x10] sm:$0xff]
  %v961 = vld [vmem:[%s5 + $0x18] sm:$0xff]
  %v962 = vld [vmem:[%s5 + $0x20] sm:$0xff]
  %v963 = vld [vmem:[%s5 + $0x28] sm:$0xff]
  %v964 = vld [vmem:[%s5 + $0x30] sm:$0xff]
  %v965 = vld [vmem:[%s5 + $0x38] sm:$0xff]
  %v966 = vld [vmem:[%s5 + $0x40] sm:$0xff]
  %v967 = vld [vmem:[%s5 + $0x48] sm:$0xff]
  %v968 = vld [vmem:[%s5 + $0x50] sm:$0xff]
  %v969 = vld [vmem:[%s5 + $0x58] sm:$0xff]
  %v970 = vld [vmem:[%s5 + $0x60] sm:$0xff]
  %v971 = vld [vmem:[%s5 + $0x68] sm:$0xff]
  %v972 = vld [vmem:[%s5 + $0x70] sm:$0xff]
  %v973 = vld [vmem:[%s5 + $0x78] sm:$0xff]
  %v974 = vld [vmem:[%s5 + $0x80] sm:$0xff]
  %v975 = vld [vmem:[%s5 + $0x88] sm:$0xff]
  %v976 = vld [vmem:[%s5 + $0x90] sm:$0xff]
  %v977 = vld [vmem:[%s5 + $0x98] sm:$0xff]
  %v978 = vld [vmem:[%s5 + $0xa0] sm:$0xff]
  %v979 = vld [vmem:[%s5 + $0xa8] sm:$0xff]
  %v980 = vld [vmem:[%s5 + $0xb0] sm:$0xff]
  %v981 = vld [vmem:[%s5 + $0xb8] sm:$0xff]
  %v982 = vld [vmem:[%s5 + $0xc0] sm:$0xff]
  %v983 = vld [vmem:[%s5 + $0xc8] sm:$0xff]
  %v984 = vld [vmem:[%s5 + $0xd0] sm:$0xff]
  %v985 = vld [vmem:[%s5 + $0xd8] sm:$0xff]
  %v986 = vld [vmem:[%s5 + $0xe0] sm:$0xff]
  %v987 = vld [vmem:[%s5 + $0xe8] sm:$0xff]
  %v988 = vld [vmem:[%s5 + $0xf0] sm:$0xff]
  %v989 = vld [vmem:[%s5 + $0xf8] sm:$0xff]
  %v990 = vld [vmem:[%s5 + $0x100] sm:$0xff]
  %v991 = vld [vmem:[%s5 + $0x108] sm:$0xff]
  %v992 = vld [vmem:[%s5 + $0x110] sm:$0xff]
  %v993 = vld [vmem:[%s5 + $0x118] sm:$0xff]
  %v994 = vld [vmem:[%s5 + $0x120] sm:$0xff]
  %v995 = vld [vmem:[%s5 + $0x128] sm:$0xff]
  %v996 = vld [vmem:[%s5 + $0x130] sm:$0xff]
  %v997 = vld [vmem:[%s5 + $0x138] sm:$0xff]
  %v998 = vld [vmem:[%s5 + $0x140] sm:$0xff]
  %v999 = vld [vmem:[%s5 + $0x148] sm:$0xff]
  %v1000 = vld [vmem:[%s5 + $0x150] sm:$0xff]
  %v1001 = vld [vmem:[%s5 + $0x158] sm:$0xff]
  %v1002 = vld [vmem:[%s5 + $0x160] sm:$0xff]
  %v1003 = vld [vmem:[%s5 + $0x168] sm:$0xff]
  %v1004 = vld [vmem:[%s5 + $0x170] sm:$0xff]
  %v1005 = vld [vmem:[%s5 + $0x178] sm:$0xff]
  %v1006 = vld [vmem:[%s5 + $0x180] sm:$0xff]
  %v1007 = vld [vmem:[%s5 + $0x188] sm:$0xff]
  %v1008 = vld [vmem:[%s5 + $0x190] sm:$0xff]
  %v1009 = vld [vmem:[%s5 + $0x198] sm:$0xff]
  %v1010 = vld [vmem:[%s5 + $0x1a0] sm:$0xff]
  %v1011 = vld [vmem:[%s5 + $0x1a8] sm:$0xff]
  %v1012 = vld [vmem:[%s5 + $0x1b0] sm:$0xff]
  %v1013 = vld [vmem:[%s5 + $0x1b8] sm:$0xff]
  %v1014 = vld [vmem:[%s5 + $0x1c0] sm:$0xff]
  %v1015 = vld [vmem:[%s5 + $0x1c8] sm:$0xff]
  %v1016 = vld [vmem:[%s5 + $0x1d0] sm:$0xff]
  %v1017 = vld [vmem:[%s5 + $0x1d8] sm:$0xff]
  %v1018 = vld [vmem:[%s5 + $0x1e0] sm:$0xff]
  %v1019 = vld [vmem:[%s5 + $0x1e8] sm:$0xff]
  %v1020 = vld [vmem:[%s5 + $0x1f0] sm:$0xff]
  %v1021 = vld [vmem:[%s5 + $0x1f8] sm:$0xff]
  %v1022 = vld [vmem:[%s5 + $0x200] sm:$0xff]
  %v1023 = vld [vmem:[%s5 + $0x208] sm:$0xff]
  %v1024 = vld [vmem:[%s5 + $0x210] sm:$0xff]
  %v1025 = vld [vmem:[%s5 + $0x218] sm:$0xff]
  %v1026 = vld [vmem:[%s5 + $0x220] sm:$0xff]
  %v1027 = vld [vmem:[%s5 + $0x228] sm:$0xff]
  %v1028 = vld [vmem:[%s5 + $0x230] sm:$0xff]
  %v1029 = vld [vmem:[%s5 + $0x238] sm:$0xff]
  %v1030 = vld [vmem:[%s5 + $0x240] sm:$0xff]
  %v1031 = vld [vmem:[%s5 + $0x248] sm:$0xff]
  %v1032 = vld [vmem:[%s5 + $0x250] sm:$0xff]
  %v1033 = vld [vmem:[%s5 + $0x258] sm:$0xff]
  %v1034 = vld [vmem:[%s5 + $0x260] sm:$0xff]
  %v1035 = vld [vmem:[%s5 + $0x268] sm:$0xff]
  %v1036 = vld [vmem:[%s5 + $0x270] sm:$0xff]
  %v1037 = vld [vmem:[%s5 + $0x278] sm:$0xff]
  %v1038 = vld [vmem:[%s5 + $0x280] sm:$0xff]
  %v1039 = vld [vmem:[%s5 + $0x288] sm:$0xff]
  %v1040 = vld [vmem:[%s5 + $0x290] sm:$0xff]
  %v1041 = vld [vmem:[%s5 + $0x298] sm:$0xff]
  %v1042 = vld [vmem:[%s5 + $0x2a0] sm:$0xff]
  %v1043 = vld [vmem:[%s5 + $0x2a8] sm:$0xff]
  %v1044 = vld [vmem:[%s5 + $0x2b0] sm:$0xff]
  %v1045 = vld [vmem:[%s5 + $0x2b8] sm:$0xff]
  %v1046 = vld [vmem:[%s5 + $0x2c0] sm:$0xff]
  %v1047 = vld [vmem:[%s5 + $0x2c8] sm:$0xff]
  %v1048 = vld [vmem:[%s5 + $0x2d0] sm:$0xff]
  %v1049 = vld [vmem:[%s5 + $0x2d8] sm:$0xff]
  %v1050 = vld [vmem:[%s5 + $0x2e0] sm:$0xff]
  %v1051 = vld [vmem:[%s5 + $0x2e8] sm:$0xff]
  %v1052 = vld [vmem:[%s5 + $0x2f0] sm:$0xff]
  %v1053 = vld [vmem:[%s5 + $0x2f8] sm:$0xff]
  %v1054 = vld [vmem:[%s5 + $0x300] sm:$0xff]
  %v1055 = vld [vmem:[%s5 + $0x308] sm:$0xff]
  %v1056 = vld [vmem:[%s5 + $0x310] sm:$0xff]
  %v1057 = vld [vmem:[%s5 + $0x318] sm:$0xff]
  %v1058 = vld [vmem:[%s5 + $0x320] sm:$0xff]
  %v1059 = vld [vmem:[%s5 + $0x328] sm:$0xff]
  %v1060 = vld [vmem:[%s5 + $0x330] sm:$0xff]
  %v1061 = vld [vmem:[%s5 + $0x338] sm:$0xff]
  %v1062 = vld [vmem:[%s5 + $0x340] sm:$0xff]
  %v1063 = vld [vmem:[%s5 + $0x348] sm:$0xff]
  %v1064 = vld [vmem:[%s5 + $0x350] sm:$0xff]
  %v1065 = vld [vmem:[%s5 + $0x358] sm:$0xff]
  %v1066 = vld [vmem:[%s5 + $0x360] sm:$0xff]
  %v1067 = vld [vmem:[%s5 + $0x368] sm:$0xff]
  %v1068 = vld [vmem:[%s5 + $0x370] sm:$0xff]
  %v1069 = vld [vmem:[%s5 + $0x378] sm:$0xff]
  %v1070 = vld [vmem:[%s5 + $0x380] sm:$0xff]
  %v1071 = vld [vmem:[%s5 + $0x388] sm:$0xff]
  %v1072 = vld [vmem:[%s5 + $0x390] sm:$0xff]
  %v1073 = vld [vmem:[%s5 + $0x398] sm:$0xff]
  %v1074 = vld [vmem:[%s5 + $0x3a0] sm:$0xff]
  %v1075 = vld [vmem:[%s5 + $0x3a8] sm:$0xff]
  %v1076 = vld [vmem:[%s5 + $0x3b0] sm:$0xff]
  %v1077 = vld [vmem:[%s5 + $0x3b8] sm:$0xff]
  %v1078 = vld [vmem:[%s5 + $0x3c0] sm:$0xff]
  %v1079 = vld [vmem:[%s5 + $0x3c8] sm:$0xff]
  %v1080 = vld [vmem:[%s5 + $0x3d0] sm:$0xff]
  %v1081 = vld [vmem:[%s5 + $0x3d8] sm:$0xff]
  %v1082 = vld [vmem:[%s5 + $0x3e0] sm:$0xff]
  %v1083 = vld [vmem:[%s5 + $0x3e8] sm:$0xff]
  %v1084 = vld [vmem:[%s5 + $0x3f0] sm:$0xff]
  %v1085 = vld [vmem:[%s5 + $0x3f8] sm:$0xff]
  %v1086 = vld [vmem:[%s5 + $0x400] sm:$0xff]
  %v1087 = vld [vmem:[%s5 + $0x408] sm:$0xff]
  %v1088 = vld [vmem:[%s5 + $0x410] sm:$0xff]
  %v1089 = vld [vmem:[%s5 + $0x418] sm:$0xff]
  %v1090 = vld [vmem:[%s5 + $0x420] sm:$0xff]
  %v1091 = vld [vmem:[%s5 + $0x428] sm:$0xff]
  %v1092 = vld [vmem:[%s5 + $0x430] sm:$0xff]
  %v1093 = vld [vmem:[%s5 + $0x438] sm:$0xff]
  %v1094 = vld [vmem:[%s5 + $0x440] sm:$0xff]
  %v1095 = vld [vmem:[%s5 + $0x448] sm:$0xff]
  %v1096 = vld [vmem:[%s5 + $0x450] sm:$0xff]
  %v1097 = vld [vmem:[%s5 + $0x458] sm:$0xff]
  %v1098 = vld [vmem:[%s5 + $0x460] sm:$0xff]
  %v1099 = vld [vmem:[%s5 + $0x468] sm:$0xff]
  %v1100 = vld [vmem:[%s5 + $0x470] sm:$0xff]
  %v1101 = vld [vmem:[%s5 + $0x478] sm:$0xff]
  %v1102 = vld [vmem:[%s5 + $0x480] sm:$0xff]
  %v1103 = vld [vmem:[%s5 + $0x488] sm:$0xff]
  %v1104 = vld [vmem:[%s5 + $0x490] sm:$0xff]
  %v1105 = vld [vmem:[%s5 + $0x498] sm:$0xff]
  %v1106 = vld [vmem:[%s5 + $0x4a0] sm:$0xff]
  %v1107 = vld [vmem:[%s5 + $0x4a8] sm:$0xff]
  %v1108 = vld [vmem:[%s5 + $0x4b0] sm:$0xff]
  %v1109 = vld [vmem:[%s5 + $0x4b8] sm:$0xff]
  %v1110 = vld [vmem:[%s5 + $0x4c0] sm:$0xff]
  %v1111 = vld [vmem:[%s5 + $0x4c8] sm:$0xff]
  %v1112 = vld [vmem:[%s5 + $0x4d0] sm:$0xff]
  %v1113 = vld [vmem:[%s5 + $0x4d8] sm:$0xff]
  %v1114 = vld [vmem:[%s5 + $0x4e0] sm:$0xff]
  %v1115 = vld [vmem:[%s5 + $0x4e8] sm:$0xff]
  %v1116 = vld [vmem:[%s5 + $0x4f0] sm:$0xff]
  %v1117 = vld [vmem:[%s5 + $0x4f8] sm:$0xff]
  %v1118 = vld [vmem:[%s5 + $0x500] sm:$0xff]
  %v1119 = vld [vmem:[%s5 + $0x508] sm:$0xff]
  %v1120 = vld [vmem:[%s5 + $0x510] sm:$0xff]
  %v1121 = vld [vmem:[%s5 + $0x518] sm:$0xff]
  %v1122 = vld [vmem:[%s5 + $0x520] sm:$0xff]
  %v1123 = vld [vmem:[%s5 + $0x528] sm:$0xff]
  %v1124 = vld [vmem:[%s5 + $0x530] sm:$0xff]
  %v1125 = vld [vmem:[%s5 + $0x538] sm:$0xff]
  %v1126 = vld [vmem:[%s5 + $0x540] sm:$0xff]
  %v1127 = vld [vmem:[%s5 + $0x548] sm:$0xff]
  %v1128 = vld [vmem:[%s5 + $0x550] sm:$0xff]
  %v1129 = vld [vmem:[%s5 + $0x558] sm:$0xff]
  %v1130 = vld [vmem:[%s5 + $0x560] sm:$0xff]
  %v1131 = vld [vmem:[%s5 + $0x568] sm:$0xff]
  %v1132 = vld [vmem:[%s5 + $0x570] sm:$0xff]
  %v1133 = vld [vmem:[%s5 + $0x578] sm:$0xff]
  %v1134 = vld [vmem:[%s5 + $0x580] sm:$0xff]
  %v1135 = vld [vmem:[%s5 + $0x588] sm:$0xff]
  %v1136 = vld [vmem:[%s5 + $0x590] sm:$0xff]
  %v1137 = vld [vmem:[%s5 + $0x598] sm:$0xff]
  %v1138 = vld [vmem:[%s5 + $0x5a0] sm:$0xff]
  %v1139 = vld [vmem:[%s5 + $0x5a8] sm:$0xff]
  %v1140 = vld [vmem:[%s5 + $0x5b0] sm:$0xff]
  %v1141 = vld [vmem:[%s5 + $0x5b8] sm:$0xff]
  %v1142 = vld [vmem:[%s5 + $0x5c0] sm:$0xff]
  %v1143 = vld [vmem:[%s5 + $0x5c8] sm:$0xff]
  %v1144 = vld [vmem:[%s5 + $0x5d0] sm:$0xff]
  %v1145 = vld [vmem:[%s5 + $0x5d8] sm:$0xff]
  %v1146 = vld [vmem:[%s5 + $0x5e0] sm:$0xff]
  %v1147 = vld [vmem:[%s5 + $0x5e8] sm:$0xff]
  %v1148 = vld [vmem:[%s5 + $0x5f0] sm:$0xff]
  %v1149 = vld [vmem:[%s5 + $0x5f8] sm:$0xff]
  %v1150 = vld [vmem:[%s5 + $0x600] sm:$0xff]
  %v1151 = vld [vmem:[%s5 + $0x608] sm:$0xff]
  %v1152 = vld [vmem:[%s5 + $0x610] sm:$0xff]
  %v1153 = vld [vmem:[%s5 + $0x618] sm:$0xff]
  %v1154 = vld [vmem:[%s5 + $0x620] sm:$0xff]
  %v1155 = vld [vmem:[%s5 + $0x628] sm:$0xff]
  %v1156 = vld [vmem:[%s5 + $0x630] sm:$0xff]
  %v1157 = vld [vmem:[%s5 + $0x638] sm:$0xff]
  %v1158 = vld [vmem:[%s5 + $0x640] sm:$0xff]
  %v1159 = vld [vmem:[%s5 + $0x648] sm:$0xff]
  %v1160 = vld [vmem:[%s5 + $0x650] sm:$0xff]
  %v1161 = vld [vmem:[%s5 + $0x658] sm:$0xff]
  %v1162 = vld [vmem:[%s5 + $0x660] sm:$0xff]
  %v1163 = vld [vmem:[%s5 + $0x668] sm:$0xff]
  %v1164 = vld [vmem:[%s5 + $0x670] sm:$0xff]
  %v1165 = vld [vmem:[%s5 + $0x678] sm:$0xff]
  %v1166 = vld [vmem:[%s5 + $0x680] sm:$0xff]
  %v1167 = vld [vmem:[%s5 + $0x688] sm:$0xff]
  %v1168 = vld [vmem:[%s5 + $0x690] sm:$0xff]
  %v1169 = vld [vmem:[%s5 + $0x698] sm:$0xff]
  %v1170 = vld [vmem:[%s5 + $0x6a0] sm:$0xff]
  %v1171 = vld [vmem:[%s5 + $0x6a8] sm:$0xff]
  %v1172 = vld [vmem:[%s5 + $0x6b0] sm:$0xff]
  %v1173 = vld [vmem:[%s5 + $0x6b8] sm:$0xff]
  %v1174 = vld [vmem:[%s5 + $0x6c0] sm:$0xff]
  %v1175 = vld [vmem:[%s5 + $0x6c8] sm:$0xff]
  %v1176 = vld [vmem:[%s5 + $0x6d0] sm:$0xff]
  %v1177 = vld [vmem:[%s5 + $0x6d8] sm:$0xff]
  %v1178 = vld [vmem:[%s5 + $0x6e0] sm:$0xff]
  %v1179 = vld [vmem:[%s5 + $0x6e8] sm:$0xff]
  %v1180 = vld [vmem:[%s5 + $0x6f0] sm:$0xff]
  %v1181 = vld [vmem:[%s5 + $0x6f8] sm:$0xff]
  %v1182 = vld [vmem:[%s5 + $0x700] sm:$0xff]
  %v1183 = vld [vmem:[%s5 + $0x708] sm:$0xff]
  %v1184 = vld [vmem:[%s5 + $0x710] sm:$0xff]
  %v1185 = vld [vmem:[%s5 + $0x718] sm:$0xff]
  %v1186 = vld [vmem:[%s5 + $0x720] sm:$0xff]
  %v1187 = vld [vmem:[%s5 + $0x728] sm:$0xff]
  %v1188 = vld [vmem:[%s5 + $0x730] sm:$0xff]
  %v1189 = vld [vmem:[%s5 + $0x738] sm:$0xff]
  %v1190 = vld [vmem:[%s5 + $0x740] sm:$0xff]
  %v1191 = vld [vmem:[%s5 + $0x748] sm:$0xff]
  %v1192 = vld [vmem:[%s5 + $0x750] sm:$0xff]
  %v1193 = vld [vmem:[%s5 + $0x758] sm:$0xff]
  %v1194 = vld [vmem:[%s5 + $0x760] sm:$0xff]
  %v1195 = vld [vmem:[%s5 + $0x768] sm:$0xff]
  %v1196 = vld [vmem:[%s5 + $0x770] sm:$0xff]
  %v1197 = vld [vmem:[%s5 + $0x778] sm:$0xff]
  %v1198 = vld [vmem:[%s5 + $0x780] sm:$0xff]
  %v1199 = vld [vmem:[%s5 + $0x788] sm:$0xff]
  %v1200 = vld [vmem:[%s5 + $0x790] sm:$0xff]
  %v1201 = vld [vmem:[%s5 + $0x798] sm:$0xff]
  %v1202 = vld [vmem:[%s5 + $0x7a0] sm:$0xff]
  %v1203 = vld [vmem:[%s5 + $0x7a8] sm:$0xff]
  %v1204 = vld [vmem:[%s5 + $0x7b0] sm:$0xff]
  %v1205 = vld [vmem:[%s5 + $0x7b8] sm:$0xff]
  %v1206 = vld [vmem:[%s5 + $0x7c0] sm:$0xff]
  %v1207 = vld [vmem:[%s5 + $0x7c8] sm:$0xff]
  %v1208 = vld [vmem:[%s5 + $0x7d0] sm:$0xff]
  %v1209 = vld [vmem:[%s5 + $0x7d8] sm:$0xff]
  %v1210 = vld [vmem:[%s5 + $0x7e0] sm:$0xff]
  %v1211 = vld [vmem:[%s5 + $0x7e8] sm:$0xff]
  %v1212 = vld [vmem:[%s5 + $0x7f0] sm:$0xff]
  %v1213 = vld [vmem:[%s5 + $0x7f8] sm:$0xff]
  %v1214 = vld [vmem:[%s6] sm:$0xff]
  %v1216 = vlaneseq
  %v1217 = vshrl.u32 %v1216, 7
  %v1218 = vsub.s32 0, %v1217
  %v1219 = vrot.slane %v1214, %v1218
  %v1220 = vlaneseq
  %v1221 = vshrl.u32 %v1220, 7
  %v1222 = vsub.s32 1, %v1221
  %v1223 = vrot.slane %v1214, %v1222
  %v1224 = vlaneseq
  %v1225 = vshrl.u32 %v1224, 7
  %v1226 = vsub.s32 2, %v1225
  %v1227 = vrot.slane %v1214, %v1226
  %v1228 = vlaneseq
  %v1229 = vshrl.u32 %v1228, 7
  %v1230 = vsub.s32 3, %v1229
  %v1231 = vrot.slane %v1214, %v1230
  %v1232 = vlaneseq
  %v1233 = vshrl.u32 %v1232, 7
  %v1234 = vsub.s32 4, %v1233
  %v1235 = vrot.slane %v1214, %v1234
  %v1236 = vlaneseq
  %v1237 = vshrl.u32 %v1236, 7
  %v1238 = vsub.s32 5, %v1237
  %v1239 = vrot.slane %v1214, %v1238
  %v1240 = vlaneseq
  %v1241 = vshrl.u32 %v1240, 7
  %v1242 = vsub.s32 6, %v1241
  %v1243 = vrot.slane %v1214, %v1242
  %v1244 = vlaneseq
  %v1245 = vshrl.u32 %v1244, 7
  %v1246 = vsub.s32 7, %v1245
  %v1247 = vrot.slane %v1214, %v1246
  %v1512 = vunpack.c.l.b16 %v958
  %v1513 = vunpack.c.h.b16 %v958
  %v1514 = vunpack.c.l.b16 %v959
  %v1515 = vunpack.c.h.b16 %v959
  %v1516 = vunpack.c.l.b16 %v960
  %v1517 = vunpack.c.h.b16 %v960
  %v1518 = vunpack.c.l.b16 %v961
  %v1519 = vunpack.c.h.b16 %v961
  %v1520 = vunpack.c.l.b16 %v962
  %v1521 = vunpack.c.h.b16 %v962
  %v1522 = vunpack.c.l.b16 %v963
  %v1523 = vunpack.c.h.b16 %v963
  %v1524 = vunpack.c.l.b16 %v964
  %v1525 = vunpack.c.h.b16 %v964
  %v1526 = vunpack.c.l.b16 %v965
  %v1527 = vunpack.c.h.b16 %v965
  %v1528 = vunpack.c.l.b16 %v966
  %v1529 = vunpack.c.h.b16 %v966
  %v1530 = vunpack.c.l.b16 %v967
  %v1531 = vunpack.c.h.b16 %v967
  %v1532 = vunpack.c.l.b16 %v968
  %v1533 = vunpack.c.h.b16 %v968
  %v1534 = vunpack.c.l.b16 %v969
  %v1535 = vunpack.c.h.b16 %v969
  %v1536 = vunpack.c.l.b16 %v970
  %v1537 = vunpack.c.h.b16 %v970
  %v1538 = vunpack.c.l.b16 %v971
  %v1539 = vunpack.c.h.b16 %v971
  %v1540 = vunpack.c.l.b16 %v972
  %v1541 = vunpack.c.h.b16 %v972
  %v1542 = vunpack.c.l.b16 %v973
  %v1543 = vunpack.c.h.b16 %v973
  %v1544 = vunpack.c.l.b16 %v974
  %v1545 = vunpack.c.h.b16 %v974
  %v1546 = vunpack.c.l.b16 %v975
  %v1547 = vunpack.c.h.b16 %v975
  %v1548 = vunpack.c.l.b16 %v976
  %v1549 = vunpack.c.h.b16 %v976
  %v1550 = vunpack.c.l.b16 %v977
  %v1551 = vunpack.c.h.b16 %v977
  %v1552 = vunpack.c.l.b16 %v978
  %v1553 = vunpack.c.h.b16 %v978
  %v1554 = vunpack.c.l.b16 %v979
  %v1555 = vunpack.c.h.b16 %v979
  %v1556 = vunpack.c.l.b16 %v980
  %v1557 = vunpack.c.h.b16 %v980
  %v1558 = vunpack.c.l.b16 %v981
  %v1559 = vunpack.c.h.b16 %v981
  %v1560 = vunpack.c.l.b16 %v982
  %v1561 = vunpack.c.h.b16 %v982
  %v1562 = vunpack.c.l.b16 %v983
  %v1563 = vunpack.c.h.b16 %v983
  %v1564 = vunpack.c.l.b16 %v984
  %v1565 = vunpack.c.h.b16 %v984
  %v1566 = vunpack.c.l.b16 %v985
  %v1567 = vunpack.c.h.b16 %v985
  %v1568 = vunpack.c.l.b16 %v986
  %v1569 = vunpack.c.h.b16 %v986
  %v1570 = vunpack.c.l.b16 %v987
  %v1571 = vunpack.c.h.b16 %v987
  %v1572 = vunpack.c.l.b16 %v988
  %v1573 = vunpack.c.h.b16 %v988
  %v1574 = vunpack.c.l.b16 %v989
  %v1575 = vunpack.c.h.b16 %v989
  %v1576 = vunpack.c.l.b16 %v990
  %v1577 = vunpack.c.h.b16 %v990
  %v1578 = vunpack.c.l.b16 %v991
  %v1579 = vunpack.c.h.b16 %v991
  %v1580 = vunpack.c.l.b16 %v992
  %v1581 = vunpack.c.h.b16 %v992
  %v1582 = vunpack.c.l.b16 %v993
  %v1583 = vunpack.c.h.b16 %v993
  %v1584 = vunpack.c.l.b16 %v994
  %v1585 = vunpack.c.h.b16 %v994
  %v1586 = vunpack.c.l.b16 %v995
  %v1587 = vunpack.c.h.b16 %v995
  %v1588 = vunpack.c.l.b16 %v996
  %v1589 = vunpack.c.h.b16 %v996
  %v1590 = vunpack.c.l.b16 %v997
  %v1591 = vunpack.c.h.b16 %v997
  %v1592 = vunpack.c.l.b16 %v998
  %v1593 = vunpack.c.h.b16 %v998
  %v1594 = vunpack.c.l.b16 %v999
  %v1595 = vunpack.c.h.b16 %v999
  %v1596 = vunpack.c.l.b16 %v1000
  %v1597 = vunpack.c.h.b16 %v1000
  %v1598 = vunpack.c.l.b16 %v1001
  %v1599 = vunpack.c.h.b16 %v1001
  %v1600 = vunpack.c.l.b16 %v1002
  %v1601 = vunpack.c.h.b16 %v1002
  %v1602 = vunpack.c.l.b16 %v1003
  %v1603 = vunpack.c.h.b16 %v1003
  %v1604 = vunpack.c.l.b16 %v1004
  %v1605 = vunpack.c.h.b16 %v1004
  %v1606 = vunpack.c.l.b16 %v1005
  %v1607 = vunpack.c.h.b16 %v1005
  %v1608 = vunpack.c.l.b16 %v1006
  %v1609 = vunpack.c.h.b16 %v1006
  %v1610 = vunpack.c.l.b16 %v1007
  %v1611 = vunpack.c.h.b16 %v1007
  %v1612 = vunpack.c.l.b16 %v1008
  %v1613 = vunpack.c.h.b16 %v1008
  %v1614 = vunpack.c.l.b16 %v1009
  %v1615 = vunpack.c.h.b16 %v1009
  %v1616 = vunpack.c.l.b16 %v1010
  %v1617 = vunpack.c.h.b16 %v1010
  %v1618 = vunpack.c.l.b16 %v1011
  %v1619 = vunpack.c.h.b16 %v1011
  %v1620 = vunpack.c.l.b16 %v1012
  %v1621 = vunpack.c.h.b16 %v1012
  %v1622 = vunpack.c.l.b16 %v1013
  %v1623 = vunpack.c.h.b16 %v1013
  %v1624 = vunpack.c.l.b16 %v1014
  %v1625 = vunpack.c.h.b16 %v1014
  %v1626 = vunpack.c.l.b16 %v1015
  %v1627 = vunpack.c.h.b16 %v1015
  %v1628 = vunpack.c.l.b16 %v1016
  %v1629 = vunpack.c.h.b16 %v1016
  %v1630 = vunpack.c.l.b16 %v1017
  %v1631 = vunpack.c.h.b16 %v1017
  %v1632 = vunpack.c.l.b16 %v1018
  %v1633 = vunpack.c.h.b16 %v1018
  %v1634 = vunpack.c.l.b16 %v1019
  %v1635 = vunpack.c.h.b16 %v1019
  %v1636 = vunpack.c.l.b16 %v1020
  %v1637 = vunpack.c.h.b16 %v1020
  %v1638 = vunpack.c.l.b16 %v1021
  %v1639 = vunpack.c.h.b16 %v1021
  %v1640 = vunpack.c.l.b16 %v1022
  %v1641 = vunpack.c.h.b16 %v1022
  %v1642 = vunpack.c.l.b16 %v1023
  %v1643 = vunpack.c.h.b16 %v1023
  %v1644 = vunpack.c.l.b16 %v1024
  %v1645 = vunpack.c.h.b16 %v1024
  %v1646 = vunpack.c.l.b16 %v1025
  %v1647 = vunpack.c.h.b16 %v1025
  %v1648 = vunpack.c.l.b16 %v1026
  %v1649 = vunpack.c.h.b16 %v1026
  %v1650 = vunpack.c.l.b16 %v1027
  %v1651 = vunpack.c.h.b16 %v1027
  %v1652 = vunpack.c.l.b16 %v1028
  %v1653 = vunpack.c.h.b16 %v1028
  %v1654 = vunpack.c.l.b16 %v1029
  %v1655 = vunpack.c.h.b16 %v1029
  %v1656 = vunpack.c.l.b16 %v1030
  %v1657 = vunpack.c.h.b16 %v1030
  %v1658 = vunpack.c.l.b16 %v1031
  %v1659 = vunpack.c.h.b16 %v1031
  %v1660 = vunpack.c.l.b16 %v1032
  %v1661 = vunpack.c.h.b16 %v1032
  %v1662 = vunpack.c.l.b16 %v1033
  %v1663 = vunpack.c.h.b16 %v1033
  %v1664 = vunpack.c.l.b16 %v1034
  %v1665 = vunpack.c.h.b16 %v1034
  %v1666 = vunpack.c.l.b16 %v1035
  %v1667 = vunpack.c.h.b16 %v1035
  %v1668 = vunpack.c.l.b16 %v1036
  %v1669 = vunpack.c.h.b16 %v1036
  %v1670 = vunpack.c.l.b16 %v1037
  %v1671 = vunpack.c.h.b16 %v1037
  %v1672 = vunpack.c.l.b16 %v1038
  %v1673 = vunpack.c.h.b16 %v1038
  %v1674 = vunpack.c.l.b16 %v1039
  %v1675 = vunpack.c.h.b16 %v1039
  %v1676 = vunpack.c.l.b16 %v1040
  %v1677 = vunpack.c.h.b16 %v1040
  %v1678 = vunpack.c.l.b16 %v1041
  %v1679 = vunpack.c.h.b16 %v1041
  %v1680 = vunpack.c.l.b16 %v1042
  %v1681 = vunpack.c.h.b16 %v1042
  %v1682 = vunpack.c.l.b16 %v1043
  %v1683 = vunpack.c.h.b16 %v1043
  %v1684 = vunpack.c.l.b16 %v1044
  %v1685 = vunpack.c.h.b16 %v1044
  %v1686 = vunpack.c.l.b16 %v1045
  %v1687 = vunpack.c.h.b16 %v1045
  %v1688 = vunpack.c.l.b16 %v1046
  %v1689 = vunpack.c.h.b16 %v1046
  %v1690 = vunpack.c.l.b16 %v1047
  %v1691 = vunpack.c.h.b16 %v1047
  %v1692 = vunpack.c.l.b16 %v1048
  %v1693 = vunpack.c.h.b16 %v1048
  %v1694 = vunpack.c.l.b16 %v1049
  %v1695 = vunpack.c.h.b16 %v1049
  %v1696 = vunpack.c.l.b16 %v1050
  %v1697 = vunpack.c.h.b16 %v1050
  %v1698 = vunpack.c.l.b16 %v1051
  %v1699 = vunpack.c.h.b16 %v1051
  %v1700 = vunpack.c.l.b16 %v1052
  %v1701 = vunpack.c.h.b16 %v1052
  %v1702 = vunpack.c.l.b16 %v1053
  %v1703 = vunpack.c.h.b16 %v1053
  %v1704 = vunpack.c.l.b16 %v1054
  %v1705 = vunpack.c.h.b16 %v1054
  %v1706 = vunpack.c.l.b16 %v1055
  %v1707 = vunpack.c.h.b16 %v1055
  %v1708 = vunpack.c.l.b16 %v1056
  %v1709 = vunpack.c.h.b16 %v1056
  %v1710 = vunpack.c.l.b16 %v1057
  %v1711 = vunpack.c.h.b16 %v1057
  %v1712 = vunpack.c.l.b16 %v1058
  %v1713 = vunpack.c.h.b16 %v1058
  %v1714 = vunpack.c.l.b16 %v1059
  %v1715 = vunpack.c.h.b16 %v1059
  %v1716 = vunpack.c.l.b16 %v1060
  %v1717 = vunpack.c.h.b16 %v1060
  %v1718 = vunpack.c.l.b16 %v1061
  %v1719 = vunpack.c.h.b16 %v1061
  %v1720 = vunpack.c.l.b16 %v1062
  %v1721 = vunpack.c.h.b16 %v1062
  %v1722 = vunpack.c.l.b16 %v1063
  %v1723 = vunpack.c.h.b16 %v1063
  %v1724 = vunpack.c.l.b16 %v1064
  %v1725 = vunpack.c.h.b16 %v1064
  %v1726 = vunpack.c.l.b16 %v1065
  %v1727 = vunpack.c.h.b16 %v1065
  %v1728 = vunpack.c.l.b16 %v1066
  %v1729 = vunpack.c.h.b16 %v1066
  %v1730 = vunpack.c.l.b16 %v1067
  %v1731 = vunpack.c.h.b16 %v1067
  %v1732 = vunpack.c.l.b16 %v1068
  %v1733 = vunpack.c.h.b16 %v1068
  %v1734 = vunpack.c.l.b16 %v1069
  %v1735 = vunpack.c.h.b16 %v1069
  %v1736 = vunpack.c.l.b16 %v1070
  %v1737 = vunpack.c.h.b16 %v1070
  %v1738 = vunpack.c.l.b16 %v1071
  %v1739 = vunpack.c.h.b16 %v1071
  %v1740 = vunpack.c.l.b16 %v1072
  %v1741 = vunpack.c.h.b16 %v1072
  %v1742 = vunpack.c.l.b16 %v1073
  %v1743 = vunpack.c.h.b16 %v1073
  %v1744 = vunpack.c.l.b16 %v1074
  %v1745 = vunpack.c.h.b16 %v1074
  %v1746 = vunpack.c.l.b16 %v1075
  %v1747 = vunpack.c.h.b16 %v1075
  %v1748 = vunpack.c.l.b16 %v1076
  %v1749 = vunpack.c.h.b16 %v1076
  %v1750 = vunpack.c.l.b16 %v1077
  %v1751 = vunpack.c.h.b16 %v1077
  %v1752 = vunpack.c.l.b16 %v1078
  %v1753 = vunpack.c.h.b16 %v1078
  %v1754 = vunpack.c.l.b16 %v1079
  %v1755 = vunpack.c.h.b16 %v1079
  %v1756 = vunpack.c.l.b16 %v1080
  %v1757 = vunpack.c.h.b16 %v1080
  %v1758 = vunpack.c.l.b16 %v1081
  %v1759 = vunpack.c.h.b16 %v1081
  %v1760 = vunpack.c.l.b16 %v1082
  %v1761 = vunpack.c.h.b16 %v1082
  %v1762 = vunpack.c.l.b16 %v1083
  %v1763 = vunpack.c.h.b16 %v1083
  %v1764 = vunpack.c.l.b16 %v1084
  %v1765 = vunpack.c.h.b16 %v1084
  %v1766 = vunpack.c.l.b16 %v1085
  %v1767 = vunpack.c.h.b16 %v1085
  %v1768 = vunpack.c.l.b16 %v1086
  %v1769 = vunpack.c.h.b16 %v1086
  %v1770 = vunpack.c.l.b16 %v1087
  %v1771 = vunpack.c.h.b16 %v1087
  %v1772 = vunpack.c.l.b16 %v1088
  %v1773 = vunpack.c.h.b16 %v1088
  %v1774 = vunpack.c.l.b16 %v1089
  %v1775 = vunpack.c.h.b16 %v1089
  %v1776 = vunpack.c.l.b16 %v1090
  %v1777 = vunpack.c.h.b16 %v1090
  %v1778 = vunpack.c.l.b16 %v1091
  %v1779 = vunpack.c.h.b16 %v1091
  %v1780 = vunpack.c.l.b16 %v1092
  %v1781 = vunpack.c.h.b16 %v1092
  %v1782 = vunpack.c.l.b16 %v1093
  %v1783 = vunpack.c.h.b16 %v1093
  %v1784 = vunpack.c.l.b16 %v1094
  %v1785 = vunpack.c.h.b16 %v1094
  %v1786 = vunpack.c.l.b16 %v1095
  %v1787 = vunpack.c.h.b16 %v1095
  %v1788 = vunpack.c.l.b16 %v1096
  %v1789 = vunpack.c.h.b16 %v1096
  %v1790 = vunpack.c.l.b16 %v1097
  %v1791 = vunpack.c.h.b16 %v1097
  %v1792 = vunpack.c.l.b16 %v1098
  %v1793 = vunpack.c.h.b16 %v1098
  %v1794 = vunpack.c.l.b16 %v1099
  %v1795 = vunpack.c.h.b16 %v1099
  %v1796 = vunpack.c.l.b16 %v1100
  %v1797 = vunpack.c.h.b16 %v1100
  %v1798 = vunpack.c.l.b16 %v1101
  %v1799 = vunpack.c.h.b16 %v1101
  %v1800 = vunpack.c.l.b16 %v1102
  %v1801 = vunpack.c.h.b16 %v1102
  %v1802 = vunpack.c.l.b16 %v1103
  %v1803 = vunpack.c.h.b16 %v1103
  %v1804 = vunpack.c.l.b16 %v1104
  %v1805 = vunpack.c.h.b16 %v1104
  %v1806 = vunpack.c.l.b16 %v1105
  %v1807 = vunpack.c.h.b16 %v1105
  %v1808 = vunpack.c.l.b16 %v1106
  %v1809 = vunpack.c.h.b16 %v1106
  %v1810 = vunpack.c.l.b16 %v1107
  %v1811 = vunpack.c.h.b16 %v1107
  %v1812 = vunpack.c.l.b16 %v1108
  %v1813 = vunpack.c.h.b16 %v1108
  %v1814 = vunpack.c.l.b16 %v1109
  %v1815 = vunpack.c.h.b16 %v1109
  %v1816 = vunpack.c.l.b16 %v1110
  %v1817 = vunpack.c.h.b16 %v1110
  %v1818 = vunpack.c.l.b16 %v1111
  %v1819 = vunpack.c.h.b16 %v1111
  %v1820 = vunpack.c.l.b16 %v1112
  %v1821 = vunpack.c.h.b16 %v1112
  %v1822 = vunpack.c.l.b16 %v1113
  %v1823 = vunpack.c.h.b16 %v1113
  %v1824 = vunpack.c.l.b16 %v1114
  %v1825 = vunpack.c.h.b16 %v1114
  %v1826 = vunpack.c.l.b16 %v1115
  %v1827 = vunpack.c.h.b16 %v1115
  %v1828 = vunpack.c.l.b16 %v1116
  %v1829 = vunpack.c.h.b16 %v1116
  %v1830 = vunpack.c.l.b16 %v1117
  %v1831 = vunpack.c.h.b16 %v1117
  %v1832 = vunpack.c.l.b16 %v1118
  %v1833 = vunpack.c.h.b16 %v1118
  %v1834 = vunpack.c.l.b16 %v1119
  %v1835 = vunpack.c.h.b16 %v1119
  %v1836 = vunpack.c.l.b16 %v1120
  %v1837 = vunpack.c.h.b16 %v1120
  %v1838 = vunpack.c.l.b16 %v1121
  %v1839 = vunpack.c.h.b16 %v1121
  %v1840 = vunpack.c.l.b16 %v1122
  %v1841 = vunpack.c.h.b16 %v1122
  %v1842 = vunpack.c.l.b16 %v1123
  %v1843 = vunpack.c.h.b16 %v1123
  %v1844 = vunpack.c.l.b16 %v1124
  %v1845 = vunpack.c.h.b16 %v1124
  %v1846 = vunpack.c.l.b16 %v1125
  %v1847 = vunpack.c.h.b16 %v1125
  %v1848 = vunpack.c.l.b16 %v1126
  %v1849 = vunpack.c.h.b16 %v1126
  %v1850 = vunpack.c.l.b16 %v1127
  %v1851 = vunpack.c.h.b16 %v1127
  %v1852 = vunpack.c.l.b16 %v1128
  %v1853 = vunpack.c.h.b16 %v1128
  %v1854 = vunpack.c.l.b16 %v1129
  %v1855 = vunpack.c.h.b16 %v1129
  %v1856 = vunpack.c.l.b16 %v1130
  %v1857 = vunpack.c.h.b16 %v1130
  %v1858 = vunpack.c.l.b16 %v1131
  %v1859 = vunpack.c.h.b16 %v1131
  %v1860 = vunpack.c.l.b16 %v1132
  %v1861 = vunpack.c.h.b16 %v1132
  %v1862 = vunpack.c.l.b16 %v1133
  %v1863 = vunpack.c.h.b16 %v1133
  %v1864 = vunpack.c.l.b16 %v1134
  %v1865 = vunpack.c.h.b16 %v1134
  %v1866 = vunpack.c.l.b16 %v1135
  %v1867 = vunpack.c.h.b16 %v1135
  %v1868 = vunpack.c.l.b16 %v1136
  %v1869 = vunpack.c.h.b16 %v1136
  %v1870 = vunpack.c.l.b16 %v1137
  %v1871 = vunpack.c.h.b16 %v1137
  %v1872 = vunpack.c.l.b16 %v1138
  %v1873 = vunpack.c.h.b16 %v1138
  %v1874 = vunpack.c.l.b16 %v1139
  %v1875 = vunpack.c.h.b16 %v1139
  %v1876 = vunpack.c.l.b16 %v1140
  %v1877 = vunpack.c.h.b16 %v1140
  %v1878 = vunpack.c.l.b16 %v1141
  %v1879 = vunpack.c.h.b16 %v1141
  %v1880 = vunpack.c.l.b16 %v1142
  %v1881 = vunpack.c.h.b16 %v1142
  %v1882 = vunpack.c.l.b16 %v1143
  %v1883 = vunpack.c.h.b16 %v1143
  %v1884 = vunpack.c.l.b16 %v1144
  %v1885 = vunpack.c.h.b16 %v1144
  %v1886 = vunpack.c.l.b16 %v1145
  %v1887 = vunpack.c.h.b16 %v1145
  %v1888 = vunpack.c.l.b16 %v1146
  %v1889 = vunpack.c.h.b16 %v1146
  %v1890 = vunpack.c.l.b16 %v1147
  %v1891 = vunpack.c.h.b16 %v1147
  %v1892 = vunpack.c.l.b16 %v1148
  %v1893 = vunpack.c.h.b16 %v1148
  %v1894 = vunpack.c.l.b16 %v1149
  %v1895 = vunpack.c.h.b16 %v1149
  %v1896 = vunpack.c.l.b16 %v1150
  %v1897 = vunpack.c.h.b16 %v1150
  %v1898 = vunpack.c.l.b16 %v1151
  %v1899 = vunpack.c.h.b16 %v1151
  %v1900 = vunpack.c.l.b16 %v1152
  %v1901 = vunpack.c.h.b16 %v1152
  %v1902 = vunpack.c.l.b16 %v1153
  %v1903 = vunpack.c.h.b16 %v1153
  %v1904 = vunpack.c.l.b16 %v1154
  %v1905 = vunpack.c.h.b16 %v1154
  %v1906 = vunpack.c.l.b16 %v1155
  %v1907 = vunpack.c.h.b16 %v1155
  %v1908 = vunpack.c.l.b16 %v1156
  %v1909 = vunpack.c.h.b16 %v1156
  %v1910 = vunpack.c.l.b16 %v1157
  %v1911 = vunpack.c.h.b16 %v1157
  %v1912 = vunpack.c.l.b16 %v1158
  %v1913 = vunpack.c.h.b16 %v1158
  %v1914 = vunpack.c.l.b16 %v1159
  %v1915 = vunpack.c.h.b16 %v1159
  %v1916 = vunpack.c.l.b16 %v1160
  %v1917 = vunpack.c.h.b16 %v1160
  %v1918 = vunpack.c.l.b16 %v1161
  %v1919 = vunpack.c.h.b16 %v1161
  %v1920 = vunpack.c.l.b16 %v1162
  %v1921 = vunpack.c.h.b16 %v1162
  %v1922 = vunpack.c.l.b16 %v1163
  %v1923 = vunpack.c.h.b16 %v1163
  %v1924 = vunpack.c.l.b16 %v1164
  %v1925 = vunpack.c.h.b16 %v1164
  %v1926 = vunpack.c.l.b16 %v1165
  %v1927 = vunpack.c.h.b16 %v1165
  %v1928 = vunpack.c.l.b16 %v1166
  %v1929 = vunpack.c.h.b16 %v1166
  %v1930 = vunpack.c.l.b16 %v1167
  %v1931 = vunpack.c.h.b16 %v1167
  %v1932 = vunpack.c.l.b16 %v1168
  %v1933 = vunpack.c.h.b16 %v1168
  %v1934 = vunpack.c.l.b16 %v1169
  %v1935 = vunpack.c.h.b16 %v1169
  %v1936 = vunpack.c.l.b16 %v1170
  %v1937 = vunpack.c.h.b16 %v1170
  %v1938 = vunpack.c.l.b16 %v1171
  %v1939 = vunpack.c.h.b16 %v1171
  %v1940 = vunpack.c.l.b16 %v1172
  %v1941 = vunpack.c.h.b16 %v1172
  %v1942 = vunpack.c.l.b16 %v1173
  %v1943 = vunpack.c.h.b16 %v1173
  %v1944 = vunpack.c.l.b16 %v1174
  %v1945 = vunpack.c.h.b16 %v1174
  %v1946 = vunpack.c.l.b16 %v1175
  %v1947 = vunpack.c.h.b16 %v1175
  %v1948 = vunpack.c.l.b16 %v1176
  %v1949 = vunpack.c.h.b16 %v1176
  %v1950 = vunpack.c.l.b16 %v1177
  %v1951 = vunpack.c.h.b16 %v1177
  %v1952 = vunpack.c.l.b16 %v1178
  %v1953 = vunpack.c.h.b16 %v1178
  %v1954 = vunpack.c.l.b16 %v1179
  %v1955 = vunpack.c.h.b16 %v1179
  %v1956 = vunpack.c.l.b16 %v1180
  %v1957 = vunpack.c.h.b16 %v1180
  %v1958 = vunpack.c.l.b16 %v1181
  %v1959 = vunpack.c.h.b16 %v1181
  %v1960 = vunpack.c.l.b16 %v1182
  %v1961 = vunpack.c.h.b16 %v1182
  %v1962 = vunpack.c.l.b16 %v1183
  %v1963 = vunpack.c.h.b16 %v1183
  %v1964 = vunpack.c.l.b16 %v1184
  %v1965 = vunpack.c.h.b16 %v1184
  %v1966 = vunpack.c.l.b16 %v1185
  %v1967 = vunpack.c.h.b16 %v1185
  %v1968 = vunpack.c.l.b16 %v1186
  %v1969 = vunpack.c.h.b16 %v1186
  %v1970 = vunpack.c.l.b16 %v1187
  %v1971 = vunpack.c.h.b16 %v1187
  %v1972 = vunpack.c.l.b16 %v1188
  %v1973 = vunpack.c.h.b16 %v1188
  %v1974 = vunpack.c.l.b16 %v1189
  %v1975 = vunpack.c.h.b16 %v1189
  %v1976 = vunpack.c.l.b16 %v1190
  %v1977 = vunpack.c.h.b16 %v1190
  %v1978 = vunpack.c.l.b16 %v1191
  %v1979 = vunpack.c.h.b16 %v1191
  %v1980 = vunpack.c.l.b16 %v1192
  %v1981 = vunpack.c.h.b16 %v1192
  %v1982 = vunpack.c.l.b16 %v1193
  %v1983 = vunpack.c.h.b16 %v1193
  %v1984 = vunpack.c.l.b16 %v1194
  %v1985 = vunpack.c.h.b16 %v1194
  %v1986 = vunpack.c.l.b16 %v1195
  %v1987 = vunpack.c.h.b16 %v1195
  %v1988 = vunpack.c.l.b16 %v1196
  %v1989 = vunpack.c.h.b16 %v1196
  %v1990 = vunpack.c.l.b16 %v1197
  %v1991 = vunpack.c.h.b16 %v1197
  %v1992 = vunpack.c.l.b16 %v1198
  %v1993 = vunpack.c.h.b16 %v1198
  %v1994 = vunpack.c.l.b16 %v1199
  %v1995 = vunpack.c.h.b16 %v1199
  %v1996 = vunpack.c.l.b16 %v1200
  %v1997 = vunpack.c.h.b16 %v1200
  %v1998 = vunpack.c.l.b16 %v1201
  %v1999 = vunpack.c.h.b16 %v1201
  %v2000 = vunpack.c.l.b16 %v1202
  %v2001 = vunpack.c.h.b16 %v1202
  %v2002 = vunpack.c.l.b16 %v1203
  %v2003 = vunpack.c.h.b16 %v1203
  %v2004 = vunpack.c.l.b16 %v1204
  %v2005 = vunpack.c.h.b16 %v1204
  %v2006 = vunpack.c.l.b16 %v1205
  %v2007 = vunpack.c.h.b16 %v1205
  %v2008 = vunpack.c.l.b16 %v1206
  %v2009 = vunpack.c.h.b16 %v1206
  %v2010 = vunpack.c.l.b16 %v1207
  %v2011 = vunpack.c.h.b16 %v1207
  %v2012 = vunpack.c.l.b16 %v1208
  %v2013 = vunpack.c.h.b16 %v1208
  %v2014 = vunpack.c.l.b16 %v1209
  %v2015 = vunpack.c.h.b16 %v1209
  %v2016 = vunpack.c.l.b16 %v1210
  %v2017 = vunpack.c.h.b16 %v1210
  %v2018 = vunpack.c.l.b16 %v1211
  %v2019 = vunpack.c.h.b16 %v1211
  %v2020 = vunpack.c.l.b16 %v1212
  %v2021 = vunpack.c.h.b16 %v1212
  %v2022 = vunpack.c.l.b16 %v1213
  %v2023 = vunpack.c.h.b16 %v1213
  %v2024 = vpack.c.b16 %v1520, %v1512
  %v2025 = vpack.c.b16 %v1521, %v1513
  %v2026 = vpack.c.b16 %v1522, %v1514
  %v2027 = vpack.c.b16 %v1523, %v1515
  %v2028 = vpack.c.b16 %v1524, %v1516
  %v2029 = vpack.c.b16 %v1525, %v1517
  %v2030 = vpack.c.b16 %v1526, %v1518
  %v2031 = vpack.c.b16 %v1527, %v1519
  %v2032 = vpack.c.b16 %v1536, %v1528
  %v2033 = vpack.c.b16 %v1537, %v1529
  %v2034 = vpack.c.b16 %v1538, %v1530
  %v2035 = vpack.c.b16 %v1539, %v1531
  %v2036 = vpack.c.b16 %v1540, %v1532
  %v2037 = vpack.c.b16 %v1541, %v1533
  %v2038 = vpack.c.b16 %v1542, %v1534
  %v2039 = vpack.c.b16 %v1543, %v1535
  %v2040 = vpack.c.b16 %v1552, %v1544
  %v2041 = vpack.c.b16 %v1553, %v1545
  %v2042 = vpack.c.b16 %v1554, %v1546
  %v2043 = vpack.c.b16 %v1555, %v1547
  %v2044 = vpack.c.b16 %v1556, %v1548
  %v2045 = vpack.c.b16 %v1557, %v1549
  %v2046 = vpack.c.b16 %v1558, %v1550
  %v2047 = vpack.c.b16 %v1559, %v1551
  %v2048 = vpack.c.b16 %v1568, %v1560
  %v2049 = vpack.c.b16 %v1569, %v1561
  %v2050 = vpack.c.b16 %v1570, %v1562
  %v2051 = vpack.c.b16 %v1571, %v1563
  %v2052 = vpack.c.b16 %v1572, %v1564
  %v2053 = vpack.c.b16 %v1573, %v1565
  %v2054 = vpack.c.b16 %v1574, %v1566
  %v2055 = vpack.c.b16 %v1575, %v1567
  %v2056 = vpack.c.b16 %v1584, %v1576
  %v2057 = vpack.c.b16 %v1585, %v1577
  %v2058 = vpack.c.b16 %v1586, %v1578
  %v2059 = vpack.c.b16 %v1587, %v1579
  %v2060 = vpack.c.b16 %v1588, %v1580
  %v2061 = vpack.c.b16 %v1589, %v1581
  %v2062 = vpack.c.b16 %v1590, %v1582
  %v2063 = vpack.c.b16 %v1591, %v1583
  %v2064 = vpack.c.b16 %v1600, %v1592
  %v2065 = vpack.c.b16 %v1601, %v1593
  %v2066 = vpack.c.b16 %v1602, %v1594
  %v2067 = vpack.c.b16 %v1603, %v1595
  %v2068 = vpack.c.b16 %v1604, %v1596
  %v2069 = vpack.c.b16 %v1605, %v1597
  %v2070 = vpack.c.b16 %v1606, %v1598
  %v2071 = vpack.c.b16 %v1607, %v1599
  %v2072 = vpack.c.b16 %v1616, %v1608
  %v2073 = vpack.c.b16 %v1617, %v1609
  %v2074 = vpack.c.b16 %v1618, %v1610
  %v2075 = vpack.c.b16 %v1619, %v1611
  %v2076 = vpack.c.b16 %v1620, %v1612
  %v2077 = vpack.c.b16 %v1621, %v1613
  %v2078 = vpack.c.b16 %v1622, %v1614
  %v2079 = vpack.c.b16 %v1623, %v1615
  %v2080 = vpack.c.b16 %v1632, %v1624
  %v2081 = vpack.c.b16 %v1633, %v1625
  %v2082 = vpack.c.b16 %v1634, %v1626
  %v2083 = vpack.c.b16 %v1635, %v1627
  %v2084 = vpack.c.b16 %v1636, %v1628
  %v2085 = vpack.c.b16 %v1637, %v1629
  %v2086 = vpack.c.b16 %v1638, %v1630
  %v2087 = vpack.c.b16 %v1639, %v1631
  %v2088 = vpack.c.b16 %v1648, %v1640
  %v2089 = vpack.c.b16 %v1649, %v1641
  %v2090 = vpack.c.b16 %v1650, %v1642
  %v2091 = vpack.c.b16 %v1651, %v1643
  %v2092 = vpack.c.b16 %v1652, %v1644
  %v2093 = vpack.c.b16 %v1653, %v1645
  %v2094 = vpack.c.b16 %v1654, %v1646
  %v2095 = vpack.c.b16 %v1655, %v1647
  %v2096 = vpack.c.b16 %v1664, %v1656
  %v2097 = vpack.c.b16 %v1665, %v1657
  %v2098 = vpack.c.b16 %v1666, %v1658
  %v2099 = vpack.c.b16 %v1667, %v1659
  %v2100 = vpack.c.b16 %v1668, %v1660
  %v2101 = vpack.c.b16 %v1669, %v1661
  %v2102 = vpack.c.b16 %v1670, %v1662
  %v2103 = vpack.c.b16 %v1671, %v1663
  %v2104 = vpack.c.b16 %v1680, %v1672
  %v2105 = vpack.c.b16 %v1681, %v1673
  %v2106 = vpack.c.b16 %v1682, %v1674
  %v2107 = vpack.c.b16 %v1683, %v1675
  %v2108 = vpack.c.b16 %v1684, %v1676
  %v2109 = vpack.c.b16 %v1685, %v1677
  %v2110 = vpack.c.b16 %v1686, %v1678
  %v2111 = vpack.c.b16 %v1687, %v1679
  %v2112 = vpack.c.b16 %v1696, %v1688
  %v2113 = vpack.c.b16 %v1697, %v1689
  %v2114 = vpack.c.b16 %v1698, %v1690
  %v2115 = vpack.c.b16 %v1699, %v1691
  %v2116 = vpack.c.b16 %v1700, %v1692
  %v2117 = vpack.c.b16 %v1701, %v1693
  %v2118 = vpack.c.b16 %v1702, %v1694
  %v2119 = vpack.c.b16 %v1703, %v1695
  %v2120 = vpack.c.b16 %v1712, %v1704
  %v2121 = vpack.c.b16 %v1713, %v1705
  %v2122 = vpack.c.b16 %v1714, %v1706
  %v2123 = vpack.c.b16 %v1715, %v1707
  %v2124 = vpack.c.b16 %v1716, %v1708
  %v2125 = vpack.c.b16 %v1717, %v1709
  %v2126 = vpack.c.b16 %v1718, %v1710
  %v2127 = vpack.c.b16 %v1719, %v1711
  %v2128 = vpack.c.b16 %v1728, %v1720
  %v2129 = vpack.c.b16 %v1729, %v1721
  %v2130 = vpack.c.b16 %v1730, %v1722
  %v2131 = vpack.c.b16 %v1731, %v1723
  %v2132 = vpack.c.b16 %v1732, %v1724
  %v2133 = vpack.c.b16 %v1733, %v1725
  %v2134 = vpack.c.b16 %v1734, %v1726
  %v2135 = vpack.c.b16 %v1735, %v1727
  %v2136 = vpack.c.b16 %v1744, %v1736
  %v2137 = vpack.c.b16 %v1745, %v1737
  %v2138 = vpack.c.b16 %v1746, %v1738
  %v2139 = vpack.c.b16 %v1747, %v1739
  %v2140 = vpack.c.b16 %v1748, %v1740
  %v2141 = vpack.c.b16 %v1749, %v1741
  %v2142 = vpack.c.b16 %v1750, %v1742
  %v2143 = vpack.c.b16 %v1751, %v1743
  %v2144 = vpack.c.b16 %v1760, %v1752
  %v2145 = vpack.c.b16 %v1761, %v1753
  %v2146 = vpack.c.b16 %v1762, %v1754
  %v2147 = vpack.c.b16 %v1763, %v1755
  %v2148 = vpack.c.b16 %v1764, %v1756
  %v2149 = vpack.c.b16 %v1765, %v1757
  %v2150 = vpack.c.b16 %v1766, %v1758
  %v2151 = vpack.c.b16 %v1767, %v1759
  %v2152 = vpack.c.b16 %v1776, %v1768
  %v2153 = vpack.c.b16 %v1777, %v1769
  %v2154 = vpack.c.b16 %v1778, %v1770
  %v2155 = vpack.c.b16 %v1779, %v1771
  %v2156 = vpack.c.b16 %v1780, %v1772
  %v2157 = vpack.c.b16 %v1781, %v1773
  %v2158 = vpack.c.b16 %v1782, %v1774
  %v2159 = vpack.c.b16 %v1783, %v1775
  %v2160 = vpack.c.b16 %v1792, %v1784
  %v2161 = vpack.c.b16 %v1793, %v1785
  %v2162 = vpack.c.b16 %v1794, %v1786
  %v2163 = vpack.c.b16 %v1795, %v1787
  %v2164 = vpack.c.b16 %v1796, %v1788
  %v2165 = vpack.c.b16 %v1797, %v1789
  %v2166 = vpack.c.b16 %v1798, %v1790
  %v2167 = vpack.c.b16 %v1799, %v1791
  %v2168 = vpack.c.b16 %v1808, %v1800
  %v2169 = vpack.c.b16 %v1809, %v1801
  %v2170 = vpack.c.b16 %v1810, %v1802
  %v2171 = vpack.c.b16 %v1811, %v1803
  %v2172 = vpack.c.b16 %v1812, %v1804
  %v2173 = vpack.c.b16 %v1813, %v1805
  %v2174 = vpack.c.b16 %v1814, %v1806
  %v2175 = vpack.c.b16 %v1815, %v1807
  %v2176 = vpack.c.b16 %v1824, %v1816
  %v2177 = vpack.c.b16 %v1825, %v1817
  %v2178 = vpack.c.b16 %v1826, %v1818
  %v2179 = vpack.c.b16 %v1827, %v1819
  %v2180 = vpack.c.b16 %v1828, %v1820
  %v2181 = vpack.c.b16 %v1829, %v1821
  %v2182 = vpack.c.b16 %v1830, %v1822
  %v2183 = vpack.c.b16 %v1831, %v1823
  %v2184 = vpack.c.b16 %v1840, %v1832
  %v2185 = vpack.c.b16 %v1841, %v1833
  %v2186 = vpack.c.b16 %v1842, %v1834
  %v2187 = vpack.c.b16 %v1843, %v1835
  %v2188 = vpack.c.b16 %v1844, %v1836
  %v2189 = vpack.c.b16 %v1845, %v1837
  %v2190 = vpack.c.b16 %v1846, %v1838
  %v2191 = vpack.c.b16 %v1847, %v1839
  %v2192 = vpack.c.b16 %v1856, %v1848
  %v2193 = vpack.c.b16 %v1857, %v1849
  %v2194 = vpack.c.b16 %v1858, %v1850
  %v2195 = vpack.c.b16 %v1859, %v1851
  %v2196 = vpack.c.b16 %v1860, %v1852
  %v2197 = vpack.c.b16 %v1861, %v1853
  %v2198 = vpack.c.b16 %v1862, %v1854
  %v2199 = vpack.c.b16 %v1863, %v1855
  %v2200 = vpack.c.b16 %v1872, %v1864
  %v2201 = vpack.c.b16 %v1873, %v1865
  %v2202 = vpack.c.b16 %v1874, %v1866
  %v2203 = vpack.c.b16 %v1875, %v1867
  %v2204 = vpack.c.b16 %v1876, %v1868
  %v2205 = vpack.c.b16 %v1877, %v1869
  %v2206 = vpack.c.b16 %v1878, %v1870
  %v2207 = vpack.c.b16 %v1879, %v1871
  %v2208 = vpack.c.b16 %v1888, %v1880
  %v2209 = vpack.c.b16 %v1889, %v1881
  %v2210 = vpack.c.b16 %v1890, %v1882
  %v2211 = vpack.c.b16 %v1891, %v1883
  %v2212 = vpack.c.b16 %v1892, %v1884
  %v2213 = vpack.c.b16 %v1893, %v1885
  %v2214 = vpack.c.b16 %v1894, %v1886
  %v2215 = vpack.c.b16 %v1895, %v1887
  %v2216 = vpack.c.b16 %v1904, %v1896
  %v2217 = vpack.c.b16 %v1905, %v1897
  %v2218 = vpack.c.b16 %v1906, %v1898
  %v2219 = vpack.c.b16 %v1907, %v1899
  %v2220 = vpack.c.b16 %v1908, %v1900
  %v2221 = vpack.c.b16 %v1909, %v1901
  %v2222 = vpack.c.b16 %v1910, %v1902
  %v2223 = vpack.c.b16 %v1911, %v1903
  %v2224 = vpack.c.b16 %v1920, %v1912
  %v2225 = vpack.c.b16 %v1921, %v1913
  %v2226 = vpack.c.b16 %v1922, %v1914
  %v2227 = vpack.c.b16 %v1923, %v1915
  %v2228 = vpack.c.b16 %v1924, %v1916
  %v2229 = vpack.c.b16 %v1925, %v1917
  %v2230 = vpack.c.b16 %v1926, %v1918
  %v2231 = vpack.c.b16 %v1927, %v1919
  %v2232 = vpack.c.b16 %v1936, %v1928
  %v2233 = vpack.c.b16 %v1937, %v1929
  %v2234 = vpack.c.b16 %v1938, %v1930
  %v2235 = vpack.c.b16 %v1939, %v1931
  %v2236 = vpack.c.b16 %v1940, %v1932
  %v2237 = vpack.c.b16 %v1941, %v1933
  %v2238 = vpack.c.b16 %v1942, %v1934
  %v2239 = vpack.c.b16 %v1943, %v1935
  %v2240 = vpack.c.b16 %v1952, %v1944
  %v2241 = vpack.c.b16 %v1953, %v1945
  %v2242 = vpack.c.b16 %v1954, %v1946
  %v2243 = vpack.c.b16 %v1955, %v1947
  %v2244 = vpack.c.b16 %v1956, %v1948
  %v2245 = vpack.c.b16 %v1957, %v1949
  %v2246 = vpack.c.b16 %v1958, %v1950
  %v2247 = vpack.c.b16 %v1959, %v1951
  %v2248 = vpack.c.b16 %v1968, %v1960
  %v2249 = vpack.c.b16 %v1969, %v1961
  %v2250 = vpack.c.b16 %v1970, %v1962
  %v2251 = vpack.c.b16 %v1971, %v1963
  %v2252 = vpack.c.b16 %v1972, %v1964
  %v2253 = vpack.c.b16 %v1973, %v1965
  %v2254 = vpack.c.b16 %v1974, %v1966
  %v2255 = vpack.c.b16 %v1975, %v1967
  %v2256 = vpack.c.b16 %v1984, %v1976
  %v2257 = vpack.c.b16 %v1985, %v1977
  %v2258 = vpack.c.b16 %v1986, %v1978
  %v2259 = vpack.c.b16 %v1987, %v1979
  %v2260 = vpack.c.b16 %v1988, %v1980
  %v2261 = vpack.c.b16 %v1989, %v1981
  %v2262 = vpack.c.b16 %v1990, %v1982
  %v2263 = vpack.c.b16 %v1991, %v1983
  %v2264 = vpack.c.b16 %v2000, %v1992
  %v2265 = vpack.c.b16 %v2001, %v1993
  %v2266 = vpack.c.b16 %v2002, %v1994
  %v2267 = vpack.c.b16 %v2003, %v1995
  %v2268 = vpack.c.b16 %v2004, %v1996
  %v2269 = vpack.c.b16 %v2005, %v1997
  %v2270 = vpack.c.b16 %v2006, %v1998
  %v2271 = vpack.c.b16 %v2007, %v1999
  %v2272 = vpack.c.b16 %v2016, %v2008
  %v2273 = vpack.c.b16 %v2017, %v2009
  %v2274 = vpack.c.b16 %v2018, %v2010
  %v2275 = vpack.c.b16 %v2019, %v2011
  %v2276 = vpack.c.b16 %v2020, %v2012
  %v2277 = vpack.c.b16 %v2021, %v2013
  %v2278 = vpack.c.b16 %v2022, %v2014
  %v2279 = vpack.c.b16 %v2023, %v2015
  %2536 = vmatprep.subr.bf16.mxu0 %v2081
  %2537 = vmatpush1.bf16.msra.mxu0 %v2080
  %2538 = vmatprep.subr.bf16.mxu0 %v2073
  %2539 = vmatpush1.bf16.msra.mxu0 %v2072
  %2540 = vmatprep.subr.bf16.mxu0 %v2065
  %2541 = vmatpush1.bf16.msra.mxu0 %v2064
  %2542 = vmatprep.subr.bf16.mxu0 %v2057
  %2543 = vmatpush1.bf16.msra.mxu0 %v2056
  %2544 = vmatprep.subr.bf16.mxu0 %v2049
  %2545 = vmatpush1.bf16.msra.mxu0 %v2048
  %2546 = vmatprep.subr.bf16.mxu0 %v2041
  %2547 = vmatpush1.bf16.msra.mxu0 %v2040
  %2548 = vmatprep.subr.bf16.mxu0 %v2033
  %2549 = vmatpush1.bf16.msra.mxu0 %v2032
  %2550 = vmatprep.subr.bf16.mxu0 %v2025
  %2551 = vmatpush1.bf16.msra.mxu0 %v2024
  %2552 = vmatprep.subr.bf16.mxu0 %v2145
  %2553 = vmatpush2.bf16.msra.mxu0 %v2144
  %2554 = vmatprep.subr.bf16.mxu0 %v2137
  %2555 = vmatpush2.bf16.msra.mxu0 %v2136
  %2556 = vmatprep.subr.bf16.mxu0 %v2129
  %2557 = vmatpush2.bf16.msra.mxu0 %v2128
  %2558 = vmatprep.subr.bf16.mxu0 %v2121
  %2559 = vmatpush2.bf16.msra.mxu0 %v2120
  %2560 = vmatprep.subr.bf16.mxu0 %v2113
  %2561 = vmatpush2.bf16.msra.mxu0 %v2112
  %2562 = vmatprep.subr.bf16.mxu0 %v2105
  %2563 = vmatpush2.bf16.msra.mxu0 %v2104
  %2564 = vmatprep.subr.bf16.mxu0 %v2097
  %2565 = vmatpush2.bf16.msra.mxu0 %v2096
  %2566 = vmatprep.subr.bf16.mxu0 %v2089
  %2567 = vmatpush2.bf16.msra.mxu0 %v2088
  %2568 = vmatprep.mubr.bf16.mxu0 %v951
  %2569 = vmatmul.mubr.bf16.gmra.mxu0 %v950
  %v2570 = vpop.f32.mrf.mxu0
  %v2571 = vadd.f32 %v1219, %v2570
  %v2572 = vpop.f32.mrf.mxu0
  %v2573 = vadd.f32 %v1223, %v2572
  %v2574 = vpop.f32.mrf.mxu0
  %v2575 = vadd.f32 %v1219, %v2574
  %v2576 = vpop.f32.mrf.mxu0
  %v2577 = vadd.f32 %v1223, %v2576
  %2578 = vmatprep.mubr.bf16.mxu0 %v955
  %2579 = vmatmul.mubr.bf16.gmra.mxu0 %v954
  %v2580 = vpop.f32.mrf.mxu0
  %v2581 = vadd.f32 %v1219, %v2580
  %v2582 = vpop.f32.mrf.mxu0
  %v2583 = vadd.f32 %v1223, %v2582
  %v2584 = vpop.f32.mrf.mxu0
  %v2585 = vadd.f32 %v1219, %v2584
  %v2586 = vpop.f32.mrf.mxu0
  %v2587 = vadd.f32 %v1223, %v2586
  %2588 = vdwg.mxu0
  %2589 = vmatprep.subr.bf16.mxu0 %v2209
  %2590 = vmatpush1.bf16.msra.mxu0 %v2208
  %2591 = vmatprep.subr.bf16.mxu0 %v2201
  %2592 = vmatpush1.bf16.msra.mxu0 %v2200
  %2593 = vmatprep.subr.bf16.mxu0 %v2193
  %2594 = vmatpush1.bf16.msra.mxu0 %v2192
  %2595 = vmatprep.subr.bf16.mxu0 %v2185
  %2596 = vmatpush1.bf16.msra.mxu0 %v2184
  %2597 = vmatprep.subr.bf16.mxu0 %v2177
  %2598 = vmatpush1.bf16.msra.mxu0 %v2176
  %2599 = vmatprep.subr.bf16.mxu0 %v2169
  %2600 = vmatpush1.bf16.msra.mxu0 %v2168
  %2601 = vmatprep.subr.bf16.mxu0 %v2161
  %2602 = vmatpush1.bf16.msra.mxu0 %v2160
  %2603 = vmatprep.subr.bf16.mxu0 %v2153
  %2604 = vmatpush1.bf16.msra.mxu0 %v2152
  %2605 = vmatprep.subr.bf16.mxu0 %v2273
  %2606 = vmatpush2.bf16.msra.mxu0 %v2272
  %2607 = vmatprep.subr.bf16.mxu0 %v2265
  %2608 = vmatpush2.bf16.msra.mxu0 %v2264
  %2609 = vmatprep.subr.bf16.mxu0 %v2257
  %2610 = vmatpush2.bf16.msra.mxu0 %v2256
  %2611 = vmatprep.subr.bf16.mxu0 %v2249
  %2612 = vmatpush2.bf16.msra.mxu0 %v2248
  %2613 = vmatprep.subr.bf16.mxu0 %v2241
  %2614 = vmatpush2.bf16.msra.mxu0 %v2240
  %2615 = vmatprep.subr.bf16.mxu0 %v2233
  %2616 = vmatpush2.bf16.msra.mxu0 %v2232
  %2617 = vmatprep.subr.bf16.mxu0 %v2225
  %2618 = vmatpush2.bf16.msra.mxu0 %v2224
  %2619 = vmatprep.subr.bf16.mxu0 %v2217
  %2620 = vmatpush2.bf16.msra.mxu0 %v2216
  %2621 = vmatprep.mubr.bf16.mxu0 %v953
  %2622 = vmatmul.mubr.bf16.gmra.mxu0 %v952
  %v2623 = vpop.f32.mrf.mxu0
  %v2624 = vadd.f32 %v2571, %v2623
  %v2625 = vpop.f32.mrf.mxu0
  %v2626 = vadd.f32 %v2573, %v2625
  %v2627 = vpop.f32.mrf.mxu0
  %v2628 = vadd.f32 %v2575, %v2627
  %v2629 = vpop.f32.mrf.mxu0
  %v2630 = vadd.f32 %v2577, %v2629
  %2631 = vmatprep.mubr.bf16.mxu0 %v957
  %2632 = vmatmul.mubr.bf16.gmra.mxu0 %v956
  %v2633 = vpop.f32.mrf.mxu0
  %v2634 = vadd.f32 %v2581, %v2633
  %v2635 = vpop.f32.mrf.mxu0
  %v2636 = vadd.f32 %v2583, %v2635
  %v2637 = vpop.f32.mrf.mxu0
  %v2638 = vadd.f32 %v2585, %v2637
  %v2639 = vpop.f32.mrf.mxu0
  %v2640 = vadd.f32 %v2587, %v2639
  %2641 = vdwg.mxu0
  %2642 = vmatprep.subr.bf16.mxu0 %v2083
  %2643 = vmatpush1.bf16.msra.mxu0 %v2082
  %2644 = vmatprep.subr.bf16.mxu0 %v2075
  %2645 = vmatpush1.bf16.msra.mxu0 %v2074
  %2646 = vmatprep.subr.bf16.mxu0 %v2067
  %2647 = vmatpush1.bf16.msra.mxu0 %v2066
  %2648 = vmatprep.subr.bf16.mxu0 %v2059
  %2649 = vmatpush1.bf16.msra.mxu0 %v2058
  %2650 = vmatprep.subr.bf16.mxu0 %v2051
  %2651 = vmatpush1.bf16.msra.mxu0 %v2050
  %2652 = vmatprep.subr.bf16.mxu0 %v2043
  %2653 = vmatpush1.bf16.msra.mxu0 %v2042
  %2654 = vmatprep.subr.bf16.mxu0 %v2035
  %2655 = vmatpush1.bf16.msra.mxu0 %v2034
  %2656 = vmatprep.subr.bf16.mxu0 %v2027
  %2657 = vmatpush1.bf16.msra.mxu0 %v2026
  %2658 = vmatprep.subr.bf16.mxu0 %v2147
  %2659 = vmatpush2.bf16.msra.mxu0 %v2146
  %2660 = vmatprep.subr.bf16.mxu0 %v2139
  %2661 = vmatpush2.bf16.msra.mxu0 %v2138
  %2662 = vmatprep.subr.bf16.mxu0 %v2131
  %2663 = vmatpush2.bf16.msra.mxu0 %v2130
  %2664 = vmatprep.subr.bf16.mxu0 %v2123
  %2665 = vmatpush2.bf16.msra.mxu0 %v2122
  %2666 = vmatprep.subr.bf16.mxu0 %v2115
  %2667 = vmatpush2.bf16.msra.mxu0 %v2114
  %2668 = vmatprep.subr.bf16.mxu0 %v2107
  %2669 = vmatpush2.bf16.msra.mxu0 %v2106
  %2670 = vmatprep.subr.bf16.mxu0 %v2099
  %2671 = vmatpush2.bf16.msra.mxu0 %v2098
  %2672 = vmatprep.subr.bf16.mxu0 %v2091
  %2673 = vmatpush2.bf16.msra.mxu0 %v2090
  %2674 = vmatprep.mubr.bf16.mxu0 %v951
  %2675 = vmatmul.mubr.bf16.gmra.mxu0 %v950
  %v2676 = vpop.f32.mrf.mxu0
  %v2677 = vadd.f32 %v1227, %v2676
  %v2678 = vpop.f32.mrf.mxu0
  %v2679 = vadd.f32 %v1231, %v2678
  %v2680 = vpop.f32.mrf.mxu0
  %v2681 = vadd.f32 %v1227, %v2680
  %v2682 = vpop.f32.mrf.mxu0
  %v2683 = vadd.f32 %v1231, %v2682
  %2684 = vmatprep.mubr.bf16.mxu0 %v955
  %2685 = vmatmul.mubr.bf16.gmra.mxu0 %v954
  %v2686 = vpop.f32.mrf.mxu0
  %v2687 = vadd.f32 %v1227, %v2686
  %v2688 = vpop.f32.mrf.mxu0
  %v2689 = vadd.f32 %v1231, %v2688
  %v2690 = vpop.f32.mrf.mxu0
  %v2691 = vadd.f32 %v1227, %v2690
  %v2692 = vpop.f32.mrf.mxu0
  %v2693 = vadd.f32 %v1231, %v2692
  %2694 = vdwg.mxu0
  %2695 = vmatprep.subr.bf16.mxu0 %v2211
  %2696 = vmatpush1.bf16.msra.mxu0 %v2210
  %2697 = vmatprep.subr.bf16.mxu0 %v2203
  %2698 = vmatpush1.bf16.msra.mxu0 %v2202
  %2699 = vmatprep.subr.bf16.mxu0 %v2195
  %2700 = vmatpush1.bf16.msra.mxu0 %v2194
  %2701 = vmatprep.subr.bf16.mxu0 %v2187
  %2702 = vmatpush1.bf16.msra.mxu0 %v2186
  %2703 = vmatprep.subr.bf16.mxu0 %v2179
  %2704 = vmatpush1.bf16.msra.mxu0 %v2178
  %2705 = vmatprep.subr.bf16.mxu0 %v2171
  %2706 = vmatpush1.bf16.msra.mxu0 %v2170
  %2707 = vmatprep.subr.bf16.mxu0 %v2163
  %2708 = vmatpush1.bf16.msra.mxu0 %v2162
  %2709 = vmatprep.subr.bf16.mxu0 %v2155
  %2710 = vmatpush1.bf16.msra.mxu0 %v2154
  %2711 = vmatprep.subr.bf16.mxu0 %v2275
  %2712 = vmatpush2.bf16.msra.mxu0 %v2274
  %2713 = vmatprep.subr.bf16.mxu0 %v2267
  %2714 = vmatpush2.bf16.msra.mxu0 %v2266
  %2715 = vmatprep.subr.bf16.mxu0 %v2259
  %2716 = vmatpush2.bf16.msra.mxu0 %v2258
  %2717 = vmatprep.subr.bf16.mxu0 %v2251
  %2718 = vmatpush2.bf16.msra.mxu0 %v2250
  %2719 = vmatprep.subr.bf16.mxu0 %v2243
  %2720 = vmatpush2.bf16.msra.mxu0 %v2242
  %2721 = vmatprep.subr.bf16.mxu0 %v2235
  %2722 = vmatpush2.bf16.msra.mxu0 %v2234
  %2723 = vmatprep.subr.bf16.mxu0 %v2227
  %2724 = vmatpush2.bf16.msra.mxu0 %v2226
  %2725 = vmatprep.subr.bf16.mxu0 %v2219
  %2726 = vmatpush2.bf16.msra.mxu0 %v2218
  %2727 = vmatprep.mubr.bf16.mxu0 %v953
  %2728 = vmatmul.mubr.bf16.gmra.mxu0 %v952
  %v2729 = vpop.f32.mrf.mxu0
  %v2730 = vadd.f32 %v2677, %v2729
  %v2731 = vpop.f32.mrf.mxu0
  %v2732 = vadd.f32 %v2679, %v2731
  %v2733 = vpop.f32.mrf.mxu0
  %v2734 = vadd.f32 %v2681, %v2733
  %v2735 = vpop.f32.mrf.mxu0
  %v2736 = vadd.f32 %v2683, %v2735
  %2737 = vmatprep.mubr.bf16.mxu0 %v957
  %2738 = vmatmul.mubr.bf16.gmra.mxu0 %v956
  %v2739 = vpop.f32.mrf.mxu0
  %v2740 = vadd.f32 %v2687, %v2739
  %v2741 = vpop.f32.mrf.mxu0
  %v2742 = vadd.f32 %v2689, %v2741
  %v2743 = vpop.f32.mrf.mxu0
  %v2744 = vadd.f32 %v2691, %v2743
  %v2745 = vpop.f32.mrf.mxu0
  %v2746 = vadd.f32 %v2693, %v2745
  %2747 = vdwg.mxu0
  %2748 = vmatprep.subr.bf16.mxu0 %v2085
  %2749 = vmatpush1.bf16.msra.mxu0 %v2084
  %2750 = vmatprep.subr.bf16.mxu0 %v2077
  %2751 = vmatpush1.bf16.msra.mxu0 %v2076
  %2752 = vmatprep.subr.bf16.mxu0 %v2069
  %2753 = vmatpush1.bf16.msra.mxu0 %v2068
  %2754 = vmatprep.subr.bf16.mxu0 %v2061
  %2755 = vmatpush1.bf16.msra.mxu0 %v2060
  %2756 = vmatprep.subr.bf16.mxu0 %v2053
  %2757 = vmatpush1.bf16.msra.mxu0 %v2052
  %2758 = vmatprep.subr.bf16.mxu0 %v2045
  %2759 = vmatpush1.bf16.msra.mxu0 %v2044
  %2760 = vmatprep.subr.bf16.mxu0 %v2037
  %2761 = vmatpush1.bf16.msra.mxu0 %v2036
  %2762 = vmatprep.subr.bf16.mxu0 %v2029
  %2763 = vmatpush1.bf16.msra.mxu0 %v2028
  %2764 = vmatprep.subr.bf16.mxu0 %v2149
  %2765 = vmatpush2.bf16.msra.mxu0 %v2148
  %2766 = vmatprep.subr.bf16.mxu0 %v2141
  %2767 = vmatpush2.bf16.msra.mxu0 %v2140
  %2768 = vmatprep.subr.bf16.mxu0 %v2133
  %2769 = vmatpush2.bf16.msra.mxu0 %v2132
  %2770 = vmatprep.subr.bf16.mxu0 %v2125
  %2771 = vmatpush2.bf16.msra.mxu0 %v2124
  %2772 = vmatprep.subr.bf16.mxu0 %v2117
  %2773 = vmatpush2.bf16.msra.mxu0 %v2116
  %2774 = vmatprep.subr.bf16.mxu0 %v2109
  %2775 = vmatpush2.bf16.msra.mxu0 %v2108
  %2776 = vmatprep.subr.bf16.mxu0 %v2101
  %2777 = vmatpush2.bf16.msra.mxu0 %v2100
  %2778 = vmatprep.subr.bf16.mxu0 %v2093
  %2779 = vmatpush2.bf16.msra.mxu0 %v2092
  %2780 = vmatprep.mubr.bf16.mxu0 %v951
  %2781 = vmatmul.mubr.bf16.gmra.mxu0 %v950
  %v2782 = vpop.f32.mrf.mxu0
  %v2783 = vadd.f32 %v1235, %v2782
  %v2784 = vpop.f32.mrf.mxu0
  %v2785 = vadd.f32 %v1239, %v2784
  %v2786 = vpop.f32.mrf.mxu0
  %v2787 = vadd.f32 %v1235, %v2786
  %v2788 = vpop.f32.mrf.mxu0
  %v2789 = vadd.f32 %v1239, %v2788
  %2790 = vmatprep.mubr.bf16.mxu0 %v955
  %2791 = vmatmul.mubr.bf16.gmra.mxu0 %v954
  %v2792 = vpop.f32.mrf.mxu0
  %v2793 = vadd.f32 %v1235, %v2792
  %v2794 = vpop.f32.mrf.mxu0
  %v2795 = vadd.f32 %v1239, %v2794
  %v2796 = vpop.f32.mrf.mxu0
  %v2797 = vadd.f32 %v1235, %v2796
  %v2798 = vpop.f32.mrf.mxu0
  %v2799 = vadd.f32 %v1239, %v2798
  %2800 = vdwg.mxu0
  %2801 = vmatprep.subr.bf16.mxu0 %v2213
  %2802 = vmatpush1.bf16.msra.mxu0 %v2212
  %2803 = vmatprep.subr.bf16.mxu0 %v2205
  %2804 = vmatpush1.bf16.msra.mxu0 %v2204
  %2805 = vmatprep.subr.bf16.mxu0 %v2197
  %2806 = vmatpush1.bf16.msra.mxu0 %v2196
  %2807 = vmatprep.subr.bf16.mxu0 %v2189
  %2808 = vmatpush1.bf16.msra.mxu0 %v2188
  %2809 = vmatprep.subr.bf16.mxu0 %v2181
  %2810 = vmatpush1.bf16.msra.mxu0 %v2180
  %2811 = vmatprep.subr.bf16.mxu0 %v2173
  %2812 = vmatpush1.bf16.msra.mxu0 %v2172
  %2813 = vmatprep.subr.bf16.mxu0 %v2165
  %2814 = vmatpush1.bf16.msra.mxu0 %v2164
  %2815 = vmatprep.subr.bf16.mxu0 %v2157
  %2816 = vmatpush1.bf16.msra.mxu0 %v2156
  %2817 = vmatprep.subr.bf16.mxu0 %v2277
  %2818 = vmatpush2.bf16.msra.mxu0 %v2276
  %2819 = vmatprep.subr.bf16.mxu0 %v2269
  %2820 = vmatpush2.bf16.msra.mxu0 %v2268
  %2821 = vmatprep.subr.bf16.mxu0 %v2261
  %2822 = vmatpush2.bf16.msra.mxu0 %v2260
  %2823 = vmatprep.subr.bf16.mxu0 %v2253
  %2824 = vmatpush2.bf16.msra.mxu0 %v2252
  %2825 = vmatprep.subr.bf16.mxu0 %v2245
  %2826 = vmatpush2.bf16.msra.mxu0 %v2244
  %2827 = vmatprep.subr.bf16.mxu0 %v2237
  %2828 = vmatpush2.bf16.msra.mxu0 %v2236
  %2829 = vmatprep.subr.bf16.mxu0 %v2229
  %2830 = vmatpush2.bf16.msra.mxu0 %v2228
  %2831 = vmatprep.subr.bf16.mxu0 %v2221
  %2832 = vmatpush2.bf16.msra.mxu0 %v2220
  %2833 = vmatprep.mubr.bf16.mxu0 %v953
  %2834 = vmatmul.mubr.bf16.gmra.mxu0 %v952
  %v2835 = vpop.f32.mrf.mxu0
  %v2836 = vadd.f32 %v2783, %v2835
  %v2837 = vpop.f32.mrf.mxu0
  %v2838 = vadd.f32 %v2785, %v2837
  %v2839 = vpop.f32.mrf.mxu0
  %v2840 = vadd.f32 %v2787, %v2839
  %v2841 = vpop.f32.mrf.mxu0
  %v2842 = vadd.f32 %v2789, %v2841
  %2843 = vmatprep.mubr.bf16.mxu0 %v957
  %2844 = vmatmul.mubr.bf16.gmra.mxu0 %v956
  %v2845 = vpop.f32.mrf.mxu0
  %v2846 = vadd.f32 %v2793, %v2845
  %v2847 = vpop.f32.mrf.mxu0
  %v2848 = vadd.f32 %v2795, %v2847
  %v2849 = vpop.f32.mrf.mxu0
  %v2850 = vadd.f32 %v2797, %v2849
  %v2851 = vpop.f32.mrf.mxu0
  %v2852 = vadd.f32 %v2799, %v2851
  %2853 = vdwg.mxu0
  %2854 = vmatprep.subr.bf16.mxu0 %v2087
  %2855 = vmatpush1.bf16.msra.mxu0 %v2086
  %2856 = vmatprep.subr.bf16.mxu0 %v2079
  %2857 = vmatpush1.bf16.msra.mxu0 %v2078
  %2858 = vmatprep.subr.bf16.mxu0 %v2071
  %2859 = vmatpush1.bf16.msra.mxu0 %v2070
  %2860 = vmatprep.subr.bf16.mxu0 %v2063
  %2861 = vmatpush1.bf16.msra.mxu0 %v2062
  %2862 = vmatprep.subr.bf16.mxu0 %v2055
  %2863 = vmatpush1.bf16.msra.mxu0 %v2054
  %2864 = vmatprep.subr.bf16.mxu0 %v2047
  %2865 = vmatpush1.bf16.msra.mxu0 %v2046
  %2866 = vmatprep.subr.bf16.mxu0 %v2039
  %2867 = vmatpush1.bf16.msra.mxu0 %v2038
  %2868 = vmatprep.subr.bf16.mxu0 %v2031
  %2869 = vmatpush1.bf16.msra.mxu0 %v2030
  %2870 = vmatprep.subr.bf16.mxu0 %v2151
  %2871 = vmatpush2.bf16.msra.mxu0 %v2150
  %2872 = vmatprep.subr.bf16.mxu0 %v2143
  %2873 = vmatpush2.bf16.msra.mxu0 %v2142
  %2874 = vmatprep.subr.bf16.mxu0 %v2135
  %2875 = vmatpush2.bf16.msra.mxu0 %v2134
  %2876 = vmatprep.subr.bf16.mxu0 %v2127
  %2877 = vmatpush2.bf16.msra.mxu0 %v2126
  %2878 = vmatprep.subr.bf16.mxu0 %v2119
  %2879 = vmatpush2.bf16.msra.mxu0 %v2118
  %2880 = vmatprep.subr.bf16.mxu0 %v2111
  %2881 = vmatpush2.bf16.msra.mxu0 %v2110
  %2882 = vmatprep.subr.bf16.mxu0 %v2103
  %2883 = vmatpush2.bf16.msra.mxu0 %v2102
  %2884 = vmatprep.subr.bf16.mxu0 %v2095
  %2885 = vmatpush2.bf16.msra.mxu0 %v2094
  %2886 = vmatprep.mubr.bf16.mxu0 %v951
  %2887 = vmatmul.mubr.bf16.gmra.mxu0 %v950
  %v2888 = vpop.f32.mrf.mxu0
  %v2889 = vadd.f32 %v1243, %v2888
  %v2890 = vpop.f32.mrf.mxu0
  %v2891 = vadd.f32 %v1247, %v2890
  %v2892 = vpop.f32.mrf.mxu0
  %v2893 = vadd.f32 %v1243, %v2892
  %v2894 = vpop.f32.mrf.mxu0
  %v2895 = vadd.f32 %v1247, %v2894
  %2896 = vmatprep.mubr.bf16.mxu0 %v955
  %2897 = vmatmul.mubr.bf16.gmra.mxu0 %v954
  %v2898 = vpop.f32.mrf.mxu0
  %v2899 = vadd.f32 %v1243, %v2898
  %v2900 = vpop.f32.mrf.mxu0
  %v2901 = vadd.f32 %v1247, %v2900
  %v2902 = vpop.f32.mrf.mxu0
  %v2903 = vadd.f32 %v1243, %v2902
  %v2904 = vpop.f32.mrf.mxu0
  %v2905 = vadd.f32 %v1247, %v2904
  %2906 = vdwg.mxu0
  %2907 = vmatprep.subr.bf16.mxu0 %v2215
  %2908 = vmatpush1.bf16.msra.mxu0 %v2214
  %2909 = vmatprep.subr.bf16.mxu0 %v2207
  %2910 = vmatpush1.bf16.msra.mxu0 %v2206
  %2911 = vmatprep.subr.bf16.mxu0 %v2199
  %2912 = vmatpush1.bf16.msra.mxu0 %v2198
  %2913 = vmatprep.subr.bf16.mxu0 %v2191
  %2914 = vmatpush1.bf16.msra.mxu0 %v2190
  %2915 = vmatprep.subr.bf16.mxu0 %v2183
  %2916 = vmatpush1.bf16.msra.mxu0 %v2182
  %2917 = vmatprep.subr.bf16.mxu0 %v2175
  %2918 = vmatpush1.bf16.msra.mxu0 %v2174
  %2919 = vmatprep.subr.bf16.mxu0 %v2167
  %2920 = vmatpush1.bf16.msra.mxu0 %v2166
  %2921 = vmatprep.subr.bf16.mxu0 %v2159
  %2922 = vmatpush1.bf16.msra.mxu0 %v2158
  %2923 = vmatprep.subr.bf16.mxu0 %v2279
  %2924 = vmatpush2.bf16.msra.mxu0 %v2278
  %2925 = vmatprep.subr.bf16.mxu0 %v2271
  %2926 = vmatpush2.bf16.msra.mxu0 %v2270
  %2927 = vmatprep.subr.bf16.mxu0 %v2263
  %2928 = vmatpush2.bf16.msra.mxu0 %v2262
  %2929 = vmatprep.subr.bf16.mxu0 %v2255
  %2930 = vmatpush2.bf16.msra.mxu0 %v2254
  %2931 = vmatprep.subr.bf16.mxu0 %v2247
  %2932 = vmatpush2.bf16.msra.mxu0 %v2246
  %2933 = vmatprep.subr.bf16.mxu0 %v2239
  %2934 = vmatpush2.bf16.msra.mxu0 %v2238
  %2935 = vmatprep.subr.bf16.mxu0 %v2231
  %2936 = vmatpush2.bf16.msra.mxu0 %v2230
  %2937 = vmatprep.subr.bf16.mxu0 %v2223
  %2938 = vmatpush2.bf16.msra.mxu0 %v2222
  %2939 = vmatprep.mubr.bf16.mxu0 %v953
  %2940 = vmatmul.mubr.bf16.gmra.mxu0 %v952
  %v2941 = vpop.f32.mrf.mxu0
  %v2942 = vadd.f32 %v2889, %v2941
  %v2943 = vpop.f32.mrf.mxu0
  %v2944 = vadd.f32 %v2891, %v2943
  %v2945 = vpop.f32.mrf.mxu0
  %v2946 = vadd.f32 %v2893, %v2945
  %v2947 = vpop.f32.mrf.mxu0
  %v2948 = vadd.f32 %v2895, %v2947
  %2949 = vmatprep.mubr.bf16.mxu0 %v957
  %2950 = vmatmul.mubr.bf16.gmra.mxu0 %v956
  %v2951 = vpop.f32.mrf.mxu0
  %v2952 = vadd.f32 %v2899, %v2951
  %v2953 = vpop.f32.mrf.mxu0
  %v2954 = vadd.f32 %v2901, %v2953
  %v2955 = vpop.f32.mrf.mxu0
  %v2956 = vadd.f32 %v2903, %v2955
  %v2957 = vpop.f32.mrf.mxu0
  %v2958 = vadd.f32 %v2905, %v2957
  %2959 = vdwg.mxu0
  %v2960 = vmax.f32 %v2624, %v2628
  %v2961 = vmax.f32 %v2960, %v2634
  %v2962 = vmax.f32 %v2961, %v2638
  %v2963 = vmax.f32 %v2626, %v2630
  %v2964 = vmax.f32 %v2963, %v2636
  %v2965 = vmax.f32 %v2964, %v2640
  %v2966 = vmax.f32 %v2730, %v2734
  %v2967 = vmax.f32 %v2966, %v2740
  %v2968 = vmax.f32 %v2967, %v2744
  %v2969 = vmax.f32 %v2732, %v2736
  %v2970 = vmax.f32 %v2969, %v2742
  %v2971 = vmax.f32 %v2970, %v2746
  %v2972 = vmax.f32 %v2836, %v2840
  %v2973 = vmax.f32 %v2972, %v2846
  %v2974 = vmax.f32 %v2973, %v2850
  %v2975 = vmax.f32 %v2838, %v2842
  %v2976 = vmax.f32 %v2975, %v2848
  %v2977 = vmax.f32 %v2976, %v2852
  %v2978 = vmax.f32 %v2942, %v2946
  %v2979 = vmax.f32 %v2978, %v2952
  %v2980 = vmax.f32 %v2979, %v2956
  %v2981 = vmax.f32 %v2944, %v2948
  %v2982 = vmax.f32 %v2981, %v2954
  %v2983 = vmax.f32 %v2982, %v2958
  %v2984 = vpack.c.bf16 %v2962, %v2962
  %v2985 = vpack.c.bf16 %v2965, %v2965
  %v2986 = vpack.c.bf16 %v2968, %v2968
  %v2987 = vpack.c.bf16 %v2971, %v2971
  %v2988 = vpack.c.bf16 %v2974, %v2974
  %v2989 = vpack.c.bf16 %v2977, %v2977
  %v2990 = vpack.c.bf16 %v2980, %v2980
  %v2991 = vpack.c.bf16 %v2983, %v2983
  %v2992 = vld [vmem:[%s7] sm:$0xff]
  %v2993 = vld [vmem:[%s7 + $0x8] sm:$0xff]
  %v2994 = vld [vmem:[%s7 + $0x10] sm:$0xff]
  %v2995 = vld [vmem:[%s7 + $0x18] sm:$0xff]
  %v2996 = vld [vmem:[%s7 + $0x20] sm:$0xff]
  %v2997 = vld [vmem:[%s7 + $0x28] sm:$0xff]
  %v2998 = vld [vmem:[%s7 + $0x30] sm:$0xff]
  %v2999 = vld [vmem:[%s7 + $0x38] sm:$0xff]
  %v3000 = vld [vmem:[%s7 + $0x40] sm:$0xff]
  %v3001 = vld [vmem:[%s7 + $0x48] sm:$0xff]
  %v3002 = vld [vmem:[%s7 + $0x50] sm:$0xff]
  %v3003 = vld [vmem:[%s7 + $0x58] sm:$0xff]
  %v3004 = vld [vmem:[%s7 + $0x60] sm:$0xff]
  %v3005 = vld [vmem:[%s7 + $0x68] sm:$0xff]
  %v3006 = vld [vmem:[%s7 + $0x70] sm:$0xff]
  %v3007 = vld [vmem:[%s7 + $0x78] sm:$0xff]
  %v3008 = vld [vmem:[%s7 + $0x80] sm:$0xff]
  %v3009 = vld [vmem:[%s7 + $0x88] sm:$0xff]
  %v3010 = vld [vmem:[%s7 + $0x90] sm:$0xff]
  %v3011 = vld [vmem:[%s7 + $0x98] sm:$0xff]
  %v3012 = vld [vmem:[%s7 + $0xa0] sm:$0xff]
  %v3013 = vld [vmem:[%s7 + $0xa8] sm:$0xff]
  %v3014 = vld [vmem:[%s7 + $0xb0] sm:$0xff]
  %v3015 = vld [vmem:[%s7 + $0xb8] sm:$0xff]
  %v3016 = vld [vmem:[%s7 + $0xc0] sm:$0xff]
  %v3017 = vld [vmem:[%s7 + $0xc8] sm:$0xff]
  %v3018 = vld [vmem:[%s7 + $0xd0] sm:$0xff]
  %v3019 = vld [vmem:[%s7 + $0xd8] sm:$0xff]
  %v3020 = vld [vmem:[%s7 + $0xe0] sm:$0xff]
  %v3021 = vld [vmem:[%s7 + $0xe8] sm:$0xff]
  %v3022 = vld [vmem:[%s7 + $0xf0] sm:$0xff]
  %v3023 = vld [vmem:[%s7 + $0xf8] sm:$0xff]
  %v3024 = vld [vmem:[%s7 + $0x100] sm:$0xff]
  %v3025 = vld [vmem:[%s7 + $0x108] sm:$0xff]
  %v3026 = vld [vmem:[%s7 + $0x110] sm:$0xff]
  %v3027 = vld [vmem:[%s7 + $0x118] sm:$0xff]
  %v3028 = vld [vmem:[%s7 + $0x120] sm:$0xff]
  %v3029 = vld [vmem:[%s7 + $0x128] sm:$0xff]
  %v3030 = vld [vmem:[%s7 + $0x130] sm:$0xff]
  %v3031 = vld [vmem:[%s7 + $0x138] sm:$0xff]
  %v3032 = vld [vmem:[%s7 + $0x140] sm:$0xff]
  %v3033 = vld [vmem:[%s7 + $0x148] sm:$0xff]
  %v3034 = vld [vmem:[%s7 + $0x150] sm:$0xff]
  %v3035 = vld [vmem:[%s7 + $0x158] sm:$0xff]
  %v3036 = vld [vmem:[%s7 + $0x160] sm:$0xff]
  %v3037 = vld [vmem:[%s7 + $0x168] sm:$0xff]
  %v3038 = vld [vmem:[%s7 + $0x170] sm:$0xff]
  %v3039 = vld [vmem:[%s7 + $0x178] sm:$0xff]
  %v3040 = vld [vmem:[%s7 + $0x180] sm:$0xff]
  %v3041 = vld [vmem:[%s7 + $0x188] sm:$0xff]
  %v3042 = vld [vmem:[%s7 + $0x190] sm:$0xff]
  %v3043 = vld [vmem:[%s7 + $0x198] sm:$0xff]
  %v3044 = vld [vmem:[%s7 + $0x1a0] sm:$0xff]
  %v3045 = vld [vmem:[%s7 + $0x1a8] sm:$0xff]
  %v3046 = vld [vmem:[%s7 + $0x1b0] sm:$0xff]
  %v3047 = vld [vmem:[%s7 + $0x1b8] sm:$0xff]
  %v3048 = vld [vmem:[%s7 + $0x1c0] sm:$0xff]
  %v3049 = vld [vmem:[%s7 + $0x1c8] sm:$0xff]
  %v3050 = vld [vmem:[%s7 + $0x1d0] sm:$0xff]
  %v3051 = vld [vmem:[%s7 + $0x1d8] sm:$0xff]
  %v3052 = vld [vmem:[%s7 + $0x1e0] sm:$0xff]
  %v3053 = vld [vmem:[%s7 + $0x1e8] sm:$0xff]
  %v3054 = vld [vmem:[%s7 + $0x1f0] sm:$0xff]
  %v3055 = vld [vmem:[%s7 + $0x1f8] sm:$0xff]
  %v3056 = vld [vmem:[%s7 + $0x200] sm:$0xff]
  %v3057 = vld [vmem:[%s7 + $0x208] sm:$0xff]
  %v3058 = vld [vmem:[%s7 + $0x210] sm:$0xff]
  %v3059 = vld [vmem:[%s7 + $0x218] sm:$0xff]
  %v3060 = vld [vmem:[%s7 + $0x220] sm:$0xff]
  %v3061 = vld [vmem:[%s7 + $0x228] sm:$0xff]
  %v3062 = vld [vmem:[%s7 + $0x230] sm:$0xff]
  %v3063 = vld [vmem:[%s7 + $0x238] sm:$0xff]
  %v3064 = vld [vmem:[%s7 + $0x240] sm:$0xff]
  %v3065 = vld [vmem:[%s7 + $0x248] sm:$0xff]
  %v3066 = vld [vmem:[%s7 + $0x250] sm:$0xff]
  %v3067 = vld [vmem:[%s7 + $0x258] sm:$0xff]
  %v3068 = vld [vmem:[%s7 + $0x260] sm:$0xff]
  %v3069 = vld [vmem:[%s7 + $0x268] sm:$0xff]
  %v3070 = vld [vmem:[%s7 + $0x270] sm:$0xff]
  %v3071 = vld [vmem:[%s7 + $0x278] sm:$0xff]
  %v3072 = vld [vmem:[%s7 + $0x280] sm:$0xff]
  %v3073 = vld [vmem:[%s7 + $0x288] sm:$0xff]
  %v3074 = vld [vmem:[%s7 + $0x290] sm:$0xff]
  %v3075 = vld [vmem:[%s7 + $0x298] sm:$0xff]
  %v3076 = vld [vmem:[%s7 + $0x2a0] sm:$0xff]
  %v3077 = vld [vmem:[%s7 + $0x2a8] sm:$0xff]
  %v3078 = vld [vmem:[%s7 + $0x2b0] sm:$0xff]
  %v3079 = vld [vmem:[%s7 + $0x2b8] sm:$0xff]
  %v3080 = vld [vmem:[%s7 + $0x2c0] sm:$0xff]
  %v3081 = vld [vmem:[%s7 + $0x2c8] sm:$0xff]
  %v3082 = vld [vmem:[%s7 + $0x2d0] sm:$0xff]
  %v3083 = vld [vmem:[%s7 + $0x2d8] sm:$0xff]
  %v3084 = vld [vmem:[%s7 + $0x2e0] sm:$0xff]
  %v3085 = vld [vmem:[%s7 + $0x2e8] sm:$0xff]
  %v3086 = vld [vmem:[%s7 + $0x2f0] sm:$0xff]
  %v3087 = vld [vmem:[%s7 + $0x2f8] sm:$0xff]
  %v3088 = vld [vmem:[%s7 + $0x300] sm:$0xff]
  %v3089 = vld [vmem:[%s7 + $0x308] sm:$0xff]
  %v3090 = vld [vmem:[%s7 + $0x310] sm:$0xff]
  %v3091 = vld [vmem:[%s7 + $0x318] sm:$0xff]
  %v3092 = vld [vmem:[%s7 + $0x320] sm:$0xff]
  %v3093 = vld [vmem:[%s7 + $0x328] sm:$0xff]
  %v3094 = vld [vmem:[%s7 + $0x330] sm:$0xff]
  %v3095 = vld [vmem:[%s7 + $0x338] sm:$0xff]
  %v3096 = vld [vmem:[%s7 + $0x340] sm:$0xff]
  %v3097 = vld [vmem:[%s7 + $0x348] sm:$0xff]
  %v3098 = vld [vmem:[%s7 + $0x350] sm:$0xff]
  %v3099 = vld [vmem:[%s7 + $0x358] sm:$0xff]
  %v3100 = vld [vmem:[%s7 + $0x360] sm:$0xff]
  %v3101 = vld [vmem:[%s7 + $0x368] sm:$0xff]
  %v3102 = vld [vmem:[%s7 + $0x370] sm:$0xff]
  %v3103 = vld [vmem:[%s7 + $0x378] sm:$0xff]
  %v3104 = vld [vmem:[%s7 + $0x380] sm:$0xff]
  %v3105 = vld [vmem:[%s7 + $0x388] sm:$0xff]
  %v3106 = vld [vmem:[%s7 + $0x390] sm:$0xff]
  %v3107 = vld [vmem:[%s7 + $0x398] sm:$0xff]
  %v3108 = vld [vmem:[%s7 + $0x3a0] sm:$0xff]
  %v3109 = vld [vmem:[%s7 + $0x3a8] sm:$0xff]
  %v3110 = vld [vmem:[%s7 + $0x3b0] sm:$0xff]
  %v3111 = vld [vmem:[%s7 + $0x3b8] sm:$0xff]
  %v3112 = vld [vmem:[%s7 + $0x3c0] sm:$0xff]
  %v3113 = vld [vmem:[%s7 + $0x3c8] sm:$0xff]
  %v3114 = vld [vmem:[%s7 + $0x3d0] sm:$0xff]
  %v3115 = vld [vmem:[%s7 + $0x3d8] sm:$0xff]
  %v3116 = vld [vmem:[%s7 + $0x3e0] sm:$0xff]
  %v3117 = vld [vmem:[%s7 + $0x3e8] sm:$0xff]
  %v3118 = vld [vmem:[%s7 + $0x3f0] sm:$0xff]
  %v3119 = vld [vmem:[%s7 + $0x3f8] sm:$0xff]
  %v3120 = vld [vmem:[%s7 + $0x400] sm:$0xff]
  %v3121 = vld [vmem:[%s7 + $0x408] sm:$0xff]
  %v3122 = vld [vmem:[%s7 + $0x410] sm:$0xff]
  %v3123 = vld [vmem:[%s7 + $0x418] sm:$0xff]
  %v3124 = vld [vmem:[%s7 + $0x420] sm:$0xff]
  %v3125 = vld [vmem:[%s7 + $0x428] sm:$0xff]
  %v3126 = vld [vmem:[%s7 + $0x430] sm:$0xff]
  %v3127 = vld [vmem:[%s7 + $0x438] sm:$0xff]
  %v3128 = vld [vmem:[%s7 + $0x440] sm:$0xff]
  %v3129 = vld [vmem:[%s7 + $0x448] sm:$0xff]
  %v3130 = vld [vmem:[%s7 + $0x450] sm:$0xff]
  %v3131 = vld [vmem:[%s7 + $0x458] sm:$0xff]
  %v3132 = vld [vmem:[%s7 + $0x460] sm:$0xff]
  %v3133 = vld [vmem:[%s7 + $0x468] sm:$0xff]
  %v3134 = vld [vmem:[%s7 + $0x470] sm:$0xff]
  %v3135 = vld [vmem:[%s7 + $0x478] sm:$0xff]
  %v3136 = vld [vmem:[%s7 + $0x480] sm:$0xff]
  %v3137 = vld [vmem:[%s7 + $0x488] sm:$0xff]
  %v3138 = vld [vmem:[%s7 + $0x490] sm:$0xff]
  %v3139 = vld [vmem:[%s7 + $0x498] sm:$0xff]
  %v3140 = vld [vmem:[%s7 + $0x4a0] sm:$0xff]
  %v3141 = vld [vmem:[%s7 + $0x4a8] sm:$0xff]
  %v3142 = vld [vmem:[%s7 + $0x4b0] sm:$0xff]
  %v3143 = vld [vmem:[%s7 + $0x4b8] sm:$0xff]
  %v3144 = vld [vmem:[%s7 + $0x4c0] sm:$0xff]
  %v3145 = vld [vmem:[%s7 + $0x4c8] sm:$0xff]
  %v3146 = vld [vmem:[%s7 + $0x4d0] sm:$0xff]
  %v3147 = vld [vmem:[%s7 + $0x4d8] sm:$0xff]
  %v3148 = vld [vmem:[%s7 + $0x4e0] sm:$0xff]
  %v3149 = vld [vmem:[%s7 + $0x4e8] sm:$0xff]
  %v3150 = vld [vmem:[%s7 + $0x4f0] sm:$0xff]
  %v3151 = vld [vmem:[%s7 + $0x4f8] sm:$0xff]
  %v3152 = vld [vmem:[%s7 + $0x500] sm:$0xff]
  %v3153 = vld [vmem:[%s7 + $0x508] sm:$0xff]
  %v3154 = vld [vmem:[%s7 + $0x510] sm:$0xff]
  %v3155 = vld [vmem:[%s7 + $0x518] sm:$0xff]
  %v3156 = vld [vmem:[%s7 + $0x520] sm:$0xff]
  %v3157 = vld [vmem:[%s7 + $0x528] sm:$0xff]
  %v3158 = vld [vmem:[%s7 + $0x530] sm:$0xff]
  %v3159 = vld [vmem:[%s7 + $0x538] sm:$0xff]
  %v3160 = vld [vmem:[%s7 + $0x540] sm:$0xff]
  %v3161 = vld [vmem:[%s7 + $0x548] sm:$0xff]
  %v3162 = vld [vmem:[%s7 + $0x550] sm:$0xff]
  %v3163 = vld [vmem:[%s7 + $0x558] sm:$0xff]
  %v3164 = vld [vmem:[%s7 + $0x560] sm:$0xff]
  %v3165 = vld [vmem:[%s7 + $0x568] sm:$0xff]
  %v3166 = vld [vmem:[%s7 + $0x570] sm:$0xff]
  %v3167 = vld [vmem:[%s7 + $0x578] sm:$0xff]
  %v3168 = vld [vmem:[%s7 + $0x580] sm:$0xff]
  %v3169 = vld [vmem:[%s7 + $0x588] sm:$0xff]
  %v3170 = vld [vmem:[%s7 + $0x590] sm:$0xff]
  %v3171 = vld [vmem:[%s7 + $0x598] sm:$0xff]
  %v3172 = vld [vmem:[%s7 + $0x5a0] sm:$0xff]
  %v3173 = vld [vmem:[%s7 + $0x5a8] sm:$0xff]
  %v3174 = vld [vmem:[%s7 + $0x5b0] sm:$0xff]
  %v3175 = vld [vmem:[%s7 + $0x5b8] sm:$0xff]
  %v3176 = vld [vmem:[%s7 + $0x5c0] sm:$0xff]
  %v3177 = vld [vmem:[%s7 + $0x5c8] sm:$0xff]
  %v3178 = vld [vmem:[%s7 + $0x5d0] sm:$0xff]
  %v3179 = vld [vmem:[%s7 + $0x5d8] sm:$0xff]
  %v3180 = vld [vmem:[%s7 + $0x5e0] sm:$0xff]
  %v3181 = vld [vmem:[%s7 + $0x5e8] sm:$0xff]
  %v3182 = vld [vmem:[%s7 + $0x5f0] sm:$0xff]
  %v3183 = vld [vmem:[%s7 + $0x5f8] sm:$0xff]
  %v3184 = vld [vmem:[%s7 + $0x600] sm:$0xff]
  %v3185 = vld [vmem:[%s7 + $0x608] sm:$0xff]
  %v3186 = vld [vmem:[%s7 + $0x610] sm:$0xff]
  %v3187 = vld [vmem:[%s7 + $0x618] sm:$0xff]
  %v3188 = vld [vmem:[%s7 + $0x620] sm:$0xff]
  %v3189 = vld [vmem:[%s7 + $0x628] sm:$0xff]
  %v3190 = vld [vmem:[%s7 + $0x630] sm:$0xff]
  %v3191 = vld [vmem:[%s7 + $0x638] sm:$0xff]
  %v3192 = vld [vmem:[%s7 + $0x640] sm:$0xff]
  %v3193 = vld [vmem:[%s7 + $0x648] sm:$0xff]
  %v3194 = vld [vmem:[%s7 + $0x650] sm:$0xff]
  %v3195 = vld [vmem:[%s7 + $0x658] sm:$0xff]
  %v3196 = vld [vmem:[%s7 + $0x660] sm:$0xff]
  %v3197 = vld [vmem:[%s7 + $0x668] sm:$0xff]
  %v3198 = vld [vmem:[%s7 + $0x670] sm:$0xff]
  %v3199 = vld [vmem:[%s7 + $0x678] sm:$0xff]
  %v3200 = vld [vmem:[%s7 + $0x680] sm:$0xff]
  %v3201 = vld [vmem:[%s7 + $0x688] sm:$0xff]
  %v3202 = vld [vmem:[%s7 + $0x690] sm:$0xff]
  %v3203 = vld [vmem:[%s7 + $0x698] sm:$0xff]
  %v3204 = vld [vmem:[%s7 + $0x6a0] sm:$0xff]
  %v3205 = vld [vmem:[%s7 + $0x6a8] sm:$0xff]
  %v3206 = vld [vmem:[%s7 + $0x6b0] sm:$0xff]
  %v3207 = vld [vmem:[%s7 + $0x6b8] sm:$0xff]
  %v3208 = vld [vmem:[%s7 + $0x6c0] sm:$0xff]
  %v3209 = vld [vmem:[%s7 + $0x6c8] sm:$0xff]
  %v3210 = vld [vmem:[%s7 + $0x6d0] sm:$0xff]
  %v3211 = vld [vmem:[%s7 + $0x6d8] sm:$0xff]
  %v3212 = vld [vmem:[%s7 + $0x6e0] sm:$0xff]
  %v3213 = vld [vmem:[%s7 + $0x6e8] sm:$0xff]
  %v3214 = vld [vmem:[%s7 + $0x6f0] sm:$0xff]
  %v3215 = vld [vmem:[%s7 + $0x6f8] sm:$0xff]
  %v3216 = vld [vmem:[%s7 + $0x700] sm:$0xff]
  %v3217 = vld [vmem:[%s7 + $0x708] sm:$0xff]
  %v3218 = vld [vmem:[%s7 + $0x710] sm:$0xff]
  %v3219 = vld [vmem:[%s7 + $0x718] sm:$0xff]
  %v3220 = vld [vmem:[%s7 + $0x720] sm:$0xff]
  %v3221 = vld [vmem:[%s7 + $0x728] sm:$0xff]
  %v3222 = vld [vmem:[%s7 + $0x730] sm:$0xff]
  %v3223 = vld [vmem:[%s7 + $0x738] sm:$0xff]
  %v3224 = vld [vmem:[%s7 + $0x740] sm:$0xff]
  %v3225 = vld [vmem:[%s7 + $0x748] sm:$0xff]
  %v3226 = vld [vmem:[%s7 + $0x750] sm:$0xff]
  %v3227 = vld [vmem:[%s7 + $0x758] sm:$0xff]
  %v3228 = vld [vmem:[%s7 + $0x760] sm:$0xff]
  %v3229 = vld [vmem:[%s7 + $0x768] sm:$0xff]
  %v3230 = vld [vmem:[%s7 + $0x770] sm:$0xff]
  %v3231 = vld [vmem:[%s7 + $0x778] sm:$0xff]
  %v3232 = vld [vmem:[%s7 + $0x780] sm:$0xff]
  %v3233 = vld [vmem:[%s7 + $0x788] sm:$0xff]
  %v3234 = vld [vmem:[%s7 + $0x790] sm:$0xff]
  %v3235 = vld [vmem:[%s7 + $0x798] sm:$0xff]
  %v3236 = vld [vmem:[%s7 + $0x7a0] sm:$0xff]
  %v3237 = vld [vmem:[%s7 + $0x7a8] sm:$0xff]
  %v3238 = vld [vmem:[%s7 + $0x7b0] sm:$0xff]
  %v3239 = vld [vmem:[%s7 + $0x7b8] sm:$0xff]
  %v3240 = vld [vmem:[%s7 + $0x7c0] sm:$0xff]
  %v3241 = vld [vmem:[%s7 + $0x7c8] sm:$0xff]
  %v3242 = vld [vmem:[%s7 + $0x7d0] sm:$0xff]
  %v3243 = vld [vmem:[%s7 + $0x7d8] sm:$0xff]
  %v3244 = vld [vmem:[%s7 + $0x7e0] sm:$0xff]
  %v3245 = vld [vmem:[%s7 + $0x7e8] sm:$0xff]
  %v3246 = vld [vmem:[%s7 + $0x7f0] sm:$0xff]
  %v3247 = vld [vmem:[%s7 + $0x7f8] sm:$0xff]
  %v3248 = vld [vmem:[%s8] sm:$0xf]
  %v3250 = vlaneseq
  %v3251 = vshrl.u32 %v3250, 7
  %v3252 = vsub.s32 0, %v3251
  %v3253 = vrot.slane %v3248, %v3252
  %v3254 = vlaneseq
  %v3255 = vshrl.u32 %v3254, 7
  %v3256 = vsub.s32 1, %v3255
  %v3257 = vrot.slane %v3248, %v3256
  %v3258 = vlaneseq
  %v3259 = vshrl.u32 %v3258, 7
  %v3260 = vsub.s32 2, %v3259
  %v3261 = vrot.slane %v3248, %v3260
  %v3262 = vlaneseq
  %v3263 = vshrl.u32 %v3262, 7
  %v3264 = vsub.s32 3, %v3263
  %v3265 = vrot.slane %v3248, %v3264
  %v3526 = vunpack.c.l.b16 %v2992
  %v3527 = vunpack.c.h.b16 %v2992
  %v3528 = vunpack.c.l.b16 %v2993
  %v3529 = vunpack.c.h.b16 %v2993
  %v3530 = vunpack.c.l.b16 %v2994
  %v3531 = vunpack.c.h.b16 %v2994
  %v3532 = vunpack.c.l.b16 %v2995
  %v3533 = vunpack.c.h.b16 %v2995
  %v3534 = vunpack.c.l.b16 %v2996
  %v3535 = vunpack.c.h.b16 %v2996
  %v3536 = vunpack.c.l.b16 %v2997
  %v3537 = vunpack.c.h.b16 %v2997
  %v3538 = vunpack.c.l.b16 %v2998
  %v3539 = vunpack.c.h.b16 %v2998
  %v3540 = vunpack.c.l.b16 %v2999
  %v3541 = vunpack.c.h.b16 %v2999
  %v3542 = vunpack.c.l.b16 %v3000
  %v3543 = vunpack.c.h.b16 %v3000
  %v3544 = vunpack.c.l.b16 %v3001
  %v3545 = vunpack.c.h.b16 %v3001
  %v3546 = vunpack.c.l.b16 %v3002
  %v3547 = vunpack.c.h.b16 %v3002
  %v3548 = vunpack.c.l.b16 %v3003
  %v3549 = vunpack.c.h.b16 %v3003
  %v3550 = vunpack.c.l.b16 %v3004
  %v3551 = vunpack.c.h.b16 %v3004
  %v3552 = vunpack.c.l.b16 %v3005
  %v3553 = vunpack.c.h.b16 %v3005
  %v3554 = vunpack.c.l.b16 %v3006
  %v3555 = vunpack.c.h.b16 %v3006
  %v3556 = vunpack.c.l.b16 %v3007
  %v3557 = vunpack.c.h.b16 %v3007
  %v3558 = vunpack.c.l.b16 %v3008
  %v3559 = vunpack.c.h.b16 %v3008
  %v3560 = vunpack.c.l.b16 %v3009
  %v3561 = vunpack.c.h.b16 %v3009
  %v3562 = vunpack.c.l.b16 %v3010
  %v3563 = vunpack.c.h.b16 %v3010
  %v3564 = vunpack.c.l.b16 %v3011
  %v3565 = vunpack.c.h.b16 %v3011
  %v3566 = vunpack.c.l.b16 %v3012
  %v3567 = vunpack.c.h.b16 %v3012
  %v3568 = vunpack.c.l.b16 %v3013
  %v3569 = vunpack.c.h.b16 %v3013
  %v3570 = vunpack.c.l.b16 %v3014
  %v3571 = vunpack.c.h.b16 %v3014
  %v3572 = vunpack.c.l.b16 %v3015
  %v3573 = vunpack.c.h.b16 %v3015
  %v3574 = vunpack.c.l.b16 %v3016
  %v3575 = vunpack.c.h.b16 %v3016
  %v3576 = vunpack.c.l.b16 %v3017
  %v3577 = vunpack.c.h.b16 %v3017
  %v3578 = vunpack.c.l.b16 %v3018
  %v3579 = vunpack.c.h.b16 %v3018
  %v3580 = vunpack.c.l.b16 %v3019
  %v3581 = vunpack.c.h.b16 %v3019
  %v3582 = vunpack.c.l.b16 %v3020
  %v3583 = vunpack.c.h.b16 %v3020
  %v3584 = vunpack.c.l.b16 %v3021
  %v3585 = vunpack.c.h.b16 %v3021
  %v3586 = vunpack.c.l.b16 %v3022
  %v3587 = vunpack.c.h.b16 %v3022
  %v3588 = vunpack.c.l.b16 %v3023
  %v3589 = vunpack.c.h.b16 %v3023
  %v3590 = vunpack.c.l.b16 %v3024
  %v3591 = vunpack.c.h.b16 %v3024
  %v3592 = vunpack.c.l.b16 %v3025
  %v3593 = vunpack.c.h.b16 %v3025
  %v3594 = vunpack.c.l.b16 %v3026
  %v3595 = vunpack.c.h.b16 %v3026
  %v3596 = vunpack.c.l.b16 %v3027
  %v3597 = vunpack.c.h.b16 %v3027
  %v3598 = vunpack.c.l.b16 %v3028
  %v3599 = vunpack.c.h.b16 %v3028
  %v3600 = vunpack.c.l.b16 %v3029
  %v3601 = vunpack.c.h.b16 %v3029
  %v3602 = vunpack.c.l.b16 %v3030
  %v3603 = vunpack.c.h.b16 %v3030
  %v3604 = vunpack.c.l.b16 %v3031
  %v3605 = vunpack.c.h.b16 %v3031
  %v3606 = vunpack.c.l.b16 %v3032
  %v3607 = vunpack.c.h.b16 %v3032
  %v3608 = vunpack.c.l.b16 %v3033
  %v3609 = vunpack.c.h.b16 %v3033
  %v3610 = vunpack.c.l.b16 %v3034
  %v3611 = vunpack.c.h.b16 %v3034
  %v3612 = vunpack.c.l.b16 %v3035
  %v3613 = vunpack.c.h.b16 %v3035
  %v3614 = vunpack.c.l.b16 %v3036
  %v3615 = vunpack.c.h.b16 %v3036
  %v3616 = vunpack.c.l.b16 %v3037
  %v3617 = vunpack.c.h.b16 %v3037
  %v3618 = vunpack.c.l.b16 %v3038
  %v3619 = vunpack.c.h.b16 %v3038
  %v3620 = vunpack.c.l.b16 %v3039
  %v3621 = vunpack.c.h.b16 %v3039
  %v3622 = vunpack.c.l.b16 %v3040
  %v3623 = vunpack.c.h.b16 %v3040
  %v3624 = vunpack.c.l.b16 %v3041
  %v3625 = vunpack.c.h.b16 %v3041
  %v3626 = vunpack.c.l.b16 %v3042
  %v3627 = vunpack.c.h.b16 %v3042
  %v3628 = vunpack.c.l.b16 %v3043
  %v3629 = vunpack.c.h.b16 %v3043
  %v3630 = vunpack.c.l.b16 %v3044
  %v3631 = vunpack.c.h.b16 %v3044
  %v3632 = vunpack.c.l.b16 %v3045
  %v3633 = vunpack.c.h.b16 %v3045
  %v3634 = vunpack.c.l.b16 %v3046
  %v3635 = vunpack.c.h.b16 %v3046
  %v3636 = vunpack.c.l.b16 %v3047
  %v3637 = vunpack.c.h.b16 %v3047
  %v3638 = vunpack.c.l.b16 %v3048
  %v3639 = vunpack.c.h.b16 %v3048
  %v3640 = vunpack.c.l.b16 %v3049
  %v3641 = vunpack.c.h.b16 %v3049
  %v3642 = vunpack.c.l.b16 %v3050
  %v3643 = vunpack.c.h.b16 %v3050
  %v3644 = vunpack.c.l.b16 %v3051
  %v3645 = vunpack.c.h.b16 %v3051
  %v3646 = vunpack.c.l.b16 %v3052
  %v3647 = vunpack.c.h.b16 %v3052
  %v3648 = vunpack.c.l.b16 %v3053
  %v3649 = vunpack.c.h.b16 %v3053
  %v3650 = vunpack.c.l.b16 %v3054
  %v3651 = vunpack.c.h.b16 %v3054
  %v3652 = vunpack.c.l.b16 %v3055
  %v3653 = vunpack.c.h.b16 %v3055
  %v3654 = vunpack.c.l.b16 %v3056
  %v3655 = vunpack.c.h.b16 %v3056
  %v3656 = vunpack.c.l.b16 %v3057
  %v3657 = vunpack.c.h.b16 %v3057
  %v3658 = vunpack.c.l.b16 %v3058
  %v3659 = vunpack.c.h.b16 %v3058
  %v3660 = vunpack.c.l.b16 %v3059
  %v3661 = vunpack.c.h.b16 %v3059
  %v3662 = vunpack.c.l.b16 %v3060
  %v3663 = vunpack.c.h.b16 %v3060
  %v3664 = vunpack.c.l.b16 %v3061
  %v3665 = vunpack.c.h.b16 %v3061
  %v3666 = vunpack.c.l.b16 %v3062
  %v3667 = vunpack.c.h.b16 %v3062
  %v3668 = vunpack.c.l.b16 %v3063
  %v3669 = vunpack.c.h.b16 %v3063
  %v3670 = vunpack.c.l.b16 %v3064
  %v3671 = vunpack.c.h.b16 %v3064
  %v3672 = vunpack.c.l.b16 %v3065
  %v3673 = vunpack.c.h.b16 %v3065
  %v3674 = vunpack.c.l.b16 %v3066
  %v3675 = vunpack.c.h.b16 %v3066
  %v3676 = vunpack.c.l.b16 %v3067
  %v3677 = vunpack.c.h.b16 %v3067
  %v3678 = vunpack.c.l.b16 %v3068
  %v3679 = vunpack.c.h.b16 %v3068
  %v3680 = vunpack.c.l.b16 %v3069
  %v3681 = vunpack.c.h.b16 %v3069
  %v3682 = vunpack.c.l.b16 %v3070
  %v3683 = vunpack.c.h.b16 %v3070
  %v3684 = vunpack.c.l.b16 %v3071
  %v3685 = vunpack.c.h.b16 %v3071
  %v3686 = vunpack.c.l.b16 %v3072
  %v3687 = vunpack.c.h.b16 %v3072
  %v3688 = vunpack.c.l.b16 %v3073
  %v3689 = vunpack.c.h.b16 %v3073
  %v3690 = vunpack.c.l.b16 %v3074
  %v3691 = vunpack.c.h.b16 %v3074
  %v3692 = vunpack.c.l.b16 %v3075
  %v3693 = vunpack.c.h.b16 %v3075
  %v3694 = vunpack.c.l.b16 %v3076
  %v3695 = vunpack.c.h.b16 %v3076
  %v3696 = vunpack.c.l.b16 %v3077
  %v3697 = vunpack.c.h.b16 %v3077
  %v3698 = vunpack.c.l.b16 %v3078
  %v3699 = vunpack.c.h.b16 %v3078
  %v3700 = vunpack.c.l.b16 %v3079
  %v3701 = vunpack.c.h.b16 %v3079
  %v3702 = vunpack.c.l.b16 %v3080
  %v3703 = vunpack.c.h.b16 %v3080
  %v3704 = vunpack.c.l.b16 %v3081
  %v3705 = vunpack.c.h.b16 %v3081
  %v3706 = vunpack.c.l.b16 %v3082
  %v3707 = vunpack.c.h.b16 %v3082
  %v3708 = vunpack.c.l.b16 %v3083
  %v3709 = vunpack.c.h.b16 %v3083
  %v3710 = vunpack.c.l.b16 %v3084
  %v3711 = vunpack.c.h.b16 %v3084
  %v3712 = vunpack.c.l.b16 %v3085
  %v3713 = vunpack.c.h.b16 %v3085
  %v3714 = vunpack.c.l.b16 %v3086
  %v3715 = vunpack.c.h.b16 %v3086
  %v3716 = vunpack.c.l.b16 %v3087
  %v3717 = vunpack.c.h.b16 %v3087
  %v3718 = vunpack.c.l.b16 %v3088
  %v3719 = vunpack.c.h.b16 %v3088
  %v3720 = vunpack.c.l.b16 %v3089
  %v3721 = vunpack.c.h.b16 %v3089
  %v3722 = vunpack.c.l.b16 %v3090
  %v3723 = vunpack.c.h.b16 %v3090
  %v3724 = vunpack.c.l.b16 %v3091
  %v3725 = vunpack.c.h.b16 %v3091
  %v3726 = vunpack.c.l.b16 %v3092
  %v3727 = vunpack.c.h.b16 %v3092
  %v3728 = vunpack.c.l.b16 %v3093
  %v3729 = vunpack.c.h.b16 %v3093
  %v3730 = vunpack.c.l.b16 %v3094
  %v3731 = vunpack.c.h.b16 %v3094
  %v3732 = vunpack.c.l.b16 %v3095
  %v3733 = vunpack.c.h.b16 %v3095
  %v3734 = vunpack.c.l.b16 %v3096
  %v3735 = vunpack.c.h.b16 %v3096
  %v3736 = vunpack.c.l.b16 %v3097
  %v3737 = vunpack.c.h.b16 %v3097
  %v3738 = vunpack.c.l.b16 %v3098
  %v3739 = vunpack.c.h.b16 %v3098
  %v3740 = vunpack.c.l.b16 %v3099
  %v3741 = vunpack.c.h.b16 %v3099
  %v3742 = vunpack.c.l.b16 %v3100
  %v3743 = vunpack.c.h.b16 %v3100
  %v3744 = vunpack.c.l.b16 %v3101
  %v3745 = vunpack.c.h.b16 %v3101
  %v3746 = vunpack.c.l.b16 %v3102
  %v3747 = vunpack.c.h.b16 %v3102
  %v3748 = vunpack.c.l.b16 %v3103
  %v3749 = vunpack.c.h.b16 %v3103
  %v3750 = vunpack.c.l.b16 %v3104
  %v3751 = vunpack.c.h.b16 %v3104
  %v3752 = vunpack.c.l.b16 %v3105
  %v3753 = vunpack.c.h.b16 %v3105
  %v3754 = vunpack.c.l.b16 %v3106
  %v3755 = vunpack.c.h.b16 %v3106
  %v3756 = vunpack.c.l.b16 %v3107
  %v3757 = vunpack.c.h.b16 %v3107
  %v3758 = vunpack.c.l.b16 %v3108
  %v3759 = vunpack.c.h.b16 %v3108
  %v3760 = vunpack.c.l.b16 %v3109
  %v3761 = vunpack.c.h.b16 %v3109
  %v3762 = vunpack.c.l.b16 %v3110
  %v3763 = vunpack.c.h.b16 %v3110
  %v3764 = vunpack.c.l.b16 %v3111
  %v3765 = vunpack.c.h.b16 %v3111
  %v3766 = vunpack.c.l.b16 %v3112
  %v3767 = vunpack.c.h.b16 %v3112
  %v3768 = vunpack.c.l.b16 %v3113
  %v3769 = vunpack.c.h.b16 %v3113
  %v3770 = vunpack.c.l.b16 %v3114
  %v3771 = vunpack.c.h.b16 %v3114
  %v3772 = vunpack.c.l.b16 %v3115
  %v3773 = vunpack.c.h.b16 %v3115
  %v3774 = vunpack.c.l.b16 %v3116
  %v3775 = vunpack.c.h.b16 %v3116
  %v3776 = vunpack.c.l.b16 %v3117
  %v3777 = vunpack.c.h.b16 %v3117
  %v3778 = vunpack.c.l.b16 %v3118
  %v3779 = vunpack.c.h.b16 %v3118
  %v3780 = vunpack.c.l.b16 %v3119
  %v3781 = vunpack.c.h.b16 %v3119
  %v3782 = vunpack.c.l.b16 %v3120
  %v3783 = vunpack.c.h.b16 %v3120
  %v3784 = vunpack.c.l.b16 %v3121
  %v3785 = vunpack.c.h.b16 %v3121
  %v3786 = vunpack.c.l.b16 %v3122
  %v3787 = vunpack.c.h.b16 %v3122
  %v3788 = vunpack.c.l.b16 %v3123
  %v3789 = vunpack.c.h.b16 %v3123
  %v3790 = vunpack.c.l.b16 %v3124
  %v3791 = vunpack.c.h.b16 %v3124
  %v3792 = vunpack.c.l.b16 %v3125
  %v3793 = vunpack.c.h.b16 %v3125
  %v3794 = vunpack.c.l.b16 %v3126
  %v3795 = vunpack.c.h.b16 %v3126
  %v3796 = vunpack.c.l.b16 %v3127
  %v3797 = vunpack.c.h.b16 %v3127
  %v3798 = vunpack.c.l.b16 %v3128
  %v3799 = vunpack.c.h.b16 %v3128
  %v3800 = vunpack.c.l.b16 %v3129
  %v3801 = vunpack.c.h.b16 %v3129
  %v3802 = vunpack.c.l.b16 %v3130
  %v3803 = vunpack.c.h.b16 %v3130
  %v3804 = vunpack.c.l.b16 %v3131
  %v3805 = vunpack.c.h.b16 %v3131
  %v3806 = vunpack.c.l.b16 %v3132
  %v3807 = vunpack.c.h.b16 %v3132
  %v3808 = vunpack.c.l.b16 %v3133
  %v3809 = vunpack.c.h.b16 %v3133
  %v3810 = vunpack.c.l.b16 %v3134
  %v3811 = vunpack.c.h.b16 %v3134
  %v3812 = vunpack.c.l.b16 %v3135
  %v3813 = vunpack.c.h.b16 %v3135
  %v3814 = vunpack.c.l.b16 %v3136
  %v3815 = vunpack.c.h.b16 %v3136
  %v3816 = vunpack.c.l.b16 %v3137
  %v3817 = vunpack.c.h.b16 %v3137
  %v3818 = vunpack.c.l.b16 %v3138
  %v3819 = vunpack.c.h.b16 %v3138
  %v3820 = vunpack.c.l.b16 %v3139
  %v3821 = vunpack.c.h.b16 %v3139
  %v3822 = vunpack.c.l.b16 %v3140
  %v3823 = vunpack.c.h.b16 %v3140
  %v3824 = vunpack.c.l.b16 %v3141
  %v3825 = vunpack.c.h.b16 %v3141
  %v3826 = vunpack.c.l.b16 %v3142
  %v3827 = vunpack.c.h.b16 %v3142
  %v3828 = vunpack.c.l.b16 %v3143
  %v3829 = vunpack.c.h.b16 %v3143
  %v3830 = vunpack.c.l.b16 %v3144
  %v3831 = vunpack.c.h.b16 %v3144
  %v3832 = vunpack.c.l.b16 %v3145
  %v3833 = vunpack.c.h.b16 %v3145
  %v3834 = vunpack.c.l.b16 %v3146
  %v3835 = vunpack.c.h.b16 %v3146
  %v3836 = vunpack.c.l.b16 %v3147
  %v3837 = vunpack.c.h.b16 %v3147
  %v3838 = vunpack.c.l.b16 %v3148
  %v3839 = vunpack.c.h.b16 %v3148
  %v3840 = vunpack.c.l.b16 %v3149
  %v3841 = vunpack.c.h.b16 %v3149
  %v3842 = vunpack.c.l.b16 %v3150
  %v3843 = vunpack.c.h.b16 %v3150
  %v3844 = vunpack.c.l.b16 %v3151
  %v3845 = vunpack.c.h.b16 %v3151
  %v3846 = vunpack.c.l.b16 %v3152
  %v3847 = vunpack.c.h.b16 %v3152
  %v3848 = vunpack.c.l.b16 %v3153
  %v3849 = vunpack.c.h.b16 %v3153
  %v3850 = vunpack.c.l.b16 %v3154
  %v3851 = vunpack.c.h.b16 %v3154
  %v3852 = vunpack.c.l.b16 %v3155
  %v3853 = vunpack.c.h.b16 %v3155
  %v3854 = vunpack.c.l.b16 %v3156
  %v3855 = vunpack.c.h.b16 %v3156
  %v3856 = vunpack.c.l.b16 %v3157
  %v3857 = vunpack.c.h.b16 %v3157
  %v3858 = vunpack.c.l.b16 %v3158
  %v3859 = vunpack.c.h.b16 %v3158
  %v3860 = vunpack.c.l.b16 %v3159
  %v3861 = vunpack.c.h.b16 %v3159
  %v3862 = vunpack.c.l.b16 %v3160
  %v3863 = vunpack.c.h.b16 %v3160
  %v3864 = vunpack.c.l.b16 %v3161
  %v3865 = vunpack.c.h.b16 %v3161
  %v3866 = vunpack.c.l.b16 %v3162
  %v3867 = vunpack.c.h.b16 %v3162
  %v3868 = vunpack.c.l.b16 %v3163
  %v3869 = vunpack.c.h.b16 %v3163
  %v3870 = vunpack.c.l.b16 %v3164
  %v3871 = vunpack.c.h.b16 %v3164
  %v3872 = vunpack.c.l.b16 %v3165
  %v3873 = vunpack.c.h.b16 %v3165
  %v3874 = vunpack.c.l.b16 %v3166
  %v3875 = vunpack.c.h.b16 %v3166
  %v3876 = vunpack.c.l.b16 %v3167
  %v3877 = vunpack.c.h.b16 %v3167
  %v3878 = vunpack.c.l.b16 %v3168
  %v3879 = vunpack.c.h.b16 %v3168
  %v3880 = vunpack.c.l.b16 %v3169
  %v3881 = vunpack.c.h.b16 %v3169
  %v3882 = vunpack.c.l.b16 %v3170
  %v3883 = vunpack.c.h.b16 %v3170
  %v3884 = vunpack.c.l.b16 %v3171
  %v3885 = vunpack.c.h.b16 %v3171
  %v3886 = vunpack.c.l.b16 %v3172
  %v3887 = vunpack.c.h.b16 %v3172
  %v3888 = vunpack.c.l.b16 %v3173
  %v3889 = vunpack.c.h.b16 %v3173
  %v3890 = vunpack.c.l.b16 %v3174
  %v3891 = vunpack.c.h.b16 %v3174
  %v3892 = vunpack.c.l.b16 %v3175
  %v3893 = vunpack.c.h.b16 %v3175
  %v3894 = vunpack.c.l.b16 %v3176
  %v3895 = vunpack.c.h.b16 %v3176
  %v3896 = vunpack.c.l.b16 %v3177
  %v3897 = vunpack.c.h.b16 %v3177
  %v3898 = vunpack.c.l.b16 %v3178
  %v3899 = vunpack.c.h.b16 %v3178
  %v3900 = vunpack.c.l.b16 %v3179
  %v3901 = vunpack.c.h.b16 %v3179
  %v3902 = vunpack.c.l.b16 %v3180
  %v3903 = vunpack.c.h.b16 %v3180
  %v3904 = vunpack.c.l.b16 %v3181
  %v3905 = vunpack.c.h.b16 %v3181
  %v3906 = vunpack.c.l.b16 %v3182
  %v3907 = vunpack.c.h.b16 %v3182
  %v3908 = vunpack.c.l.b16 %v3183
  %v3909 = vunpack.c.h.b16 %v3183
  %v3910 = vunpack.c.l.b16 %v3184
  %v3911 = vunpack.c.h.b16 %v3184
  %v3912 = vunpack.c.l.b16 %v3185
  %v3913 = vunpack.c.h.b16 %v3185
  %v3914 = vunpack.c.l.b16 %v3186
  %v3915 = vunpack.c.h.b16 %v3186
  %v3916 = vunpack.c.l.b16 %v3187
  %v3917 = vunpack.c.h.b16 %v3187
  %v3918 = vunpack.c.l.b16 %v3188
  %v3919 = vunpack.c.h.b16 %v3188
  %v3920 = vunpack.c.l.b16 %v3189
  %v3921 = vunpack.c.h.b16 %v3189
  %v3922 = vunpack.c.l.b16 %v3190
  %v3923 = vunpack.c.h.b16 %v3190
  %v3924 = vunpack.c.l.b16 %v3191
  %v3925 = vunpack.c.h.b16 %v3191
  %v3926 = vunpack.c.l.b16 %v3192
  %v3927 = vunpack.c.h.b16 %v3192
  %v3928 = vunpack.c.l.b16 %v3193
  %v3929 = vunpack.c.h.b16 %v3193
  %v3930 = vunpack.c.l.b16 %v3194
  %v3931 = vunpack.c.h.b16 %v3194
  %v3932 = vunpack.c.l.b16 %v3195
  %v3933 = vunpack.c.h.b16 %v3195
  %v3934 = vunpack.c.l.b16 %v3196
  %v3935 = vunpack.c.h.b16 %v3196
  %v3936 = vunpack.c.l.b16 %v3197
  %v3937 = vunpack.c.h.b16 %v3197
  %v3938 = vunpack.c.l.b16 %v3198
  %v3939 = vunpack.c.h.b16 %v3198
  %v3940 = vunpack.c.l.b16 %v3199
  %v3941 = vunpack.c.h.b16 %v3199
  %v3942 = vunpack.c.l.b16 %v3200
  %v3943 = vunpack.c.h.b16 %v3200
  %v3944 = vunpack.c.l.b16 %v3201
  %v3945 = vunpack.c.h.b16 %v3201
  %v3946 = vunpack.c.l.b16 %v3202
  %v3947 = vunpack.c.h.b16 %v3202
  %v3948 = vunpack.c.l.b16 %v3203
  %v3949 = vunpack.c.h.b16 %v3203
  %v3950 = vunpack.c.l.b16 %v3204
  %v3951 = vunpack.c.h.b16 %v3204
  %v3952 = vunpack.c.l.b16 %v3205
  %v3953 = vunpack.c.h.b16 %v3205
  %v3954 = vunpack.c.l.b16 %v3206
  %v3955 = vunpack.c.h.b16 %v3206
  %v3956 = vunpack.c.l.b16 %v3207
  %v3957 = vunpack.c.h.b16 %v3207
  %v3958 = vunpack.c.l.b16 %v3208
  %v3959 = vunpack.c.h.b16 %v3208
  %v3960 = vunpack.c.l.b16 %v3209
  %v3961 = vunpack.c.h.b16 %v3209
  %v3962 = vunpack.c.l.b16 %v3210
  %v3963 = vunpack.c.h.b16 %v3210
  %v3964 = vunpack.c.l.b16 %v3211
  %v3965 = vunpack.c.h.b16 %v3211
  %v3966 = vunpack.c.l.b16 %v3212
  %v3967 = vunpack.c.h.b16 %v3212
  %v3968 = vunpack.c.l.b16 %v3213
  %v3969 = vunpack.c.h.b16 %v3213
  %v3970 = vunpack.c.l.b16 %v3214
  %v3971 = vunpack.c.h.b16 %v3214
  %v3972 = vunpack.c.l.b16 %v3215
  %v3973 = vunpack.c.h.b16 %v3215
  %v3974 = vunpack.c.l.b16 %v3216
  %v3975 = vunpack.c.h.b16 %v3216
  %v3976 = vunpack.c.l.b16 %v3217
  %v3977 = vunpack.c.h.b16 %v3217
  %v3978 = vunpack.c.l.b16 %v3218
  %v3979 = vunpack.c.h.b16 %v3218
  %v3980 = vunpack.c.l.b16 %v3219
  %v3981 = vunpack.c.h.b16 %v3219
  %v3982 = vunpack.c.l.b16 %v3220
  %v3983 = vunpack.c.h.b16 %v3220
  %v3984 = vunpack.c.l.b16 %v3221
  %v3985 = vunpack.c.h.b16 %v3221
  %v3986 = vunpack.c.l.b16 %v3222
  %v3987 = vunpack.c.h.b16 %v3222
  %v3988 = vunpack.c.l.b16 %v3223
  %v3989 = vunpack.c.h.b16 %v3223
  %v3990 = vunpack.c.l.b16 %v3224
  %v3991 = vunpack.c.h.b16 %v3224
  %v3992 = vunpack.c.l.b16 %v3225
  %v3993 = vunpack.c.h.b16 %v3225
  %v3994 = vunpack.c.l.b16 %v3226
  %v3995 = vunpack.c.h.b16 %v3226
  %v3996 = vunpack.c.l.b16 %v3227
  %v3997 = vunpack.c.h.b16 %v3227
  %v3998 = vunpack.c.l.b16 %v3228
  %v3999 = vunpack.c.h.b16 %v3228
  %v4000 = vunpack.c.l.b16 %v3229
  %v4001 = vunpack.c.h.b16 %v3229
  %v4002 = vunpack.c.l.b16 %v3230
  %v4003 = vunpack.c.h.b16 %v3230
  %v4004 = vunpack.c.l.b16 %v3231
  %v4005 = vunpack.c.h.b16 %v3231
  %v4006 = vunpack.c.l.b16 %v3232
  %v4007 = vunpack.c.h.b16 %v3232
  %v4008 = vunpack.c.l.b16 %v3233
  %v4009 = vunpack.c.h.b16 %v3233
  %v4010 = vunpack.c.l.b16 %v3234
  %v4011 = vunpack.c.h.b16 %v3234
  %v4012 = vunpack.c.l.b16 %v3235
  %v4013 = vunpack.c.h.b16 %v3235
  %v4014 = vunpack.c.l.b16 %v3236
  %v4015 = vunpack.c.h.b16 %v3236
  %v4016 = vunpack.c.l.b16 %v3237
  %v4017 = vunpack.c.h.b16 %v3237
  %v4018 = vunpack.c.l.b16 %v3238
  %v4019 = vunpack.c.h.b16 %v3238
  %v4020 = vunpack.c.l.b16 %v3239
  %v4021 = vunpack.c.h.b16 %v3239
  %v4022 = vunpack.c.l.b16 %v3240
  %v4023 = vunpack.c.h.b16 %v3240
  %v4024 = vunpack.c.l.b16 %v3241
  %v4025 = vunpack.c.h.b16 %v3241
  %v4026 = vunpack.c.l.b16 %v3242
  %v4027 = vunpack.c.h.b16 %v3242
  %v4028 = vunpack.c.l.b16 %v3243
  %v4029 = vunpack.c.h.b16 %v3243
  %v4030 = vunpack.c.l.b16 %v3244
  %v4031 = vunpack.c.h.b16 %v3244
  %v4032 = vunpack.c.l.b16 %v3245
  %v4033 = vunpack.c.h.b16 %v3245
  %v4034 = vunpack.c.l.b16 %v3246
  %v4035 = vunpack.c.h.b16 %v3246
  %v4036 = vunpack.c.l.b16 %v3247
  %v4037 = vunpack.c.h.b16 %v3247
  %v4038 = vpack.c.b16 %v3530, %v3526
  %v4039 = vpack.c.b16 %v3531, %v3527
  %v4040 = vpack.c.b16 %v3532, %v3528
  %v4041 = vpack.c.b16 %v3533, %v3529
  %v4042 = vpack.c.b16 %v3538, %v3534
  %v4043 = vpack.c.b16 %v3539, %v3535
  %v4044 = vpack.c.b16 %v3540, %v3536
  %v4045 = vpack.c.b16 %v3541, %v3537
  %v4046 = vpack.c.b16 %v3546, %v3542
  %v4047 = vpack.c.b16 %v3547, %v3543
  %v4048 = vpack.c.b16 %v3548, %v3544
  %v4049 = vpack.c.b16 %v3549, %v3545
  %v4050 = vpack.c.b16 %v3554, %v3550
  %v4051 = vpack.c.b16 %v3555, %v3551
  %v4052 = vpack.c.b16 %v3556, %v3552
  %v4053 = vpack.c.b16 %v3557, %v3553
  %v4054 = vpack.c.b16 %v3562, %v3558
  %v4055 = vpack.c.b16 %v3563, %v3559
  %v4056 = vpack.c.b16 %v3564, %v3560
  %v4057 = vpack.c.b16 %v3565, %v3561
  %v4058 = vpack.c.b16 %v3570, %v3566
  %v4059 = vpack.c.b16 %v3571, %v3567
  %v4060 = vpack.c.b16 %v3572, %v3568
  %v4061 = vpack.c.b16 %v3573, %v3569
  %v4062 = vpack.c.b16 %v3578, %v3574
  %v4063 = vpack.c.b16 %v3579, %v3575
  %v4064 = vpack.c.b16 %v3580, %v3576
  %v4065 = vpack.c.b16 %v3581, %v3577
  %v4066 = vpack.c.b16 %v3586, %v3582
  %v4067 = vpack.c.b16 %v3587, %v3583
  %v4068 = vpack.c.b16 %v3588, %v3584
  %v4069 = vpack.c.b16 %v3589, %v3585
  %v4070 = vpack.c.b16 %v3594, %v3590
  %v4071 = vpack.c.b16 %v3595, %v3591
  %v4072 = vpack.c.b16 %v3596, %v3592
  %v4073 = vpack.c.b16 %v3597, %v3593
  %v4074 = vpack.c.b16 %v3602, %v3598
  %v4075 = vpack.c.b16 %v3603, %v3599
  %v4076 = vpack.c.b16 %v3604, %v3600
  %v4077 = vpack.c.b16 %v3605, %v3601
  %v4078 = vpack.c.b16 %v3610, %v3606
  %v4079 = vpack.c.b16 %v3611, %v3607
  %v4080 = vpack.c.b16 %v3612, %v3608
  %v4081 = vpack.c.b16 %v3613, %v3609
  %v4082 = vpack.c.b16 %v3618, %v3614
  %v4083 = vpack.c.b16 %v3619, %v3615
  %v4084 = vpack.c.b16 %v3620, %v3616
  %v4085 = vpack.c.b16 %v3621, %v3617
  %v4086 = vpack.c.b16 %v3626, %v3622
  %v4087 = vpack.c.b16 %v3627, %v3623
  %v4088 = vpack.c.b16 %v3628, %v3624
  %v4089 = vpack.c.b16 %v3629, %v3625
  %v4090 = vpack.c.b16 %v3634, %v3630
  %v4091 = vpack.c.b16 %v3635, %v3631
  %v4092 = vpack.c.b16 %v3636, %v3632
  %v4093 = vpack.c.b16 %v3637, %v3633
  %v4094 = vpack.c.b16 %v3642, %v3638
  %v4095 = vpack.c.b16 %v3643, %v3639
  %v4096 = vpack.c.b16 %v3644, %v3640
  %v4097 = vpack.c.b16 %v3645, %v3641
  %v4098 = vpack.c.b16 %v3650, %v3646
  %v4099 = vpack.c.b16 %v3651, %v3647
  %v4100 = vpack.c.b16 %v3652, %v3648
  %v4101 = vpack.c.b16 %v3653, %v3649
  %v4102 = vpack.c.b16 %v3658, %v3654
  %v4103 = vpack.c.b16 %v3659, %v3655
  %v4104 = vpack.c.b16 %v3660, %v3656
  %v4105 = vpack.c.b16 %v3661, %v3657
  %v4106 = vpack.c.b16 %v3666, %v3662
  %v4107 = vpack.c.b16 %v3667, %v3663
  %v4108 = vpack.c.b16 %v3668, %v3664
  %v4109 = vpack.c.b16 %v3669, %v3665
  %v4110 = vpack.c.b16 %v3674, %v3670
  %v4111 = vpack.c.b16 %v3675, %v3671
  %v4112 = vpack.c.b16 %v3676, %v3672
  %v4113 = vpack.c.b16 %v3677, %v3673
  %v4114 = vpack.c.b16 %v3682, %v3678
  %v4115 = vpack.c.b16 %v3683, %v3679
  %v4116 = vpack.c.b16 %v3684, %v3680
  %v4117 = vpack.c.b16 %v3685, %v3681
  %v4118 = vpack.c.b16 %v3690, %v3686
  %v4119 = vpack.c.b16 %v3691, %v3687
  %v4120 = vpack.c.b16 %v3692, %v3688
  %v4121 = vpack.c.b16 %v3693, %v3689
  %v4122 = vpack.c.b16 %v3698, %v3694
  %v4123 = vpack.c.b16 %v3699, %v3695
  %v4124 = vpack.c.b16 %v3700, %v3696
  %v4125 = vpack.c.b16 %v3701, %v3697
  %v4126 = vpack.c.b16 %v3706, %v3702
  %v4127 = vpack.c.b16 %v3707, %v3703
  %v4128 = vpack.c.b16 %v3708, %v3704
  %v4129 = vpack.c.b16 %v3709, %v3705
  %v4130 = vpack.c.b16 %v3714, %v3710
  %v4131 = vpack.c.b16 %v3715, %v3711
  %v4132 = vpack.c.b16 %v3716, %v3712
  %v4133 = vpack.c.b16 %v3717, %v3713
  %v4134 = vpack.c.b16 %v3722, %v3718
  %v4135 = vpack.c.b16 %v3723, %v3719
  %v4136 = vpack.c.b16 %v3724, %v3720
  %v4137 = vpack.c.b16 %v3725, %v3721
  %v4138 = vpack.c.b16 %v3730, %v3726
  %v4139 = vpack.c.b16 %v3731, %v3727
  %v4140 = vpack.c.b16 %v3732, %v3728
  %v4141 = vpack.c.b16 %v3733, %v3729
  %v4142 = vpack.c.b16 %v3738, %v3734
  %v4143 = vpack.c.b16 %v3739, %v3735
  %v4144 = vpack.c.b16 %v3740, %v3736
  %v4145 = vpack.c.b16 %v3741, %v3737
  %v4146 = vpack.c.b16 %v3746, %v3742
  %v4147 = vpack.c.b16 %v3747, %v3743
  %v4148 = vpack.c.b16 %v3748, %v3744
  %v4149 = vpack.c.b16 %v3749, %v3745
  %v4150 = vpack.c.b16 %v3754, %v3750
  %v4151 = vpack.c.b16 %v3755, %v3751
  %v4152 = vpack.c.b16 %v3756, %v3752
  %v4153 = vpack.c.b16 %v3757, %v3753
  %v4154 = vpack.c.b16 %v3762, %v3758
  %v4155 = vpack.c.b16 %v3763, %v3759
  %v4156 = vpack.c.b16 %v3764, %v3760
  %v4157 = vpack.c.b16 %v3765, %v3761
  %v4158 = vpack.c.b16 %v3770, %v3766
  %v4159 = vpack.c.b16 %v3771, %v3767
  %v4160 = vpack.c.b16 %v3772, %v3768
  %v4161 = vpack.c.b16 %v3773, %v3769
  %v4162 = vpack.c.b16 %v3778, %v3774
  %v4163 = vpack.c.b16 %v3779, %v3775
  %v4164 = vpack.c.b16 %v3780, %v3776
  %v4165 = vpack.c.b16 %v3781, %v3777
  %v4166 = vpack.c.b16 %v3786, %v3782
  %v4167 = vpack.c.b16 %v3787, %v3783
  %v4168 = vpack.c.b16 %v3788, %v3784
  %v4169 = vpack.c.b16 %v3789, %v3785
  %v4170 = vpack.c.b16 %v3794, %v3790
  %v4171 = vpack.c.b16 %v3795, %v3791
  %v4172 = vpack.c.b16 %v3796, %v3792
  %v4173 = vpack.c.b16 %v3797, %v3793
  %v4174 = vpack.c.b16 %v3802, %v3798
  %v4175 = vpack.c.b16 %v3803, %v3799
  %v4176 = vpack.c.b16 %v3804, %v3800
  %v4177 = vpack.c.b16 %v3805, %v3801
  %v4178 = vpack.c.b16 %v3810, %v3806
  %v4179 = vpack.c.b16 %v3811, %v3807
  %v4180 = vpack.c.b16 %v3812, %v3808
  %v4181 = vpack.c.b16 %v3813, %v3809
  %v4182 = vpack.c.b16 %v3818, %v3814
  %v4183 = vpack.c.b16 %v3819, %v3815
  %v4184 = vpack.c.b16 %v3820, %v3816
  %v4185 = vpack.c.b16 %v3821, %v3817
  %v4186 = vpack.c.b16 %v3826, %v3822
  %v4187 = vpack.c.b16 %v3827, %v3823
  %v4188 = vpack.c.b16 %v3828, %v3824
  %v4189 = vpack.c.b16 %v3829, %v3825
  %v4190 = vpack.c.b16 %v3834, %v3830
  %v4191 = vpack.c.b16 %v3835, %v3831
  %v4192 = vpack.c.b16 %v3836, %v3832
  %v4193 = vpack.c.b16 %v3837, %v3833
  %v4194 = vpack.c.b16 %v3842, %v3838
  %v4195 = vpack.c.b16 %v3843, %v3839
  %v4196 = vpack.c.b16 %v3844, %v3840
  %v4197 = vpack.c.b16 %v3845, %v3841
  %v4198 = vpack.c.b16 %v3850, %v3846
  %v4199 = vpack.c.b16 %v3851, %v3847
  %v4200 = vpack.c.b16 %v3852, %v3848
  %v4201 = vpack.c.b16 %v3853, %v3849
  %v4202 = vpack.c.b16 %v3858, %v3854
  %v4203 = vpack.c.b16 %v3859, %v3855
  %v4204 = vpack.c.b16 %v3860, %v3856
  %v4205 = vpack.c.b16 %v3861, %v3857
  %v4206 = vpack.c.b16 %v3866, %v3862
  %v4207 = vpack.c.b16 %v3867, %v3863
  %v4208 = vpack.c.b16 %v3868, %v3864
  %v4209 = vpack.c.b16 %v3869, %v3865
  %v4210 = vpack.c.b16 %v3874, %v3870
  %v4211 = vpack.c.b16 %v3875, %v3871
  %v4212 = vpack.c.b16 %v3876, %v3872
  %v4213 = vpack.c.b16 %v3877, %v3873
  %v4214 = vpack.c.b16 %v3882, %v3878
  %v4215 = vpack.c.b16 %v3883, %v3879
  %v4216 = vpack.c.b16 %v3884, %v3880
  %v4217 = vpack.c.b16 %v3885, %v3881
  %v4218 = vpack.c.b16 %v3890, %v3886
  %v4219 = vpack.c.b16 %v3891, %v3887
  %v4220 = vpack.c.b16 %v3892, %v3888
  %v4221 = vpack.c.b16 %v3893, %v3889
  %v4222 = vpack.c.b16 %v3898, %v3894
  %v4223 = vpack.c.b16 %v3899, %v3895
  %v4224 = vpack.c.b16 %v3900, %v3896
  %v4225 = vpack.c.b16 %v3901, %v3897
  %v4226 = vpack.c.b16 %v3906, %v3902
  %v4227 = vpack.c.b16 %v3907, %v3903
  %v4228 = vpack.c.b16 %v3908, %v3904
  %v4229 = vpack.c.b16 %v3909, %v3905
  %v4230 = vpack.c.b16 %v3914, %v3910
  %v4231 = vpack.c.b16 %v3915, %v3911
  %v4232 = vpack.c.b16 %v3916, %v3912
  %v4233 = vpack.c.b16 %v3917, %v3913
  %v4234 = vpack.c.b16 %v3922, %v3918
  %v4235 = vpack.c.b16 %v3923, %v3919
  %v4236 = vpack.c.b16 %v3924, %v3920
  %v4237 = vpack.c.b16 %v3925, %v3921
  %v4238 = vpack.c.b16 %v3930, %v3926
  %v4239 = vpack.c.b16 %v3931, %v3927
  %v4240 = vpack.c.b16 %v3932, %v3928
  %v4241 = vpack.c.b16 %v3933, %v3929
  %v4242 = vpack.c.b16 %v3938, %v3934
  %v4243 = vpack.c.b16 %v3939, %v3935
  %v4244 = vpack.c.b16 %v3940, %v3936
  %v4245 = vpack.c.b16 %v3941, %v3937
  %v4246 = vpack.c.b16 %v3946, %v3942
  %v4247 = vpack.c.b16 %v3947, %v3943
  %v4248 = vpack.c.b16 %v3948, %v3944
  %v4249 = vpack.c.b16 %v3949, %v3945
  %v4250 = vpack.c.b16 %v3954, %v3950
  %v4251 = vpack.c.b16 %v3955, %v3951
  %v4252 = vpack.c.b16 %v3956, %v3952
  %v4253 = vpack.c.b16 %v3957, %v3953
  %v4254 = vpack.c.b16 %v3962, %v3958
  %v4255 = vpack.c.b16 %v3963, %v3959
  %v4256 = vpack.c.b16 %v3964, %v3960
  %v4257 = vpack.c.b16 %v3965, %v3961
  %v4258 = vpack.c.b16 %v3970, %v3966
  %v4259 = vpack.c.b16 %v3971, %v3967
  %v4260 = vpack.c.b16 %v3972, %v3968
  %v4261 = vpack.c.b16 %v3973, %v3969
  %v4262 = vpack.c.b16 %v3978, %v3974
  %v4263 = vpack.c.b16 %v3979, %v3975
  %v4264 = vpack.c.b16 %v3980, %v3976
  %v4265 = vpack.c.b16 %v3981, %v3977
  %v4266 = vpack.c.b16 %v3986, %v3982
  %v4267 = vpack.c.b16 %v3987, %v3983
  %v4268 = vpack.c.b16 %v3988, %v3984
  %v4269 = vpack.c.b16 %v3989, %v3985
  %v4270 = vpack.c.b16 %v3994, %v3990
  %v4271 = vpack.c.b16 %v3995, %v3991
  %v4272 = vpack.c.b16 %v3996, %v3992
  %v4273 = vpack.c.b16 %v3997, %v3993
  %v4274 = vpack.c.b16 %v4002, %v3998
  %v4275 = vpack.c.b16 %v4003, %v3999
  %v4276 = vpack.c.b16 %v4004, %v4000
  %v4277 = vpack.c.b16 %v4005, %v4001
  %v4278 = vpack.c.b16 %v4010, %v4006
  %v4279 = vpack.c.b16 %v4011, %v4007
  %v4280 = vpack.c.b16 %v4012, %v4008
  %v4281 = vpack.c.b16 %v4013, %v4009
  %v4282 = vpack.c.b16 %v4018, %v4014
  %v4283 = vpack.c.b16 %v4019, %v4015
  %v4284 = vpack.c.b16 %v4020, %v4016
  %v4285 = vpack.c.b16 %v4021, %v4017
  %v4286 = vpack.c.b16 %v4026, %v4022
  %v4287 = vpack.c.b16 %v4027, %v4023
  %v4288 = vpack.c.b16 %v4028, %v4024
  %v4289 = vpack.c.b16 %v4029, %v4025
  %v4290 = vpack.c.b16 %v4034, %v4030
  %v4291 = vpack.c.b16 %v4035, %v4031
  %v4292 = vpack.c.b16 %v4036, %v4032
  %v4293 = vpack.c.b16 %v4037, %v4033
  %4550 = vmatprep.subr.bf16.mxu0 %v4067
  %4551 = vmatpush1.bf16.msra.mxu0 %v4066
  %4552 = vmatprep.subr.bf16.mxu0 %v4063
  %4553 = vmatpush1.bf16.msra.mxu0 %v4062
  %4554 = vmatprep.subr.bf16.mxu0 %v4059
  %4555 = vmatpush1.bf16.msra.mxu0 %v4058
  %4556 = vmatprep.subr.bf16.mxu0 %v4055
  %4557 = vmatpush1.bf16.msra.mxu0 %v4054
  %4558 = vmatprep.subr.bf16.mxu0 %v4051
  %4559 = vmatpush1.bf16.msra.mxu0 %v4050
  %4560 = vmatprep.subr.bf16.mxu0 %v4047
  %4561 = vmatpush1.bf16.msra.mxu0 %v4046
  %4562 = vmatprep.subr.bf16.mxu0 %v4043
  %4563 = vmatpush1.bf16.msra.mxu0 %v4042
  %4564 = vmatprep.subr.bf16.mxu0 %v4039
  %4565 = vmatpush1.bf16.msra.mxu0 %v4038
  %4566 = vmatprep.subr.bf16.mxu0 %v4099
  %4567 = vmatpush2.bf16.msra.mxu0 %v4098
  %4568 = vmatprep.subr.bf16.mxu0 %v4095
  %4569 = vmatpush2.bf16.msra.mxu0 %v4094
  %4570 = vmatprep.subr.bf16.mxu0 %v4091
  %4571 = vmatpush2.bf16.msra.mxu0 %v4090
  %4572 = vmatprep.subr.bf16.mxu0 %v4087
  %4573 = vmatpush2.bf16.msra.mxu0 %v4086
  %4574 = vmatprep.subr.bf16.mxu0 %v4083
  %4575 = vmatpush2.bf16.msra.mxu0 %v4082
  %4576 = vmatprep.subr.bf16.mxu0 %v4079
  %4577 = vmatpush2.bf16.msra.mxu0 %v4078
  %4578 = vmatprep.subr.bf16.mxu0 %v4075
  %4579 = vmatpush2.bf16.msra.mxu0 %v4074
  %4580 = vmatprep.subr.bf16.mxu0 %v4071
  %4581 = vmatpush2.bf16.msra.mxu0 %v4070
  %4582 = vmatprep.mubr.bf16.mxu0 %v2985
  %4583 = vmatmul.mubr.bf16.gmra.mxu0 %v2984
  %v4584 = vpop.f32.mrf.mxu0
  %v4585 = vadd.f32 %v3253, %v4584
  %v4586 = vpop.f32.mrf.mxu0
  %v4587 = vadd.f32 %v3257, %v4586
  %v4588 = vpop.f32.mrf.mxu0
  %v4589 = vpop.f32.mrf.mxu0
  %4590 = vdwg.mxu0
  %4591 = vmatprep.subr.bf16.mxu0 %v4131
  %4592 = vmatpush1.bf16.msra.mxu0 %v4130
  %4593 = vmatprep.subr.bf16.mxu0 %v4127
  %4594 = vmatpush1.bf16.msra.mxu0 %v4126
  %4595 = vmatprep.subr.bf16.mxu0 %v4123
  %4596 = vmatpush1.bf16.msra.mxu0 %v4122
  %4597 = vmatprep.subr.bf16.mxu0 %v4119
  %4598 = vmatpush1.bf16.msra.mxu0 %v4118
  %4599 = vmatprep.subr.bf16.mxu0 %v4115
  %4600 = vmatpush1.bf16.msra.mxu0 %v4114
  %4601 = vmatprep.subr.bf16.mxu0 %v4111
  %4602 = vmatpush1.bf16.msra.mxu0 %v4110
  %4603 = vmatprep.subr.bf16.mxu0 %v4107
  %4604 = vmatpush1.bf16.msra.mxu0 %v4106
  %4605 = vmatprep.subr.bf16.mxu0 %v4103
  %4606 = vmatpush1.bf16.msra.mxu0 %v4102
  %4607 = vmatprep.subr.bf16.mxu0 %v4163
  %4608 = vmatpush2.bf16.msra.mxu0 %v4162
  %4609 = vmatprep.subr.bf16.mxu0 %v4159
  %4610 = vmatpush2.bf16.msra.mxu0 %v4158
  %4611 = vmatprep.subr.bf16.mxu0 %v4155
  %4612 = vmatpush2.bf16.msra.mxu0 %v4154
  %4613 = vmatprep.subr.bf16.mxu0 %v4151
  %4614 = vmatpush2.bf16.msra.mxu0 %v4150
  %4615 = vmatprep.subr.bf16.mxu0 %v4147
  %4616 = vmatpush2.bf16.msra.mxu0 %v4146
  %4617 = vmatprep.subr.bf16.mxu0 %v4143
  %4618 = vmatpush2.bf16.msra.mxu0 %v4142
  %4619 = vmatprep.subr.bf16.mxu0 %v4139
  %4620 = vmatpush2.bf16.msra.mxu0 %v4138
  %4621 = vmatprep.subr.bf16.mxu0 %v4135
  %4622 = vmatpush2.bf16.msra.mxu0 %v4134
  %4623 = vmatprep.mubr.bf16.mxu0 %v2987
  %4624 = vmatmul.mubr.bf16.gmra.mxu0 %v2986
  %v4625 = vpop.f32.mrf.mxu0
  %v4626 = vadd.f32 %v4585, %v4625
  %v4627 = vpop.f32.mrf.mxu0
  %v4628 = vadd.f32 %v4587, %v4627
  %v4629 = vpop.f32.mrf.mxu0
  %v4630 = vpop.f32.mrf.mxu0
  %4631 = vdwg.mxu0
  %4632 = vmatprep.subr.bf16.mxu0 %v4195
  %4633 = vmatpush1.bf16.msra.mxu0 %v4194
  %4634 = vmatprep.subr.bf16.mxu0 %v4191
  %4635 = vmatpush1.bf16.msra.mxu0 %v4190
  %4636 = vmatprep.subr.bf16.mxu0 %v4187
  %4637 = vmatpush1.bf16.msra.mxu0 %v4186
  %4638 = vmatprep.subr.bf16.mxu0 %v4183
  %4639 = vmatpush1.bf16.msra.mxu0 %v4182
  %4640 = vmatprep.subr.bf16.mxu0 %v4179
  %4641 = vmatpush1.bf16.msra.mxu0 %v4178
  %4642 = vmatprep.subr.bf16.mxu0 %v4175
  %4643 = vmatpush1.bf16.msra.mxu0 %v4174
  %4644 = vmatprep.subr.bf16.mxu0 %v4171
  %4645 = vmatpush1.bf16.msra.mxu0 %v4170
  %4646 = vmatprep.subr.bf16.mxu0 %v4167
  %4647 = vmatpush1.bf16.msra.mxu0 %v4166
  %4648 = vmatprep.subr.bf16.mxu0 %v4227
  %4649 = vmatpush2.bf16.msra.mxu0 %v4226
  %4650 = vmatprep.subr.bf16.mxu0 %v4223
  %4651 = vmatpush2.bf16.msra.mxu0 %v4222
  %4652 = vmatprep.subr.bf16.mxu0 %v4219
  %4653 = vmatpush2.bf16.msra.mxu0 %v4218
  %4654 = vmatprep.subr.bf16.mxu0 %v4215
  %4655 = vmatpush2.bf16.msra.mxu0 %v4214
  %4656 = vmatprep.subr.bf16.mxu0 %v4211
  %4657 = vmatpush2.bf16.msra.mxu0 %v4210
  %4658 = vmatprep.subr.bf16.mxu0 %v4207
  %4659 = vmatpush2.bf16.msra.mxu0 %v4206
  %4660 = vmatprep.subr.bf16.mxu0 %v4203
  %4661 = vmatpush2.bf16.msra.mxu0 %v4202
  %4662 = vmatprep.subr.bf16.mxu0 %v4199
  %4663 = vmatpush2.bf16.msra.mxu0 %v4198
  %4664 = vmatprep.mubr.bf16.mxu0 %v2989
  %4665 = vmatmul.mubr.bf16.gmra.mxu0 %v2988
  %v4666 = vpop.f32.mrf.mxu0
  %v4667 = vadd.f32 %v4626, %v4666
  %v4668 = vpop.f32.mrf.mxu0
  %v4669 = vadd.f32 %v4628, %v4668
  %v4670 = vpop.f32.mrf.mxu0
  %v4671 = vpop.f32.mrf.mxu0
  %4672 = vdwg.mxu0
  %4673 = vmatprep.subr.bf16.mxu0 %v4259
  %4674 = vmatpush1.bf16.msra.mxu0 %v4258
  %4675 = vmatprep.subr.bf16.mxu0 %v4255
  %4676 = vmatpush1.bf16.msra.mxu0 %v4254
  %4677 = vmatprep.subr.bf16.mxu0 %v4251
  %4678 = vmatpush1.bf16.msra.mxu0 %v4250
  %4679 = vmatprep.subr.bf16.mxu0 %v4247
  %4680 = vmatpush1.bf16.msra.mxu0 %v4246
  %4681 = vmatprep.subr.bf16.mxu0 %v4243
  %4682 = vmatpush1.bf16.msra.mxu0 %v4242
  %4683 = vmatprep.subr.bf16.mxu0 %v4239
  %4684 = vmatpush1.bf16.msra.mxu0 %v4238
  %4685 = vmatprep.subr.bf16.mxu0 %v4235
  %4686 = vmatpush1.bf16.msra.mxu0 %v4234
  %4687 = vmatprep.subr.bf16.mxu0 %v4231
  %4688 = vmatpush1.bf16.msra.mxu0 %v4230
  %4689 = vmatprep.subr.bf16.mxu0 %v4291
  %4690 = vmatpush2.bf16.msra.mxu0 %v4290
  %4691 = vmatprep.subr.bf16.mxu0 %v4287
  %4692 = vmatpush2.bf16.msra.mxu0 %v4286
  %4693 = vmatprep.subr.bf16.mxu0 %v4283
  %4694 = vmatpush2.bf16.msra.mxu0 %v4282
  %4695 = vmatprep.subr.bf16.mxu0 %v4279
  %4696 = vmatpush2.bf16.msra.mxu0 %v4278
  %4697 = vmatprep.subr.bf16.mxu0 %v4275
  %4698 = vmatpush2.bf16.msra.mxu0 %v4274
  %4699 = vmatprep.subr.bf16.mxu0 %v4271
  %4700 = vmatpush2.bf16.msra.mxu0 %v4270
  %4701 = vmatprep.subr.bf16.mxu0 %v4267
  %4702 = vmatpush2.bf16.msra.mxu0 %v4266
  %4703 = vmatprep.subr.bf16.mxu0 %v4263
  %4704 = vmatpush2.bf16.msra.mxu0 %v4262
  %4705 = vmatprep.mubr.bf16.mxu0 %v2991
  %4706 = vmatmul.mubr.bf16.gmra.mxu0 %v2990
  %v4707 = vpop.f32.mrf.mxu0
  %v4708 = vadd.f32 %v4667, %v4707
  %v4709 = vpop.f32.mrf.mxu0
  %v4710 = vadd.f32 %v4669, %v4709
  %v4711 = vpop.f32.mrf.mxu0
  %v4712 = vpop.f32.mrf.mxu0
  %4713 = vdwg.mxu0
  %4714 = vmatprep.subr.bf16.mxu0 %v4069
  %4715 = vmatpush1.bf16.msra.mxu0 %v4068
  %4716 = vmatprep.subr.bf16.mxu0 %v4065
  %4717 = vmatpush1.bf16.msra.mxu0 %v4064
  %4718 = vmatprep.subr.bf16.mxu0 %v4061
  %4719 = vmatpush1.bf16.msra.mxu0 %v4060
  %4720 = vmatprep.subr.bf16.mxu0 %v4057
  %4721 = vmatpush1.bf16.msra.mxu0 %v4056
  %4722 = vmatprep.subr.bf16.mxu0 %v4053
  %4723 = vmatpush1.bf16.msra.mxu0 %v4052
  %4724 = vmatprep.subr.bf16.mxu0 %v4049
  %4725 = vmatpush1.bf16.msra.mxu0 %v4048
  %4726 = vmatprep.subr.bf16.mxu0 %v4045
  %4727 = vmatpush1.bf16.msra.mxu0 %v4044
  %4728 = vmatprep.subr.bf16.mxu0 %v4041
  %4729 = vmatpush1.bf16.msra.mxu0 %v4040
  %4730 = vmatprep.subr.bf16.mxu0 %v4101
  %4731 = vmatpush2.bf16.msra.mxu0 %v4100
  %4732 = vmatprep.subr.bf16.mxu0 %v4097
  %4733 = vmatpush2.bf16.msra.mxu0 %v4096
  %4734 = vmatprep.subr.bf16.mxu0 %v4093
  %4735 = vmatpush2.bf16.msra.mxu0 %v4092
  %4736 = vmatprep.subr.bf16.mxu0 %v4089
  %4737 = vmatpush2.bf16.msra.mxu0 %v4088
  %4738 = vmatprep.subr.bf16.mxu0 %v4085
  %4739 = vmatpush2.bf16.msra.mxu0 %v4084
  %4740 = vmatprep.subr.bf16.mxu0 %v4081
  %4741 = vmatpush2.bf16.msra.mxu0 %v4080
  %4742 = vmatprep.subr.bf16.mxu0 %v4077
  %4743 = vmatpush2.bf16.msra.mxu0 %v4076
  %4744 = vmatprep.subr.bf16.mxu0 %v4073
  %4745 = vmatpush2.bf16.msra.mxu0 %v4072
  %4746 = vmatprep.mubr.bf16.mxu0 %v2985
  %4747 = vmatmul.mubr.bf16.gmra.mxu0 %v2984
  %v4748 = vpop.f32.mrf.mxu0
  %v4749 = vadd.f32 %v3261, %v4748
  %v4750 = vpop.f32.mrf.mxu0
  %v4751 = vadd.f32 %v3265, %v4750
  %v4752 = vpop.f32.mrf.mxu0
  %v4753 = vpop.f32.mrf.mxu0
  %4754 = vdwg.mxu0
  %4755 = vmatprep.subr.bf16.mxu0 %v4133
  %4756 = vmatpush1.bf16.msra.mxu0 %v4132
  %4757 = vmatprep.subr.bf16.mxu0 %v4129
  %4758 = vmatpush1.bf16.msra.mxu0 %v4128
  %4759 = vmatprep.subr.bf16.mxu0 %v4125
  %4760 = vmatpush1.bf16.msra.mxu0 %v4124
  %4761 = vmatprep.subr.bf16.mxu0 %v4121
  %4762 = vmatpush1.bf16.msra.mxu0 %v4120
  %4763 = vmatprep.subr.bf16.mxu0 %v4117
  %4764 = vmatpush1.bf16.msra.mxu0 %v4116
  %4765 = vmatprep.subr.bf16.mxu0 %v4113
  %4766 = vmatpush1.bf16.msra.mxu0 %v4112
  %4767 = vmatprep.subr.bf16.mxu0 %v4109
  %4768 = vmatpush1.bf16.msra.mxu0 %v4108
  %4769 = vmatprep.subr.bf16.mxu0 %v4105
  %4770 = vmatpush1.bf16.msra.mxu0 %v4104
  %4771 = vmatprep.subr.bf16.mxu0 %v4165
  %4772 = vmatpush2.bf16.msra.mxu0 %v4164
  %4773 = vmatprep.subr.bf16.mxu0 %v4161
  %4774 = vmatpush2.bf16.msra.mxu0 %v4160
  %4775 = vmatprep.subr.bf16.mxu0 %v4157
  %4776 = vmatpush2.bf16.msra.mxu0 %v4156
  %4777 = vmatprep.subr.bf16.mxu0 %v4153
  %4778 = vmatpush2.bf16.msra.mxu0 %v4152
  %4779 = vmatprep.subr.bf16.mxu0 %v4149
  %4780 = vmatpush2.bf16.msra.mxu0 %v4148
  %4781 = vmatprep.subr.bf16.mxu0 %v4145
  %4782 = vmatpush2.bf16.msra.mxu0 %v4144
  %4783 = vmatprep.subr.bf16.mxu0 %v4141
  %4784 = vmatpush2.bf16.msra.mxu0 %v4140
  %4785 = vmatprep.subr.bf16.mxu0 %v4137
  %4786 = vmatpush2.bf16.msra.mxu0 %v4136
  %4787 = vmatprep.mubr.bf16.mxu0 %v2987
  %4788 = vmatmul.mubr.bf16.gmra.mxu0 %v2986
  %v4789 = vpop.f32.mrf.mxu0
  %v4790 = vadd.f32 %v4749, %v4789
  %v4791 = vpop.f32.mrf.mxu0
  %v4792 = vadd.f32 %v4751, %v4791
  %v4793 = vpop.f32.mrf.mxu0
  %v4794 = vpop.f32.mrf.mxu0
  %4795 = vdwg.mxu0
  %4796 = vmatprep.subr.bf16.mxu0 %v4197
  %4797 = vmatpush1.bf16.msra.mxu0 %v4196
  %4798 = vmatprep.subr.bf16.mxu0 %v4193
  %4799 = vmatpush1.bf16.msra.mxu0 %v4192
  %4800 = vmatprep.subr.bf16.mxu0 %v4189
  %4801 = vmatpush1.bf16.msra.mxu0 %v4188
  %4802 = vmatprep.subr.bf16.mxu0 %v4185
  %4803 = vmatpush1.bf16.msra.mxu0 %v4184
  %4804 = vmatprep.subr.bf16.mxu0 %v4181
  %4805 = vmatpush1.bf16.msra.mxu0 %v4180
  %4806 = vmatprep.subr.bf16.mxu0 %v4177
  %4807 = vmatpush1.bf16.msra.mxu0 %v4176
  %4808 = vmatprep.subr.bf16.mxu0 %v4173
  %4809 = vmatpush1.bf16.msra.mxu0 %v4172
  %4810 = vmatprep.subr.bf16.mxu0 %v4169
  %4811 = vmatpush1.bf16.msra.mxu0 %v4168
  %4812 = vmatprep.subr.bf16.mxu0 %v4229
  %4813 = vmatpush2.bf16.msra.mxu0 %v4228
  %4814 = vmatprep.subr.bf16.mxu0 %v4225
  %4815 = vmatpush2.bf16.msra.mxu0 %v4224
  %4816 = vmatprep.subr.bf16.mxu0 %v4221
  %4817 = vmatpush2.bf16.msra.mxu0 %v4220
  %4818 = vmatprep.subr.bf16.mxu0 %v4217
  %4819 = vmatpush2.bf16.msra.mxu0 %v4216
  %4820 = vmatprep.subr.bf16.mxu0 %v4213
  %4821 = vmatpush2.bf16.msra.mxu0 %v4212
  %4822 = vmatprep.subr.bf16.mxu0 %v4209
  %4823 = vmatpush2.bf16.msra.mxu0 %v4208
  %4824 = vmatprep.subr.bf16.mxu0 %v4205
  %4825 = vmatpush2.bf16.msra.mxu0 %v4204
  %4826 = vmatprep.subr.bf16.mxu0 %v4201
  %4827 = vmatpush2.bf16.msra.mxu0 %v4200
  %4828 = vmatprep.mubr.bf16.mxu0 %v2989
  %4829 = vmatmul.mubr.bf16.gmra.mxu0 %v2988
  %v4830 = vpop.f32.mrf.mxu0
  %v4831 = vadd.f32 %v4790, %v4830
  %v4832 = vpop.f32.mrf.mxu0
  %v4833 = vadd.f32 %v4792, %v4832
  %v4834 = vpop.f32.mrf.mxu0
  %v4835 = vpop.f32.mrf.mxu0
  %4836 = vdwg.mxu0
  %4837 = vmatprep.subr.bf16.mxu0 %v4261
  %4838 = vmatpush1.bf16.msra.mxu0 %v4260
  %4839 = vmatprep.subr.bf16.mxu0 %v4257
  %4840 = vmatpush1.bf16.msra.mxu0 %v4256
  %4841 = vmatprep.subr.bf16.mxu0 %v4253
  %4842 = vmatpush1.bf16.msra.mxu0 %v4252
  %4843 = vmatprep.subr.bf16.mxu0 %v4249
  %4844 = vmatpush1.bf16.msra.mxu0 %v4248
  %4845 = vmatprep.subr.bf16.mxu0 %v4245
  %4846 = vmatpush1.bf16.msra.mxu0 %v4244
  %4847 = vmatprep.subr.bf16.mxu0 %v4241
  %4848 = vmatpush1.bf16.msra.mxu0 %v4240
  %4849 = vmatprep.subr.bf16.mxu0 %v4237
  %4850 = vmatpush1.bf16.msra.mxu0 %v4236
  %4851 = vmatprep.subr.bf16.mxu0 %v4233
  %4852 = vmatpush1.bf16.msra.mxu0 %v4232
  %4853 = vmatprep.subr.bf16.mxu0 %v4293
  %4854 = vmatpush2.bf16.msra.mxu0 %v4292
  %4855 = vmatprep.subr.bf16.mxu0 %v4289
  %4856 = vmatpush2.bf16.msra.mxu0 %v4288
  %4857 = vmatprep.subr.bf16.mxu0 %v4285
  %4858 = vmatpush2.bf16.msra.mxu0 %v4284
  %4859 = vmatprep.subr.bf16.mxu0 %v4281
  %4860 = vmatpush2.bf16.msra.mxu0 %v4280
  %4861 = vmatprep.subr.bf16.mxu0 %v4277
  %4862 = vmatpush2.bf16.msra.mxu0 %v4276
  %4863 = vmatprep.subr.bf16.mxu0 %v4273
  %4864 = vmatpush2.bf16.msra.mxu0 %v4272
  %4865 = vmatprep.subr.bf16.mxu0 %v4269
  %4866 = vmatpush2.bf16.msra.mxu0 %v4268
  %4867 = vmatprep.subr.bf16.mxu0 %v4265
  %4868 = vmatpush2.bf16.msra.mxu0 %v4264
  %4869 = vmatprep.mubr.bf16.mxu0 %v2991
  %4870 = vmatmul.mubr.bf16.gmra.mxu0 %v2990
  %v4871 = vpop.f32.mrf.mxu0
  %v4872 = vadd.f32 %v4831, %v4871
  %v4873 = vpop.f32.mrf.mxu0
  %v4874 = vadd.f32 %v4833, %v4873
  %v4875 = vpop.f32.mrf.mxu0
  %v4876 = vpop.f32.mrf.mxu0
  %4877 = vdwg.mxu0
  %v4878 = vmax.f32 %v4708, 0.0
  %v4879 = vmax.f32 %v4710, 0.0
  %v4880 = vmax.f32 %v4872, 0.0
  %v4881 = vmax.f32 %v4874, 0.0
  %v4882 = vpack.c.bf16 %v4878, %v4878
  %v4883 = vpack.c.bf16 %v4879, %v4879
  %v4884 = vpack.c.bf16 %v4880, %v4880
  %v4885 = vpack.c.bf16 %v4881, %v4881
  %v4886 = vld [vmem:[%s9] sm:$0xf]
  %v4887 = vld [vmem:[%s9 + $0x4] sm:$0xf]
  %v4888 = vld [vmem:[%s9 + $0x8] sm:$0xf]
  %v4889 = vld [vmem:[%s9 + $0xc] sm:$0xf]
  %v4890 = vld [vmem:[%s9 + $0x10] sm:$0xf]
  %v4891 = vld [vmem:[%s9 + $0x14] sm:$0xf]
  %v4892 = vld [vmem:[%s9 + $0x18] sm:$0xf]
  %v4893 = vld [vmem:[%s9 + $0x1c] sm:$0xf]
  %v4894 = vld [vmem:[%s9 + $0x20] sm:$0xf]
  %v4895 = vld [vmem:[%s9 + $0x24] sm:$0xf]
  %v4896 = vld [vmem:[%s9 + $0x28] sm:$0xf]
  %v4897 = vld [vmem:[%s9 + $0x2c] sm:$0xf]
  %v4898 = vld [vmem:[%s9 + $0x30] sm:$0xf]
  %v4899 = vld [vmem:[%s9 + $0x34] sm:$0xf]
  %v4900 = vld [vmem:[%s9 + $0x38] sm:$0xf]
  %v4901 = vld [vmem:[%s9 + $0x3c] sm:$0xf]
  %v4902 = vld [vmem:[%s9 + $0x40] sm:$0xf]
  %v4903 = vld [vmem:[%s9 + $0x44] sm:$0xf]
  %v4904 = vld [vmem:[%s9 + $0x48] sm:$0xf]
  %v4905 = vld [vmem:[%s9 + $0x4c] sm:$0xf]
  %v4906 = vld [vmem:[%s9 + $0x50] sm:$0xf]
  %v4907 = vld [vmem:[%s9 + $0x54] sm:$0xf]
  %v4908 = vld [vmem:[%s9 + $0x58] sm:$0xf]
  %v4909 = vld [vmem:[%s9 + $0x5c] sm:$0xf]
  %v4910 = vld [vmem:[%s9 + $0x60] sm:$0xf]
  %v4911 = vld [vmem:[%s9 + $0x64] sm:$0xf]
  %v4912 = vld [vmem:[%s9 + $0x68] sm:$0xf]
  %v4913 = vld [vmem:[%s9 + $0x6c] sm:$0xf]
  %v4914 = vld [vmem:[%s9 + $0x70] sm:$0xf]
  %v4915 = vld [vmem:[%s9 + $0x74] sm:$0xf]
  %v4916 = vld [vmem:[%s9 + $0x78] sm:$0xf]
  %v4917 = vld [vmem:[%s9 + $0x7c] sm:$0xf]
  %v4918 = vld [vmem:[%s9 + $0x80] sm:$0xf]
  %v4919 = vld [vmem:[%s9 + $0x84] sm:$0xf]
  %v4920 = vld [vmem:[%s9 + $0x88] sm:$0xf]
  %v4921 = vld [vmem:[%s9 + $0x8c] sm:$0xf]
  %v4922 = vld [vmem:[%s9 + $0x90] sm:$0xf]
  %v4923 = vld [vmem:[%s9 + $0x94] sm:$0xf]
  %v4924 = vld [vmem:[%s9 + $0x98] sm:$0xf]
  %v4925 = vld [vmem:[%s9 + $0x9c] sm:$0xf]
  %v4926 = vld [vmem:[%s9 + $0xa0] sm:$0xf]
  %v4927 = vld [vmem:[%s9 + $0xa4] sm:$0xf]
  %v4928 = vld [vmem:[%s9 + $0xa8] sm:$0xf]
  %v4929 = vld [vmem:[%s9 + $0xac] sm:$0xf]
  %v4930 = vld [vmem:[%s9 + $0xb0] sm:$0xf]
  %v4931 = vld [vmem:[%s9 + $0xb4] sm:$0xf]
  %v4932 = vld [vmem:[%s9 + $0xb8] sm:$0xf]
  %v4933 = vld [vmem:[%s9 + $0xbc] sm:$0xf]
  %v4934 = vld [vmem:[%s9 + $0xc0] sm:$0xf]
  %v4935 = vld [vmem:[%s9 + $0xc4] sm:$0xf]
  %v4936 = vld [vmem:[%s9 + $0xc8] sm:$0xf]
  %v4937 = vld [vmem:[%s9 + $0xcc] sm:$0xf]
  %v4938 = vld [vmem:[%s9 + $0xd0] sm:$0xf]
  %v4939 = vld [vmem:[%s9 + $0xd4] sm:$0xf]
  %v4940 = vld [vmem:[%s9 + $0xd8] sm:$0xf]
  %v4941 = vld [vmem:[%s9 + $0xdc] sm:$0xf]
  %v4942 = vld [vmem:[%s9 + $0xe0] sm:$0xf]
  %v4943 = vld [vmem:[%s9 + $0xe4] sm:$0xf]
  %v4944 = vld [vmem:[%s9 + $0xe8] sm:$0xf]
  %v4945 = vld [vmem:[%s9 + $0xec] sm:$0xf]
  %v4946 = vld [vmem:[%s9 + $0xf0] sm:$0xf]
  %v4947 = vld [vmem:[%s9 + $0xf4] sm:$0xf]
  %v4948 = vld [vmem:[%s9 + $0xf8] sm:$0xf]
  %v4949 = vld [vmem:[%s9 + $0xfc] sm:$0xf]
  %v4950 = vld [vmem:[%s10] sm:$0x1]
  %v4952 = vlaneseq
  %v4953 = vshrl.u32 %v4952, 7
  %v4954 = vsub.s32 0, %v4953
  %v4955 = vrot.slane %v4950, %v4954
  %v5021 = vunpack.c.l.b16 %v4886
  %v5022 = vunpack.c.l.b16 %v4887
  %v5023 = vunpack.c.l.b16 %v4888
  %v5024 = vunpack.c.l.b16 %v4889
  %v5025 = vunpack.c.l.b16 %v4890
  %v5026 = vunpack.c.l.b16 %v4891
  %v5027 = vunpack.c.l.b16 %v4892
  %v5028 = vunpack.c.l.b16 %v4893
  %v5029 = vunpack.c.l.b16 %v4894
  %v5030 = vunpack.c.l.b16 %v4895
  %v5031 = vunpack.c.l.b16 %v4896
  %v5032 = vunpack.c.l.b16 %v4897
  %v5033 = vunpack.c.l.b16 %v4898
  %v5034 = vunpack.c.l.b16 %v4899
  %v5035 = vunpack.c.l.b16 %v4900
  %v5036 = vunpack.c.l.b16 %v4901
  %v5037 = vunpack.c.l.b16 %v4902
  %v5038 = vunpack.c.l.b16 %v4903
  %v5039 = vunpack.c.l.b16 %v4904
  %v5040 = vunpack.c.l.b16 %v4905
  %v5041 = vunpack.c.l.b16 %v4906
  %v5042 = vunpack.c.l.b16 %v4907
  %v5043 = vunpack.c.l.b16 %v4908
  %v5044 = vunpack.c.l.b16 %v4909
  %v5045 = vunpack.c.l.b16 %v4910
  %v5046 = vunpack.c.l.b16 %v4911
  %v5047 = vunpack.c.l.b16 %v4912
  %v5048 = vunpack.c.l.b16 %v4913
  %v5049 = vunpack.c.l.b16 %v4914
  %v5050 = vunpack.c.l.b16 %v4915
  %v5051 = vunpack.c.l.b16 %v4916
  %v5052 = vunpack.c.l.b16 %v4917
  %v5053 = vunpack.c.l.b16 %v4918
  %v5054 = vunpack.c.l.b16 %v4919
  %v5055 = vunpack.c.l.b16 %v4920
  %v5056 = vunpack.c.l.b16 %v4921
  %v5057 = vunpack.c.l.b16 %v4922
  %v5058 = vunpack.c.l.b16 %v4923
  %v5059 = vunpack.c.l.b16 %v4924
  %v5060 = vunpack.c.l.b16 %v4925
  %v5061 = vunpack.c.l.b16 %v4926
  %v5062 = vunpack.c.l.b16 %v4927
  %v5063 = vunpack.c.l.b16 %v4928
  %v5064 = vunpack.c.l.b16 %v4929
  %v5065 = vunpack.c.l.b16 %v4930
  %v5066 = vunpack.c.l.b16 %v4931
  %v5067 = vunpack.c.l.b16 %v4932
  %v5068 = vunpack.c.l.b16 %v4933
  %v5069 = vunpack.c.l.b16 %v4934
  %v5070 = vunpack.c.l.b16 %v4935
  %v5071 = vunpack.c.l.b16 %v4936
  %v5072 = vunpack.c.l.b16 %v4937
  %v5073 = vunpack.c.l.b16 %v4938
  %v5074 = vunpack.c.l.b16 %v4939
  %v5075 = vunpack.c.l.b16 %v4940
  %v5076 = vunpack.c.l.b16 %v4941
  %v5077 = vunpack.c.l.b16 %v4942
  %v5078 = vunpack.c.l.b16 %v4943
  %v5079 = vunpack.c.l.b16 %v4944
  %v5080 = vunpack.c.l.b16 %v4945
  %v5081 = vunpack.c.l.b16 %v4946
  %v5082 = vunpack.c.l.b16 %v4947
  %v5083 = vunpack.c.l.b16 %v4948
  %v5084 = vunpack.c.l.b16 %v4949
  %v5085 = vpack.c.b16 %v5022, %v5021
  %v5086 = vpack.c.b16 %v5024, %v5023
  %v5087 = vpack.c.b16 %v5026, %v5025
  %v5088 = vpack.c.b16 %v5028, %v5027
  %v5089 = vpack.c.b16 %v5030, %v5029
  %v5090 = vpack.c.b16 %v5032, %v5031
  %v5091 = vpack.c.b16 %v5034, %v5033
  %v5092 = vpack.c.b16 %v5036, %v5035
  %v5093 = vpack.c.b16 %v5038, %v5037
  %v5094 = vpack.c.b16 %v5040, %v5039
  %v5095 = vpack.c.b16 %v5042, %v5041
  %v5096 = vpack.c.b16 %v5044, %v5043
  %v5097 = vpack.c.b16 %v5046, %v5045
  %v5098 = vpack.c.b16 %v5048, %v5047
  %v5099 = vpack.c.b16 %v5050, %v5049
  %v5100 = vpack.c.b16 %v5052, %v5051
  %v5101 = vpack.c.b16 %v5054, %v5053
  %v5102 = vpack.c.b16 %v5056, %v5055
  %v5103 = vpack.c.b16 %v5058, %v5057
  %v5104 = vpack.c.b16 %v5060, %v5059
  %v5105 = vpack.c.b16 %v5062, %v5061
  %v5106 = vpack.c.b16 %v5064, %v5063
  %v5107 = vpack.c.b16 %v5066, %v5065
  %v5108 = vpack.c.b16 %v5068, %v5067
  %v5109 = vpack.c.b16 %v5070, %v5069
  %v5110 = vpack.c.b16 %v5072, %v5071
  %v5111 = vpack.c.b16 %v5074, %v5073
  %v5112 = vpack.c.b16 %v5076, %v5075
  %v5113 = vpack.c.b16 %v5078, %v5077
  %v5114 = vpack.c.b16 %v5080, %v5079
  %v5115 = vpack.c.b16 %v5082, %v5081
  %v5116 = vpack.c.b16 %v5084, %v5083
  %5149 = vmatprep.subr.bf16.mxu0 0
  %5150 = vmatpush1.bf16.msra.mxu0 %v5092
  %5151 = vmatprep.subr.bf16.mxu0 0
  %5152 = vmatpush1.bf16.msra.mxu0 %v5091
  %5153 = vmatprep.subr.bf16.mxu0 0
  %5154 = vmatpush1.bf16.msra.mxu0 %v5090
  %5155 = vmatprep.subr.bf16.mxu0 0
  %5156 = vmatpush1.bf16.msra.mxu0 %v5089
  %5157 = vmatprep.subr.bf16.mxu0 0
  %5158 = vmatpush1.bf16.msra.mxu0 %v5088
  %5159 = vmatprep.subr.bf16.mxu0 0
  %5160 = vmatpush1.bf16.msra.mxu0 %v5087
  %5161 = vmatprep.subr.bf16.mxu0 0
  %5162 = vmatpush1.bf16.msra.mxu0 %v5086
  %5163 = vmatprep.subr.bf16.mxu0 0
  %5164 = vmatpush1.bf16.msra.mxu0 %v5085
  %5165 = vmatprep.subr.bf16.mxu0 0
  %5166 = vmatpush2.bf16.msra.mxu0 %v5100
  %5167 = vmatprep.subr.bf16.mxu0 0
  %5168 = vmatpush2.bf16.msra.mxu0 %v5099
  %5169 = vmatprep.subr.bf16.mxu0 0
  %5170 = vmatpush2.bf16.msra.mxu0 %v5098
  %5171 = vmatprep.subr.bf16.mxu0 0
  %5172 = vmatpush2.bf16.msra.mxu0 %v5097
  %5173 = vmatprep.subr.bf16.mxu0 0
  %5174 = vmatpush2.bf16.msra.mxu0 %v5096
  %5175 = vmatprep.subr.bf16.mxu0 0
  %5176 = vmatpush2.bf16.msra.mxu0 %v5095
  %5177 = vmatprep.subr.bf16.mxu0 0
  %5178 = vmatpush2.bf16.msra.mxu0 %v5094
  %5179 = vmatprep.subr.bf16.mxu0 0
  %5180 = vmatpush2.bf16.msra.mxu0 %v5093
  %5181 = vmatprep.mubr.bf16.mxu0 %v4883
  %5182 = vmatmul.mubr.bf16.gmra.mxu0 %v4882
  %v5183 = vpop.f32.mrf.mxu0
  %v5184 = vadd.f32 %v4955, %v5183
  %v5185 = vpop.f32.mrf.mxu0
  %v5186 = vpop.f32.mrf.mxu0
  %v5187 = vpop.f32.mrf.mxu0
  %5188 = vdwg.mxu0
  %5189 = vmatprep.subr.bf16.mxu0 0
  %5190 = vmatpush1.bf16.msra.mxu0 %v5108
  %5191 = vmatprep.subr.bf16.mxu0 0
  %5192 = vmatpush1.bf16.msra.mxu0 %v5107
  %5193 = vmatprep.subr.bf16.mxu0 0
  %5194 = vmatpush1.bf16.msra.mxu0 %v5106
  %5195 = vmatprep.subr.bf16.mxu0 0
  %5196 = vmatpush1.bf16.msra.mxu0 %v5105
  %5197 = vmatprep.subr.bf16.mxu0 0
  %5198 = vmatpush1.bf16.msra.mxu0 %v5104
  %5199 = vmatprep.subr.bf16.mxu0 0
  %5200 = vmatpush1.bf16.msra.mxu0 %v5103
  %5201 = vmatprep.subr.bf16.mxu0 0
  %5202 = vmatpush1.bf16.msra.mxu0 %v5102
  %5203 = vmatprep.subr.bf16.mxu0 0
  %5204 = vmatpush1.bf16.msra.mxu0 %v5101
  %5205 = vmatprep.subr.bf16.mxu0 0
  %5206 = vmatpush2.bf16.msra.mxu0 %v5116
  %5207 = vmatprep.subr.bf16.mxu0 0
  %5208 = vmatpush2.bf16.msra.mxu0 %v5115
  %5209 = vmatprep.subr.bf16.mxu0 0
  %5210 = vmatpush2.bf16.msra.mxu0 %v5114
  %5211 = vmatprep.subr.bf16.mxu0 0
  %5212 = vmatpush2.bf16.msra.mxu0 %v5113
  %5213 = vmatprep.subr.bf16.mxu0 0
  %5214 = vmatpush2.bf16.msra.mxu0 %v5112
  %5215 = vmatprep.subr.bf16.mxu0 0
  %5216 = vmatpush2.bf16.msra.mxu0 %v5111
  %5217 = vmatprep.subr.bf16.mxu0 0
  %5218 = vmatpush2.bf16.msra.mxu0 %v5110
  %5219 = vmatprep.subr.bf16.mxu0 0
  %5220 = vmatpush2.bf16.msra.mxu0 %v5109
  %5221 = vmatprep.mubr.bf16.mxu0 %v4885
  %5222 = vmatmul.mubr.bf16.gmra.mxu0 %v4884
  %v5223 = vpop.f32.mrf.mxu0
  %v5224 = vadd.f32 %v5184, %v5223
  %v5225 = vpop.f32.mrf.mxu0
  %v5226 = vpop.f32.mrf.mxu0
  %v5227 = vpop.f32.mrf.mxu0
  %5228 = vdwg.mxu0
  %vm5229 = vcmask 523264
  %5230 = vst.msk [vmem:[%s11] sm:$0xff] %vm5229, %v5224
  // Predicated region
  $region46: #{pointnetpp_forward.5} parent=0 // pred_check
    _
  $region47: #{pointnetpp_forward.5} parent=0 // pred_check_branch
    %5232 = sbr.rel (0) target = $region49
  $region48: #{pointnetpp_forward.5} parent=0 // pred_region
    _
  $region49: #{pointnetpp_forward.5} parent=0 // pred_fallthru
    _
  // Predicated region
  $region50: #{pointnetpp_forward.5} parent=0 // pred_check
    _
  $region51: #{pointnetpp_forward.5} parent=0 // pred_check_branch
    %5234 = sbr.rel (0) target = $region53
  $region52: #{pointnetpp_forward.5} parent=0 // pred_region
    _
  $region53: #{pointnetpp_forward.5} parent=0 // pred_fallthru
    _

</llo_original>
